<compile_context>
chip_gen: v5e
topology: v5e:2x2
jax: 0.10.0
libtpu: 0.0.40
codegen_flags: <defaults>
</compile_context>

<pallas_src>
import math
import functools

import jax
import jax.numpy as jnp
from jax.experimental import pallas as pl
from jax.experimental.pallas import tpu as pltpu

N_EMBD = 32
N_HEAD = 4
N_AGENT = 8          # L (sequence length == number of agents, start_pos = -1 path)
HEAD_DIM = N_EMBD // N_HEAD


def _gelu_tanh(x):
    # tanh-approx GELU (jax.nn.gelu(approximate=True)); |diff| vs erf GELU < ~3e-3.
    c = 0.7978845608028654  # sqrt(2/pi)
    return 0.5 * x * (1.0 + jnp.tanh(c * (x + 0.044715 * x * x * x)))


def _layer_norm(x, gamma, beta, eps=1e-5):
    mu = jnp.mean(x, axis=-1, keepdims=True)
    xc = x - mu
    var = jnp.mean(xc * xc, axis=-1, keepdims=True)
    return xc * jax.lax.rsqrt(var + eps) * gamma + beta


def decode_block_kernel(x_ref, rep_ref, mask_ref,
                        w_obs_ref, b_obs_ref, w_act_ref,
                        w_proj_ref, w_mlp1_ref, w_mlp2_ref, vecp_ref,
                        o_ref):
    """One grid step = TILE_B batch elements.

    x_ref / rep_ref / o_ref : (TILE_B*L, D)   flattened activations
    mask_ref                : (TILE_B, L, L)  nonzero == attend
    w_obs_ref (D, 5D), b_obs_ref (1, 5D), w_act_ref (D, 2D)
    w_proj_ref / w_mlp1_ref / w_mlp2_ref : (D, D)
    vecp_ref (8, D): rows 0 b_proj, 1 b_mlp1, 2 b_mlp2, 3 ln1_g, 4 ln1_b,
                     5 ln2_g, 6 ln2_b, 7 unused
    """
    D, L, H, hd = N_EMBD, N_AGENT, N_HEAD, HEAD_DIM
    TB = mask_ref.shape[0]
    TBL = TB * L

    obs2 = rep_ref[...]            # (TBL, D)  observations (rep_enc)
    act2 = x_ref[...]              # (TBL, D)  actions (x)
    mask3 = mask_ref[...]          # (TB, L, L)

    f32 = jnp.float32
    dot = functools.partial(jnp.dot, preferred_element_type=f32)

    # Input projections: cat([obs, act]) @ W == obs @ W_obs + act @ W_act.
    po = dot(obs2, w_obs_ref[...]) + b_obs_ref[...]     # (TBL, 5D) = [k|v|q|ks|vs]
    pa = dot(act2, w_act_ref[...])                      # (TBL, 2D) = [k|v] act part

    kv = po[:, :2 * D] + pa                             # (TBL, 2D)
    scale = 1.0 / math.sqrt(hd)
    k3  = kv[:, :D].reshape(TB, L, D)
    v3  = kv[:, D:].reshape(TB, L, D)
    q3  = (po[:, 2 * D:3 * D] * scale).reshape(TB, L, D)   # pre-scale q (== scaling scores)
    ks3 = po[:, 3 * D:4 * D].reshape(TB, L, D)
    vs3 = po[:, 4 * D:5 * D].reshape(TB, L, D)

    # --- loop-invariant mask work, hoisted out of the unrolled head loop ---
    row = jax.lax.broadcasted_iota(jnp.int32, (L, L), 0)
    col = jax.lax.broadcasted_iota(jnp.int32, (L, L), 1)
    diag = row == col
    neg_inf = jnp.float32(-jnp.inf)
    bias3 = jnp.where(mask3 == 0.0, neg_inf, 0.0)                                # (TB, L, L)
    diag_bias = jnp.sum(jnp.where(diag, bias3, 0.0), axis=-1, keepdims=True)     # (TB, L, 1)

    wp = w_proj_ref[...]                                # (D, D)
    attn_out = None

    for h in range(H):                                  # H = 4, unrolled at trace time
        sl = slice(h * hd, (h + 1) * hd)
        qh, kh, vh = q3[:, :, sl], k3[:, :, sl], v3[:, :, sl]
        ksh, vsh = ks3[:, :, sl], vs3[:, :, sl]

        # self-attention weight for the diagonal uses key_self
        self_w = jnp.sum(qh * ksh, axis=-1, keepdims=True)                    # (TB, L, 1)
        # batched q @ k^T without an explicit transpose
        qk = jax.lax.dot_general(qh, kh, (((2,), (2,)), ((0,), (0,))),
                                 preferred_element_type=f32)                  # (TB, L, L)
        aw = jnp.where(diag, self_w, qk) + bias3        # diag <- self_w, then mask bias

        m = jnp.max(aw, axis=-1, keepdims=True)
        p = jnp.exp(aw - m)
        r = pl.reciprocal(jnp.sum(p, axis=-1, keepdims=True), approx=True)    # EUP

        # Closed-form diagonal: softmax[i,i] == exp(self_w + diag_bias - m) * r,
        # so y = softmax @ v with the diagonal swapped to v_self is
        #   (p @ v) * r + self_att * (v_self - v).
        self_att = jnp.exp(self_w + diag_bias - m) * r                        # (TB, L, 1)
        pv = jax.lax.dot_general(p, vh, (((2,), (1,)), ((0,), (0,))),
                                 preferred_element_type=f32)                  # (TB, L, hd)
        yh = (pv * r + self_att * (vsh - vh)).reshape(TBL, hd)

        # Fold this head straight into the output projection:
        # concat_h(y_h) @ Wp == sum_h y_h @ Wp[h*hd:(h+1)*hd, :]
        contrib = dot(yh, wp[h * hd:(h + 1) * hd, :])                         # (TBL, D)
        attn_out = contrib if attn_out is None else attn_out + contrib

    attn_out = attn_out + vecp_ref[0:1, :]                                    # + b_proj

    x1 = _layer_norm(obs2 + attn_out, vecp_ref[3:4, :], vecp_ref[4:5, :])     # ln1(rep + attn)
    hmid = _gelu_tanh(dot(x1, w_mlp1_ref[...]) + vecp_ref[1:2, :])
    mlp = dot(hmid, w_mlp2_ref[...]) + vecp_ref[2:3, :]
    o_ref[...] = _layer_norm(x1 + mlp, vecp_ref[5:6, :], vecp_ref[6:7, :])    # ln2(x + mlp(x))


def prepare_params(raw):
    """Fuse / stack raw per-layer parameters (all weights already (in, out))."""
    D = N_EMBD
    Wk, Wv = raw["Wk"], raw["Wv"]                       # (2D, D): rows 0:D obs, D:2D act
    w_obs = jnp.concatenate([Wk[:D], Wv[:D], raw["Wq"], raw["Wks"], raw["Wvs"]], axis=1)  # (D, 5D)
    w_act = jnp.concatenate([Wk[D:], Wv[D:]], axis=1)                                     # (D, 2D)
    b_obs = jnp.concatenate([raw["bk"], raw["bv"], raw["bq"],
                             raw["bks"], raw["bvs"]]).reshape(1, 5 * D)                   # (1, 5D)
    vecp = jnp.stack([raw["bp"], raw["b1"], raw["b2"], raw["g1"], raw["be1"],
                      raw["g2"], raw["be2"], jnp.zeros((D,), jnp.float32)])               # (8, D)
    return {"w_obs": w_obs.astype(jnp.float32), "w_act": w_act.astype(jnp.float32),
            "b_obs": b_obs.astype(jnp.float32), "w_proj": raw["Wp"].astype(jnp.float32),
            "w_mlp1": raw["W1"].astype(jnp.float32), "w_mlp2": raw["W2"].astype(jnp.float32),
            "vecp": vecp.astype(jnp.float32)}


def _derive_tile_b(B, tile_b):
    """Big blocks amortize the ~0.35us/step pipeline overhead; keep >= 2 blocks
    so dimension_semantics=("parallel",) can shard across v7x's 2 TensorCores
    (a no-op on single-TC v5e/v6e)."""
    if tile_b is None:
        tile_b = pl.cdiv(B, 2) if B > 1 else 1
        tile_b = min(tile_b, 256)
    tile_b = max(1, min(tile_b, B))
    if tile_b >= 8:
        tile_b = ((tile_b + 7) // 8) * 8    # 8-aligned batch blocks
    return tile_b


def decode_block_forward(x, rep_enc, atten_masks, params, *, tile_b=None):
    B, L, D = x.shape
    assert L == N_AGENT and D == N_EMBD

    tile_b = _derive_tile_b(B, tile_b)
    n_blocks = pl.cdiv(B, tile_b)
    Bp = n_blocks * tile_b
    if Bp != B:
        pad = Bp - B
        x = jnp.pad(x, ((0, pad), (0, 0), (0, 0)))
        rep_enc = jnp.pad(rep_enc, ((0, pad), (0, 0), (0, 0)))
        # pad mask with ones so padded rows softmax over finite values (no NaN)
        atten_masks = jnp.pad(atten_masks, ((0, pad), (0, 0), (0, 0)), constant_values=1.0)

    x2 = x.reshape(Bp * L, D)
    rep2 = rep_enc.reshape(Bp * L, D)
    TBL = tile_b * L

    out = pl.pallas_call(
        decode_block_kernel,
        out_shape=jax.ShapeDtypeStruct((Bp * L, D), jnp.float32),
        grid_spec=pltpu.PrefetchScalarGridSpec(
            num_scalar_prefetch=0,
            grid=(n_blocks,),
            in_specs=[
                pl.BlockSpec((TBL, D), lambda b: (b, 0)),             # x (actions), flattened
                pl.BlockSpec((TBL, D), lambda b: (b, 0)),             # rep_enc (observations)
                pl.BlockSpec((tile_b, L, L), lambda b: (b, 0, 0)),    # atten_masks
                pl.BlockSpec((D, 5 * D), lambda b: (0, 0)),           # fused obs-side weights
                pl.BlockSpec((1, 5 * D), lambda b: (0, 0)),           # fused obs-side biases
                pl.BlockSpec((D, 2 * D), lambda b: (0, 0)),           # fused act-side weights
                pl.BlockSpec((D, D), lambda b: (0, 0)),               # proj weight
                pl.BlockSpec((D, D), lambda b: (0, 0)),               # mlp fc1 weight
                pl.BlockSpec((D, D), lambda b: (0, 0)),               # mlp fc2 weight
                pl.BlockSpec((8, D), lambda b: (0, 0)),               # biases / LN params
            ],
            out_specs=pl.BlockSpec((TBL, D), lambda b: (b, 0)),
        ),
        compiler_params=pltpu.CompilerParams(
            dimension_semantics=("parallel",),
            vmem_limit_bytes=64 * 1024 * 1024,   # large tiles overflow v5e's 16 MiB default
        ),
    )(x2, rep2, atten_masks, params["w_obs"], params["b_obs"], params["w_act"],
      params["w_proj"], params["w_mlp1"], params["w_mlp2"], params["vecp"])

    out = out.reshape(Bp, L, D)
    return out[:B] if Bp != B else out


def reference_forward(x, rep_enc, mask, raw):
    """Plain-JAX reference matching the torch module (erf GELU, exact softmax)."""
    obs, act = rep_enc, x
    B, L, D = obs.shape
    H, hd = N_HEAD, HEAD_DIM
    aug = jnp.concatenate([obs, act], axis=-1)
    k = aug @ raw["Wk"] + raw["bk"]
    v = aug @ raw["Wv"] + raw["bv"]
    q = obs @ raw["Wq"] + raw["bq"]
    ks = obs @ raw["Wks"] + raw["bks"]
    vs = obs @ raw["Wvs"] + raw["bvs"]

    def split(t):
        return t.reshape(B, L, H, hd).transpose(0, 2, 1, 3)   # (B,H,L,hd)

    qh, kh, vh, ksh, vsh = map(split, (q, k, v, ks, vs))
    self_w = jnp.sum(qh * ksh, -1)                            # (B,H,L)
    aw = qh @ jnp.swapaxes(kh, -1, -2)                        # (B,H,L,L)
    eye = jnp.eye(L, dtype=bool)
    aw = jnp.where(eye, self_w[..., None], aw)
    aw = aw / math.sqrt(hd)
    aw = jnp.where(mask[:, None] == 0.0, -jnp.inf, aw)
    sm = jax.nn.softmax(aw, axis=-1)
    self_att = jnp.sum(jnp.where(eye, sm, 0.0), -1)
    sm_nd = jnp.where(eye, 0.0, sm)
    y = sm_nd @ vh + self_att[..., None] * vsh
    y = y.transpose(0, 2, 1, 3).reshape(B, L, D)
    y = y @ raw["Wp"] + raw["bp"]

    def ln(t, g, b):
        mu = jnp.mean(t, -1, keepdims=True)
        var = jnp.mean((t - mu) ** 2, -1, keepdims=True)
        return (t - mu) / jnp.sqrt(var + 1e-5) * g + b

    x1 = ln(obs + y, raw["g1"], raw["be1"])
    hm = jax.nn.gelu(x1 @ raw["W1"] + raw["b1"], approximate=False)
    return ln(x1 + (hm @ raw["W2"] + raw["b2"]), raw["g2"], raw["be2"])


if __name__ == "__main__":
    B, L, D = 21, N_AGENT, N_EMBD     # B=21 -> derived tile_b=16, 2 blocks, 11 padded rows
    key = jax.random.PRNGKey(0)
    keys = jax.random.split(key, 24)

    def rw(k, shape, s=0.1):
        return (s * jax.random.normal(k, shape)).astype(jnp.float32)

    raw = dict(
        Wk=rw(keys[0], (2 * D, D)), bk=rw(keys[1], (D,), 0.02),
        Wv=rw(keys[2], (2 * D, D)), bv=rw(keys[3], (D,), 0.02),
        Wq=rw(keys[4], (D, D)), bq=rw(keys[5], (D,), 0.02),
        Wks=rw(keys[6], (D, D)), bks=rw(keys[7], (D,), 0.02),
        Wvs=rw(keys[8], (D, D)), bvs=rw(keys[9], (D,), 0.02),
        Wp=rw(keys[10], (D, D)), bp=rw(keys[11], (D,), 0.02),
        W1=rw(keys[12], (D, D)), b1=rw(keys[13], (D,), 0.02),
        W2=rw(keys[14], (D, D)), b2=rw(keys[15], (D,), 0.02),
        g1=(1.0 + 0.1 * jax.random.normal(keys[16], (D,))).astype(jnp.float32),
        be1=rw(keys[17], (D,), 0.05),
        g2=(1.0 + 0.1 * jax.random.normal(keys[18], (D,))).astype(jnp.float32),
        be2=rw(keys[19], (D,), 0.05),
    )
    params = prepare_params(raw)

    x = jax.random.normal(keys[20], (B, L, D), jnp.float32)         # prev-layer / action embed
    rep_enc = jax.random.normal(keys[21], (B, L, D), jnp.float32)   # encoder representation
    # DAG / causal mask: each row attends to itself and previous agents
    atten_masks = jnp.broadcast_to(jnp.tril(jnp.ones((L, L), jnp.float32)), (B, L, L))

    # auto-derived tile_b (=16 here): exercises multi-block grid, megacore
    # semantics and batch padding.
    out = decode_block_forward(x, rep_enc, atten_masks, params)
    out = jax.block_until_ready(out)

    ref = reference_forward(x, rep_enc, atten_masks, raw)
    max_err = float(jnp.max(jnp.abs(out - ref)))
    assert out.shape == (B, L, D)
    assert max_err < 5e-3, f"mismatch vs reference: {max_err}"
    print("KERNEL_OK")
</pallas_src>

<mosaic_0001>
module attributes {stable_mosaic.version = 11 : i64} {
  func.func @decode_block_kernel(%arg0: i32, %arg1: memref<128x32xf32, #tpu.memory_space<vmem>>, %arg2: memref<128x32xf32, #tpu.memory_space<vmem>>, %arg3: memref<16x8x8xf32, #tpu.memory_space<vmem>>, %arg4: memref<32x160xf32, #tpu.memory_space<vmem>>, %arg5: memref<1x160xf32, #tpu.memory_space<vmem>>, %arg6: memref<32x64xf32, #tpu.memory_space<vmem>>, %arg7: memref<32x32xf32, #tpu.memory_space<vmem>>, %arg8: memref<32x32xf32, #tpu.memory_space<vmem>>, %arg9: memref<32x32xf32, #tpu.memory_space<vmem>>, %arg10: memref<8x32xf32, #tpu.memory_space<vmem>>, %arg11: memref<128x32xf32, #tpu.memory_space<vmem>>) attributes {dimension_semantics = [#tpu.dimension_semantics<parallel>], iteration_bounds = array<i64: 2>, scalar_prefetch = 0 : i64, scratch_operands = 0 : i64, tpu.core_type = #tpu.core_type<tc>, window_params = [{transform_indices = @transform_0, window_bounds = array<i64: 128, 32>}, {transform_indices = @transform_1, window_bounds = array<i64: 128, 32>}, {transform_indices = @transform_2, window_bounds = array<i64: 16, 8, 8>}, {pipeline_mode = #tpu.pipeline_mode<synchronous>, transform_indices = @transform_3, window_bounds = array<i64: 32, 160>}, {pipeline_mode = #tpu.pipeline_mode<synchronous>, transform_indices = @transform_4, window_bounds = array<i64: 1, 160>}, {pipeline_mode = #tpu.pipeline_mode<synchronous>, transform_indices = @transform_5, window_bounds = array<i64: 32, 64>}, {pipeline_mode = #tpu.pipeline_mode<synchronous>, transform_indices = @transform_6, window_bounds = array<i64: 32, 32>}, {pipeline_mode = #tpu.pipeline_mode<synchronous>, transform_indices = @transform_7, window_bounds = array<i64: 32, 32>}, {pipeline_mode = #tpu.pipeline_mode<synchronous>, transform_indices = @transform_8, window_bounds = array<i64: 32, 32>}, {pipeline_mode = #tpu.pipeline_mode<synchronous>, transform_indices = @transform_9, window_bounds = array<i64: 8, 32>}, {transform_indices = @transform_10, window_bounds = array<i64: 128, 32>}]} {
    %c0 = arith.constant 0 : index
    %c0_0 = arith.constant 0 : index
    %0 = vector.load %arg2[%c0, %c0_0] : memref<128x32xf32, #tpu.memory_space<vmem>>, vector<128x32xf32>
    %c0_1 = arith.constant 0 : index
    %c0_2 = arith.constant 0 : index
    %1 = vector.load %arg1[%c0_1, %c0_2] : memref<128x32xf32, #tpu.memory_space<vmem>>, vector<128x32xf32>
    %c0_3 = arith.constant 0 : index
    %c0_4 = arith.constant 0 : index
    %c0_5 = arith.constant 0 : index
    %2 = vector.load %arg3[%c0_3, %c0_4, %c0_5] : memref<16x8x8xf32, #tpu.memory_space<vmem>>, vector<16x8x8xf32>
    %c0_6 = arith.constant 0 : index
    %c0_7 = arith.constant 0 : index
    %3 = vector.load %arg4[%c0_6, %c0_7] : memref<32x160xf32, #tpu.memory_space<vmem>>, vector<32x160xf32>
    %cst = arith.constant dense<0.000000e+00> : vector<128x160xf32>
    %4 = tpu.matmul %0, %3, %cst {dimension_numbers = #tpu.dot_dimension_numbers<[1], [0], [0], [1], [0, 0, 1, 1], [], []>} : vector<128x32xf32>, vector<32x160xf32>, vector<128x160xf32> -> vector<128x160xf32>
    %c0_8 = arith.constant 0 : index
    %c0_9 = arith.constant 0 : index
    %5 = vector.load %arg5[%c0_8, %c0_9] : memref<1x160xf32, #tpu.memory_space<vmem>>, vector<1x160xf32>
    %6 = vector.broadcast %5 : vector<1x160xf32> to vector<128x160xf32>
    %7 = arith.addf %4, %6 : vector<128x160xf32>
    %c0_10 = arith.constant 0 : index
    %c0_11 = arith.constant 0 : index
    %8 = vector.load %arg6[%c0_10, %c0_11] : memref<32x64xf32, #tpu.memory_space<vmem>>, vector<32x64xf32>
    %cst_12 = arith.constant dense<0.000000e+00> : vector<128x64xf32>
    %9 = tpu.matmul %1, %8, %cst_12 {dimension_numbers = #tpu.dot_dimension_numbers<[1], [0], [0], [1], [0, 0, 1, 1], [], []>} : vector<128x32xf32>, vector<32x64xf32>, vector<128x64xf32> -> vector<128x64xf32>
    %10 = vector.extract_strided_slice %7 {offsets = [0, 0], sizes = [128, 64], strides = [1, 1]} : vector<128x160xf32> to vector<128x64xf32>
    %11 = arith.addf %10, %9 : vector<128x64xf32>
    %12 = vector.extract_strided_slice %11 {offsets = [0, 0], sizes = [128, 32], strides = [1, 1]} : vector<128x64xf32> to vector<128x32xf32>
    %13 = vector.shape_cast %12 : vector<128x32xf32> to vector<16x8x32xf32>
    %14 = vector.extract_strided_slice %11 {offsets = [0, 32], sizes = [128, 32], strides = [1, 1]} : vector<128x64xf32> to vector<128x32xf32>
    %15 = vector.shape_cast %14 : vector<128x32xf32> to vector<16x8x32xf32>
    %16 = vector.extract_strided_slice %7 {offsets = [0, 64], sizes = [128, 32], strides = [1, 1]} : vector<128x160xf32> to vector<128x32xf32>
    %cst_13 = arith.constant 0.353553385 : f32
    %17 = vector.broadcast %cst_13 : f32 to vector<128x32xf32>
    %18 = arith.mulf %16, %17 : vector<128x32xf32>
    %19 = vector.shape_cast %18 : vector<128x32xf32> to vector<16x8x32xf32>
    %20 = vector.extract_strided_slice %7 {offsets = [0, 96], sizes = [128, 32], strides = [1, 1]} : vector<128x160xf32> to vector<128x32xf32>
    %21 = vector.shape_cast %20 : vector<128x32xf32> to vector<16x8x32xf32>
    %22 = vector.extract_strided_slice %7 {offsets = [0, 128], sizes = [128, 32], strides = [1, 1]} : vector<128x160xf32> to vector<128x32xf32>
    %23 = vector.shape_cast %22 : vector<128x32xf32> to vector<16x8x32xf32>
    %24 = tpu.iota {dimensions = array<i32: 0>} : vector<8x8xi32>
    %25 = tpu.iota {dimensions = array<i32: 1>} : vector<8x8xi32>
    %26 = arith.cmpi eq, %24, %25 : vector<8x8xi32>
    %cst_14 = arith.constant 0.000000e+00 : f32
    %27 = vector.broadcast %cst_14 : f32 to vector<16x8x8xf32>
    %28 = arith.cmpf oeq, %2, %27 : vector<16x8x8xf32>
    %cst_15 = arith.constant 0xFF800000 : f32
    %cst_16 = arith.constant 0.000000e+00 : f32
    %29 = vector.broadcast %cst_15 : f32 to vector<16x8x8xf32>
    %30 = vector.broadcast %cst_16 : f32 to vector<16x8x8xf32>
    %31 = arith.select %28, %29, %30 : vector<16x8x8xi1>, vector<16x8x8xf32>
    %cst_17 = arith.constant 0.000000e+00 : f32
    %32 = vector.shape_cast %26 : vector<8x8xi1> to vector<1x8x8xi1>
    %33 = vector.broadcast %32 : vector<1x8x8xi1> to vector<16x8x8xi1>
    %34 = vector.broadcast %cst_17 : f32 to vector<16x8x8xf32>
    %35 = arith.select %33, %31, %34 : vector<16x8x8xi1>, vector<16x8x8xf32>
    %cst_18 = arith.constant dense<0.000000e+00> : vector<16x8xf32>
    %36 = vector.multi_reduction <add>, %35, %cst_18 [2] : vector<16x8x8xf32> to vector<16x8xf32>
    %37 = vector.shape_cast %36 : vector<16x8xf32> to vector<16x8x1xf32>
    %c0_19 = arith.constant 0 : index
    %c0_20 = arith.constant 0 : index
    %38 = vector.load %arg7[%c0_19, %c0_20] : memref<32x32xf32, #tpu.memory_space<vmem>>, vector<32x32xf32>
    %39 = vector.extract_strided_slice %19 {offsets = [0, 0, 0], sizes = [16, 8, 8], strides = [1, 1, 1]} : vector<16x8x32xf32> to vector<16x8x8xf32>
    %40 = vector.extract_strided_slice %13 {offsets = [0, 0, 0], sizes = [16, 8, 8], strides = [1, 1, 1]} : vector<16x8x32xf32> to vector<16x8x8xf32>
    %41 = vector.extract_strided_slice %15 {offsets = [0, 0, 0], sizes = [16, 8, 8], strides = [1, 1, 1]} : vector<16x8x32xf32> to vector<16x8x8xf32>
    %42 = vector.extract_strided_slice %21 {offsets = [0, 0, 0], sizes = [16, 8, 8], strides = [1, 1, 1]} : vector<16x8x32xf32> to vector<16x8x8xf32>
    %43 = vector.extract_strided_slice %23 {offsets = [0, 0, 0], sizes = [16, 8, 8], strides = [1, 1, 1]} : vector<16x8x32xf32> to vector<16x8x8xf32>
    %44 = arith.mulf %39, %42 : vector<16x8x8xf32>
    %cst_21 = arith.constant dense<0.000000e+00> : vector<16x8xf32>
    %45 = vector.multi_reduction <add>, %44, %cst_21 [2] : vector<16x8x8xf32> to vector<16x8xf32>
    %46 = vector.shape_cast %45 : vector<16x8xf32> to vector<16x8x1xf32>
    %cst_22 = arith.constant dense<0.000000e+00> : vector<16x8x8xf32>
    %47 = tpu.matmul %39, %40, %cst_22 {dimension_numbers = #tpu.dot_dimension_numbers<[2], [2], [1], [1], [0, 0, 0, 1, 1, 1], [0], [0]>} : vector<16x8x8xf32>, vector<16x8x8xf32>, vector<16x8x8xf32> -> vector<16x8x8xf32>
    %48 = vector.shape_cast %26 : vector<8x8xi1> to vector<1x8x8xi1>
    %49 = vector.broadcast %48 : vector<1x8x8xi1> to vector<16x8x8xi1>
    %50 = vector.shape_cast %46 : vector<16x8x1xf32> to vector<16x8x1xf32>
    %51 = vector.broadcast %50 : vector<16x8x1xf32> to vector<16x8x8xf32>
    %52 = arith.select %49, %51, %47 : vector<16x8x8xi1>, vector<16x8x8xf32>
    %53 = arith.addf %52, %31 : vector<16x8x8xf32>
    %cst_23 = arith.constant dense<0xFF800000> : vector<16x8xf32>
    %54 = vector.multi_reduction <maximumf>, %53, %cst_23 [2] : vector<16x8x8xf32> to vector<16x8xf32>
    %55 = vector.shape_cast %54 : vector<16x8xf32> to vector<16x8x1xf32>
    %56 = vector.broadcast %55 : vector<16x8x1xf32> to vector<16x8x8xf32>
    %57 = arith.subf %53, %56 : vector<16x8x8xf32>
    %58 = math.exp %57 : vector<16x8x8xf32>
    %cst_24 = arith.constant dense<0.000000e+00> : vector<16x8xf32>
    %59 = vector.multi_reduction <add>, %58, %cst_24 [2] : vector<16x8x8xf32> to vector<16x8xf32>
    %60 = vector.shape_cast %59 : vector<16x8xf32> to vector<16x8x1xf32>
    %61 = tpu.reciprocal %60 {approx = true} : vector<16x8x1xf32> -> vector<16x8x1xf32>
    %62 = arith.addf %46, %37 : vector<16x8x1xf32>
    %63 = arith.subf %62, %55 : vector<16x8x1xf32>
    %64 = math.exp %63 : vector<16x8x1xf32>
    %65 = arith.mulf %64, %61 : vector<16x8x1xf32>
    %cst_25 = arith.constant dense<0.000000e+00> : vector<16x8x8xf32>
    %66 = tpu.matmul %58, %41, %cst_25 {dimension_numbers = #tpu.dot_dimension_numbers<[2], [1], [1], [2], [0, 0, 0, 1, 1, 2], [0], [0]>} : vector<16x8x8xf32>, vector<16x8x8xf32>, vector<16x8x8xf32> -> vector<16x8x8xf32>
    %67 = vector.broadcast %61 : vector<16x8x1xf32> to vector<16x8x8xf32>
    %68 = arith.mulf %66, %67 : vector<16x8x8xf32>
    %69 = arith.subf %43, %41 : vector<16x8x8xf32>
    %70 = vector.broadcast %65 : vector<16x8x1xf32> to vector<16x8x8xf32>
    %71 = arith.mulf %70, %69 : vector<16x8x8xf32>
    %72 = arith.addf %68, %71 : vector<16x8x8xf32>
    %73 = vector.shape_cast %72 : vector<16x8x8xf32> to vector<128x8xf32>
    %74 = vector.extract_strided_slice %38 {offsets = [0, 0], sizes = [8, 32], strides = [1, 1]} : vector<32x32xf32> to vector<8x32xf32>
    %cst_26 = arith.constant dense<0.000000e+00> : vector<128x32xf32>
    %75 = tpu.matmul %73, %74, %cst_26 {dimension_numbers = #tpu.dot_dimension_numbers<[1], [0], [0], [1], [0, 0, 1, 1], [], []>} : vector<128x8xf32>, vector<8x32xf32>, vector<128x32xf32> -> vector<128x32xf32>
    %76 = vector.extract_strided_slice %19 {offsets = [0, 0, 8], sizes = [16, 8, 8], strides = [1, 1, 1]} : vector<16x8x32xf32> to vector<16x8x8xf32>
    %77 = vector.extract_strided_slice %13 {offsets = [0, 0, 8], sizes = [16, 8, 8], strides = [1, 1, 1]} : vector<16x8x32xf32> to vector<16x8x8xf32>
    %78 = vector.extract_strided_slice %15 {offsets = [0, 0, 8], sizes = [16, 8, 8], strides = [1, 1, 1]} : vector<16x8x32xf32> to vector<16x8x8xf32>
    %79 = vector.extract_strided_slice %21 {offsets = [0, 0, 8], sizes = [16, 8, 8], strides = [1, 1, 1]} : vector<16x8x32xf32> to vector<16x8x8xf32>
    %80 = vector.extract_strided_slice %23 {offsets = [0, 0, 8], sizes = [16, 8, 8], strides = [1, 1, 1]} : vector<16x8x32xf32> to vector<16x8x8xf32>
    %81 = arith.mulf %76, %79 : vector<16x8x8xf32>
    %cst_27 = arith.constant dense<0.000000e+00> : vector<16x8xf32>
    %82 = vector.multi_reduction <add>, %81, %cst_27 [2] : vector<16x8x8xf32> to vector<16x8xf32>
    %83 = vector.shape_cast %82 : vector<16x8xf32> to vector<16x8x1xf32>
    %cst_28 = arith.constant dense<0.000000e+00> : vector<16x8x8xf32>
    %84 = tpu.matmul %76, %77, %cst_28 {dimension_numbers = #tpu.dot_dimension_numbers<[2], [2], [1], [1], [0, 0, 0, 1, 1, 1], [0], [0]>} : vector<16x8x8xf32>, vector<16x8x8xf32>, vector<16x8x8xf32> -> vector<16x8x8xf32>
    %85 = vector.shape_cast %26 : vector<8x8xi1> to vector<1x8x8xi1>
    %86 = vector.broadcast %85 : vector<1x8x8xi1> to vector<16x8x8xi1>
    %87 = vector.shape_cast %83 : vector<16x8x1xf32> to vector<16x8x1xf32>
    %88 = vector.broadcast %87 : vector<16x8x1xf32> to vector<16x8x8xf32>
    %89 = arith.select %86, %88, %84 : vector<16x8x8xi1>, vector<16x8x8xf32>
    %90 = arith.addf %89, %31 : vector<16x8x8xf32>
    %cst_29 = arith.constant dense<0xFF800000> : vector<16x8xf32>
    %91 = vector.multi_reduction <maximumf>, %90, %cst_29 [2] : vector<16x8x8xf32> to vector<16x8xf32>
    %92 = vector.shape_cast %91 : vector<16x8xf32> to vector<16x8x1xf32>
    %93 = vector.broadcast %92 : vector<16x8x1xf32> to vector<16x8x8xf32>
    %94 = arith.subf %90, %93 : vector<16x8x8xf32>
    %95 = math.exp %94 : vector<16x8x8xf32>
    %cst_30 = arith.constant dense<0.000000e+00> : vector<16x8xf32>
    %96 = vector.multi_reduction <add>, %95, %cst_30 [2] : vector<16x8x8xf32> to vector<16x8xf32>
    %97 = vector.shape_cast %96 : vector<16x8xf32> to vector<16x8x1xf32>
    %98 = tpu.reciprocal %97 {approx = true} : vector<16x8x1xf32> -> vector<16x8x1xf32>
    %99 = arith.addf %83, %37 : vector<16x8x1xf32>
    %100 = arith.subf %99, %92 : vector<16x8x1xf32>
    %101 = math.exp %100 : vector<16x8x1xf32>
    %102 = arith.mulf %101, %98 : vector<16x8x1xf32>
    %cst_31 = arith.constant dense<0.000000e+00> : vector<16x8x8xf32>
    %103 = tpu.matmul %95, %78, %cst_31 {dimension_numbers = #tpu.dot_dimension_numbers<[2], [1], [1], [2], [0, 0, 0, 1, 1, 2], [0], [0]>} : vector<16x8x8xf32>, vector<16x8x8xf32>, vector<16x8x8xf32> -> vector<16x8x8xf32>
    %104 = vector.broadcast %98 : vector<16x8x1xf32> to vector<16x8x8xf32>
    %105 = arith.mulf %103, %104 : vector<16x8x8xf32>
    %106 = arith.subf %80, %78 : vector<16x8x8xf32>
    %107 = vector.broadcast %102 : vector<16x8x1xf32> to vector<16x8x8xf32>
    %108 = arith.mulf %107, %106 : vector<16x8x8xf32>
    %109 = arith.addf %105, %108 : vector<16x8x8xf32>
    %110 = vector.shape_cast %109 : vector<16x8x8xf32> to vector<128x8xf32>
    %111 = vector.extract_strided_slice %38 {offsets = [8, 0], sizes = [8, 32], strides = [1, 1]} : vector<32x32xf32> to vector<8x32xf32>
    %cst_32 = arith.constant dense<0.000000e+00> : vector<128x32xf32>
    %112 = tpu.matmul %110, %111, %cst_32 {dimension_numbers = #tpu.dot_dimension_numbers<[1], [0], [0], [1], [0, 0, 1, 1], [], []>} : vector<128x8xf32>, vector<8x32xf32>, vector<128x32xf32> -> vector<128x32xf32>
    %113 = arith.addf %75, %112 : vector<128x32xf32>
    %114 = vector.extract_strided_slice %19 {offsets = [0, 0, 16], sizes = [16, 8, 8], strides = [1, 1, 1]} : vector<16x8x32xf32> to vector<16x8x8xf32>
    %115 = vector.extract_strided_slice %13 {offsets = [0, 0, 16], sizes = [16, 8, 8], strides = [1, 1, 1]} : vector<16x8x32xf32> to vector<16x8x8xf32>
    %116 = vector.extract_strided_slice %15 {offsets = [0, 0, 16], sizes = [16, 8, 8], strides = [1, 1, 1]} : vector<16x8x32xf32> to vector<16x8x8xf32>
    %117 = vector.extract_strided_slice %21 {offsets = [0, 0, 16], sizes = [16, 8, 8], strides = [1, 1, 1]} : vector<16x8x32xf32> to vector<16x8x8xf32>
    %118 = vector.extract_strided_slice %23 {offsets = [0, 0, 16], sizes = [16, 8, 8], strides = [1, 1, 1]} : vector<16x8x32xf32> to vector<16x8x8xf32>
    %119 = arith.mulf %114, %117 : vector<16x8x8xf32>
    %cst_33 = arith.constant dense<0.000000e+00> : vector<16x8xf32>
    %120 = vector.multi_reduction <add>, %119, %cst_33 [2] : vector<16x8x8xf32> to vector<16x8xf32>
    %121 = vector.shape_cast %120 : vector<16x8xf32> to vector<16x8x1xf32>
    %cst_34 = arith.constant dense<0.000000e+00> : vector<16x8x8xf32>
    %122 = tpu.matmul %114, %115, %cst_34 {dimension_numbers = #tpu.dot_dimension_numbers<[2], [2], [1], [1], [0, 0, 0, 1, 1, 1], [0], [0]>} : vector<16x8x8xf32>, vector<16x8x8xf32>, vector<16x8x8xf32> -> vector<16x8x8xf32>
    %123 = vector.shape_cast %26 : vector<8x8xi1> to vector<1x8x8xi1>
    %124 = vector.broadcast %123 : vector<1x8x8xi1> to vector<16x8x8xi1>
    %125 = vector.shape_cast %121 : vector<16x8x1xf32> to vector<16x8x1xf32>
    %126 = vector.broadcast %125 : vector<16x8x1xf32> to vector<16x8x8xf32>
    %127 = arith.select %124, %126, %122 : vector<16x8x8xi1>, vector<16x8x8xf32>
    %128 = arith.addf %127, %31 : vector<16x8x8xf32>
    %cst_35 = arith.constant dense<0xFF800000> : vector<16x8xf32>
    %129 = vector.multi_reduction <maximumf>, %128, %cst_35 [2] : vector<16x8x8xf32> to vector<16x8xf32>
    %130 = vector.shape_cast %129 : vector<16x8xf32> to vector<16x8x1xf32>
    %131 = vector.broadcast %130 : vector<16x8x1xf32> to vector<16x8x8xf32>
    %132 = arith.subf %128, %131 : vector<16x8x8xf32>
    %133 = math.exp %132 : vector<16x8x8xf32>
    %cst_36 = arith.constant dense<0.000000e+00> : vector<16x8xf32>
    %134 = vector.multi_reduction <add>, %133, %cst_36 [2] : vector<16x8x8xf32> to vector<16x8xf32>
    %135 = vector.shape_cast %134 : vector<16x8xf32> to vector<16x8x1xf32>
    %136 = tpu.reciprocal %135 {approx = true} : vector<16x8x1xf32> -> vector<16x8x1xf32>
    %137 = arith.addf %121, %37 : vector<16x8x1xf32>
    %138 = arith.subf %137, %130 : vector<16x8x1xf32>
    %139 = math.exp %138 : vector<16x8x1xf32>
    %140 = arith.mulf %139, %136 : vector<16x8x1xf32>
    %cst_37 = arith.constant dense<0.000000e+00> : vector<16x8x8xf32>
    %141 = tpu.matmul %133, %116, %cst_37 {dimension_numbers = #tpu.dot_dimension_numbers<[2], [1], [1], [2], [0, 0, 0, 1, 1, 2], [0], [0]>} : vector<16x8x8xf32>, vector<16x8x8xf32>, vector<16x8x8xf32> -> vector<16x8x8xf32>
    %142 = vector.broadcast %136 : vector<16x8x1xf32> to vector<16x8x8xf32>
    %143 = arith.mulf %141, %142 : vector<16x8x8xf32>
    %144 = arith.subf %118, %116 : vector<16x8x8xf32>
    %145 = vector.broadcast %140 : vector<16x8x1xf32> to vector<16x8x8xf32>
    %146 = arith.mulf %145, %144 : vector<16x8x8xf32>
    %147 = arith.addf %143, %146 : vector<16x8x8xf32>
    %148 = vector.shape_cast %147 : vector<16x8x8xf32> to vector<128x8xf32>
    %149 = vector.extract_strided_slice %38 {offsets = [16, 0], sizes = [8, 32], strides = [1, 1]} : vector<32x32xf32> to vector<8x32xf32>
    %cst_38 = arith.constant dense<0.000000e+00> : vector<128x32xf32>
    %150 = tpu.matmul %148, %149, %cst_38 {dimension_numbers = #tpu.dot_dimension_numbers<[1], [0], [0], [1], [0, 0, 1, 1], [], []>} : vector<128x8xf32>, vector<8x32xf32>, vector<128x32xf32> -> vector<128x32xf32>
    %151 = arith.addf %113, %150 : vector<128x32xf32>
    %152 = vector.extract_strided_slice %19 {offsets = [0, 0, 24], sizes = [16, 8, 8], strides = [1, 1, 1]} : vector<16x8x32xf32> to vector<16x8x8xf32>
    %153 = vector.extract_strided_slice %13 {offsets = [0, 0, 24], sizes = [16, 8, 8], strides = [1, 1, 1]} : vector<16x8x32xf32> to vector<16x8x8xf32>
    %154 = vector.extract_strided_slice %15 {offsets = [0, 0, 24], sizes = [16, 8, 8], strides = [1, 1, 1]} : vector<16x8x32xf32> to vector<16x8x8xf32>
    %155 = vector.extract_strided_slice %21 {offsets = [0, 0, 24], sizes = [16, 8, 8], strides = [1, 1, 1]} : vector<16x8x32xf32> to vector<16x8x8xf32>
    %156 = vector.extract_strided_slice %23 {offsets = [0, 0, 24], sizes = [16, 8, 8], strides = [1, 1, 1]} : vector<16x8x32xf32> to vector<16x8x8xf32>
    %157 = arith.mulf %152, %155 : vector<16x8x8xf32>
    %cst_39 = arith.constant dense<0.000000e+00> : vector<16x8xf32>
    %158 = vector.multi_reduction <add>, %157, %cst_39 [2] : vector<16x8x8xf32> to vector<16x8xf32>
    %159 = vector.shape_cast %158 : vector<16x8xf32> to vector<16x8x1xf32>
    %cst_40 = arith.constant dense<0.000000e+00> : vector<16x8x8xf32>
    %160 = tpu.matmul %152, %153, %cst_40 {dimension_numbers = #tpu.dot_dimension_numbers<[2], [2], [1], [1], [0, 0, 0, 1, 1, 1], [0], [0]>} : vector<16x8x8xf32>, vector<16x8x8xf32>, vector<16x8x8xf32> -> vector<16x8x8xf32>
    %161 = vector.shape_cast %26 : vector<8x8xi1> to vector<1x8x8xi1>
    %162 = vector.broadcast %161 : vector<1x8x8xi1> to vector<16x8x8xi1>
    %163 = vector.shape_cast %159 : vector<16x8x1xf32> to vector<16x8x1xf32>
    %164 = vector.broadcast %163 : vector<16x8x1xf32> to vector<16x8x8xf32>
    %165 = arith.select %162, %164, %160 : vector<16x8x8xi1>, vector<16x8x8xf32>
    %166 = arith.addf %165, %31 : vector<16x8x8xf32>
    %cst_41 = arith.constant dense<0xFF800000> : vector<16x8xf32>
    %167 = vector.multi_reduction <maximumf>, %166, %cst_41 [2] : vector<16x8x8xf32> to vector<16x8xf32>
    %168 = vector.shape_cast %167 : vector<16x8xf32> to vector<16x8x1xf32>
    %169 = vector.broadcast %168 : vector<16x8x1xf32> to vector<16x8x8xf32>
    %170 = arith.subf %166, %169 : vector<16x8x8xf32>
    %171 = math.exp %170 : vector<16x8x8xf32>
    %cst_42 = arith.constant dense<0.000000e+00> : vector<16x8xf32>
    %172 = vector.multi_reduction <add>, %171, %cst_42 [2] : vector<16x8x8xf32> to vector<16x8xf32>
    %173 = vector.shape_cast %172 : vector<16x8xf32> to vector<16x8x1xf32>
    %174 = tpu.reciprocal %173 {approx = true} : vector<16x8x1xf32> -> vector<16x8x1xf32>
    %175 = arith.addf %159, %37 : vector<16x8x1xf32>
    %176 = arith.subf %175, %168 : vector<16x8x1xf32>
    %177 = math.exp %176 : vector<16x8x1xf32>
    %178 = arith.mulf %177, %174 : vector<16x8x1xf32>
    %cst_43 = arith.constant dense<0.000000e+00> : vector<16x8x8xf32>
    %179 = tpu.matmul %171, %154, %cst_43 {dimension_numbers = #tpu.dot_dimension_numbers<[2], [1], [1], [2], [0, 0, 0, 1, 1, 2], [0], [0]>} : vector<16x8x8xf32>, vector<16x8x8xf32>, vector<16x8x8xf32> -> vector<16x8x8xf32>
    %180 = vector.broadcast %174 : vector<16x8x1xf32> to vector<16x8x8xf32>
    %181 = arith.mulf %179, %180 : vector<16x8x8xf32>
    %182 = arith.subf %156, %154 : vector<16x8x8xf32>
    %183 = vector.broadcast %178 : vector<16x8x1xf32> to vector<16x8x8xf32>
    %184 = arith.mulf %183, %182 : vector<16x8x8xf32>
    %185 = arith.addf %181, %184 : vector<16x8x8xf32>
    %186 = vector.shape_cast %185 : vector<16x8x8xf32> to vector<128x8xf32>
    %187 = vector.extract_strided_slice %38 {offsets = [24, 0], sizes = [8, 32], strides = [1, 1]} : vector<32x32xf32> to vector<8x32xf32>
    %cst_44 = arith.constant dense<0.000000e+00> : vector<128x32xf32>
    %188 = tpu.matmul %186, %187, %cst_44 {dimension_numbers = #tpu.dot_dimension_numbers<[1], [0], [0], [1], [0, 0, 1, 1], [], []>} : vector<128x8xf32>, vector<8x32xf32>, vector<128x32xf32> -> vector<128x32xf32>
    %189 = arith.addf %151, %188 : vector<128x32xf32>
    %c0_45 = arith.constant 0 : index
    %c0_46 = arith.constant 0 : index
    %190 = vector.load %arg10[%c0_45, %c0_46] : memref<8x32xf32, #tpu.memory_space<vmem>>, vector<1x32xf32>
    %191 = vector.broadcast %190 : vector<1x32xf32> to vector<128x32xf32>
    %192 = arith.addf %189, %191 : vector<128x32xf32>
    %193 = arith.addf %0, %192 : vector<128x32xf32>
    %c3 = arith.constant 3 : index
    %c0_47 = arith.constant 0 : index
    %194 = vector.load %arg10[%c3, %c0_47] : memref<8x32xf32, #tpu.memory_space<vmem>>, vector<1x32xf32>
    %c4 = arith.constant 4 : index
    %c0_48 = arith.constant 0 : index
    %195 = vector.load %arg10[%c4, %c0_48] : memref<8x32xf32, #tpu.memory_space<vmem>>, vector<1x32xf32>
    %cst_49 = arith.constant dense<0.000000e+00> : vector<128xf32>
    %196 = vector.multi_reduction <add>, %193, %cst_49 [1] : vector<128x32xf32> to vector<128xf32>
    %197 = vector.shape_cast %196 : vector<128xf32> to vector<128x1xf32>
    %cst_50 = arith.constant 3.200000e+01 : f32
    %198 = vector.broadcast %cst_50 : f32 to vector<128x1xf32>
    %199 = arith.divf %197, %198 : vector<128x1xf32>
    %200 = vector.broadcast %199 : vector<128x1xf32> to vector<128x32xf32>
    %201 = arith.subf %193, %200 : vector<128x32xf32>
    %202 = arith.mulf %201, %201 : vector<128x32xf32>
    %cst_51 = arith.constant dense<0.000000e+00> : vector<128xf32>
    %203 = vector.multi_reduction <add>, %202, %cst_51 [1] : vector<128x32xf32> to vector<128xf32>
    %204 = vector.shape_cast %203 : vector<128xf32> to vector<128x1xf32>
    %cst_52 = arith.constant 3.200000e+01 : f32
    %205 = vector.broadcast %cst_52 : f32 to vector<128x1xf32>
    %206 = arith.divf %204, %205 : vector<128x1xf32>
    %cst_53 = arith.constant 9.99999974E-6 : f32
    %207 = vector.broadcast %cst_53 : f32 to vector<128x1xf32>
    %208 = arith.addf %206, %207 : vector<128x1xf32>
    %209 = math.rsqrt %208 : vector<128x1xf32>
    %210 = vector.broadcast %209 : vector<128x1xf32> to vector<128x32xf32>
    %211 = arith.mulf %201, %210 : vector<128x32xf32>
    %212 = vector.broadcast %194 : vector<1x32xf32> to vector<128x32xf32>
    %213 = arith.mulf %211, %212 : vector<128x32xf32>
    %214 = vector.broadcast %195 : vector<1x32xf32> to vector<128x32xf32>
    %215 = arith.addf %213, %214 : vector<128x32xf32>
    %c0_54 = arith.constant 0 : index
    %c0_55 = arith.constant 0 : index
    %216 = vector.load %arg8[%c0_54, %c0_55] : memref<32x32xf32, #tpu.memory_space<vmem>>, vector<32x32xf32>
    %cst_56 = arith.constant dense<0.000000e+00> : vector<128x32xf32>
    %217 = tpu.matmul %215, %216, %cst_56 {dimension_numbers = #tpu.dot_dimension_numbers<[1], [0], [0], [1], [0, 0, 1, 1], [], []>} : vector<128x32xf32>, vector<32x32xf32>, vector<128x32xf32> -> vector<128x32xf32>
    %c1 = arith.constant 1 : index
    %c0_57 = arith.constant 0 : index
    %218 = vector.load %arg10[%c1, %c0_57] : memref<8x32xf32, #tpu.memory_space<vmem>>, vector<1x32xf32>
    %219 = vector.broadcast %218 : vector<1x32xf32> to vector<128x32xf32>
    %220 = arith.addf %217, %219 : vector<128x32xf32>
    %cst_58 = arith.constant 5.000000e-01 : f32
    %221 = vector.broadcast %cst_58 : f32 to vector<128x32xf32>
    %222 = arith.mulf %221, %220 : vector<128x32xf32>
    %cst_59 = arith.constant 4.471500e-02 : f32
    %223 = vector.broadcast %cst_59 : f32 to vector<128x32xf32>
    %224 = arith.mulf %223, %220 : vector<128x32xf32>
    %225 = arith.mulf %224, %220 : vector<128x32xf32>
    %226 = arith.mulf %225, %220 : vector<128x32xf32>
    %227 = arith.addf %220, %226 : vector<128x32xf32>
    %cst_60 = arith.constant 0.797884583 : f32
    %228 = vector.broadcast %cst_60 : f32 to vector<128x32xf32>
    %229 = arith.mulf %228, %227 : vector<128x32xf32>
    %230 = math.tanh %229 : vector<128x32xf32>
    %cst_61 = arith.constant 1.000000e+00 : f32
    %231 = vector.broadcast %cst_61 : f32 to vector<128x32xf32>
    %232 = arith.addf %231, %230 : vector<128x32xf32>
    %233 = arith.mulf %222, %232 : vector<128x32xf32>
    %c0_62 = arith.constant 0 : index
    %c0_63 = arith.constant 0 : index
    %234 = vector.load %arg9[%c0_62, %c0_63] : memref<32x32xf32, #tpu.memory_space<vmem>>, vector<32x32xf32>
    %cst_64 = arith.constant dense<0.000000e+00> : vector<128x32xf32>
    %235 = tpu.matmul %233, %234, %cst_64 {dimension_numbers = #tpu.dot_dimension_numbers<[1], [0], [0], [1], [0, 0, 1, 1], [], []>} : vector<128x32xf32>, vector<32x32xf32>, vector<128x32xf32> -> vector<128x32xf32>
    %c2 = arith.constant 2 : index
    %c0_65 = arith.constant 0 : index
    %236 = vector.load %arg10[%c2, %c0_65] : memref<8x32xf32, #tpu.memory_space<vmem>>, vector<1x32xf32>
    %237 = vector.broadcast %236 : vector<1x32xf32> to vector<128x32xf32>
    %238 = arith.addf %235, %237 : vector<128x32xf32>
    %239 = arith.addf %215, %238 : vector<128x32xf32>
    %c5 = arith.constant 5 : index
    %c0_66 = arith.constant 0 : index
    %240 = vector.load %arg10[%c5, %c0_66] : memref<8x32xf32, #tpu.memory_space<vmem>>, vector<1x32xf32>
    %c6 = arith.constant 6 : index
    %c0_67 = arith.constant 0 : index
    %241 = vector.load %arg10[%c6, %c0_67] : memref<8x32xf32, #tpu.memory_space<vmem>>, vector<1x32xf32>
    %cst_68 = arith.constant dense<0.000000e+00> : vector<128xf32>
    %242 = vector.multi_reduction <add>, %239, %cst_68 [1] : vector<128x32xf32> to vector<128xf32>
    %243 = vector.shape_cast %242 : vector<128xf32> to vector<128x1xf32>
    %cst_69 = arith.constant 3.200000e+01 : f32
    %244 = vector.broadcast %cst_69 : f32 to vector<128x1xf32>
    %245 = arith.divf %243, %244 : vector<128x1xf32>
    %246 = vector.broadcast %245 : vector<128x1xf32> to vector<128x32xf32>
    %247 = arith.subf %239, %246 : vector<128x32xf32>
    %248 = arith.mulf %247, %247 : vector<128x32xf32>
    %cst_70 = arith.constant dense<0.000000e+00> : vector<128xf32>
    %249 = vector.multi_reduction <add>, %248, %cst_70 [1] : vector<128x32xf32> to vector<128xf32>
    %250 = vector.shape_cast %249 : vector<128xf32> to vector<128x1xf32>
    %cst_71 = arith.constant 3.200000e+01 : f32
    %251 = vector.broadcast %cst_71 : f32 to vector<128x1xf32>
    %252 = arith.divf %250, %251 : vector<128x1xf32>
    %cst_72 = arith.constant 9.99999974E-6 : f32
    %253 = vector.broadcast %cst_72 : f32 to vector<128x1xf32>
    %254 = arith.addf %252, %253 : vector<128x1xf32>
    %255 = math.rsqrt %254 : vector<128x1xf32>
    %256 = vector.broadcast %255 : vector<128x1xf32> to vector<128x32xf32>
    %257 = arith.mulf %247, %256 : vector<128x32xf32>
    %258 = vector.broadcast %240 : vector<1x32xf32> to vector<128x32xf32>
    %259 = arith.mulf %257, %258 : vector<128x32xf32>
    %260 = vector.broadcast %241 : vector<1x32xf32> to vector<128x32xf32>
    %261 = arith.addf %259, %260 : vector<128x32xf32>
    %c0_73 = arith.constant 0 : index
    %c0_74 = arith.constant 0 : index
    %262 = vector.load %arg11[%c0_73, %c0_74] : memref<128x32xf32, #tpu.memory_space<vmem>>, vector<128x32xf32>
    tpu.vector_store %arg11[%c0_73, %c0_74], %261 {strides = array<i32>} : memref<128x32xf32, #tpu.memory_space<vmem>>, vector<128x32xf32>,
    return
  }
  func.func @transform_0(%arg0: i32) -> (i32, i32) {
    %c0_i32 = arith.constant 0 : i32
    %c0_i32_0 = arith.constant 0 : i32
    return %arg0, %c0_i32 : i32, i32
  }
  func.func @transform_1(%arg0: i32) -> (i32, i32) {
    %c0_i32 = arith.constant 0 : i32
    %c0_i32_0 = arith.constant 0 : i32
    return %arg0, %c0_i32 : i32, i32
  }
  func.func @transform_2(%arg0: i32) -> (i32, i32, i32) {
    %c0_i32 = arith.constant 0 : i32
    %c0_i32_0 = arith.constant 0 : i32
    %c0_i32_1 = arith.constant 0 : i32
    return %arg0, %c0_i32, %c0_i32_0 : i32, i32, i32
  }
  func.func @transform_3(%arg0: i32) -> (i32, i32) {
    %c0_i32 = arith.constant 0 : i32
    %c0_i32_0 = arith.constant 0 : i32
    %c0_i32_1 = arith.constant 0 : i32
    return %c0_i32, %c0_i32_0 : i32, i32
  }
  func.func @transform_4(%arg0: i32) -> (i32, i32) {
    %c0_i32 = arith.constant 0 : i32
    %c0_i32_0 = arith.constant 0 : i32
    %c0_i32_1 = arith.constant 0 : i32
    return %c0_i32, %c0_i32_0 : i32, i32
  }
  func.func @transform_5(%arg0: i32) -> (i32, i32) {
    %c0_i32 = arith.constant 0 : i32
    %c0_i32_0 = arith.constant 0 : i32
    %c0_i32_1 = arith.constant 0 : i32
    return %c0_i32, %c0_i32_0 : i32, i32
  }
  func.func @transform_6(%arg0: i32) -> (i32, i32) {
    %c0_i32 = arith.constant 0 : i32
    %c0_i32_0 = arith.constant 0 : i32
    %c0_i32_1 = arith.constant 0 : i32
    return %c0_i32, %c0_i32_0 : i32, i32
  }
  func.func @transform_7(%arg0: i32) -> (i32, i32) {
    %c0_i32 = arith.constant 0 : i32
    %c0_i32_0 = arith.constant 0 : i32
    %c0_i32_1 = arith.constant 0 : i32
    return %c0_i32, %c0_i32_0 : i32, i32
  }
  func.func @transform_8(%arg0: i32) -> (i32, i32) {
    %c0_i32 = arith.constant 0 : i32
    %c0_i32_0 = arith.constant 0 : i32
    %c0_i32_1 = arith.constant 0 : i32
    return %c0_i32, %c0_i32_0 : i32, i32
  }
  func.func @transform_9(%arg0: i32) -> (i32, i32) {
    %c0_i32 = arith.constant 0 : i32
    %c0_i32_0 = arith.constant 0 : i32
    %c0_i32_1 = arith.constant 0 : i32
    return %c0_i32, %c0_i32_0 : i32, i32
  }
  func.func @transform_10(%arg0: i32) -> (i32, i32) {
    %c0_i32 = arith.constant 0 : i32
    %c0_i32_0 = arith.constant 0 : i32
    return %arg0, %c0_i32 : i32, i32
  }
}

</mosaic_0001>

<llo_original>
// kernel: tpu_custom_call.1
$region0: #{tpu_custom_call.1}
  #allocation0 [shape = 'u32[]', space=smem, size = 0x4, offset = 0x4, fixed_abs, tag = 'smem constant byte address 0x4 - core index']
  #allocation1 [shape = 'u32[72,128]{1,0:T(1,128)}', space=vmem, size = 0x9000, scoped, tag = 'internal scratch']
  %s0 = inlined_call_operand.vmem [shape: f32[256,32], index: 0, kind: input, shape index: {}]
  %s1 = inlined_call_operand.vmem [shape: f32[256,32], index: 1, kind: input, shape index: {}]
  %s2 = inlined_call_operand.vmem [shape: f32[32,8,8], index: 2, kind: input, shape index: {}]
  %s3 = inlined_call_operand.vmem [shape: f32[32,160], index: 3, kind: input, shape index: {}]
  %s4 = inlined_call_operand.vmem [shape: f32[1,160], index: 4, kind: input, shape index: {}]
  %s5 = inlined_call_operand.vmem [shape: f32[32,64], index: 5, kind: input, shape index: {}]
  %s6 = inlined_call_operand.vmem [shape: f32[32,32], index: 6, kind: input, shape index: {}]
  %s7 = inlined_call_operand.vmem [shape: f32[32,32], index: 7, kind: input, shape index: {}]
  %s8 = inlined_call_operand.vmem [shape: f32[32,32], index: 8, kind: input, shape index: {}]
  %s9 = inlined_call_operand.vmem [shape: f32[8,32], index: 9, kind: input, shape index: {}]
  %s10 = inlined_call_operand.vmem [shape: f32[256,32], index: 10, kind: output, shape index: {}]
  %s11 = sld [smem:[#allocation0]]
  $region73: #{tpu_custom_call.1} parent=0
    _
  %s13 = ssub.s32 1, %s11
  %s14 = scalar_select 0, %s13, %s11
  loop: start=0, step=1, limit=4
  $region2: #{tpu_custom_call.1} parent=0 // loop_pre_header
    _
  $region3: #{tpu_custom_call.1} parent=0 // loop_header
    %s16 = sphi 0, %s20
    %p17 = scmp.ge.s32.totalorder %s16, 4
    %s26 = sphi 0, %s28
    %s29 = sphi 0, %s26
    %s30 = sphi 0, %s29
    %s46 = sphi 0, %s30
    %s52 = sphi 0, %s54
    %s55 = sphi 0, %s52
    %s56 = sphi 0, %s55
    %s72 = sphi 0, %s56
    %s78 = sphi 0, %s80
    %s81 = sphi 0, %s78
    %s82 = sphi 0, %s81
    %s98 = sphi 0, %s82
    %s102 = sphi 0, %s102
    %s104 = sphi 0, %s102
    %s105 = sphi 0, %s104
    %s119 = sphi 0, %s105
    %s123 = sphi 0, %s123
    %s125 = sphi 0, %s123
    %s126 = sphi 0, %s125
    %s140 = sphi 0, %s126
    %s144 = sphi 0, %s144
    %s146 = sphi 0, %s144
    %s147 = sphi 0, %s146
    %s161 = sphi 0, %s147
    %s165 = sphi 0, %s165
    %s167 = sphi 0, %s165
    %s168 = sphi 0, %s167
    %s182 = sphi 0, %s168
    %s186 = sphi 0, %s186
    %s188 = sphi 0, %s186
    %s189 = sphi 0, %s188
    %s203 = sphi 0, %s189
    %s207 = sphi 0, %s207
    %s209 = sphi 0, %s207
    %s210 = sphi 0, %s209
    %s224 = sphi 0, %s210
    %s228 = sphi 0, %s228
    %s230 = sphi 0, %s228
    %s231 = sphi 0, %s230
    %s245 = sphi 0, %s231
    %s251 = sphi 0, %s253
    %s254 = sphi 0, %s251
    %s255 = sphi 0, %s254
    %s271 = sphi 0, %s255
  $region4: #{tpu_custom_call.1} parent=0 // loop_header_branch
    %19 = sbr.rel (%p17) target = $region8
  $region5: #{tpu_custom_call.1} parent=0 // loop_body
    %s21 = ssub.s32 %s16, 1
    %s22 = ssub.s32 %s16, 2
    %s23 = sadd.s32 %s16, 1
    %s24 = ssub.s32 %s16, %s23
    %p25 = scmp.eq.s32.totalorder %s24, 0
    %s27 = sadd.s32 %s26, 1
    %s28 = scalar_select %p25, %s26, %s27
    %p31 = pneg %p25
    %p32 = scmp.eq.s32.totalorder %s16, 1
    %p33 = por %p31, %p32
    %p34 = scmp.ne.s32.totalorder %s26, %s29
    %p35 = scmp.eq.s32.totalorder %s16, 0
    %p36 = por %p34, %p35
    %p37 = scmp.ne.s32.totalorder %s26, %s29
    %p38 = scmp.eq.s32.totalorder %s21, 1
    %p39 = por %p37, %p38
    %p40 = scmp.ne.s32.totalorder %s29, %s30
    %p41 = scmp.eq.s32.totalorder %s21, 0
    %p42 = por %p40, %p41
    %p43 = scmp.ne.s32.totalorder %s29, %s30
    %p44 = scmp.eq.s32.totalorder %s22, 1
    %p45 = por %p43, %p44
    %p47 = scmp.ne.s32.totalorder %s30, %s46
    %p48 = scmp.eq.s32.totalorder %s22, 0
    %p49 = por %p47, %p48
    %s50 = ssub.s32 %s16, %s23
    %p51 = scmp.eq.s32.totalorder %s50, 0
    %s53 = sadd.s32 %s52, 1
    %s54 = scalar_select %p51, %s52, %s53
    %p57 = pneg %p51
    %p58 = scmp.eq.s32.totalorder %s16, 1
    %p59 = por %p57, %p58
    %p60 = scmp.ne.s32.totalorder %s52, %s55
    %p61 = scmp.eq.s32.totalorder %s16, 0
    %p62 = por %p60, %p61
    %p63 = scmp.ne.s32.totalorder %s52, %s55
    %p64 = scmp.eq.s32.totalorder %s21, 1
    %p65 = por %p63, %p64
    %p66 = scmp.ne.s32.totalorder %s55, %s56
    %p67 = scmp.eq.s32.totalorder %s21, 0
    %p68 = por %p66, %p67
    %p69 = scmp.ne.s32.totalorder %s55, %s56
    %p70 = scmp.eq.s32.totalorder %s22, 1
    %p71 = por %p69, %p70
    %p73 = scmp.ne.s32.totalorder %s56, %s72
    %p74 = scmp.eq.s32.totalorder %s22, 0
    %p75 = por %p73, %p74
    %s76 = ssub.s32 %s16, %s23
    %p77 = scmp.eq.s32.totalorder %s76, 0
    %s79 = sadd.s32 %s78, 1
    %s80 = scalar_select %p77, %s78, %s79
    %p83 = pneg %p77
    %p84 = scmp.eq.s32.totalorder %s16, 1
    %p85 = por %p83, %p84
    %p86 = scmp.ne.s32.totalorder %s78, %s81
    %p87 = scmp.eq.s32.totalorder %s16, 0
    %p88 = por %p86, %p87
    %p89 = scmp.ne.s32.totalorder %s78, %s81
    %p90 = scmp.eq.s32.totalorder %s21, 1
    %p91 = por %p89, %p90
    %p92 = scmp.ne.s32.totalorder %s81, %s82
    %p93 = scmp.eq.s32.totalorder %s21, 0
    %p94 = por %p92, %p93
    %p95 = scmp.ne.s32.totalorder %s81, %s82
    %p96 = scmp.eq.s32.totalorder %s22, 1
    %p97 = por %p95, %p96
    %p99 = scmp.ne.s32.totalorder %s82, %s98
    %p100 = scmp.eq.s32.totalorder %s22, 0
    %p101 = por %p99, %p100
    %s103 = sadd.s32 %s102, 1
    %p106 = scmp.eq.s32.totalorder %s16, 1
    %p107 = scmp.ne.s32.totalorder %s102, %s104
    %p108 = scmp.eq.s32.totalorder %s16, 0
    %p109 = por %p107, %p108
    %p110 = scmp.ne.s32.totalorder %s102, %s104
    %p111 = scmp.eq.s32.totalorder %s21, 1
    %p112 = por %p110, %p111
    %p113 = scmp.ne.s32.totalorder %s104, %s105
    %p114 = scmp.eq.s32.totalorder %s21, 0
    %p115 = por %p113, %p114
    %p116 = scmp.ne.s32.totalorder %s104, %s105
    %p117 = scmp.eq.s32.totalorder %s22, 1
    %p118 = por %p116, %p117
    %p120 = scmp.ne.s32.totalorder %s105, %s119
    %p121 = scmp.eq.s32.totalorder %s22, 0
    %p122 = por %p120, %p121
    %s124 = sadd.s32 %s123, 1
    %p127 = scmp.eq.s32.totalorder %s16, 1
    %p128 = scmp.ne.s32.totalorder %s123, %s125
    %p129 = scmp.eq.s32.totalorder %s16, 0
    %p130 = por %p128, %p129
    %p131 = scmp.ne.s32.totalorder %s123, %s125
    %p132 = scmp.eq.s32.totalorder %s21, 1
    %p133 = por %p131, %p132
    %p134 = scmp.ne.s32.totalorder %s125, %s126
    %p135 = scmp.eq.s32.totalorder %s21, 0
    %p136 = por %p134, %p135
    %p137 = scmp.ne.s32.totalorder %s125, %s126
    %p138 = scmp.eq.s32.totalorder %s22, 1
    %p139 = por %p137, %p138
    %p141 = scmp.ne.s32.totalorder %s126, %s140
    %p142 = scmp.eq.s32.totalorder %s22, 0
    %p143 = por %p141, %p142
    %s145 = sadd.s32 %s144, 1
    %p148 = scmp.eq.s32.totalorder %s16, 1
    %p149 = scmp.ne.s32.totalorder %s144, %s146
    %p150 = scmp.eq.s32.totalorder %s16, 0
    %p151 = por %p149, %p150
    %p152 = scmp.ne.s32.totalorder %s144, %s146
    %p153 = scmp.eq.s32.totalorder %s21, 1
    %p154 = por %p152, %p153
    %p155 = scmp.ne.s32.totalorder %s146, %s147
    %p156 = scmp.eq.s32.totalorder %s21, 0
    %p157 = por %p155, %p156
    %p158 = scmp.ne.s32.totalorder %s146, %s147
    %p159 = scmp.eq.s32.totalorder %s22, 1
    %p160 = por %p158, %p159
    %p162 = scmp.ne.s32.totalorder %s147, %s161
    %p163 = scmp.eq.s32.totalorder %s22, 0
    %p164 = por %p162, %p163
    %s166 = sadd.s32 %s165, 1
    %p169 = scmp.eq.s32.totalorder %s16, 1
    %p170 = scmp.ne.s32.totalorder %s165, %s167
    %p171 = scmp.eq.s32.totalorder %s16, 0
    %p172 = por %p170, %p171
    %p173 = scmp.ne.s32.totalorder %s165, %s167
    %p174 = scmp.eq.s32.totalorder %s21, 1
    %p175 = por %p173, %p174
    %p176 = scmp.ne.s32.totalorder %s167, %s168
    %p177 = scmp.eq.s32.totalorder %s21, 0
    %p178 = por %p176, %p177
    %p179 = scmp.ne.s32.totalorder %s167, %s168
    %p180 = scmp.eq.s32.totalorder %s22, 1
    %p181 = por %p179, %p180
    %p183 = scmp.ne.s32.totalorder %s168, %s182
    %p184 = scmp.eq.s32.totalorder %s22, 0
    %p185 = por %p183, %p184
    %s187 = sadd.s32 %s186, 1
    %p190 = scmp.eq.s32.totalorder %s16, 1
    %p191 = scmp.ne.s32.totalorder %s186, %s188
    %p192 = scmp.eq.s32.totalorder %s16, 0
    %p193 = por %p191, %p192
    %p194 = scmp.ne.s32.totalorder %s186, %s188
    %p195 = scmp.eq.s32.totalorder %s21, 1
    %p196 = por %p194, %p195
    %p197 = scmp.ne.s32.totalorder %s188, %s189
    %p198 = scmp.eq.s32.totalorder %s21, 0
    %p199 = por %p197, %p198
    %p200 = scmp.ne.s32.totalorder %s188, %s189
    %p201 = scmp.eq.s32.totalorder %s22, 1
    %p202 = por %p200, %p201
    %p204 = scmp.ne.s32.totalorder %s189, %s203
    %p205 = scmp.eq.s32.totalorder %s22, 0
    %p206 = por %p204, %p205
    %s208 = sadd.s32 %s207, 1
    %p211 = scmp.eq.s32.totalorder %s16, 1
    %p212 = scmp.ne.s32.totalorder %s207, %s209
    %p213 = scmp.eq.s32.totalorder %s16, 0
    %p214 = por %p212, %p213
    %p215 = scmp.ne.s32.totalorder %s207, %s209
    %p216 = scmp.eq.s32.totalorder %s21, 1
    %p217 = por %p215, %p216
    %p218 = scmp.ne.s32.totalorder %s209, %s210
    %p219 = scmp.eq.s32.totalorder %s21, 0
    %p220 = por %p218, %p219
    %p221 = scmp.ne.s32.totalorder %s209, %s210
    %p222 = scmp.eq.s32.totalorder %s22, 1
    %p223 = por %p221, %p222
    %p225 = scmp.ne.s32.totalorder %s210, %s224
    %p226 = scmp.eq.s32.totalorder %s22, 0
    %p227 = por %p225, %p226
    %s229 = sadd.s32 %s228, 1
    %p232 = scmp.eq.s32.totalorder %s16, 1
    %p233 = scmp.ne.s32.totalorder %s228, %s230
    %p234 = scmp.eq.s32.totalorder %s16, 0
    %p235 = por %p233, %p234
    %p236 = scmp.ne.s32.totalorder %s228, %s230
    %p237 = scmp.eq.s32.totalorder %s21, 1
    %p238 = por %p236, %p237
    %p239 = scmp.ne.s32.totalorder %s230, %s231
    %p240 = scmp.eq.s32.totalorder %s21, 0
    %p241 = por %p239, %p240
    %p242 = scmp.ne.s32.totalorder %s230, %s231
    %p243 = scmp.eq.s32.totalorder %s22, 1
    %p244 = por %p242, %p243
    %p246 = scmp.ne.s32.totalorder %s231, %s245
    %p247 = scmp.eq.s32.totalorder %s22, 0
    %p248 = por %p246, %p247
    %s249 = ssub.s32 %s16, %s23
    %p250 = scmp.eq.s32.totalorder %s249, 0
    %s252 = sadd.s32 %s251, 1
    %s253 = scalar_select %p250, %s251, %s252
    %p256 = pneg %p250
    %p257 = scmp.eq.s32.totalorder %s16, 1
    %p258 = por %p256, %p257
    %p259 = scmp.ne.s32.totalorder %s251, %s254
    %p260 = scmp.eq.s32.totalorder %s16, 0
    %p261 = por %p259, %p260
    %p262 = scmp.ne.s32.totalorder %s251, %s254
    %p263 = scmp.eq.s32.totalorder %s21, 1
    %p264 = por %p262, %p263
    %p265 = scmp.ne.s32.totalorder %s254, %s255
    %p266 = scmp.eq.s32.totalorder %s21, 0
    %p267 = por %p265, %p266
    %p268 = scmp.ne.s32.totalorder %s254, %s255
    %p269 = scmp.eq.s32.totalorder %s22, 1
    %p270 = por %p268, %p269
    %p272 = scmp.ne.s32.totalorder %s255, %s271
    %p273 = scmp.eq.s32.totalorder %s22, 0
    %p274 = por %p272, %p273
    %p275 = scmp.le.s32.totalorder 1, %s16
    %p276 = scmp.lt.s32.totalorder %s16, 3
    %p277 = pnand %p275, %p276
    %p278 = pneg %p277
    // Predicated region
    $region9: #{tpu_custom_call.1} parent=5 // pred_check
      _
    $region10: #{tpu_custom_call.1} parent=5 // pred_check_branch
      %280 = sbr.rel (%p277) target = $region12
    $region11: #{tpu_custom_call.1} parent=5 // pred_region
      %s281 = ssub.s32 %s16, 1
      // Predicated region
      $region13: #{tpu_custom_call.1} parent=11 // pred_check
        %p282 = pneg %p115
      $region14: #{tpu_custom_call.1} parent=11 // pred_check_branch
        %284 = sbr.rel (%p282) target = $region16
      $region15: #{tpu_custom_call.1} parent=11 // pred_region
        _
      $region16: #{tpu_custom_call.1} parent=11 // pred_fallthru
        _
      // Predicated region
      $region17: #{tpu_custom_call.1} parent=11 // pred_check
        %p285 = pneg %p136
      $region18: #{tpu_custom_call.1} parent=11 // pred_check_branch
        %287 = sbr.rel (%p285) target = $region20
      $region19: #{tpu_custom_call.1} parent=11 // pred_region
        _
      $region20: #{tpu_custom_call.1} parent=11 // pred_fallthru
        _
      // Predicated region
      $region21: #{tpu_custom_call.1} parent=11 // pred_check
        %p288 = pneg %p157
      $region22: #{tpu_custom_call.1} parent=11 // pred_check_branch
        %290 = sbr.rel (%p288) target = $region24
      $region23: #{tpu_custom_call.1} parent=11 // pred_region
        _
      $region24: #{tpu_custom_call.1} parent=11 // pred_fallthru
        _
      // Predicated region
      $region25: #{tpu_custom_call.1} parent=11 // pred_check
        %p291 = pneg %p178
      $region26: #{tpu_custom_call.1} parent=11 // pred_check_branch
        %293 = sbr.rel (%p291) target = $region28
      $region27: #{tpu_custom_call.1} parent=11 // pred_region
        _
      $region28: #{tpu_custom_call.1} parent=11 // pred_fallthru
        _
      // Predicated region
      $region29: #{tpu_custom_call.1} parent=11 // pred_check
        %p294 = pneg %p199
      $region30: #{tpu_custom_call.1} parent=11 // pred_check_branch
        %296 = sbr.rel (%p294) target = $region32
      $region31: #{tpu_custom_call.1} parent=11 // pred_region
        _
      $region32: #{tpu_custom_call.1} parent=11 // pred_fallthru
        _
      // Predicated region
      $region33: #{tpu_custom_call.1} parent=11 // pred_check
        %p297 = pneg %p220
      $region34: #{tpu_custom_call.1} parent=11 // pred_check_branch
        %299 = sbr.rel (%p297) target = $region36
      $region35: #{tpu_custom_call.1} parent=11 // pred_region
        _
      $region36: #{tpu_custom_call.1} parent=11 // pred_fallthru
        _
      // Predicated region
      $region37: #{tpu_custom_call.1} parent=11 // pred_check
        %p300 = pneg %p241
      $region38: #{tpu_custom_call.1} parent=11 // pred_check_branch
        %302 = sbr.rel (%p300) target = $region40
      $region39: #{tpu_custom_call.1} parent=11 // pred_region
        _
      $region40: #{tpu_custom_call.1} parent=11 // pred_fallthru
        _
    $region12: #{tpu_custom_call.1} parent=5 // pred_fallthru
      _
    %p303 = scmp.lt.s32.totalorder %s16, 2
    // Predicated region
    $region41: #{tpu_custom_call.1} parent=5 // pred_check
      %p304 = pneg %p303
    $region42: #{tpu_custom_call.1} parent=5 // pred_check_branch
      %306 = sbr.rel (%p304) target = $region44
    $region43: #{tpu_custom_call.1} parent=5 // pred_region
      // Predicated region
      $region45: #{tpu_custom_call.1} parent=43 // pred_check
        %p307 = pneg %p36
      $region46: #{tpu_custom_call.1} parent=43 // pred_check_branch
        %309 = sbr.rel (%p307) target = $region48
      $region47: #{tpu_custom_call.1} parent=43 // pred_region
        %s310 = smul.u32 16, %s16
        %p311 = scmp.lt.s32.totalorder %s310, 31
        %s312 = scalar_select %p311, %s310, 31
        %s313 = smul.addr %s312, 8
        %s314 = scalar_lea.vmem %s0, %s313
        %s315 = smul.u32 16, %s16
      $region48: #{tpu_custom_call.1} parent=43 // pred_fallthru
        _
      // Predicated region
      $region49: #{tpu_custom_call.1} parent=43 // pred_check
        %p316 = pneg %p62
      $region50: #{tpu_custom_call.1} parent=43 // pred_check_branch
        %318 = sbr.rel (%p316) target = $region52
      $region51: #{tpu_custom_call.1} parent=43 // pred_region
        %s319 = smul.u32 16, %s16
        %p320 = scmp.lt.s32.totalorder %s319, 31
        %s321 = scalar_select %p320, %s319, 31
        %s322 = smul.addr %s321, 8
        %s323 = scalar_lea.vmem %s1, %s322
        %s324 = smul.u32 16, %s16
      $region52: #{tpu_custom_call.1} parent=43 // pred_fallthru
        _
      // Predicated region
      $region53: #{tpu_custom_call.1} parent=43 // pred_check
        %p325 = pneg %p88
      $region54: #{tpu_custom_call.1} parent=43 // pred_check_branch
        %327 = sbr.rel (%p325) target = $region56
      $region55: #{tpu_custom_call.1} parent=43 // pred_region
        %s328 = smul.u32 16, %s16
        %p329 = scmp.lt.s32.totalorder %s328, 31
        %s330 = scalar_select %p329, %s328, 31
        %s331 = smul.addr %s330, 8
        %s332 = scalar_lea.vmem %s2, %s331
        %s333 = smul.u32 16, %s16
      $region56: #{tpu_custom_call.1} parent=43 // pred_fallthru
        _
    $region44: #{tpu_custom_call.1} parent=5 // pred_fallthru
      _
    %p334 = scmp.le.s32.totalorder 1, %s16
    %p335 = scmp.lt.s32.totalorder %s16, 3
    %p336 = pnand %p334, %p335
    %p337 = pneg %p336
    // Predicated region
    $region57: #{tpu_custom_call.1} parent=5 // pred_check
      _
    $region58: #{tpu_custom_call.1} parent=5 // pred_check_branch
      %339 = sbr.rel (%p336) target = $region60
    $region59: #{tpu_custom_call.1} parent=5 // pred_region
      %s340 = ssub.s32 %s16, 1
      %s341 = smul.u32 16, %s21
      %p342 = scmp.lt.s32.totalorder %s341, 31
      %s343 = scalar_select %p342, %s341, 31
      %s344 = smul.addr %s343, 8
      %s345 = scalar_lea.vmem %s0, %s344
      %p346 = pneg %p42
      %p347 = pneg %p39
      %s348 = smul.u32 16, %s21
      %p349 = scmp.lt.s32.totalorder %s348, 31
      %s350 = scalar_select %p349, %s348, 31
      %s351 = smul.addr %s350, 8
      %s352 = scalar_lea.vmem %s1, %s351
      %p353 = pneg %p68
      %p354 = pneg %p65
      %s355 = smul.u32 16, %s21
      %p356 = scmp.lt.s32.totalorder %s355, 31
      %s357 = scalar_select %p356, %s355, 31
      %s358 = smul.addr %s357, 8
      %s359 = scalar_lea.vmem %s2, %s358
      %p360 = pneg %p94
      %p361 = pneg %p91
      %p362 = pneg %p115
      %p363 = pneg %p112
      %p364 = pneg %p136
      %p365 = pneg %p133
      %p366 = pneg %p157
      %p367 = pneg %p154
      %p368 = pneg %p178
      %p369 = pneg %p175
      %p370 = pneg %p199
      %p371 = pneg %p196
      %p372 = pneg %p220
      %p373 = pneg %p217
      %p374 = pneg %p241
      %p375 = pneg %p238
      %p376 = pneg %p267
      %p377 = pneg %p264
      %s378 = smul.u32 16, %s21
      %p379 = scmp.lt.s32.totalorder %s378, 31
      %s380 = scalar_select %p379, %s378, 31
      %s381 = smul.addr %s380, 8
      %s382 = scalar_lea.vmem %s10, %s381
      %s383 = smul.u32 16, %s21
      %p384 = scmp.lt.s32.totalorder %s383, 31
      %s385 = scalar_select %p384, %s383, 31
      %s386 = smul.addr %s385, 8
      %s387 = scalar_lea.vmem %s0, %s386
      %s388 = smul.u32 16, %s21
      %s389 = smul.u32 16, %s21
      %p390 = scmp.lt.s32.totalorder %s389, 31
      %s391 = scalar_select %p390, %s389, 31
      %s392 = smul.addr %s391, 8
      %s393 = scalar_lea.vmem %s1, %s392
      %s394 = smul.u32 16, %s21
      %s395 = smul.u32 16, %s21
      %p396 = scmp.lt.s32.totalorder %s395, 31
      %s397 = scalar_select %p396, %s395, 31
      %s398 = smul.addr %s397, 8
      %s399 = scalar_lea.vmem %s2, %s398
      %s400 = smul.u32 16, %s21
      %s401 = smul.u32 16, %s21
      %p402 = scmp.lt.s32.totalorder %s401, 31
      %s403 = scalar_select %p402, %s401, 31
      %s404 = smul.addr %s403, 8
      %s405 = scalar_lea.vmem %s10, %s404
      %s406 = smul.u32 16, %s21
      %v407 = vld [vmem:[%s393] sm:$0xff]
      %v408 = vld [vmem:[%s393 + $0x8] sm:$0xff]
      %v409 = vld [vmem:[%s393 + $0x10] sm:$0xff]
      %v410 = vld [vmem:[%s393 + $0x18] sm:$0xff]
      %v411 = vld [vmem:[%s393 + $0x20] sm:$0xff]
      %v412 = vld [vmem:[%s393 + $0x28] sm:$0xff]
      %v413 = vld [vmem:[%s393 + $0x30] sm:$0xff]
      %v414 = vld [vmem:[%s393 + $0x38] sm:$0xff]
      %v415 = vld [vmem:[%s393 + $0x40] sm:$0xff]
      %v416 = vld [vmem:[%s393 + $0x48] sm:$0xff]
      %v417 = vld [vmem:[%s393 + $0x50] sm:$0xff]
      %v418 = vld [vmem:[%s393 + $0x58] sm:$0xff]
      %v419 = vld [vmem:[%s393 + $0x60] sm:$0xff]
      %v420 = vld [vmem:[%s393 + $0x68] sm:$0xff]
      %v421 = vld [vmem:[%s393 + $0x70] sm:$0xff]
      %v422 = vld [vmem:[%s393 + $0x78] sm:$0xff]
      %v423 = vld [vmem:[%s387] sm:$0xff]
      %v424 = vld [vmem:[%s387 + $0x8] sm:$0xff]
      %v425 = vld [vmem:[%s387 + $0x10] sm:$0xff]
      %v426 = vld [vmem:[%s387 + $0x18] sm:$0xff]
      %v427 = vld [vmem:[%s387 + $0x20] sm:$0xff]
      %v428 = vld [vmem:[%s387 + $0x28] sm:$0xff]
      %v429 = vld [vmem:[%s387 + $0x30] sm:$0xff]
      %v430 = vld [vmem:[%s387 + $0x38] sm:$0xff]
      %v431 = vld [vmem:[%s387 + $0x40] sm:$0xff]
      %v432 = vld [vmem:[%s387 + $0x48] sm:$0xff]
      %v433 = vld [vmem:[%s387 + $0x50] sm:$0xff]
      %v434 = vld [vmem:[%s387 + $0x58] sm:$0xff]
      %v435 = vld [vmem:[%s387 + $0x60] sm:$0xff]
      %v436 = vld [vmem:[%s387 + $0x68] sm:$0xff]
      %v437 = vld [vmem:[%s387 + $0x70] sm:$0xff]
      %v438 = vld [vmem:[%s387 + $0x78] sm:$0xff]
      %v439 = vld [vmem:[%s399] sm:$0xff]
      %v440 = vld [vmem:[%s399 + $0x8] sm:$0xff]
      %v441 = vld [vmem:[%s399 + $0x10] sm:$0xff]
      %v442 = vld [vmem:[%s399 + $0x18] sm:$0xff]
      %v443 = vld [vmem:[%s399 + $0x20] sm:$0xff]
      %v444 = vld [vmem:[%s399 + $0x28] sm:$0xff]
      %v445 = vld [vmem:[%s399 + $0x30] sm:$0xff]
      %v446 = vld [vmem:[%s399 + $0x38] sm:$0xff]
      %v447 = vld [vmem:[%s399 + $0x40] sm:$0xff]
      %v448 = vld [vmem:[%s399 + $0x48] sm:$0xff]
      %v449 = vld [vmem:[%s399 + $0x50] sm:$0xff]
      %v450 = vld [vmem:[%s399 + $0x58] sm:$0xff]
      %v451 = vld [vmem:[%s399 + $0x60] sm:$0xff]
      %v452 = vld [vmem:[%s399 + $0x68] sm:$0xff]
      %v453 = vld [vmem:[%s399 + $0x70] sm:$0xff]
      %v454 = vld [vmem:[%s399 + $0x78] sm:$0xff]
      %v455 = vld [vmem:[%s3] sm:$0xff]
      %v456 = vld [vmem:[%s3 + $0x8] sm:$0xff]
      %v457 = vld [vmem:[%s3 + $0x10] sm:$0xff]
      %v458 = vld [vmem:[%s3 + $0x18] sm:$0xff]
      %v459 = vld [vmem:[%s3 + $0x20] sm:$0xff]
      %v460 = vld [vmem:[%s3 + $0x28] sm:$0xff]
      %v461 = vld [vmem:[%s3 + $0x30] sm:$0xff]
      %v462 = vld [vmem:[%s3 + $0x38] sm:$0xff]
      %v463 = vld [vmem:[%s4] sm:$0x3]
      %v465 = vperm.slane %v463, 0
      %v466 = vperm.slane %v463, 1
      %vm469 = vcmask 261120
      %v471 = vsel %vm469, %v407, 0
      %v474 = vsel %vm469, %v408, 0
      %v477 = vsel %vm469, %v409, 0
      %v480 = vsel %vm469, %v410, 0
      %v483 = vsel %vm469, %v411, 0
      %v486 = vsel %vm469, %v412, 0
      %v489 = vsel %vm469, %v413, 0
      %v492 = vsel %vm469, %v414, 0
      %v495 = vsel %vm469, %v415, 0
      %v498 = vsel %vm469, %v416, 0
      %v501 = vsel %vm469, %v417, 0
      %v504 = vsel %vm469, %v418, 0
      %v507 = vsel %vm469, %v419, 0
      %v510 = vsel %vm469, %v420, 0
      %v513 = vsel %vm469, %v421, 0
      %v516 = vsel %vm469, %v422, 0
      %518 = vmatpush.msra.mxu0 0.0
      %519 = vmatpush.msra.mxu0 0.0
      %520 = vmatpush.msra.mxu0 0.0
      %521 = vmatpush.msra.mxu0 0.0
      %522 = vmatpush.msra.mxu0 0.0
      %523 = vmatpush.msra.mxu0 0.0
      %524 = vmatpush.msra.mxu0 0.0
      %525 = vmatpush.msra.mxu0 0.0
      %526 = vmatpush.msra.mxu0 0.0
      %527 = vmatpush.msra.mxu0 0.0
      %528 = vmatpush.msra.mxu0 0.0
      %529 = vmatpush.msra.mxu0 0.0
      %530 = vmatpush.msra.mxu0 %v461
      %531 = vmatpush.msra.mxu0 %v459
      %532 = vmatpush.msra.mxu0 %v457
      %533 = vmatpush.msra.mxu0 %v455
      %534 = vmatmul.f32.gmra.mxu0 %v471
      %v535 = vpop.f32.mrf.mxu0
      %v536 = vadd.f32 %v465, %v535
      %537 = vmatmul.f32.gmra.mxu0 %v474
      %v538 = vpop.f32.mrf.mxu0
      %v539 = vadd.f32 %v465, %v538
      %540 = vmatmul.f32.gmra.mxu0 %v477
      %v541 = vpop.f32.mrf.mxu0
      %v542 = vadd.f32 %v465, %v541
      %543 = vmatmul.f32.gmra.mxu0 %v480
      %v544 = vpop.f32.mrf.mxu0
      %v545 = vadd.f32 %v465, %v544
      %546 = vmatmul.f32.gmra.mxu0 %v483
      %v547 = vpop.f32.mrf.mxu0
      %v548 = vadd.f32 %v465, %v547
      %549 = vmatmul.f32.gmra.mxu0 %v486
      %v550 = vpop.f32.mrf.mxu0
      %v551 = vadd.f32 %v465, %v550
      %552 = vmatmul.f32.gmra.mxu0 %v489
      %v553 = vpop.f32.mrf.mxu0
      %v554 = vadd.f32 %v465, %v553
      %555 = vmatmul.f32.gmra.mxu0 %v492
      %v556 = vpop.f32.mrf.mxu0
      %v557 = vadd.f32 %v465, %v556
      %558 = vmatmul.f32.gmra.mxu0 %v495
      %v559 = vpop.f32.mrf.mxu0
      %v560 = vadd.f32 %v465, %v559
      %561 = vmatmul.f32.gmra.mxu0 %v498
      %v562 = vpop.f32.mrf.mxu0
      %v563 = vadd.f32 %v465, %v562
      %564 = vmatmul.f32.gmra.mxu0 %v501
      %v565 = vpop.f32.mrf.mxu0
      %v566 = vadd.f32 %v465, %v565
      %567 = vmatmul.f32.gmra.mxu0 %v504
      %v568 = vpop.f32.mrf.mxu0
      %v569 = vadd.f32 %v465, %v568
      %570 = vmatmul.f32.gmra.mxu0 %v507
      %v571 = vpop.f32.mrf.mxu0
      %v572 = vadd.f32 %v465, %v571
      %573 = vmatmul.f32.gmra.mxu0 %v510
      %v574 = vpop.f32.mrf.mxu0
      %v575 = vadd.f32 %v465, %v574
      %576 = vmatmul.f32.gmra.mxu0 %v513
      %v577 = vpop.f32.mrf.mxu0
      %v578 = vadd.f32 %v465, %v577
      %579 = vmatmul.f32.gmra.mxu0 %v516
      %v580 = vpop.f32.mrf.mxu0
      %v581 = vadd.f32 %v465, %v580
      %582 = vdwg.mxu0
      %583 = vmatpush.msra.mxu0 0.0
      %584 = vmatpush.msra.mxu0 0.0
      %585 = vmatpush.msra.mxu0 0.0
      %586 = vmatpush.msra.mxu0 0.0
      %587 = vmatpush.msra.mxu0 0.0
      %588 = vmatpush.msra.mxu0 0.0
      %589 = vmatpush.msra.mxu0 0.0
      %590 = vmatpush.msra.mxu0 0.0
      %591 = vmatpush.msra.mxu0 0.0
      %592 = vmatpush.msra.mxu0 0.0
      %593 = vmatpush.msra.mxu0 0.0
      %594 = vmatpush.msra.mxu0 0.0
      %595 = vmatpush.msra.mxu0 %v462
      %596 = vmatpush.msra.mxu0 %v460
      %597 = vmatpush.msra.mxu0 %v458
      %598 = vmatpush.msra.mxu0 %v456
      %599 = vmatmul.f32.gmra.mxu0 %v471
      %v600 = vpop.f32.mrf.mxu0
      %v601 = vadd.f32 %v466, %v600
      %602 = vmatmul.f32.gmra.mxu0 %v474
      %v603 = vpop.f32.mrf.mxu0
      %v604 = vadd.f32 %v466, %v603
      %605 = vmatmul.f32.gmra.mxu0 %v477
      %v606 = vpop.f32.mrf.mxu0
      %v607 = vadd.f32 %v466, %v606
      %608 = vmatmul.f32.gmra.mxu0 %v480
      %v609 = vpop.f32.mrf.mxu0
      %v610 = vadd.f32 %v466, %v609
      %611 = vmatmul.f32.gmra.mxu0 %v483
      %v612 = vpop.f32.mrf.mxu0
      %v613 = vadd.f32 %v466, %v612
      %614 = vmatmul.f32.gmra.mxu0 %v486
      %v615 = vpop.f32.mrf.mxu0
      %v616 = vadd.f32 %v466, %v615
      %617 = vmatmul.f32.gmra.mxu0 %v489
      %v618 = vpop.f32.mrf.mxu0
      %v619 = vadd.f32 %v466, %v618
      %620 = vmatmul.f32.gmra.mxu0 %v492
      %v621 = vpop.f32.mrf.mxu0
      %v622 = vadd.f32 %v466, %v621
      %623 = vmatmul.f32.gmra.mxu0 %v495
      %v624 = vpop.f32.mrf.mxu0
      %v625 = vadd.f32 %v466, %v624
      %626 = vmatmul.f32.gmra.mxu0 %v498
      %v627 = vpop.f32.mrf.mxu0
      %v628 = vadd.f32 %v466, %v627
      %629 = vmatmul.f32.gmra.mxu0 %v501
      %v630 = vpop.f32.mrf.mxu0
      %v631 = vadd.f32 %v466, %v630
      %632 = vmatmul.f32.gmra.mxu0 %v504
      %v633 = vpop.f32.mrf.mxu0
      %v634 = vadd.f32 %v466, %v633
      %635 = vmatmul.f32.gmra.mxu0 %v507
      %v636 = vpop.f32.mrf.mxu0
      %v637 = vadd.f32 %v466, %v636
      %638 = vmatmul.f32.gmra.mxu0 %v510
      %v639 = vpop.f32.mrf.mxu0
      %v640 = vadd.f32 %v466, %v639
      %641 = vmatmul.f32.gmra.mxu0 %v513
      %v642 = vpop.f32.mrf.mxu0
      %v643 = vadd.f32 %v466, %v642
      %644 = vmatmul.f32.gmra.mxu0 %v516
      %v645 = vpop.f32.mrf.mxu0
      %v646 = vadd.f32 %v466, %v645
      %647 = vdwg.mxu0
      %v648 = vld [vmem:[%s5] sm:$0xff]
      %v649 = vld [vmem:[%s5 + $0x8] sm:$0xff]
      %v650 = vld [vmem:[%s5 + $0x10] sm:$0xff]
      %v651 = vld [vmem:[%s5 + $0x18] sm:$0xff]
      %v653 = vsel %vm469, %v423, 0
      %v656 = vsel %vm469, %v424, 0
      %v659 = vsel %vm469, %v425, 0
      %v662 = vsel %vm469, %v426, 0
      %v665 = vsel %vm469, %v427, 0
      %v668 = vsel %vm469, %v428, 0
      %v671 = vsel %vm469, %v429, 0
      %v674 = vsel %vm469, %v430, 0
      %v677 = vsel %vm469, %v431, 0
      %v680 = vsel %vm469, %v432, 0
      %v683 = vsel %vm469, %v433, 0
      %v686 = vsel %vm469, %v434, 0
      %v689 = vsel %vm469, %v435, 0
      %v692 = vsel %vm469, %v436, 0
      %v695 = vsel %vm469, %v437, 0
      %v698 = vsel %vm469, %v438, 0
      %700 = vmatpush.msra.mxu0 0.0
      %701 = vmatpush.msra.mxu0 0.0
      %702 = vmatpush.msra.mxu0 0.0
      %703 = vmatpush.msra.mxu0 0.0
      %704 = vmatpush.msra.mxu0 0.0
      %705 = vmatpush.msra.mxu0 0.0
      %706 = vmatpush.msra.mxu0 0.0
      %707 = vmatpush.msra.mxu0 0.0
      %708 = vmatpush.msra.mxu0 0.0
      %709 = vmatpush.msra.mxu0 0.0
      %710 = vmatpush.msra.mxu0 0.0
      %711 = vmatpush.msra.mxu0 0.0
      %712 = vmatpush.msra.mxu0 %v651
      %713 = vmatpush.msra.mxu0 %v650
      %714 = vmatpush.msra.mxu0 %v649
      %715 = vmatpush.msra.mxu0 %v648
      %716 = vmatmul.f32.gmra.mxu0 %v653
      %v717 = vpop.f32.mrf.mxu0
      %v718 = vadd.f32 0.0, %v717
      %719 = vmatmul.f32.gmra.mxu0 %v656
      %v720 = vpop.f32.mrf.mxu0
      %v721 = vadd.f32 0.0, %v720
      %722 = vmatmul.f32.gmra.mxu0 %v659
      %v723 = vpop.f32.mrf.mxu0
      %v724 = vadd.f32 0.0, %v723
      %725 = vmatmul.f32.gmra.mxu0 %v662
      %v726 = vpop.f32.mrf.mxu0
      %v727 = vadd.f32 0.0, %v726
      %728 = vmatmul.f32.gmra.mxu0 %v665
      %v729 = vpop.f32.mrf.mxu0
      %v730 = vadd.f32 0.0, %v729
      %731 = vmatmul.f32.gmra.mxu0 %v668
      %v732 = vpop.f32.mrf.mxu0
      %v733 = vadd.f32 0.0, %v732
      %734 = vmatmul.f32.gmra.mxu0 %v671
      %v735 = vpop.f32.mrf.mxu0
      %v736 = vadd.f32 0.0, %v735
      %737 = vmatmul.f32.gmra.mxu0 %v674
      %v738 = vpop.f32.mrf.mxu0
      %v739 = vadd.f32 0.0, %v738
      %740 = vmatmul.f32.gmra.mxu0 %v677
      %v741 = vpop.f32.mrf.mxu0
      %v742 = vadd.f32 0.0, %v741
      %743 = vmatmul.f32.gmra.mxu0 %v680
      %v744 = vpop.f32.mrf.mxu0
      %v745 = vadd.f32 0.0, %v744
      %746 = vmatmul.f32.gmra.mxu0 %v683
      %v747 = vpop.f32.mrf.mxu0
      %v748 = vadd.f32 0.0, %v747
      %749 = vmatmul.f32.gmra.mxu0 %v686
      %v750 = vpop.f32.mrf.mxu0
      %v751 = vadd.f32 0.0, %v750
      %752 = vmatmul.f32.gmra.mxu0 %v689
      %v753 = vpop.f32.mrf.mxu0
      %v754 = vadd.f32 0.0, %v753
      %755 = vmatmul.f32.gmra.mxu0 %v692
      %v756 = vpop.f32.mrf.mxu0
      %v757 = vadd.f32 0.0, %v756
      %758 = vmatmul.f32.gmra.mxu0 %v695
      %v759 = vpop.f32.mrf.mxu0
      %v760 = vadd.f32 0.0, %v759
      %761 = vmatmul.f32.gmra.mxu0 %v698
      %v762 = vpop.f32.mrf.mxu0
      %v763 = vadd.f32 0.0, %v762
      %764 = vdwg.mxu0
      %v765 = vadd.f32 %v536, %v718
      %v766 = vadd.f32 %v539, %v721
      %v767 = vadd.f32 %v542, %v724
      %v768 = vadd.f32 %v545, %v727
      %v769 = vadd.f32 %v548, %v730
      %v770 = vadd.f32 %v551, %v733
      %v771 = vadd.f32 %v554, %v736
      %v772 = vadd.f32 %v557, %v739
      %v773 = vadd.f32 %v560, %v742
      %v774 = vadd.f32 %v563, %v745
      %v775 = vadd.f32 %v566, %v748
      %v776 = vadd.f32 %v569, %v751
      %v777 = vadd.f32 %v572, %v754
      %v778 = vadd.f32 %v575, %v757
      %v779 = vadd.f32 %v578, %v760
      %v780 = vadd.f32 %v581, %v763
      %v781 = vmul.f32 %v536, 0.35355338
      %v782 = vmul.f32 %v539, 0.35355338
      %v783 = vmul.f32 %v542, 0.35355338
      %v784 = vmul.f32 %v545, 0.35355338
      %v785 = vmul.f32 %v548, 0.35355338
      %v786 = vmul.f32 %v551, 0.35355338
      %v787 = vmul.f32 %v554, 0.35355338
      %v788 = vmul.f32 %v557, 0.35355338
      %v789 = vmul.f32 %v560, 0.35355338
      %v790 = vmul.f32 %v563, 0.35355338
      %v791 = vmul.f32 %v566, 0.35355338
      %v792 = vmul.f32 %v569, 0.35355338
      %v793 = vmul.f32 %v572, 0.35355338
      %v794 = vmul.f32 %v575, 0.35355338
      %v795 = vmul.f32 %v578, 0.35355338
      %v796 = vmul.f32 %v581, 0.35355338
      %v797 = vlaneseq
      %v798 = vshrl.u32 %v797, 7
      %v799 = vlaneseq
      %v800 = vand.u32 %v799, 127
      %vm801 = vcmp.eq.s32.totalorder %v798, %v800
      %vm802 = vcmp.eq.f32.partialorder %v439, 0.0
      %vm803 = vcmp.eq.f32.partialorder %v440, 0.0
      %vm804 = vcmp.eq.f32.partialorder %v441, 0.0
      %vm805 = vcmp.eq.f32.partialorder %v442, 0.0
      %vm806 = vcmp.eq.f32.partialorder %v443, 0.0
      %vm807 = vcmp.eq.f32.partialorder %v444, 0.0
      %vm808 = vcmp.eq.f32.partialorder %v445, 0.0
      %vm809 = vcmp.eq.f32.partialorder %v446, 0.0
      %vm810 = vcmp.eq.f32.partialorder %v447, 0.0
      %vm811 = vcmp.eq.f32.partialorder %v448, 0.0
      %vm812 = vcmp.eq.f32.partialorder %v449, 0.0
      %vm813 = vcmp.eq.f32.partialorder %v450, 0.0
      %vm814 = vcmp.eq.f32.partialorder %v451, 0.0
      %vm815 = vcmp.eq.f32.partialorder %v452, 0.0
      %vm816 = vcmp.eq.f32.partialorder %v453, 0.0
      %vm817 = vcmp.eq.f32.partialorder %v454, 0.0
      %v818 = vsel %vm802, -inf, 0.0
      %v819 = vsel %vm803, -inf, 0.0
      %v820 = vsel %vm804, -inf, 0.0
      %v821 = vsel %vm805, -inf, 0.0
      %v822 = vsel %vm806, -inf, 0.0
      %v823 = vsel %vm807, -inf, 0.0
      %v824 = vsel %vm808, -inf, 0.0
      %v825 = vsel %vm809, -inf, 0.0
      %v826 = vsel %vm810, -inf, 0.0
      %v827 = vsel %vm811, -inf, 0.0
      %v828 = vsel %vm812, -inf, 0.0
      %v829 = vsel %vm813, -inf, 0.0
      %v830 = vsel %vm814, -inf, 0.0
      %v831 = vsel %vm815, -inf, 0.0
      %v832 = vsel %vm816, -inf, 0.0
      %v833 = vsel %vm817, -inf, 0.0
      %v834 = vsel %vm801, 1, 0
      %vm835 = vcmp.eq.s32.totalorder %v834, 1
      %v836 = vsel %vm835, %v818, 0.0
      %v837 = vsel %vm835, %v819, 0.0
      %v838 = vsel %vm835, %v820, 0.0
      %v839 = vsel %vm835, %v821, 0.0
      %v840 = vsel %vm835, %v822, 0.0
      %v841 = vsel %vm835, %v823, 0.0
      %v842 = vsel %vm835, %v824, 0.0
      %v843 = vsel %vm835, %v825, 0.0
      %v844 = vsel %vm835, %v826, 0.0
      %v845 = vsel %vm835, %v827, 0.0
      %v846 = vsel %vm835, %v828, 0.0
      %v847 = vsel %vm835, %v829, 0.0
      %v848 = vsel %vm835, %v830, 0.0
      %v849 = vsel %vm835, %v831, 0.0
      %v850 = vsel %vm835, %v832, 0.0
      %v851 = vsel %vm835, %v833, 0.0
      %vm852 = vcmask 64512
      %v853 = vsel %vm852, %v836, 0.0
      %854 = vadd.xlane.f32.xlu0 %v853
      %v855 = vpop.xlane.xlu0 %854
      %v856 = vsel %vm852, %v837, 0.0
      %857 = vadd.xlane.f32.xlu0 %v856
      %v858 = vpop.xlane.xlu0 %857
      %v859 = vsel %vm852, %v838, 0.0
      %860 = vadd.xlane.f32.xlu0 %v859
      %v861 = vpop.xlane.xlu0 %860
      %v862 = vsel %vm852, %v839, 0.0
      %863 = vadd.xlane.f32.xlu0 %v862
      %v864 = vpop.xlane.xlu0 %863
      %v865 = vsel %vm852, %v840, 0.0
      %866 = vadd.xlane.f32.xlu0 %v865
      %v867 = vpop.xlane.xlu0 %866
      %v868 = vsel %vm852, %v841, 0.0
      %869 = vadd.xlane.f32.xlu0 %v868
      %v870 = vpop.xlane.xlu0 %869
      %v871 = vsel %vm852, %v842, 0.0
      %872 = vadd.xlane.f32.xlu0 %v871
      %v873 = vpop.xlane.xlu0 %872
      %v874 = vsel %vm852, %v843, 0.0
      %875 = vadd.xlane.f32.xlu0 %v874
      %v876 = vpop.xlane.xlu0 %875
      %v877 = vsel %vm852, %v844, 0.0
      %878 = vadd.xlane.f32.xlu0 %v877
      %v879 = vpop.xlane.xlu0 %878
      %v880 = vsel %vm852, %v845, 0.0
      %881 = vadd.xlane.f32.xlu0 %v880
      %v882 = vpop.xlane.xlu0 %881
      %v883 = vsel %vm852, %v846, 0.0
      %884 = vadd.xlane.f32.xlu0 %v883
      %v885 = vpop.xlane.xlu0 %884
      %v886 = vsel %vm852, %v847, 0.0
      %887 = vadd.xlane.f32.xlu0 %v886
      %v888 = vpop.xlane.xlu0 %887
      %v889 = vsel %vm852, %v848, 0.0
      %890 = vadd.xlane.f32.xlu0 %v889
      %v891 = vpop.xlane.xlu0 %890
      %v892 = vsel %vm852, %v849, 0.0
      %893 = vadd.xlane.f32.xlu0 %v892
      %v894 = vpop.xlane.xlu0 %893
      %v895 = vsel %vm852, %v850, 0.0
      %896 = vadd.xlane.f32.xlu0 %v895
      %v897 = vpop.xlane.xlu0 %896
      %v898 = vsel %vm852, %v851, 0.0
      %899 = vadd.xlane.f32.xlu0 %v898
      %v900 = vpop.xlane.xlu0 %899
      %v901 = vld [vmem:[%s6] sm:$0xff]
      %v902 = vld [vmem:[%s6 + $0x8] sm:$0xff]
      %v903 = vld [vmem:[%s6 + $0x10] sm:$0xff]
      %v904 = vld [vmem:[%s6 + $0x18] sm:$0xff]
      %921 = vrot.lane.b32.xlu0 %v536, 96
      %v922 = vpop.permute.xlu0 %921
      %923 = vrot.lane.b32.xlu0 %v539, 96
      %v924 = vpop.permute.xlu0 %923
      %925 = vrot.lane.b32.xlu0 %v542, 96
      %v926 = vpop.permute.xlu0 %925
      %927 = vrot.lane.b32.xlu0 %v545, 96
      %v928 = vpop.permute.xlu0 %927
      %929 = vrot.lane.b32.xlu0 %v548, 96
      %v930 = vpop.permute.xlu0 %929
      %931 = vrot.lane.b32.xlu0 %v551, 96
      %v932 = vpop.permute.xlu0 %931
      %933 = vrot.lane.b32.xlu0 %v554, 96
      %v934 = vpop.permute.xlu0 %933
      %935 = vrot.lane.b32.xlu0 %v557, 96
      %v936 = vpop.permute.xlu0 %935
      %937 = vrot.lane.b32.xlu0 %v560, 96
      %v938 = vpop.permute.xlu0 %937
      %939 = vrot.lane.b32.xlu0 %v563, 96
      %v940 = vpop.permute.xlu0 %939
      %941 = vrot.lane.b32.xlu0 %v566, 96
      %v942 = vpop.permute.xlu0 %941
      %943 = vrot.lane.b32.xlu0 %v569, 96
      %v944 = vpop.permute.xlu0 %943
      %945 = vrot.lane.b32.xlu0 %v572, 96
      %v946 = vpop.permute.xlu0 %945
      %947 = vrot.lane.b32.xlu0 %v575, 96
      %v948 = vpop.permute.xlu0 %947
      %949 = vrot.lane.b32.xlu0 %v578, 96
      %v950 = vpop.permute.xlu0 %949
      %951 = vrot.lane.b32.xlu0 %v581, 96
      %v952 = vpop.permute.xlu0 %951
      %v969 = vmul.f32 %v781, %v922
      %v970 = vmul.f32 %v782, %v924
      %v971 = vmul.f32 %v783, %v926
      %v972 = vmul.f32 %v784, %v928
      %v973 = vmul.f32 %v785, %v930
      %v974 = vmul.f32 %v786, %v932
      %v975 = vmul.f32 %v787, %v934
      %v976 = vmul.f32 %v788, %v936
      %v977 = vmul.f32 %v789, %v938
      %v978 = vmul.f32 %v790, %v940
      %v979 = vmul.f32 %v791, %v942
      %v980 = vmul.f32 %v792, %v944
      %v981 = vmul.f32 %v793, %v946
      %v982 = vmul.f32 %v794, %v948
      %v983 = vmul.f32 %v795, %v950
      %v984 = vmul.f32 %v796, %v952
      %1001 = vrot.lane.b32.xlu0 %v969, 64
      %v1002 = vpop.permute.xlu0 %1001
      %1003 = vrot.lane.b32.xlu0 %v970, 64
      %v1004 = vpop.permute.xlu0 %1003
      %1005 = vrot.lane.b32.xlu0 %v971, 64
      %v1006 = vpop.permute.xlu0 %1005
      %1007 = vrot.lane.b32.xlu0 %v972, 64
      %v1008 = vpop.permute.xlu0 %1007
      %1009 = vrot.lane.b32.xlu0 %v973, 64
      %v1010 = vpop.permute.xlu0 %1009
      %1011 = vrot.lane.b32.xlu0 %v974, 64
      %v1012 = vpop.permute.xlu0 %1011
      %1013 = vrot.lane.b32.xlu0 %v975, 64
      %v1014 = vpop.permute.xlu0 %1013
      %1015 = vrot.lane.b32.xlu0 %v976, 64
      %v1016 = vpop.permute.xlu0 %1015
      %1017 = vrot.lane.b32.xlu0 %v977, 64
      %v1018 = vpop.permute.xlu0 %1017
      %1019 = vrot.lane.b32.xlu0 %v978, 64
      %v1020 = vpop.permute.xlu0 %1019
      %1021 = vrot.lane.b32.xlu0 %v979, 64
      %v1022 = vpop.permute.xlu0 %1021
      %1023 = vrot.lane.b32.xlu0 %v980, 64
      %v1024 = vpop.permute.xlu0 %1023
      %1025 = vrot.lane.b32.xlu0 %v981, 64
      %v1026 = vpop.permute.xlu0 %1025
      %1027 = vrot.lane.b32.xlu0 %v982, 64
      %v1028 = vpop.permute.xlu0 %1027
      %1029 = vrot.lane.b32.xlu0 %v983, 64
      %v1030 = vpop.permute.xlu0 %1029
      %1031 = vrot.lane.b32.xlu0 %v984, 64
      %v1032 = vpop.permute.xlu0 %1031
      %v1049 = vsel %vm852, %v1002, 0.0
      %1050 = vadd.xlane.f32.xlu0 %v1049
      %v1051 = vpop.xlane.xlu0 %1050
      %v1052 = vsel %vm852, %v1004, 0.0
      %1053 = vadd.xlane.f32.xlu0 %v1052
      %v1054 = vpop.xlane.xlu0 %1053
      %v1055 = vsel %vm852, %v1006, 0.0
      %1056 = vadd.xlane.f32.xlu0 %v1055
      %v1057 = vpop.xlane.xlu0 %1056
      %v1058 = vsel %vm852, %v1008, 0.0
      %1059 = vadd.xlane.f32.xlu0 %v1058
      %v1060 = vpop.xlane.xlu0 %1059
      %v1061 = vsel %vm852, %v1010, 0.0
      %1062 = vadd.xlane.f32.xlu0 %v1061
      %v1063 = vpop.xlane.xlu0 %1062
      %v1064 = vsel %vm852, %v1012, 0.0
      %1065 = vadd.xlane.f32.xlu0 %v1064
      %v1066 = vpop.xlane.xlu0 %1065
      %v1067 = vsel %vm852, %v1014, 0.0
      %1068 = vadd.xlane.f32.xlu0 %v1067
      %v1069 = vpop.xlane.xlu0 %1068
      %v1070 = vsel %vm852, %v1016, 0.0
      %1071 = vadd.xlane.f32.xlu0 %v1070
      %v1072 = vpop.xlane.xlu0 %1071
      %v1073 = vsel %vm852, %v1018, 0.0
      %1074 = vadd.xlane.f32.xlu0 %v1073
      %v1075 = vpop.xlane.xlu0 %1074
      %v1076 = vsel %vm852, %v1020, 0.0
      %1077 = vadd.xlane.f32.xlu0 %v1076
      %v1078 = vpop.xlane.xlu0 %1077
      %v1079 = vsel %vm852, %v1022, 0.0
      %1080 = vadd.xlane.f32.xlu0 %v1079
      %v1081 = vpop.xlane.xlu0 %1080
      %v1082 = vsel %vm852, %v1024, 0.0
      %1083 = vadd.xlane.f32.xlu0 %v1082
      %v1084 = vpop.xlane.xlu0 %1083
      %v1085 = vsel %vm852, %v1026, 0.0
      %1086 = vadd.xlane.f32.xlu0 %v1085
      %v1087 = vpop.xlane.xlu0 %1086
      %v1088 = vsel %vm852, %v1028, 0.0
      %1089 = vadd.xlane.f32.xlu0 %v1088
      %v1090 = vpop.xlane.xlu0 %1089
      %v1091 = vsel %vm852, %v1030, 0.0
      %1092 = vadd.xlane.f32.xlu0 %v1091
      %v1093 = vpop.xlane.xlu0 %1092
      %v1094 = vsel %vm852, %v1032, 0.0
      %1095 = vadd.xlane.f32.xlu0 %v1094
      %v1096 = vpop.xlane.xlu0 %1095
      %1098 = vrot.lane.b32.xlu0 %v781, 64
      %v1099 = vpop.permute.xlu0 %1098
      %v1100 = vsel %vm852, %v1099, 0
      %v1103 = vsel %vm852, %v765, 0
      %1105 = vmatpush.xpose.msra.mxu0 0.0
      %1106 = vmatpush.xpose.msra.mxu0 0.0
      %1107 = vmatpush.xpose.msra.mxu0 0.0
      %1108 = vmatpush.xpose.msra.mxu0 0.0
      %1109 = vmatpush.xpose.msra.mxu0 0.0
      %1110 = vmatpush.xpose.msra.mxu0 0.0
      %1111 = vmatpush.xpose.msra.mxu0 0.0
      %1112 = vmatpush.xpose.msra.mxu0 0.0
      %1113 = vmatpush.xpose.msra.mxu0 0.0
      %1114 = vmatpush.xpose.msra.mxu0 0.0
      %1115 = vmatpush.xpose.msra.mxu0 0.0
      %1116 = vmatpush.xpose.msra.mxu0 0.0
      %1117 = vmatpush.xpose.msra.mxu0 0.0
      %1118 = vmatpush.xpose.msra.mxu0 0.0
      %1119 = vmatpush.xpose.msra.mxu0 0.0
      %1120 = vmatpush.xpose.msra.mxu0 %v1103
      %1121 = vmatmul.f32.gmra.mxu0 %v1100
      %v1122 = vpop.f32.mrf.mxu0
      %v1123 = vadd.f32 0.0, %v1122
      %1124 = vdwg.mxu0
      %1126 = vrot.lane.b32.xlu0 %v782, 64
      %v1127 = vpop.permute.xlu0 %1126
      %v1128 = vsel %vm852, %v1127, 0
      %v1131 = vsel %vm852, %v766, 0
      %1133 = vmatpush.xpose.msra.mxu0 0.0
      %1134 = vmatpush.xpose.msra.mxu0 0.0
      %1135 = vmatpush.xpose.msra.mxu0 0.0
      %1136 = vmatpush.xpose.msra.mxu0 0.0
      %1137 = vmatpush.xpose.msra.mxu0 0.0
      %1138 = vmatpush.xpose.msra.mxu0 0.0
      %1139 = vmatpush.xpose.msra.mxu0 0.0
      %1140 = vmatpush.xpose.msra.mxu0 0.0
      %1141 = vmatpush.xpose.msra.mxu0 0.0
      %1142 = vmatpush.xpose.msra.mxu0 0.0
      %1143 = vmatpush.xpose.msra.mxu0 0.0
      %1144 = vmatpush.xpose.msra.mxu0 0.0
      %1145 = vmatpush.xpose.msra.mxu0 0.0
      %1146 = vmatpush.xpose.msra.mxu0 0.0
      %1147 = vmatpush.xpose.msra.mxu0 0.0
      %1148 = vmatpush.xpose.msra.mxu0 %v1131
      %1149 = vmatmul.f32.gmra.mxu0 %v1128
      %v1150 = vpop.f32.mrf.mxu0
      %v1151 = vadd.f32 0.0, %v1150
      %1152 = vdwg.mxu0
      %1154 = vrot.lane.b32.xlu0 %v783, 64
      %v1155 = vpop.permute.xlu0 %1154
      %v1156 = vsel %vm852, %v1155, 0
      %v1159 = vsel %vm852, %v767, 0
      %1161 = vmatpush.xpose.msra.mxu0 0.0
      %1162 = vmatpush.xpose.msra.mxu0 0.0
      %1163 = vmatpush.xpose.msra.mxu0 0.0
      %1164 = vmatpush.xpose.msra.mxu0 0.0
      %1165 = vmatpush.xpose.msra.mxu0 0.0
      %1166 = vmatpush.xpose.msra.mxu0 0.0
      %1167 = vmatpush.xpose.msra.mxu0 0.0
      %1168 = vmatpush.xpose.msra.mxu0 0.0
      %1169 = vmatpush.xpose.msra.mxu0 0.0
      %1170 = vmatpush.xpose.msra.mxu0 0.0
      %1171 = vmatpush.xpose.msra.mxu0 0.0
      %1172 = vmatpush.xpose.msra.mxu0 0.0
      %1173 = vmatpush.xpose.msra.mxu0 0.0
      %1174 = vmatpush.xpose.msra.mxu0 0.0
      %1175 = vmatpush.xpose.msra.mxu0 0.0
      %1176 = vmatpush.xpose.msra.mxu0 %v1159
      %1177 = vmatmul.f32.gmra.mxu0 %v1156
      %v1178 = vpop.f32.mrf.mxu0
      %v1179 = vadd.f32 0.0, %v1178
      %1180 = vdwg.mxu0
      %1182 = vrot.lane.b32.xlu0 %v784, 64
      %v1183 = vpop.permute.xlu0 %1182
      %v1184 = vsel %vm852, %v1183, 0
      %v1187 = vsel %vm852, %v768, 0
      %1189 = vmatpush.xpose.msra.mxu0 0.0
      %1190 = vmatpush.xpose.msra.mxu0 0.0
      %1191 = vmatpush.xpose.msra.mxu0 0.0
      %1192 = vmatpush.xpose.msra.mxu0 0.0
      %1193 = vmatpush.xpose.msra.mxu0 0.0
      %1194 = vmatpush.xpose.msra.mxu0 0.0
      %1195 = vmatpush.xpose.msra.mxu0 0.0
      %1196 = vmatpush.xpose.msra.mxu0 0.0
      %1197 = vmatpush.xpose.msra.mxu0 0.0
      %1198 = vmatpush.xpose.msra.mxu0 0.0
      %1199 = vmatpush.xpose.msra.mxu0 0.0
      %1200 = vmatpush.xpose.msra.mxu0 0.0
      %1201 = vmatpush.xpose.msra.mxu0 0.0
      %1202 = vmatpush.xpose.msra.mxu0 0.0
      %1203 = vmatpush.xpose.msra.mxu0 0.0
      %1204 = vmatpush.xpose.msra.mxu0 %v1187
      %1205 = vmatmul.f32.gmra.mxu0 %v1184
      %v1206 = vpop.f32.mrf.mxu0
      %v1207 = vadd.f32 0.0, %v1206
      %1208 = vdwg.mxu0
      %1210 = vrot.lane.b32.xlu0 %v785, 64
      %v1211 = vpop.permute.xlu0 %1210
      %v1212 = vsel %vm852, %v1211, 0
      %v1215 = vsel %vm852, %v769, 0
      %1217 = vmatpush.xpose.msra.mxu0 0.0
      %1218 = vmatpush.xpose.msra.mxu0 0.0
      %1219 = vmatpush.xpose.msra.mxu0 0.0
      %1220 = vmatpush.xpose.msra.mxu0 0.0
      %1221 = vmatpush.xpose.msra.mxu0 0.0
      %1222 = vmatpush.xpose.msra.mxu0 0.0
      %1223 = vmatpush.xpose.msra.mxu0 0.0
      %1224 = vmatpush.xpose.msra.mxu0 0.0
      %1225 = vmatpush.xpose.msra.mxu0 0.0
      %1226 = vmatpush.xpose.msra.mxu0 0.0
      %1227 = vmatpush.xpose.msra.mxu0 0.0
      %1228 = vmatpush.xpose.msra.mxu0 0.0
      %1229 = vmatpush.xpose.msra.mxu0 0.0
      %1230 = vmatpush.xpose.msra.mxu0 0.0
      %1231 = vmatpush.xpose.msra.mxu0 0.0
      %1232 = vmatpush.xpose.msra.mxu0 %v1215
      %1233 = vmatmul.f32.gmra.mxu0 %v1212
      %v1234 = vpop.f32.mrf.mxu0
      %v1235 = vadd.f32 0.0, %v1234
      %1236 = vdwg.mxu0
      %1238 = vrot.lane.b32.xlu0 %v786, 64
      %v1239 = vpop.permute.xlu0 %1238
      %v1240 = vsel %vm852, %v1239, 0
      %v1243 = vsel %vm852, %v770, 0
      %1245 = vmatpush.xpose.msra.mxu0 0.0
      %1246 = vmatpush.xpose.msra.mxu0 0.0
      %1247 = vmatpush.xpose.msra.mxu0 0.0
      %1248 = vmatpush.xpose.msra.mxu0 0.0
      %1249 = vmatpush.xpose.msra.mxu0 0.0
      %1250 = vmatpush.xpose.msra.mxu0 0.0
      %1251 = vmatpush.xpose.msra.mxu0 0.0
      %1252 = vmatpush.xpose.msra.mxu0 0.0
      %1253 = vmatpush.xpose.msra.mxu0 0.0
      %1254 = vmatpush.xpose.msra.mxu0 0.0
      %1255 = vmatpush.xpose.msra.mxu0 0.0
      %1256 = vmatpush.xpose.msra.mxu0 0.0
      %1257 = vmatpush.xpose.msra.mxu0 0.0
      %1258 = vmatpush.xpose.msra.mxu0 0.0
      %1259 = vmatpush.xpose.msra.mxu0 0.0
      %1260 = vmatpush.xpose.msra.mxu0 %v1243
      %1261 = vmatmul.f32.gmra.mxu0 %v1240
      %v1262 = vpop.f32.mrf.mxu0
      %v1263 = vadd.f32 0.0, %v1262
      %1264 = vdwg.mxu0
      %1266 = vrot.lane.b32.xlu0 %v787, 64
      %v1267 = vpop.permute.xlu0 %1266
      %v1268 = vsel %vm852, %v1267, 0
      %v1271 = vsel %vm852, %v771, 0
      %1273 = vmatpush.xpose.msra.mxu0 0.0
      %1274 = vmatpush.xpose.msra.mxu0 0.0
      %1275 = vmatpush.xpose.msra.mxu0 0.0
      %1276 = vmatpush.xpose.msra.mxu0 0.0
      %1277 = vmatpush.xpose.msra.mxu0 0.0
      %1278 = vmatpush.xpose.msra.mxu0 0.0
      %1279 = vmatpush.xpose.msra.mxu0 0.0
      %1280 = vmatpush.xpose.msra.mxu0 0.0
      %1281 = vmatpush.xpose.msra.mxu0 0.0
      %1282 = vmatpush.xpose.msra.mxu0 0.0
      %1283 = vmatpush.xpose.msra.mxu0 0.0
      %1284 = vmatpush.xpose.msra.mxu0 0.0
      %1285 = vmatpush.xpose.msra.mxu0 0.0
      %1286 = vmatpush.xpose.msra.mxu0 0.0
      %1287 = vmatpush.xpose.msra.mxu0 0.0
      %1288 = vmatpush.xpose.msra.mxu0 %v1271
      %1289 = vmatmul.f32.gmra.mxu0 %v1268
      %v1290 = vpop.f32.mrf.mxu0
      %v1291 = vadd.f32 0.0, %v1290
      %1292 = vdwg.mxu0
      %1294 = vrot.lane.b32.xlu0 %v788, 64
      %v1295 = vpop.permute.xlu0 %1294
      %v1296 = vsel %vm852, %v1295, 0
      %v1299 = vsel %vm852, %v772, 0
      %1301 = vmatpush.xpose.msra.mxu0 0.0
      %1302 = vmatpush.xpose.msra.mxu0 0.0
      %1303 = vmatpush.xpose.msra.mxu0 0.0
      %1304 = vmatpush.xpose.msra.mxu0 0.0
      %1305 = vmatpush.xpose.msra.mxu0 0.0
      %1306 = vmatpush.xpose.msra.mxu0 0.0
      %1307 = vmatpush.xpose.msra.mxu0 0.0
      %1308 = vmatpush.xpose.msra.mxu0 0.0
      %1309 = vmatpush.xpose.msra.mxu0 0.0
      %1310 = vmatpush.xpose.msra.mxu0 0.0
      %1311 = vmatpush.xpose.msra.mxu0 0.0
      %1312 = vmatpush.xpose.msra.mxu0 0.0
      %1313 = vmatpush.xpose.msra.mxu0 0.0
      %1314 = vmatpush.xpose.msra.mxu0 0.0
      %1315 = vmatpush.xpose.msra.mxu0 0.0
      %1316 = vmatpush.xpose.msra.mxu0 %v1299
      %1317 = vmatmul.f32.gmra.mxu0 %v1296
      %v1318 = vpop.f32.mrf.mxu0
      %v1319 = vadd.f32 0.0, %v1318
      %1320 = vdwg.mxu0
      %1322 = vrot.lane.b32.xlu0 %v789, 64
      %v1323 = vpop.permute.xlu0 %1322
      %v1324 = vsel %vm852, %v1323, 0
      %v1327 = vsel %vm852, %v773, 0
      %1329 = vmatpush.xpose.msra.mxu0 0.0
      %1330 = vmatpush.xpose.msra.mxu0 0.0
      %1331 = vmatpush.xpose.msra.mxu0 0.0
      %1332 = vmatpush.xpose.msra.mxu0 0.0
      %1333 = vmatpush.xpose.msra.mxu0 0.0
      %1334 = vmatpush.xpose.msra.mxu0 0.0
      %1335 = vmatpush.xpose.msra.mxu0 0.0
      %1336 = vmatpush.xpose.msra.mxu0 0.0
      %1337 = vmatpush.xpose.msra.mxu0 0.0
      %1338 = vmatpush.xpose.msra.mxu0 0.0
      %1339 = vmatpush.xpose.msra.mxu0 0.0
      %1340 = vmatpush.xpose.msra.mxu0 0.0
      %1341 = vmatpush.xpose.msra.mxu0 0.0
      %1342 = vmatpush.xpose.msra.mxu0 0.0
      %1343 = vmatpush.xpose.msra.mxu0 0.0
      %1344 = vmatpush.xpose.msra.mxu0 %v1327
      %1345 = vmatmul.f32.gmra.mxu0 %v1324
      %v1346 = vpop.f32.mrf.mxu0
      %v1347 = vadd.f32 0.0, %v1346
      %1348 = vdwg.mxu0
      %1350 = vrot.lane.b32.xlu0 %v790, 64
      %v1351 = vpop.permute.xlu0 %1350
      %v1352 = vsel %vm852, %v1351, 0
      %v1355 = vsel %vm852, %v774, 0
      %1357 = vmatpush.xpose.msra.mxu0 0.0
      %1358 = vmatpush.xpose.msra.mxu0 0.0
      %1359 = vmatpush.xpose.msra.mxu0 0.0
      %1360 = vmatpush.xpose.msra.mxu0 0.0
      %1361 = vmatpush.xpose.msra.mxu0 0.0
      %1362 = vmatpush.xpose.msra.mxu0 0.0
      %1363 = vmatpush.xpose.msra.mxu0 0.0
      %1364 = vmatpush.xpose.msra.mxu0 0.0
      %1365 = vmatpush.xpose.msra.mxu0 0.0
      %1366 = vmatpush.xpose.msra.mxu0 0.0
      %1367 = vmatpush.xpose.msra.mxu0 0.0
      %1368 = vmatpush.xpose.msra.mxu0 0.0
      %1369 = vmatpush.xpose.msra.mxu0 0.0
      %1370 = vmatpush.xpose.msra.mxu0 0.0
      %1371 = vmatpush.xpose.msra.mxu0 0.0
      %1372 = vmatpush.xpose.msra.mxu0 %v1355
      %1373 = vmatmul.f32.gmra.mxu0 %v1352
      %v1374 = vpop.f32.mrf.mxu0
      %v1375 = vadd.f32 0.0, %v1374
      %1376 = vdwg.mxu0
      %1378 = vrot.lane.b32.xlu0 %v791, 64
      %v1379 = vpop.permute.xlu0 %1378
      %v1380 = vsel %vm852, %v1379, 0
      %v1383 = vsel %vm852, %v775, 0
      %1385 = vmatpush.xpose.msra.mxu0 0.0
      %1386 = vmatpush.xpose.msra.mxu0 0.0
      %1387 = vmatpush.xpose.msra.mxu0 0.0
      %1388 = vmatpush.xpose.msra.mxu0 0.0
      %1389 = vmatpush.xpose.msra.mxu0 0.0
      %1390 = vmatpush.xpose.msra.mxu0 0.0
      %1391 = vmatpush.xpose.msra.mxu0 0.0
      %1392 = vmatpush.xpose.msra.mxu0 0.0
      %1393 = vmatpush.xpose.msra.mxu0 0.0
      %1394 = vmatpush.xpose.msra.mxu0 0.0
      %1395 = vmatpush.xpose.msra.mxu0 0.0
      %1396 = vmatpush.xpose.msra.mxu0 0.0
      %1397 = vmatpush.xpose.msra.mxu0 0.0
      %1398 = vmatpush.xpose.msra.mxu0 0.0
      %1399 = vmatpush.xpose.msra.mxu0 0.0
      %1400 = vmatpush.xpose.msra.mxu0 %v1383
      %1401 = vmatmul.f32.gmra.mxu0 %v1380
      %v1402 = vpop.f32.mrf.mxu0
      %v1403 = vadd.f32 0.0, %v1402
      %1404 = vdwg.mxu0
      %1406 = vrot.lane.b32.xlu0 %v792, 64
      %v1407 = vpop.permute.xlu0 %1406
      %v1408 = vsel %vm852, %v1407, 0
      %v1411 = vsel %vm852, %v776, 0
      %1413 = vmatpush.xpose.msra.mxu0 0.0
      %1414 = vmatpush.xpose.msra.mxu0 0.0
      %1415 = vmatpush.xpose.msra.mxu0 0.0
      %1416 = vmatpush.xpose.msra.mxu0 0.0
      %1417 = vmatpush.xpose.msra.mxu0 0.0
      %1418 = vmatpush.xpose.msra.mxu0 0.0
      %1419 = vmatpush.xpose.msra.mxu0 0.0
      %1420 = vmatpush.xpose.msra.mxu0 0.0
      %1421 = vmatpush.xpose.msra.mxu0 0.0
      %1422 = vmatpush.xpose.msra.mxu0 0.0
      %1423 = vmatpush.xpose.msra.mxu0 0.0
      %1424 = vmatpush.xpose.msra.mxu0 0.0
      %1425 = vmatpush.xpose.msra.mxu0 0.0
      %1426 = vmatpush.xpose.msra.mxu0 0.0
      %1427 = vmatpush.xpose.msra.mxu0 0.0
      %1428 = vmatpush.xpose.msra.mxu0 %v1411
      %1429 = vmatmul.f32.gmra.mxu0 %v1408
      %v1430 = vpop.f32.mrf.mxu0
      %v1431 = vadd.f32 0.0, %v1430
      %1432 = vdwg.mxu0
      %1434 = vrot.lane.b32.xlu0 %v793, 64
      %v1435 = vpop.permute.xlu0 %1434
      %v1436 = vsel %vm852, %v1435, 0
      %v1439 = vsel %vm852, %v777, 0
      %1441 = vmatpush.xpose.msra.mxu0 0.0
      %1442 = vmatpush.xpose.msra.mxu0 0.0
      %1443 = vmatpush.xpose.msra.mxu0 0.0
      %1444 = vmatpush.xpose.msra.mxu0 0.0
      %1445 = vmatpush.xpose.msra.mxu0 0.0
      %1446 = vmatpush.xpose.msra.mxu0 0.0
      %1447 = vmatpush.xpose.msra.mxu0 0.0
      %1448 = vmatpush.xpose.msra.mxu0 0.0
      %1449 = vmatpush.xpose.msra.mxu0 0.0
      %1450 = vmatpush.xpose.msra.mxu0 0.0
      %1451 = vmatpush.xpose.msra.mxu0 0.0
      %1452 = vmatpush.xpose.msra.mxu0 0.0
      %1453 = vmatpush.xpose.msra.mxu0 0.0
      %1454 = vmatpush.xpose.msra.mxu0 0.0
      %1455 = vmatpush.xpose.msra.mxu0 0.0
      %1456 = vmatpush.xpose.msra.mxu0 %v1439
      %1457 = vmatmul.f32.gmra.mxu0 %v1436
      %v1458 = vpop.f32.mrf.mxu0
      %v1459 = vadd.f32 0.0, %v1458
      %1460 = vdwg.mxu0
      %1462 = vrot.lane.b32.xlu0 %v794, 64
      %v1463 = vpop.permute.xlu0 %1462
      %v1464 = vsel %vm852, %v1463, 0
      %v1467 = vsel %vm852, %v778, 0
      %1469 = vmatpush.xpose.msra.mxu0 0.0
      %1470 = vmatpush.xpose.msra.mxu0 0.0
      %1471 = vmatpush.xpose.msra.mxu0 0.0
      %1472 = vmatpush.xpose.msra.mxu0 0.0
      %1473 = vmatpush.xpose.msra.mxu0 0.0
      %1474 = vmatpush.xpose.msra.mxu0 0.0
      %1475 = vmatpush.xpose.msra.mxu0 0.0
      %1476 = vmatpush.xpose.msra.mxu0 0.0
      %1477 = vmatpush.xpose.msra.mxu0 0.0
      %1478 = vmatpush.xpose.msra.mxu0 0.0
      %1479 = vmatpush.xpose.msra.mxu0 0.0
      %1480 = vmatpush.xpose.msra.mxu0 0.0
      %1481 = vmatpush.xpose.msra.mxu0 0.0
      %1482 = vmatpush.xpose.msra.mxu0 0.0
      %1483 = vmatpush.xpose.msra.mxu0 0.0
      %1484 = vmatpush.xpose.msra.mxu0 %v1467
      %1485 = vmatmul.f32.gmra.mxu0 %v1464
      %v1486 = vpop.f32.mrf.mxu0
      %v1487 = vadd.f32 0.0, %v1486
      %1488 = vdwg.mxu0
      %1490 = vrot.lane.b32.xlu0 %v795, 64
      %v1491 = vpop.permute.xlu0 %1490
      %v1492 = vsel %vm852, %v1491, 0
      %v1495 = vsel %vm852, %v779, 0
      %1497 = vmatpush.xpose.msra.mxu0 0.0
      %1498 = vmatpush.xpose.msra.mxu0 0.0
      %1499 = vmatpush.xpose.msra.mxu0 0.0
      %1500 = vmatpush.xpose.msra.mxu0 0.0
      %1501 = vmatpush.xpose.msra.mxu0 0.0
      %1502 = vmatpush.xpose.msra.mxu0 0.0
      %1503 = vmatpush.xpose.msra.mxu0 0.0
      %1504 = vmatpush.xpose.msra.mxu0 0.0
      %1505 = vmatpush.xpose.msra.mxu0 0.0
      %1506 = vmatpush.xpose.msra.mxu0 0.0
      %1507 = vmatpush.xpose.msra.mxu0 0.0
      %1508 = vmatpush.xpose.msra.mxu0 0.0
      %1509 = vmatpush.xpose.msra.mxu0 0.0
      %1510 = vmatpush.xpose.msra.mxu0 0.0
      %1511 = vmatpush.xpose.msra.mxu0 0.0
      %1512 = vmatpush.xpose.msra.mxu0 %v1495
      %1513 = vmatmul.f32.gmra.mxu0 %v1492
      %v1514 = vpop.f32.mrf.mxu0
      %v1515 = vadd.f32 0.0, %v1514
      %1516 = vdwg.mxu0
      %1518 = vrot.lane.b32.xlu0 %v796, 64
      %v1519 = vpop.permute.xlu0 %1518
      %v1520 = vsel %vm852, %v1519, 0
      %v1523 = vsel %vm852, %v780, 0
      %1525 = vmatpush.xpose.msra.mxu0 0.0
      %1526 = vmatpush.xpose.msra.mxu0 0.0
      %1527 = vmatpush.xpose.msra.mxu0 0.0
      %1528 = vmatpush.xpose.msra.mxu0 0.0
      %1529 = vmatpush.xpose.msra.mxu0 0.0
      %1530 = vmatpush.xpose.msra.mxu0 0.0
      %1531 = vmatpush.xpose.msra.mxu0 0.0
      %1532 = vmatpush.xpose.msra.mxu0 0.0
      %1533 = vmatpush.xpose.msra.mxu0 0.0
      %1534 = vmatpush.xpose.msra.mxu0 0.0
      %1535 = vmatpush.xpose.msra.mxu0 0.0
      %1536 = vmatpush.xpose.msra.mxu0 0.0
      %1537 = vmatpush.xpose.msra.mxu0 0.0
      %1538 = vmatpush.xpose.msra.mxu0 0.0
      %1539 = vmatpush.xpose.msra.mxu0 0.0
      %1540 = vmatpush.xpose.msra.mxu0 %v1523
      %1541 = vmatmul.f32.gmra.mxu0 %v1520
      %v1542 = vpop.f32.mrf.mxu0
      %v1543 = vadd.f32 0.0, %v1542
      %1544 = vdwg.mxu0
      %v1545 = vsel %vm835, %v1051, %v1123
      %v1546 = vsel %vm835, %v1054, %v1151
      %v1547 = vsel %vm835, %v1057, %v1179
      %v1548 = vsel %vm835, %v1060, %v1207
      %v1549 = vsel %vm835, %v1063, %v1235
      %v1550 = vsel %vm835, %v1066, %v1263
      %v1551 = vsel %vm835, %v1069, %v1291
      %v1552 = vsel %vm835, %v1072, %v1319
      %v1553 = vsel %vm835, %v1075, %v1347
      %v1554 = vsel %vm835, %v1078, %v1375
      %v1555 = vsel %vm835, %v1081, %v1403
      %v1556 = vsel %vm835, %v1084, %v1431
      %v1557 = vsel %vm835, %v1087, %v1459
      %v1558 = vsel %vm835, %v1090, %v1487
      %v1559 = vsel %vm835, %v1093, %v1515
      %v1560 = vsel %vm835, %v1096, %v1543
      %v1561 = vadd.f32 %v1545, %v818
      %v1562 = vadd.f32 %v1546, %v819
      %v1563 = vadd.f32 %v1547, %v820
      %v1564 = vadd.f32 %v1548, %v821
      %v1565 = vadd.f32 %v1549, %v822
      %v1566 = vadd.f32 %v1550, %v823
      %v1567 = vadd.f32 %v1551, %v824
      %v1568 = vadd.f32 %v1552, %v825
      %v1569 = vadd.f32 %v1553, %v826
      %v1570 = vadd.f32 %v1554, %v827
      %v1571 = vadd.f32 %v1555, %v828
      %v1572 = vadd.f32 %v1556, %v829
      %v1573 = vadd.f32 %v1557, %v830
      %v1574 = vadd.f32 %v1558, %v831
      %v1575 = vadd.f32 %v1559, %v832
      %v1576 = vadd.f32 %v1560, %v833
      %v1577 = vsel %vm852, %v1561, -inf
      %1578 = vmax.xlane.f32.xlu0 %v1577
      %v1579 = vpop.xlane.xlu0 %1578
      %v1580 = vsel %vm852, %v1562, -inf
      %1581 = vmax.xlane.f32.xlu0 %v1580
      %v1582 = vpop.xlane.xlu0 %1581
      %v1583 = vsel %vm852, %v1563, -inf
      %1584 = vmax.xlane.f32.xlu0 %v1583
      %v1585 = vpop.xlane.xlu0 %1584
      %v1586 = vsel %vm852, %v1564, -inf
      %1587 = vmax.xlane.f32.xlu0 %v1586
      %v1588 = vpop.xlane.xlu0 %1587
      %v1589 = vsel %vm852, %v1565, -inf
      %1590 = vmax.xlane.f32.xlu0 %v1589
      %v1591 = vpop.xlane.xlu0 %1590
      %v1592 = vsel %vm852, %v1566, -inf
      %1593 = vmax.xlane.f32.xlu0 %v1592
      %v1594 = vpop.xlane.xlu0 %1593
      %v1595 = vsel %vm852, %v1567, -inf
      %1596 = vmax.xlane.f32.xlu0 %v1595
      %v1597 = vpop.xlane.xlu0 %1596
      %v1598 = vsel %vm852, %v1568, -inf
      %1599 = vmax.xlane.f32.xlu0 %v1598
      %v1600 = vpop.xlane.xlu0 %1599
      %v1601 = vsel %vm852, %v1569, -inf
      %1602 = vmax.xlane.f32.xlu0 %v1601
      %v1603 = vpop.xlane.xlu0 %1602
      %v1604 = vsel %vm852, %v1570, -inf
      %1605 = vmax.xlane.f32.xlu0 %v1604
      %v1606 = vpop.xlane.xlu0 %1605
      %v1607 = vsel %vm852, %v1571, -inf
      %1608 = vmax.xlane.f32.xlu0 %v1607
      %v1609 = vpop.xlane.xlu0 %1608
      %v1610 = vsel %vm852, %v1572, -inf
      %1611 = vmax.xlane.f32.xlu0 %v1610
      %v1612 = vpop.xlane.xlu0 %1611
      %v1613 = vsel %vm852, %v1573, -inf
      %1614 = vmax.xlane.f32.xlu0 %v1613
      %v1615 = vpop.xlane.xlu0 %1614
      %v1616 = vsel %vm852, %v1574, -inf
      %1617 = vmax.xlane.f32.xlu0 %v1616
      %v1618 = vpop.xlane.xlu0 %1617
      %v1619 = vsel %vm852, %v1575, -inf
      %1620 = vmax.xlane.f32.xlu0 %v1619
      %v1621 = vpop.xlane.xlu0 %1620
      %v1622 = vsel %vm852, %v1576, -inf
      %1623 = vmax.xlane.f32.xlu0 %v1622
      %v1624 = vpop.xlane.xlu0 %1623
      %v1625 = vsub.f32 %v1561, %v1579
      %v1626 = vsub.f32 %v1562, %v1582
      %v1627 = vsub.f32 %v1563, %v1585
      %v1628 = vsub.f32 %v1564, %v1588
      %v1629 = vsub.f32 %v1565, %v1591
      %v1630 = vsub.f32 %v1566, %v1594
      %v1631 = vsub.f32 %v1567, %v1597
      %v1632 = vsub.f32 %v1568, %v1600
      %v1633 = vsub.f32 %v1569, %v1603
      %v1634 = vsub.f32 %v1570, %v1606
      %v1635 = vsub.f32 %v1571, %v1609
      %v1636 = vsub.f32 %v1572, %v1612
      %v1637 = vsub.f32 %v1573, %v1615
      %v1638 = vsub.f32 %v1574, %v1618
      %v1639 = vsub.f32 %v1575, %v1621
      %v1640 = vsub.f32 %v1576, %v1624
      %v1641 = vmul.f32 %v1625, 1.442695
      %v1642 = vpow.pop %v1641
      %v1643 = vmul.f32 %v1626, 1.442695
      %v1644 = vpow.pop %v1643
      %v1645 = vmul.f32 %v1627, 1.442695
      %v1646 = vpow.pop %v1645
      %v1647 = vmul.f32 %v1628, 1.442695
      %v1648 = vpow.pop %v1647
      %v1649 = vmul.f32 %v1629, 1.442695
      %v1650 = vpow.pop %v1649
      %v1651 = vmul.f32 %v1630, 1.442695
      %v1652 = vpow.pop %v1651
      %v1653 = vmul.f32 %v1631, 1.442695
      %v1654 = vpow.pop %v1653
      %v1655 = vmul.f32 %v1632, 1.442695
      %v1656 = vpow.pop %v1655
      %v1657 = vmul.f32 %v1633, 1.442695
      %v1658 = vpow.pop %v1657
      %v1659 = vmul.f32 %v1634, 1.442695
      %v1660 = vpow.pop %v1659
      %v1661 = vmul.f32 %v1635, 1.442695
      %v1662 = vpow.pop %v1661
      %v1663 = vmul.f32 %v1636, 1.442695
      %v1664 = vpow.pop %v1663
      %v1665 = vmul.f32 %v1637, 1.442695
      %v1666 = vpow.pop %v1665
      %v1667 = vmul.f32 %v1638, 1.442695
      %v1668 = vpow.pop %v1667
      %v1669 = vmul.f32 %v1639, 1.442695
      %v1670 = vpow.pop %v1669
      %v1671 = vmul.f32 %v1640, 1.442695
      %v1672 = vpow.pop %v1671
      %v1673 = vsel %vm852, %v1642, 0.0
      %1674 = vadd.xlane.f32.xlu0 %v1673
      %v1675 = vpop.xlane.xlu0 %1674
      %v1676 = vsel %vm852, %v1644, 0.0
      %1677 = vadd.xlane.f32.xlu0 %v1676
      %v1678 = vpop.xlane.xlu0 %1677
      %v1679 = vsel %vm852, %v1646, 0.0
      %1680 = vadd.xlane.f32.xlu0 %v1679
      %v1681 = vpop.xlane.xlu0 %1680
      %v1682 = vsel %vm852, %v1648, 0.0
      %1683 = vadd.xlane.f32.xlu0 %v1682
      %v1684 = vpop.xlane.xlu0 %1683
      %v1685 = vsel %vm852, %v1650, 0.0
      %1686 = vadd.xlane.f32.xlu0 %v1685
      %v1687 = vpop.xlane.xlu0 %1686
      %v1688 = vsel %vm852, %v1652, 0.0
      %1689 = vadd.xlane.f32.xlu0 %v1688
      %v1690 = vpop.xlane.xlu0 %1689
      %v1691 = vsel %vm852, %v1654, 0.0
      %1692 = vadd.xlane.f32.xlu0 %v1691
      %v1693 = vpop.xlane.xlu0 %1692
      %v1694 = vsel %vm852, %v1656, 0.0
      %1695 = vadd.xlane.f32.xlu0 %v1694
      %v1696 = vpop.xlane.xlu0 %1695
      %v1697 = vsel %vm852, %v1658, 0.0
      %1698 = vadd.xlane.f32.xlu0 %v1697
      %v1699 = vpop.xlane.xlu0 %1698
      %v1700 = vsel %vm852, %v1660, 0.0
      %1701 = vadd.xlane.f32.xlu0 %v1700
      %v1702 = vpop.xlane.xlu0 %1701
      %v1703 = vsel %vm852, %v1662, 0.0
      %1704 = vadd.xlane.f32.xlu0 %v1703
      %v1705 = vpop.xlane.xlu0 %1704
      %v1706 = vsel %vm852, %v1664, 0.0
      %1707 = vadd.xlane.f32.xlu0 %v1706
      %v1708 = vpop.xlane.xlu0 %1707
      %v1709 = vsel %vm852, %v1666, 0.0
      %1710 = vadd.xlane.f32.xlu0 %v1709
      %v1711 = vpop.xlane.xlu0 %1710
      %v1712 = vsel %vm852, %v1668, 0.0
      %1713 = vadd.xlane.f32.xlu0 %v1712
      %v1714 = vpop.xlane.xlu0 %1713
      %v1715 = vsel %vm852, %v1670, 0.0
      %1716 = vadd.xlane.f32.xlu0 %v1715
      %v1717 = vpop.xlane.xlu0 %1716
      %v1718 = vsel %vm852, %v1672, 0.0
      %1719 = vadd.xlane.f32.xlu0 %v1718
      %v1720 = vpop.xlane.xlu0 %1719
      %v1721 = vrcp.pop %v1675
      %v1722 = vrcp.pop %v1678
      %v1723 = vrcp.pop %v1681
      %v1724 = vrcp.pop %v1684
      %v1725 = vrcp.pop %v1687
      %v1726 = vrcp.pop %v1690
      %v1727 = vrcp.pop %v1693
      %v1728 = vrcp.pop %v1696
      %v1729 = vrcp.pop %v1699
      %v1730 = vrcp.pop %v1702
      %v1731 = vrcp.pop %v1705
      %v1732 = vrcp.pop %v1708
      %v1733 = vrcp.pop %v1711
      %v1734 = vrcp.pop %v1714
      %v1735 = vrcp.pop %v1717
      %v1736 = vrcp.pop %v1720
      %v1737 = vadd.f32 %v1051, %v855
      %v1738 = vadd.f32 %v1054, %v858
      %v1739 = vadd.f32 %v1057, %v861
      %v1740 = vadd.f32 %v1060, %v864
      %v1741 = vadd.f32 %v1063, %v867
      %v1742 = vadd.f32 %v1066, %v870
      %v1743 = vadd.f32 %v1069, %v873
      %v1744 = vadd.f32 %v1072, %v876
      %v1745 = vadd.f32 %v1075, %v879
      %v1746 = vadd.f32 %v1078, %v882
      %v1747 = vadd.f32 %v1081, %v885
      %v1748 = vadd.f32 %v1084, %v888
      %v1749 = vadd.f32 %v1087, %v891
      %v1750 = vadd.f32 %v1090, %v894
      %v1751 = vadd.f32 %v1093, %v897
      %v1752 = vadd.f32 %v1096, %v900
      %v1753 = vsub.f32 %v1737, %v1579
      %v1754 = vsub.f32 %v1738, %v1582
      %v1755 = vsub.f32 %v1739, %v1585
      %v1756 = vsub.f32 %v1740, %v1588
      %v1757 = vsub.f32 %v1741, %v1591
      %v1758 = vsub.f32 %v1742, %v1594
      %v1759 = vsub.f32 %v1743, %v1597
      %v1760 = vsub.f32 %v1744, %v1600
      %v1761 = vsub.f32 %v1745, %v1603
      %v1762 = vsub.f32 %v1746, %v1606
      %v1763 = vsub.f32 %v1747, %v1609
      %v1764 = vsub.f32 %v1748, %v1612
      %v1765 = vsub.f32 %v1749, %v1615
      %v1766 = vsub.f32 %v1750, %v1618
      %v1767 = vsub.f32 %v1751, %v1621
      %v1768 = vsub.f32 %v1752, %v1624
      %v1769 = vmul.f32 %v1753, 1.442695
      %v1770 = vpow.pop %v1769
      %v1771 = vmul.f32 %v1754, 1.442695
      %v1772 = vpow.pop %v1771
      %v1773 = vmul.f32 %v1755, 1.442695
      %v1774 = vpow.pop %v1773
      %v1775 = vmul.f32 %v1756, 1.442695
      %v1776 = vpow.pop %v1775
      %v1777 = vmul.f32 %v1757, 1.442695
      %v1778 = vpow.pop %v1777
      %v1779 = vmul.f32 %v1758, 1.442695
      %v1780 = vpow.pop %v1779
      %v1781 = vmul.f32 %v1759, 1.442695
      %v1782 = vpow.pop %v1781
      %v1783 = vmul.f32 %v1760, 1.442695
      %v1784 = vpow.pop %v1783
      %v1785 = vmul.f32 %v1761, 1.442695
      %v1786 = vpow.pop %v1785
      %v1787 = vmul.f32 %v1762, 1.442695
      %v1788 = vpow.pop %v1787
      %v1789 = vmul.f32 %v1763, 1.442695
      %v1790 = vpow.pop %v1789
      %v1791 = vmul.f32 %v1764, 1.442695
      %v1792 = vpow.pop %v1791
      %v1793 = vmul.f32 %v1765, 1.442695
      %v1794 = vpow.pop %v1793
      %v1795 = vmul.f32 %v1766, 1.442695
      %v1796 = vpow.pop %v1795
      %v1797 = vmul.f32 %v1767, 1.442695
      %v1798 = vpow.pop %v1797
      %v1799 = vmul.f32 %v1768, 1.442695
      %v1800 = vpow.pop %v1799
      %v1801 = vmul.f32 %v1770, %v1721
      %v1802 = vmul.f32 %v1772, %v1722
      %v1803 = vmul.f32 %v1774, %v1723
      %v1804 = vmul.f32 %v1776, %v1724
      %v1805 = vmul.f32 %v1778, %v1725
      %v1806 = vmul.f32 %v1780, %v1726
      %v1807 = vmul.f32 %v1782, %v1727
      %v1808 = vmul.f32 %v1784, %v1728
      %v1809 = vmul.f32 %v1786, %v1729
      %v1810 = vmul.f32 %v1788, %v1730
      %v1811 = vmul.f32 %v1790, %v1731
      %v1812 = vmul.f32 %v1792, %v1732
      %v1813 = vmul.f32 %v1794, %v1733
      %v1814 = vmul.f32 %v1796, %v1734
      %v1815 = vmul.f32 %v1798, %v1735
      %v1816 = vmul.f32 %v1800, %v1736
      %1817 = vrot.lane.b32.xlu0 %v765, 96
      %v1818 = vpop.permute.xlu0 %1817
      %v1821 = vsel %vm852, %v1642, 0
      %1823 = vmatpush.msra.mxu0 0.0
      %1824 = vmatpush.msra.mxu0 0.0
      %1825 = vmatpush.msra.mxu0 0.0
      %1826 = vmatpush.msra.mxu0 0.0
      %1827 = vmatpush.msra.mxu0 0.0
      %1828 = vmatpush.msra.mxu0 0.0
      %1829 = vmatpush.msra.mxu0 0.0
      %1830 = vmatpush.msra.mxu0 0.0
      %1831 = vmatpush.msra.mxu0 0.0
      %1832 = vmatpush.msra.mxu0 0.0
      %1833 = vmatpush.msra.mxu0 0.0
      %1834 = vmatpush.msra.mxu0 0.0
      %1835 = vmatpush.msra.mxu0 0.0
      %1836 = vmatpush.msra.mxu0 0.0
      %1837 = vmatpush.msra.mxu0 0.0
      %1838 = vmatpush.msra.mxu0 %v1818
      %1839 = vmatmul.f32.gmra.mxu0 %v1821
      %v1840 = vpop.f32.mrf.mxu0
      %v1841 = vadd.f32 0.0, %v1840
      %1842 = vdwg.mxu0
      %1843 = vrot.lane.b32.xlu0 %v766, 96
      %v1844 = vpop.permute.xlu0 %1843
      %v1847 = vsel %vm852, %v1644, 0
      %1849 = vmatpush.msra.mxu0 0.0
      %1850 = vmatpush.msra.mxu0 0.0
      %1851 = vmatpush.msra.mxu0 0.0
      %1852 = vmatpush.msra.mxu0 0.0
      %1853 = vmatpush.msra.mxu0 0.0
      %1854 = vmatpush.msra.mxu0 0.0
      %1855 = vmatpush.msra.mxu0 0.0
      %1856 = vmatpush.msra.mxu0 0.0
      %1857 = vmatpush.msra.mxu0 0.0
      %1858 = vmatpush.msra.mxu0 0.0
      %1859 = vmatpush.msra.mxu0 0.0
      %1860 = vmatpush.msra.mxu0 0.0
      %1861 = vmatpush.msra.mxu0 0.0
      %1862 = vmatpush.msra.mxu0 0.0
      %1863 = vmatpush.msra.mxu0 0.0
      %1864 = vmatpush.msra.mxu0 %v1844
      %1865 = vmatmul.f32.gmra.mxu0 %v1847
      %v1866 = vpop.f32.mrf.mxu0
      %v1867 = vadd.f32 0.0, %v1866
      %1868 = vdwg.mxu0
      %1869 = vrot.lane.b32.xlu0 %v767, 96
      %v1870 = vpop.permute.xlu0 %1869
      %v1873 = vsel %vm852, %v1646, 0
      %1875 = vmatpush.msra.mxu0 0.0
      %1876 = vmatpush.msra.mxu0 0.0
      %1877 = vmatpush.msra.mxu0 0.0
      %1878 = vmatpush.msra.mxu0 0.0
      %1879 = vmatpush.msra.mxu0 0.0
      %1880 = vmatpush.msra.mxu0 0.0
      %1881 = vmatpush.msra.mxu0 0.0
      %1882 = vmatpush.msra.mxu0 0.0
      %1883 = vmatpush.msra.mxu0 0.0
      %1884 = vmatpush.msra.mxu0 0.0
      %1885 = vmatpush.msra.mxu0 0.0
      %1886 = vmatpush.msra.mxu0 0.0
      %1887 = vmatpush.msra.mxu0 0.0
      %1888 = vmatpush.msra.mxu0 0.0
      %1889 = vmatpush.msra.mxu0 0.0
      %1890 = vmatpush.msra.mxu0 %v1870
      %1891 = vmatmul.f32.gmra.mxu0 %v1873
      %v1892 = vpop.f32.mrf.mxu0
      %v1893 = vadd.f32 0.0, %v1892
      %1894 = vdwg.mxu0
      %1895 = vrot.lane.b32.xlu0 %v768, 96
      %v1896 = vpop.permute.xlu0 %1895
      %v1899 = vsel %vm852, %v1648, 0
      %1901 = vmatpush.msra.mxu0 0.0
      %1902 = vmatpush.msra.mxu0 0.0
      %1903 = vmatpush.msra.mxu0 0.0
      %1904 = vmatpush.msra.mxu0 0.0
      %1905 = vmatpush.msra.mxu0 0.0
      %1906 = vmatpush.msra.mxu0 0.0
      %1907 = vmatpush.msra.mxu0 0.0
      %1908 = vmatpush.msra.mxu0 0.0
      %1909 = vmatpush.msra.mxu0 0.0
      %1910 = vmatpush.msra.mxu0 0.0
      %1911 = vmatpush.msra.mxu0 0.0
      %1912 = vmatpush.msra.mxu0 0.0
      %1913 = vmatpush.msra.mxu0 0.0
      %1914 = vmatpush.msra.mxu0 0.0
      %1915 = vmatpush.msra.mxu0 0.0
      %1916 = vmatpush.msra.mxu0 %v1896
      %1917 = vmatmul.f32.gmra.mxu0 %v1899
      %v1918 = vpop.f32.mrf.mxu0
      %v1919 = vadd.f32 0.0, %v1918
      %1920 = vdwg.mxu0
      %1921 = vrot.lane.b32.xlu0 %v769, 96
      %v1922 = vpop.permute.xlu0 %1921
      %v1925 = vsel %vm852, %v1650, 0
      %1927 = vmatpush.msra.mxu0 0.0
      %1928 = vmatpush.msra.mxu0 0.0
      %1929 = vmatpush.msra.mxu0 0.0
      %1930 = vmatpush.msra.mxu0 0.0
      %1931 = vmatpush.msra.mxu0 0.0
      %1932 = vmatpush.msra.mxu0 0.0
      %1933 = vmatpush.msra.mxu0 0.0
      %1934 = vmatpush.msra.mxu0 0.0
      %1935 = vmatpush.msra.mxu0 0.0
      %1936 = vmatpush.msra.mxu0 0.0
      %1937 = vmatpush.msra.mxu0 0.0
      %1938 = vmatpush.msra.mxu0 0.0
      %1939 = vmatpush.msra.mxu0 0.0
      %1940 = vmatpush.msra.mxu0 0.0
      %1941 = vmatpush.msra.mxu0 0.0
      %1942 = vmatpush.msra.mxu0 %v1922
      %1943 = vmatmul.f32.gmra.mxu0 %v1925
      %v1944 = vpop.f32.mrf.mxu0
      %v1945 = vadd.f32 0.0, %v1944
      %1946 = vdwg.mxu0
      %1947 = vrot.lane.b32.xlu0 %v770, 96
      %v1948 = vpop.permute.xlu0 %1947
      %v1951 = vsel %vm852, %v1652, 0
      %1953 = vmatpush.msra.mxu0 0.0
      %1954 = vmatpush.msra.mxu0 0.0
      %1955 = vmatpush.msra.mxu0 0.0
      %1956 = vmatpush.msra.mxu0 0.0
      %1957 = vmatpush.msra.mxu0 0.0
      %1958 = vmatpush.msra.mxu0 0.0
      %1959 = vmatpush.msra.mxu0 0.0
      %1960 = vmatpush.msra.mxu0 0.0
      %1961 = vmatpush.msra.mxu0 0.0
      %1962 = vmatpush.msra.mxu0 0.0
      %1963 = vmatpush.msra.mxu0 0.0
      %1964 = vmatpush.msra.mxu0 0.0
      %1965 = vmatpush.msra.mxu0 0.0
      %1966 = vmatpush.msra.mxu0 0.0
      %1967 = vmatpush.msra.mxu0 0.0
      %1968 = vmatpush.msra.mxu0 %v1948
      %1969 = vmatmul.f32.gmra.mxu0 %v1951
      %v1970 = vpop.f32.mrf.mxu0
      %v1971 = vadd.f32 0.0, %v1970
      %1972 = vdwg.mxu0
      %1973 = vrot.lane.b32.xlu0 %v771, 96
      %v1974 = vpop.permute.xlu0 %1973
      %v1977 = vsel %vm852, %v1654, 0
      %1979 = vmatpush.msra.mxu0 0.0
      %1980 = vmatpush.msra.mxu0 0.0
      %1981 = vmatpush.msra.mxu0 0.0
      %1982 = vmatpush.msra.mxu0 0.0
      %1983 = vmatpush.msra.mxu0 0.0
      %1984 = vmatpush.msra.mxu0 0.0
      %1985 = vmatpush.msra.mxu0 0.0
      %1986 = vmatpush.msra.mxu0 0.0
      %1987 = vmatpush.msra.mxu0 0.0
      %1988 = vmatpush.msra.mxu0 0.0
      %1989 = vmatpush.msra.mxu0 0.0
      %1990 = vmatpush.msra.mxu0 0.0
      %1991 = vmatpush.msra.mxu0 0.0
      %1992 = vmatpush.msra.mxu0 0.0
      %1993 = vmatpush.msra.mxu0 0.0
      %1994 = vmatpush.msra.mxu0 %v1974
      %1995 = vmatmul.f32.gmra.mxu0 %v1977
      %v1996 = vpop.f32.mrf.mxu0
      %v1997 = vadd.f32 0.0, %v1996
      %1998 = vdwg.mxu0
      %1999 = vrot.lane.b32.xlu0 %v772, 96
      %v2000 = vpop.permute.xlu0 %1999
      %v2003 = vsel %vm852, %v1656, 0
      %2005 = vmatpush.msra.mxu0 0.0
      %2006 = vmatpush.msra.mxu0 0.0
      %2007 = vmatpush.msra.mxu0 0.0
      %2008 = vmatpush.msra.mxu0 0.0
      %2009 = vmatpush.msra.mxu0 0.0
      %2010 = vmatpush.msra.mxu0 0.0
      %2011 = vmatpush.msra.mxu0 0.0
      %2012 = vmatpush.msra.mxu0 0.0
      %2013 = vmatpush.msra.mxu0 0.0
      %2014 = vmatpush.msra.mxu0 0.0
      %2015 = vmatpush.msra.mxu0 0.0
      %2016 = vmatpush.msra.mxu0 0.0
      %2017 = vmatpush.msra.mxu0 0.0
      %2018 = vmatpush.msra.mxu0 0.0
      %2019 = vmatpush.msra.mxu0 0.0
      %2020 = vmatpush.msra.mxu0 %v2000
      %2021 = vmatmul.f32.gmra.mxu0 %v2003
      %v2022 = vpop.f32.mrf.mxu0
      %v2023 = vadd.f32 0.0, %v2022
      %2024 = vdwg.mxu0
      %2025 = vrot.lane.b32.xlu0 %v773, 96
      %v2026 = vpop.permute.xlu0 %2025
      %v2029 = vsel %vm852, %v1658, 0
      %2031 = vmatpush.msra.mxu0 0.0
      %2032 = vmatpush.msra.mxu0 0.0
      %2033 = vmatpush.msra.mxu0 0.0
      %2034 = vmatpush.msra.mxu0 0.0
      %2035 = vmatpush.msra.mxu0 0.0
      %2036 = vmatpush.msra.mxu0 0.0
      %2037 = vmatpush.msra.mxu0 0.0
      %2038 = vmatpush.msra.mxu0 0.0
      %2039 = vmatpush.msra.mxu0 0.0
      %2040 = vmatpush.msra.mxu0 0.0
      %2041 = vmatpush.msra.mxu0 0.0
      %2042 = vmatpush.msra.mxu0 0.0
      %2043 = vmatpush.msra.mxu0 0.0
      %2044 = vmatpush.msra.mxu0 0.0
      %2045 = vmatpush.msra.mxu0 0.0
      %2046 = vmatpush.msra.mxu0 %v2026
      %2047 = vmatmul.f32.gmra.mxu0 %v2029
      %v2048 = vpop.f32.mrf.mxu0
      %v2049 = vadd.f32 0.0, %v2048
      %2050 = vdwg.mxu0
      %2051 = vrot.lane.b32.xlu0 %v774, 96
      %v2052 = vpop.permute.xlu0 %2051
      %v2055 = vsel %vm852, %v1660, 0
      %2057 = vmatpush.msra.mxu0 0.0
      %2058 = vmatpush.msra.mxu0 0.0
      %2059 = vmatpush.msra.mxu0 0.0
      %2060 = vmatpush.msra.mxu0 0.0
      %2061 = vmatpush.msra.mxu0 0.0
      %2062 = vmatpush.msra.mxu0 0.0
      %2063 = vmatpush.msra.mxu0 0.0
      %2064 = vmatpush.msra.mxu0 0.0
      %2065 = vmatpush.msra.mxu0 0.0
      %2066 = vmatpush.msra.mxu0 0.0
      %2067 = vmatpush.msra.mxu0 0.0
      %2068 = vmatpush.msra.mxu0 0.0
      %2069 = vmatpush.msra.mxu0 0.0
      %2070 = vmatpush.msra.mxu0 0.0
      %2071 = vmatpush.msra.mxu0 0.0
      %2072 = vmatpush.msra.mxu0 %v2052
      %2073 = vmatmul.f32.gmra.mxu0 %v2055
      %v2074 = vpop.f32.mrf.mxu0
      %v2075 = vadd.f32 0.0, %v2074
      %2076 = vdwg.mxu0
      %2077 = vrot.lane.b32.xlu0 %v775, 96
      %v2078 = vpop.permute.xlu0 %2077
      %v2081 = vsel %vm852, %v1662, 0
      %2083 = vmatpush.msra.mxu0 0.0
      %2084 = vmatpush.msra.mxu0 0.0
      %2085 = vmatpush.msra.mxu0 0.0
      %2086 = vmatpush.msra.mxu0 0.0
      %2087 = vmatpush.msra.mxu0 0.0
      %2088 = vmatpush.msra.mxu0 0.0
      %2089 = vmatpush.msra.mxu0 0.0
      %2090 = vmatpush.msra.mxu0 0.0
      %2091 = vmatpush.msra.mxu0 0.0
      %2092 = vmatpush.msra.mxu0 0.0
      %2093 = vmatpush.msra.mxu0 0.0
      %2094 = vmatpush.msra.mxu0 0.0
      %2095 = vmatpush.msra.mxu0 0.0
      %2096 = vmatpush.msra.mxu0 0.0
      %2097 = vmatpush.msra.mxu0 0.0
      %2098 = vmatpush.msra.mxu0 %v2078
      %2099 = vmatmul.f32.gmra.mxu0 %v2081
      %v2100 = vpop.f32.mrf.mxu0
      %v2101 = vadd.f32 0.0, %v2100
      %2102 = vdwg.mxu0
      %2103 = vrot.lane.b32.xlu0 %v776, 96
      %v2104 = vpop.permute.xlu0 %2103
      %v2107 = vsel %vm852, %v1664, 0
      %2109 = vmatpush.msra.mxu0 0.0
      %2110 = vmatpush.msra.mxu0 0.0
      %2111 = vmatpush.msra.mxu0 0.0
      %2112 = vmatpush.msra.mxu0 0.0
      %2113 = vmatpush.msra.mxu0 0.0
      %2114 = vmatpush.msra.mxu0 0.0
      %2115 = vmatpush.msra.mxu0 0.0
      %2116 = vmatpush.msra.mxu0 0.0
      %2117 = vmatpush.msra.mxu0 0.0
      %2118 = vmatpush.msra.mxu0 0.0
      %2119 = vmatpush.msra.mxu0 0.0
      %2120 = vmatpush.msra.mxu0 0.0
      %2121 = vmatpush.msra.mxu0 0.0
      %2122 = vmatpush.msra.mxu0 0.0
      %2123 = vmatpush.msra.mxu0 0.0
      %2124 = vmatpush.msra.mxu0 %v2104
      %2125 = vmatmul.f32.gmra.mxu0 %v2107
      %v2126 = vpop.f32.mrf.mxu0
      %v2127 = vadd.f32 0.0, %v2126
      %2128 = vdwg.mxu0
      %2129 = vrot.lane.b32.xlu0 %v777, 96
      %v2130 = vpop.permute.xlu0 %2129
      %v2133 = vsel %vm852, %v1666, 0
      %2135 = vmatpush.msra.mxu0 0.0
      %2136 = vmatpush.msra.mxu0 0.0
      %2137 = vmatpush.msra.mxu0 0.0
      %2138 = vmatpush.msra.mxu0 0.0
      %2139 = vmatpush.msra.mxu0 0.0
      %2140 = vmatpush.msra.mxu0 0.0
      %2141 = vmatpush.msra.mxu0 0.0
      %2142 = vmatpush.msra.mxu0 0.0
      %2143 = vmatpush.msra.mxu0 0.0
      %2144 = vmatpush.msra.mxu0 0.0
      %2145 = vmatpush.msra.mxu0 0.0
      %2146 = vmatpush.msra.mxu0 0.0
      %2147 = vmatpush.msra.mxu0 0.0
      %2148 = vmatpush.msra.mxu0 0.0
      %2149 = vmatpush.msra.mxu0 0.0
      %2150 = vmatpush.msra.mxu0 %v2130
      %2151 = vmatmul.f32.gmra.mxu0 %v2133
      %v2152 = vpop.f32.mrf.mxu0
      %v2153 = vadd.f32 0.0, %v2152
      %2154 = vdwg.mxu0
      %2155 = vrot.lane.b32.xlu0 %v778, 96
      %v2156 = vpop.permute.xlu0 %2155
      %v2159 = vsel %vm852, %v1668, 0
      %2161 = vmatpush.msra.mxu0 0.0
      %2162 = vmatpush.msra.mxu0 0.0
      %2163 = vmatpush.msra.mxu0 0.0
      %2164 = vmatpush.msra.mxu0 0.0
      %2165 = vmatpush.msra.mxu0 0.0
      %2166 = vmatpush.msra.mxu0 0.0
      %2167 = vmatpush.msra.mxu0 0.0
      %2168 = vmatpush.msra.mxu0 0.0
      %2169 = vmatpush.msra.mxu0 0.0
      %2170 = vmatpush.msra.mxu0 0.0
      %2171 = vmatpush.msra.mxu0 0.0
      %2172 = vmatpush.msra.mxu0 0.0
      %2173 = vmatpush.msra.mxu0 0.0
      %2174 = vmatpush.msra.mxu0 0.0
      %2175 = vmatpush.msra.mxu0 0.0
      %2176 = vmatpush.msra.mxu0 %v2156
      %2177 = vmatmul.f32.gmra.mxu0 %v2159
      %v2178 = vpop.f32.mrf.mxu0
      %v2179 = vadd.f32 0.0, %v2178
      %2180 = vdwg.mxu0
      %2181 = vrot.lane.b32.xlu0 %v779, 96
      %v2182 = vpop.permute.xlu0 %2181
      %v2185 = vsel %vm852, %v1670, 0
      %2187 = vmatpush.msra.mxu0 0.0
      %2188 = vmatpush.msra.mxu0 0.0
      %2189 = vmatpush.msra.mxu0 0.0
      %2190 = vmatpush.msra.mxu0 0.0
      %2191 = vmatpush.msra.mxu0 0.0
      %2192 = vmatpush.msra.mxu0 0.0
      %2193 = vmatpush.msra.mxu0 0.0
      %2194 = vmatpush.msra.mxu0 0.0
      %2195 = vmatpush.msra.mxu0 0.0
      %2196 = vmatpush.msra.mxu0 0.0
      %2197 = vmatpush.msra.mxu0 0.0
      %2198 = vmatpush.msra.mxu0 0.0
      %2199 = vmatpush.msra.mxu0 0.0
      %2200 = vmatpush.msra.mxu0 0.0
      %2201 = vmatpush.msra.mxu0 0.0
      %2202 = vmatpush.msra.mxu0 %v2182
      %2203 = vmatmul.f32.gmra.mxu0 %v2185
      %v2204 = vpop.f32.mrf.mxu0
      %v2205 = vadd.f32 0.0, %v2204
      %2206 = vdwg.mxu0
      %2207 = vrot.lane.b32.xlu0 %v780, 96
      %v2208 = vpop.permute.xlu0 %2207
      %v2211 = vsel %vm852, %v1672, 0
      %2213 = vmatpush.msra.mxu0 0.0
      %2214 = vmatpush.msra.mxu0 0.0
      %2215 = vmatpush.msra.mxu0 0.0
      %2216 = vmatpush.msra.mxu0 0.0
      %2217 = vmatpush.msra.mxu0 0.0
      %2218 = vmatpush.msra.mxu0 0.0
      %2219 = vmatpush.msra.mxu0 0.0
      %2220 = vmatpush.msra.mxu0 0.0
      %2221 = vmatpush.msra.mxu0 0.0
      %2222 = vmatpush.msra.mxu0 0.0
      %2223 = vmatpush.msra.mxu0 0.0
      %2224 = vmatpush.msra.mxu0 0.0
      %2225 = vmatpush.msra.mxu0 0.0
      %2226 = vmatpush.msra.mxu0 0.0
      %2227 = vmatpush.msra.mxu0 0.0
      %2228 = vmatpush.msra.mxu0 %v2208
      %2229 = vmatmul.f32.gmra.mxu0 %v2211
      %v2230 = vpop.f32.mrf.mxu0
      %v2231 = vadd.f32 0.0, %v2230
      %2232 = vdwg.mxu0
      %v2233 = vmul.f32 %v1841, %v1721
      %v2234 = vmul.f32 %v1867, %v1722
      %v2235 = vmul.f32 %v1893, %v1723
      %v2236 = vmul.f32 %v1919, %v1724
      %v2237 = vmul.f32 %v1945, %v1725
      %v2238 = vmul.f32 %v1971, %v1726
      %v2239 = vmul.f32 %v1997, %v1727
      %v2240 = vmul.f32 %v2023, %v1728
      %v2241 = vmul.f32 %v2049, %v1729
      %v2242 = vmul.f32 %v2075, %v1730
      %v2243 = vmul.f32 %v2101, %v1731
      %v2244 = vmul.f32 %v2127, %v1732
      %v2245 = vmul.f32 %v2153, %v1733
      %v2246 = vmul.f32 %v2179, %v1734
      %v2247 = vmul.f32 %v2205, %v1735
      %v2248 = vmul.f32 %v2231, %v1736
      %v2249 = vsub.f32 %v601, %v1818
      %v2250 = vsub.f32 %v604, %v1844
      %v2251 = vsub.f32 %v607, %v1870
      %v2252 = vsub.f32 %v610, %v1896
      %v2253 = vsub.f32 %v613, %v1922
      %v2254 = vsub.f32 %v616, %v1948
      %v2255 = vsub.f32 %v619, %v1974
      %v2256 = vsub.f32 %v622, %v2000
      %v2257 = vsub.f32 %v625, %v2026
      %v2258 = vsub.f32 %v628, %v2052
      %v2259 = vsub.f32 %v631, %v2078
      %v2260 = vsub.f32 %v634, %v2104
      %v2261 = vsub.f32 %v637, %v2130
      %v2262 = vsub.f32 %v640, %v2156
      %v2263 = vsub.f32 %v643, %v2182
      %v2264 = vsub.f32 %v646, %v2208
      %v2265 = vmul.f32 %v1801, %v2249
      %v2266 = vmul.f32 %v1802, %v2250
      %v2267 = vmul.f32 %v1803, %v2251
      %v2268 = vmul.f32 %v1804, %v2252
      %v2269 = vmul.f32 %v1805, %v2253
      %v2270 = vmul.f32 %v1806, %v2254
      %v2271 = vmul.f32 %v1807, %v2255
      %v2272 = vmul.f32 %v1808, %v2256
      %v2273 = vmul.f32 %v1809, %v2257
      %v2274 = vmul.f32 %v1810, %v2258
      %v2275 = vmul.f32 %v1811, %v2259
      %v2276 = vmul.f32 %v1812, %v2260
      %v2277 = vmul.f32 %v1813, %v2261
      %v2278 = vmul.f32 %v1814, %v2262
      %v2279 = vmul.f32 %v1815, %v2263
      %v2280 = vmul.f32 %v1816, %v2264
      %v2281 = vadd.f32 %v2233, %v2265
      %v2282 = vadd.f32 %v2234, %v2266
      %v2283 = vadd.f32 %v2235, %v2267
      %v2284 = vadd.f32 %v2236, %v2268
      %v2285 = vadd.f32 %v2237, %v2269
      %v2286 = vadd.f32 %v2238, %v2270
      %v2287 = vadd.f32 %v2239, %v2271
      %v2288 = vadd.f32 %v2240, %v2272
      %v2289 = vadd.f32 %v2241, %v2273
      %v2290 = vadd.f32 %v2242, %v2274
      %v2291 = vadd.f32 %v2243, %v2275
      %v2292 = vadd.f32 %v2244, %v2276
      %v2293 = vadd.f32 %v2245, %v2277
      %v2294 = vadd.f32 %v2246, %v2278
      %v2295 = vadd.f32 %v2247, %v2279
      %v2296 = vadd.f32 %v2248, %v2280
      %2297 = vrot.lane.b32.xlu0 %v969, 56
      %v2298 = vpop.permute.xlu0 %2297
      %2299 = vrot.lane.b32.xlu0 %v970, 56
      %v2300 = vpop.permute.xlu0 %2299
      %2301 = vrot.lane.b32.xlu0 %v971, 56
      %v2302 = vpop.permute.xlu0 %2301
      %2303 = vrot.lane.b32.xlu0 %v972, 56
      %v2304 = vpop.permute.xlu0 %2303
      %2305 = vrot.lane.b32.xlu0 %v973, 56
      %v2306 = vpop.permute.xlu0 %2305
      %2307 = vrot.lane.b32.xlu0 %v974, 56
      %v2308 = vpop.permute.xlu0 %2307
      %2309 = vrot.lane.b32.xlu0 %v975, 56
      %v2310 = vpop.permute.xlu0 %2309
      %2311 = vrot.lane.b32.xlu0 %v976, 56
      %v2312 = vpop.permute.xlu0 %2311
      %2313 = vrot.lane.b32.xlu0 %v977, 56
      %v2314 = vpop.permute.xlu0 %2313
      %2315 = vrot.lane.b32.xlu0 %v978, 56
      %v2316 = vpop.permute.xlu0 %2315
      %2317 = vrot.lane.b32.xlu0 %v979, 56
      %v2318 = vpop.permute.xlu0 %2317
      %2319 = vrot.lane.b32.xlu0 %v980, 56
      %v2320 = vpop.permute.xlu0 %2319
      %2321 = vrot.lane.b32.xlu0 %v981, 56
      %v2322 = vpop.permute.xlu0 %2321
      %2323 = vrot.lane.b32.xlu0 %v982, 56
      %v2324 = vpop.permute.xlu0 %2323
      %2325 = vrot.lane.b32.xlu0 %v983, 56
      %v2326 = vpop.permute.xlu0 %2325
      %2327 = vrot.lane.b32.xlu0 %v984, 56
      %v2328 = vpop.permute.xlu0 %2327
      %v2345 = vsel %vm852, %v2298, 0.0
      %2346 = vadd.xlane.f32.xlu0 %v2345
      %v2347 = vpop.xlane.xlu0 %2346
      %v2348 = vsel %vm852, %v2300, 0.0
      %2349 = vadd.xlane.f32.xlu0 %v2348
      %v2350 = vpop.xlane.xlu0 %2349
      %v2351 = vsel %vm852, %v2302, 0.0
      %2352 = vadd.xlane.f32.xlu0 %v2351
      %v2353 = vpop.xlane.xlu0 %2352
      %v2354 = vsel %vm852, %v2304, 0.0
      %2355 = vadd.xlane.f32.xlu0 %v2354
      %v2356 = vpop.xlane.xlu0 %2355
      %v2357 = vsel %vm852, %v2306, 0.0
      %2358 = vadd.xlane.f32.xlu0 %v2357
      %v2359 = vpop.xlane.xlu0 %2358
      %v2360 = vsel %vm852, %v2308, 0.0
      %2361 = vadd.xlane.f32.xlu0 %v2360
      %v2362 = vpop.xlane.xlu0 %2361
      %v2363 = vsel %vm852, %v2310, 0.0
      %2364 = vadd.xlane.f32.xlu0 %v2363
      %v2365 = vpop.xlane.xlu0 %2364
      %v2366 = vsel %vm852, %v2312, 0.0
      %2367 = vadd.xlane.f32.xlu0 %v2366
      %v2368 = vpop.xlane.xlu0 %2367
      %v2369 = vsel %vm852, %v2314, 0.0
      %2370 = vadd.xlane.f32.xlu0 %v2369
      %v2371 = vpop.xlane.xlu0 %2370
      %v2372 = vsel %vm852, %v2316, 0.0
      %2373 = vadd.xlane.f32.xlu0 %v2372
      %v2374 = vpop.xlane.xlu0 %2373
      %v2375 = vsel %vm852, %v2318, 0.0
      %2376 = vadd.xlane.f32.xlu0 %v2375
      %v2377 = vpop.xlane.xlu0 %2376
      %v2378 = vsel %vm852, %v2320, 0.0
      %2379 = vadd.xlane.f32.xlu0 %v2378
      %v2380 = vpop.xlane.xlu0 %2379
      %v2381 = vsel %vm852, %v2322, 0.0
      %2382 = vadd.xlane.f32.xlu0 %v2381
      %v2383 = vpop.xlane.xlu0 %2382
      %v2384 = vsel %vm852, %v2324, 0.0
      %2385 = vadd.xlane.f32.xlu0 %v2384
      %v2386 = vpop.xlane.xlu0 %2385
      %v2387 = vsel %vm852, %v2326, 0.0
      %2388 = vadd.xlane.f32.xlu0 %v2387
      %v2389 = vpop.xlane.xlu0 %2388
      %v2390 = vsel %vm852, %v2328, 0.0
      %2391 = vadd.xlane.f32.xlu0 %v2390
      %v2392 = vpop.xlane.xlu0 %2391
      %2393 = vrot.lane.b32.xlu0 %v781, 56
      %v2394 = vpop.permute.xlu0 %2393
      %2395 = vrot.lane.b32.xlu0 %v765, 120
      %v2396 = vpop.permute.xlu0 %2395
      %v2397 = vsel %vm852, %v2394, 0
      %v2399 = vsel %vm852, %v2396, 0
      %2401 = vmatpush.xpose.msra.mxu0 0.0
      %2402 = vmatpush.xpose.msra.mxu0 0.0
      %2403 = vmatpush.xpose.msra.mxu0 0.0
      %2404 = vmatpush.xpose.msra.mxu0 0.0
      %2405 = vmatpush.xpose.msra.mxu0 0.0
      %2406 = vmatpush.xpose.msra.mxu0 0.0
      %2407 = vmatpush.xpose.msra.mxu0 0.0
      %2408 = vmatpush.xpose.msra.mxu0 0.0
      %2409 = vmatpush.xpose.msra.mxu0 0.0
      %2410 = vmatpush.xpose.msra.mxu0 0.0
      %2411 = vmatpush.xpose.msra.mxu0 0.0
      %2412 = vmatpush.xpose.msra.mxu0 0.0
      %2413 = vmatpush.xpose.msra.mxu0 0.0
      %2414 = vmatpush.xpose.msra.mxu0 0.0
      %2415 = vmatpush.xpose.msra.mxu0 0.0
      %2416 = vmatpush.xpose.msra.mxu0 %v2399
      %2417 = vmatmul.f32.gmra.mxu0 %v2397
      %v2418 = vpop.f32.mrf.mxu0
      %v2419 = vadd.f32 0.0, %v2418
      %2420 = vdwg.mxu0
      %2421 = vrot.lane.b32.xlu0 %v782, 56
      %v2422 = vpop.permute.xlu0 %2421
      %2423 = vrot.lane.b32.xlu0 %v766, 120
      %v2424 = vpop.permute.xlu0 %2423
      %v2425 = vsel %vm852, %v2422, 0
      %v2427 = vsel %vm852, %v2424, 0
      %2429 = vmatpush.xpose.msra.mxu0 0.0
      %2430 = vmatpush.xpose.msra.mxu0 0.0
      %2431 = vmatpush.xpose.msra.mxu0 0.0
      %2432 = vmatpush.xpose.msra.mxu0 0.0
      %2433 = vmatpush.xpose.msra.mxu0 0.0
      %2434 = vmatpush.xpose.msra.mxu0 0.0
      %2435 = vmatpush.xpose.msra.mxu0 0.0
      %2436 = vmatpush.xpose.msra.mxu0 0.0
      %2437 = vmatpush.xpose.msra.mxu0 0.0
      %2438 = vmatpush.xpose.msra.mxu0 0.0
      %2439 = vmatpush.xpose.msra.mxu0 0.0
      %2440 = vmatpush.xpose.msra.mxu0 0.0
      %2441 = vmatpush.xpose.msra.mxu0 0.0
      %2442 = vmatpush.xpose.msra.mxu0 0.0
      %2443 = vmatpush.xpose.msra.mxu0 0.0
      %2444 = vmatpush.xpose.msra.mxu0 %v2427
      %2445 = vmatmul.f32.gmra.mxu0 %v2425
      %v2446 = vpop.f32.mrf.mxu0
      %v2447 = vadd.f32 0.0, %v2446
      %2448 = vdwg.mxu0
      %2449 = vrot.lane.b32.xlu0 %v783, 56
      %v2450 = vpop.permute.xlu0 %2449
      %2451 = vrot.lane.b32.xlu0 %v767, 120
      %v2452 = vpop.permute.xlu0 %2451
      %v2453 = vsel %vm852, %v2450, 0
      %v2455 = vsel %vm852, %v2452, 0
      %2457 = vmatpush.xpose.msra.mxu0 0.0
      %2458 = vmatpush.xpose.msra.mxu0 0.0
      %2459 = vmatpush.xpose.msra.mxu0 0.0
      %2460 = vmatpush.xpose.msra.mxu0 0.0
      %2461 = vmatpush.xpose.msra.mxu0 0.0
      %2462 = vmatpush.xpose.msra.mxu0 0.0
      %2463 = vmatpush.xpose.msra.mxu0 0.0
      %2464 = vmatpush.xpose.msra.mxu0 0.0
      %2465 = vmatpush.xpose.msra.mxu0 0.0
      %2466 = vmatpush.xpose.msra.mxu0 0.0
      %2467 = vmatpush.xpose.msra.mxu0 0.0
      %2468 = vmatpush.xpose.msra.mxu0 0.0
      %2469 = vmatpush.xpose.msra.mxu0 0.0
      %2470 = vmatpush.xpose.msra.mxu0 0.0
      %2471 = vmatpush.xpose.msra.mxu0 0.0
      %2472 = vmatpush.xpose.msra.mxu0 %v2455
      %2473 = vmatmul.f32.gmra.mxu0 %v2453
      %v2474 = vpop.f32.mrf.mxu0
      %v2475 = vadd.f32 0.0, %v2474
      %2476 = vdwg.mxu0
      %2477 = vrot.lane.b32.xlu0 %v784, 56
      %v2478 = vpop.permute.xlu0 %2477
      %2479 = vrot.lane.b32.xlu0 %v768, 120
      %v2480 = vpop.permute.xlu0 %2479
      %v2481 = vsel %vm852, %v2478, 0
      %v2483 = vsel %vm852, %v2480, 0
      %2485 = vmatpush.xpose.msra.mxu0 0.0
      %2486 = vmatpush.xpose.msra.mxu0 0.0
      %2487 = vmatpush.xpose.msra.mxu0 0.0
      %2488 = vmatpush.xpose.msra.mxu0 0.0
      %2489 = vmatpush.xpose.msra.mxu0 0.0
      %2490 = vmatpush.xpose.msra.mxu0 0.0
      %2491 = vmatpush.xpose.msra.mxu0 0.0
      %2492 = vmatpush.xpose.msra.mxu0 0.0
      %2493 = vmatpush.xpose.msra.mxu0 0.0
      %2494 = vmatpush.xpose.msra.mxu0 0.0
      %2495 = vmatpush.xpose.msra.mxu0 0.0
      %2496 = vmatpush.xpose.msra.mxu0 0.0
      %2497 = vmatpush.xpose.msra.mxu0 0.0
      %2498 = vmatpush.xpose.msra.mxu0 0.0
      %2499 = vmatpush.xpose.msra.mxu0 0.0
      %2500 = vmatpush.xpose.msra.mxu0 %v2483
      %2501 = vmatmul.f32.gmra.mxu0 %v2481
      %v2502 = vpop.f32.mrf.mxu0
      %v2503 = vadd.f32 0.0, %v2502
      %2504 = vdwg.mxu0
      %2505 = vrot.lane.b32.xlu0 %v785, 56
      %v2506 = vpop.permute.xlu0 %2505
      %2507 = vrot.lane.b32.xlu0 %v769, 120
      %v2508 = vpop.permute.xlu0 %2507
      %v2509 = vsel %vm852, %v2506, 0
      %v2511 = vsel %vm852, %v2508, 0
      %2513 = vmatpush.xpose.msra.mxu0 0.0
      %2514 = vmatpush.xpose.msra.mxu0 0.0
      %2515 = vmatpush.xpose.msra.mxu0 0.0
      %2516 = vmatpush.xpose.msra.mxu0 0.0
      %2517 = vmatpush.xpose.msra.mxu0 0.0
      %2518 = vmatpush.xpose.msra.mxu0 0.0
      %2519 = vmatpush.xpose.msra.mxu0 0.0
      %2520 = vmatpush.xpose.msra.mxu0 0.0
      %2521 = vmatpush.xpose.msra.mxu0 0.0
      %2522 = vmatpush.xpose.msra.mxu0 0.0
      %2523 = vmatpush.xpose.msra.mxu0 0.0
      %2524 = vmatpush.xpose.msra.mxu0 0.0
      %2525 = vmatpush.xpose.msra.mxu0 0.0
      %2526 = vmatpush.xpose.msra.mxu0 0.0
      %2527 = vmatpush.xpose.msra.mxu0 0.0
      %2528 = vmatpush.xpose.msra.mxu0 %v2511
      %2529 = vmatmul.f32.gmra.mxu0 %v2509
      %v2530 = vpop.f32.mrf.mxu0
      %v2531 = vadd.f32 0.0, %v2530
      %2532 = vdwg.mxu0
      %2533 = vrot.lane.b32.xlu0 %v786, 56
      %v2534 = vpop.permute.xlu0 %2533
      %2535 = vrot.lane.b32.xlu0 %v770, 120
      %v2536 = vpop.permute.xlu0 %2535
      %v2537 = vsel %vm852, %v2534, 0
      %v2539 = vsel %vm852, %v2536, 0
      %2541 = vmatpush.xpose.msra.mxu0 0.0
      %2542 = vmatpush.xpose.msra.mxu0 0.0
      %2543 = vmatpush.xpose.msra.mxu0 0.0
      %2544 = vmatpush.xpose.msra.mxu0 0.0
      %2545 = vmatpush.xpose.msra.mxu0 0.0
      %2546 = vmatpush.xpose.msra.mxu0 0.0
      %2547 = vmatpush.xpose.msra.mxu0 0.0
      %2548 = vmatpush.xpose.msra.mxu0 0.0
      %2549 = vmatpush.xpose.msra.mxu0 0.0
      %2550 = vmatpush.xpose.msra.mxu0 0.0
      %2551 = vmatpush.xpose.msra.mxu0 0.0
      %2552 = vmatpush.xpose.msra.mxu0 0.0
      %2553 = vmatpush.xpose.msra.mxu0 0.0
      %2554 = vmatpush.xpose.msra.mxu0 0.0
      %2555 = vmatpush.xpose.msra.mxu0 0.0
      %2556 = vmatpush.xpose.msra.mxu0 %v2539
      %2557 = vmatmul.f32.gmra.mxu0 %v2537
      %v2558 = vpop.f32.mrf.mxu0
      %v2559 = vadd.f32 0.0, %v2558
      %2560 = vdwg.mxu0
      %2561 = vrot.lane.b32.xlu0 %v787, 56
      %v2562 = vpop.permute.xlu0 %2561
      %2563 = vrot.lane.b32.xlu0 %v771, 120
      %v2564 = vpop.permute.xlu0 %2563
      %v2565 = vsel %vm852, %v2562, 0
      %v2567 = vsel %vm852, %v2564, 0
      %2569 = vmatpush.xpose.msra.mxu0 0.0
      %2570 = vmatpush.xpose.msra.mxu0 0.0
      %2571 = vmatpush.xpose.msra.mxu0 0.0
      %2572 = vmatpush.xpose.msra.mxu0 0.0
      %2573 = vmatpush.xpose.msra.mxu0 0.0
      %2574 = vmatpush.xpose.msra.mxu0 0.0
      %2575 = vmatpush.xpose.msra.mxu0 0.0
      %2576 = vmatpush.xpose.msra.mxu0 0.0
      %2577 = vmatpush.xpose.msra.mxu0 0.0
      %2578 = vmatpush.xpose.msra.mxu0 0.0
      %2579 = vmatpush.xpose.msra.mxu0 0.0
      %2580 = vmatpush.xpose.msra.mxu0 0.0
      %2581 = vmatpush.xpose.msra.mxu0 0.0
      %2582 = vmatpush.xpose.msra.mxu0 0.0
      %2583 = vmatpush.xpose.msra.mxu0 0.0
      %2584 = vmatpush.xpose.msra.mxu0 %v2567
      %2585 = vmatmul.f32.gmra.mxu0 %v2565
      %v2586 = vpop.f32.mrf.mxu0
      %v2587 = vadd.f32 0.0, %v2586
      %2588 = vdwg.mxu0
      %2589 = vrot.lane.b32.xlu0 %v788, 56
      %v2590 = vpop.permute.xlu0 %2589
      %2591 = vrot.lane.b32.xlu0 %v772, 120
      %v2592 = vpop.permute.xlu0 %2591
      %v2593 = vsel %vm852, %v2590, 0
      %v2595 = vsel %vm852, %v2592, 0
      %2597 = vmatpush.xpose.msra.mxu0 0.0
      %2598 = vmatpush.xpose.msra.mxu0 0.0
      %2599 = vmatpush.xpose.msra.mxu0 0.0
      %2600 = vmatpush.xpose.msra.mxu0 0.0
      %2601 = vmatpush.xpose.msra.mxu0 0.0
      %2602 = vmatpush.xpose.msra.mxu0 0.0
      %2603 = vmatpush.xpose.msra.mxu0 0.0
      %2604 = vmatpush.xpose.msra.mxu0 0.0
      %2605 = vmatpush.xpose.msra.mxu0 0.0
      %2606 = vmatpush.xpose.msra.mxu0 0.0
      %2607 = vmatpush.xpose.msra.mxu0 0.0
      %2608 = vmatpush.xpose.msra.mxu0 0.0
      %2609 = vmatpush.xpose.msra.mxu0 0.0
      %2610 = vmatpush.xpose.msra.mxu0 0.0
      %2611 = vmatpush.xpose.msra.mxu0 0.0
      %2612 = vmatpush.xpose.msra.mxu0 %v2595
      %2613 = vmatmul.f32.gmra.mxu0 %v2593
      %v2614 = vpop.f32.mrf.mxu0
      %v2615 = vadd.f32 0.0, %v2614
      %2616 = vdwg.mxu0
      %2617 = vrot.lane.b32.xlu0 %v789, 56
      %v2618 = vpop.permute.xlu0 %2617
      %2619 = vrot.lane.b32.xlu0 %v773, 120
      %v2620 = vpop.permute.xlu0 %2619
      %v2621 = vsel %vm852, %v2618, 0
      %v2623 = vsel %vm852, %v2620, 0
      %2625 = vmatpush.xpose.msra.mxu0 0.0
      %2626 = vmatpush.xpose.msra.mxu0 0.0
      %2627 = vmatpush.xpose.msra.mxu0 0.0
      %2628 = vmatpush.xpose.msra.mxu0 0.0
      %2629 = vmatpush.xpose.msra.mxu0 0.0
      %2630 = vmatpush.xpose.msra.mxu0 0.0
      %2631 = vmatpush.xpose.msra.mxu0 0.0
      %2632 = vmatpush.xpose.msra.mxu0 0.0
      %2633 = vmatpush.xpose.msra.mxu0 0.0
      %2634 = vmatpush.xpose.msra.mxu0 0.0
      %2635 = vmatpush.xpose.msra.mxu0 0.0
      %2636 = vmatpush.xpose.msra.mxu0 0.0
      %2637 = vmatpush.xpose.msra.mxu0 0.0
      %2638 = vmatpush.xpose.msra.mxu0 0.0
      %2639 = vmatpush.xpose.msra.mxu0 0.0
      %2640 = vmatpush.xpose.msra.mxu0 %v2623
      %2641 = vmatmul.f32.gmra.mxu0 %v2621
      %v2642 = vpop.f32.mrf.mxu0
      %v2643 = vadd.f32 0.0, %v2642
      %2644 = vdwg.mxu0
      %2645 = vrot.lane.b32.xlu0 %v790, 56
      %v2646 = vpop.permute.xlu0 %2645
      %2647 = vrot.lane.b32.xlu0 %v774, 120
      %v2648 = vpop.permute.xlu0 %2647
      %v2649 = vsel %vm852, %v2646, 0
      %v2651 = vsel %vm852, %v2648, 0
      %2653 = vmatpush.xpose.msra.mxu0 0.0
      %2654 = vmatpush.xpose.msra.mxu0 0.0
      %2655 = vmatpush.xpose.msra.mxu0 0.0
      %2656 = vmatpush.xpose.msra.mxu0 0.0
      %2657 = vmatpush.xpose.msra.mxu0 0.0
      %2658 = vmatpush.xpose.msra.mxu0 0.0
      %2659 = vmatpush.xpose.msra.mxu0 0.0
      %2660 = vmatpush.xpose.msra.mxu0 0.0
      %2661 = vmatpush.xpose.msra.mxu0 0.0
      %2662 = vmatpush.xpose.msra.mxu0 0.0
      %2663 = vmatpush.xpose.msra.mxu0 0.0
      %2664 = vmatpush.xpose.msra.mxu0 0.0
      %2665 = vmatpush.xpose.msra.mxu0 0.0
      %2666 = vmatpush.xpose.msra.mxu0 0.0
      %2667 = vmatpush.xpose.msra.mxu0 0.0
      %2668 = vmatpush.xpose.msra.mxu0 %v2651
      %2669 = vmatmul.f32.gmra.mxu0 %v2649
      %v2670 = vpop.f32.mrf.mxu0
      %v2671 = vadd.f32 0.0, %v2670
      %2672 = vdwg.mxu0
      %2673 = vrot.lane.b32.xlu0 %v791, 56
      %v2674 = vpop.permute.xlu0 %2673
      %2675 = vrot.lane.b32.xlu0 %v775, 120
      %v2676 = vpop.permute.xlu0 %2675
      %v2677 = vsel %vm852, %v2674, 0
      %v2679 = vsel %vm852, %v2676, 0
      %2681 = vmatpush.xpose.msra.mxu0 0.0
      %2682 = vmatpush.xpose.msra.mxu0 0.0
      %2683 = vmatpush.xpose.msra.mxu0 0.0
      %2684 = vmatpush.xpose.msra.mxu0 0.0
      %2685 = vmatpush.xpose.msra.mxu0 0.0
      %2686 = vmatpush.xpose.msra.mxu0 0.0
      %2687 = vmatpush.xpose.msra.mxu0 0.0
      %2688 = vmatpush.xpose.msra.mxu0 0.0
      %2689 = vmatpush.xpose.msra.mxu0 0.0
      %2690 = vmatpush.xpose.msra.mxu0 0.0
      %2691 = vmatpush.xpose.msra.mxu0 0.0
      %2692 = vmatpush.xpose.msra.mxu0 0.0
      %2693 = vmatpush.xpose.msra.mxu0 0.0
      %2694 = vmatpush.xpose.msra.mxu0 0.0
      %2695 = vmatpush.xpose.msra.mxu0 0.0
      %2696 = vmatpush.xpose.msra.mxu0 %v2679
      %2697 = vmatmul.f32.gmra.mxu0 %v2677
      %v2698 = vpop.f32.mrf.mxu0
      %v2699 = vadd.f32 0.0, %v2698
      %2700 = vdwg.mxu0
      %2701 = vrot.lane.b32.xlu0 %v792, 56
      %v2702 = vpop.permute.xlu0 %2701
      %2703 = vrot.lane.b32.xlu0 %v776, 120
      %v2704 = vpop.permute.xlu0 %2703
      %v2705 = vsel %vm852, %v2702, 0
      %v2707 = vsel %vm852, %v2704, 0
      %2709 = vmatpush.xpose.msra.mxu0 0.0
      %2710 = vmatpush.xpose.msra.mxu0 0.0
      %2711 = vmatpush.xpose.msra.mxu0 0.0
      %2712 = vmatpush.xpose.msra.mxu0 0.0
      %2713 = vmatpush.xpose.msra.mxu0 0.0
      %2714 = vmatpush.xpose.msra.mxu0 0.0
      %2715 = vmatpush.xpose.msra.mxu0 0.0
      %2716 = vmatpush.xpose.msra.mxu0 0.0
      %2717 = vmatpush.xpose.msra.mxu0 0.0
      %2718 = vmatpush.xpose.msra.mxu0 0.0
      %2719 = vmatpush.xpose.msra.mxu0 0.0
      %2720 = vmatpush.xpose.msra.mxu0 0.0
      %2721 = vmatpush.xpose.msra.mxu0 0.0
      %2722 = vmatpush.xpose.msra.mxu0 0.0
      %2723 = vmatpush.xpose.msra.mxu0 0.0
      %2724 = vmatpush.xpose.msra.mxu0 %v2707
      %2725 = vmatmul.f32.gmra.mxu0 %v2705
      %v2726 = vpop.f32.mrf.mxu0
      %v2727 = vadd.f32 0.0, %v2726
      %2728 = vdwg.mxu0
      %2729 = vrot.lane.b32.xlu0 %v793, 56
      %v2730 = vpop.permute.xlu0 %2729
      %2731 = vrot.lane.b32.xlu0 %v777, 120
      %v2732 = vpop.permute.xlu0 %2731
      %v2733 = vsel %vm852, %v2730, 0
      %v2735 = vsel %vm852, %v2732, 0
      %2737 = vmatpush.xpose.msra.mxu0 0.0
      %2738 = vmatpush.xpose.msra.mxu0 0.0
      %2739 = vmatpush.xpose.msra.mxu0 0.0
      %2740 = vmatpush.xpose.msra.mxu0 0.0
      %2741 = vmatpush.xpose.msra.mxu0 0.0
      %2742 = vmatpush.xpose.msra.mxu0 0.0
      %2743 = vmatpush.xpose.msra.mxu0 0.0
      %2744 = vmatpush.xpose.msra.mxu0 0.0
      %2745 = vmatpush.xpose.msra.mxu0 0.0
      %2746 = vmatpush.xpose.msra.mxu0 0.0
      %2747 = vmatpush.xpose.msra.mxu0 0.0
      %2748 = vmatpush.xpose.msra.mxu0 0.0
      %2749 = vmatpush.xpose.msra.mxu0 0.0
      %2750 = vmatpush.xpose.msra.mxu0 0.0
      %2751 = vmatpush.xpose.msra.mxu0 0.0
      %2752 = vmatpush.xpose.msra.mxu0 %v2735
      %2753 = vmatmul.f32.gmra.mxu0 %v2733
      %v2754 = vpop.f32.mrf.mxu0
      %v2755 = vadd.f32 0.0, %v2754
      %2756 = vdwg.mxu0
      %2757 = vrot.lane.b32.xlu0 %v794, 56
      %v2758 = vpop.permute.xlu0 %2757
      %2759 = vrot.lane.b32.xlu0 %v778, 120
      %v2760 = vpop.permute.xlu0 %2759
      %v2761 = vsel %vm852, %v2758, 0
      %v2763 = vsel %vm852, %v2760, 0
      %2765 = vmatpush.xpose.msra.mxu0 0.0
      %2766 = vmatpush.xpose.msra.mxu0 0.0
      %2767 = vmatpush.xpose.msra.mxu0 0.0
      %2768 = vmatpush.xpose.msra.mxu0 0.0
      %2769 = vmatpush.xpose.msra.mxu0 0.0
      %2770 = vmatpush.xpose.msra.mxu0 0.0
      %2771 = vmatpush.xpose.msra.mxu0 0.0
      %2772 = vmatpush.xpose.msra.mxu0 0.0
      %2773 = vmatpush.xpose.msra.mxu0 0.0
      %2774 = vmatpush.xpose.msra.mxu0 0.0
      %2775 = vmatpush.xpose.msra.mxu0 0.0
      %2776 = vmatpush.xpose.msra.mxu0 0.0
      %2777 = vmatpush.xpose.msra.mxu0 0.0
      %2778 = vmatpush.xpose.msra.mxu0 0.0
      %2779 = vmatpush.xpose.msra.mxu0 0.0
      %2780 = vmatpush.xpose.msra.mxu0 %v2763
      %2781 = vmatmul.f32.gmra.mxu0 %v2761
      %v2782 = vpop.f32.mrf.mxu0
      %v2783 = vadd.f32 0.0, %v2782
      %2784 = vdwg.mxu0
      %2785 = vrot.lane.b32.xlu0 %v795, 56
      %v2786 = vpop.permute.xlu0 %2785
      %2787 = vrot.lane.b32.xlu0 %v779, 120
      %v2788 = vpop.permute.xlu0 %2787
      %v2789 = vsel %vm852, %v2786, 0
      %v2791 = vsel %vm852, %v2788, 0
      %2793 = vmatpush.xpose.msra.mxu0 0.0
      %2794 = vmatpush.xpose.msra.mxu0 0.0
      %2795 = vmatpush.xpose.msra.mxu0 0.0
      %2796 = vmatpush.xpose.msra.mxu0 0.0
      %2797 = vmatpush.xpose.msra.mxu0 0.0
      %2798 = vmatpush.xpose.msra.mxu0 0.0
      %2799 = vmatpush.xpose.msra.mxu0 0.0
      %2800 = vmatpush.xpose.msra.mxu0 0.0
      %2801 = vmatpush.xpose.msra.mxu0 0.0
      %2802 = vmatpush.xpose.msra.mxu0 0.0
      %2803 = vmatpush.xpose.msra.mxu0 0.0
      %2804 = vmatpush.xpose.msra.mxu0 0.0
      %2805 = vmatpush.xpose.msra.mxu0 0.0
      %2806 = vmatpush.xpose.msra.mxu0 0.0
      %2807 = vmatpush.xpose.msra.mxu0 0.0
      %2808 = vmatpush.xpose.msra.mxu0 %v2791
      %2809 = vmatmul.f32.gmra.mxu0 %v2789
      %v2810 = vpop.f32.mrf.mxu0
      %v2811 = vadd.f32 0.0, %v2810
      %2812 = vdwg.mxu0
      %2813 = vrot.lane.b32.xlu0 %v796, 56
      %v2814 = vpop.permute.xlu0 %2813
      %2815 = vrot.lane.b32.xlu0 %v780, 120
      %v2816 = vpop.permute.xlu0 %2815
      %v2817 = vsel %vm852, %v2814, 0
      %v2819 = vsel %vm852, %v2816, 0
      %2821 = vmatpush.xpose.msra.mxu0 0.0
      %2822 = vmatpush.xpose.msra.mxu0 0.0
      %2823 = vmatpush.xpose.msra.mxu0 0.0
      %2824 = vmatpush.xpose.msra.mxu0 0.0
      %2825 = vmatpush.xpose.msra.mxu0 0.0
      %2826 = vmatpush.xpose.msra.mxu0 0.0
      %2827 = vmatpush.xpose.msra.mxu0 0.0
      %2828 = vmatpush.xpose.msra.mxu0 0.0
      %2829 = vmatpush.xpose.msra.mxu0 0.0
      %2830 = vmatpush.xpose.msra.mxu0 0.0
      %2831 = vmatpush.xpose.msra.mxu0 0.0
      %2832 = vmatpush.xpose.msra.mxu0 0.0
      %2833 = vmatpush.xpose.msra.mxu0 0.0
      %2834 = vmatpush.xpose.msra.mxu0 0.0
      %2835 = vmatpush.xpose.msra.mxu0 0.0
      %2836 = vmatpush.xpose.msra.mxu0 %v2819
      %2837 = vmatmul.f32.gmra.mxu0 %v2817
      %v2838 = vpop.f32.mrf.mxu0
      %v2839 = vadd.f32 0.0, %v2838
      %2840 = vdwg.mxu0
      %v2841 = vsel %vm835, %v2347, %v2419
      %v2842 = vsel %vm835, %v2350, %v2447
      %v2843 = vsel %vm835, %v2353, %v2475
      %v2844 = vsel %vm835, %v2356, %v2503
      %v2845 = vsel %vm835, %v2359, %v2531
      %v2846 = vsel %vm835, %v2362, %v2559
      %v2847 = vsel %vm835, %v2365, %v2587
      %v2848 = vsel %vm835, %v2368, %v2615
      %v2849 = vsel %vm835, %v2371, %v2643
      %v2850 = vsel %vm835, %v2374, %v2671
      %v2851 = vsel %vm835, %v2377, %v2699
      %v2852 = vsel %vm835, %v2380, %v2727
      %v2853 = vsel %vm835, %v2383, %v2755
      %v2854 = vsel %vm835, %v2386, %v2783
      %v2855 = vsel %vm835, %v2389, %v2811
      %v2856 = vsel %vm835, %v2392, %v2839
      %v2857 = vadd.f32 %v2841, %v818
      %v2858 = vadd.f32 %v2842, %v819
      %v2859 = vadd.f32 %v2843, %v820
      %v2860 = vadd.f32 %v2844, %v821
      %v2861 = vadd.f32 %v2845, %v822
      %v2862 = vadd.f32 %v2846, %v823
      %v2863 = vadd.f32 %v2847, %v824
      %v2864 = vadd.f32 %v2848, %v825
      %v2865 = vadd.f32 %v2849, %v826
      %v2866 = vadd.f32 %v2850, %v827
      %v2867 = vadd.f32 %v2851, %v828
      %v2868 = vadd.f32 %v2852, %v829
      %v2869 = vadd.f32 %v2853, %v830
      %v2870 = vadd.f32 %v2854, %v831
      %v2871 = vadd.f32 %v2855, %v832
      %v2872 = vadd.f32 %v2856, %v833
      %v2873 = vsel %vm852, %v2857, -inf
      %2874 = vmax.xlane.f32.xlu0 %v2873
      %v2875 = vpop.xlane.xlu0 %2874
      %v2876 = vsel %vm852, %v2858, -inf
      %2877 = vmax.xlane.f32.xlu0 %v2876
      %v2878 = vpop.xlane.xlu0 %2877
      %v2879 = vsel %vm852, %v2859, -inf
      %2880 = vmax.xlane.f32.xlu0 %v2879
      %v2881 = vpop.xlane.xlu0 %2880
      %v2882 = vsel %vm852, %v2860, -inf
      %2883 = vmax.xlane.f32.xlu0 %v2882
      %v2884 = vpop.xlane.xlu0 %2883
      %v2885 = vsel %vm852, %v2861, -inf
      %2886 = vmax.xlane.f32.xlu0 %v2885
      %v2887 = vpop.xlane.xlu0 %2886
      %v2888 = vsel %vm852, %v2862, -inf
      %2889 = vmax.xlane.f32.xlu0 %v2888
      %v2890 = vpop.xlane.xlu0 %2889
      %v2891 = vsel %vm852, %v2863, -inf
      %2892 = vmax.xlane.f32.xlu0 %v2891
      %v2893 = vpop.xlane.xlu0 %2892
      %v2894 = vsel %vm852, %v2864, -inf
      %2895 = vmax.xlane.f32.xlu0 %v2894
      %v2896 = vpop.xlane.xlu0 %2895
      %v2897 = vsel %vm852, %v2865, -inf
      %2898 = vmax.xlane.f32.xlu0 %v2897
      %v2899 = vpop.xlane.xlu0 %2898
      %v2900 = vsel %vm852, %v2866, -inf
      %2901 = vmax.xlane.f32.xlu0 %v2900
      %v2902 = vpop.xlane.xlu0 %2901
      %v2903 = vsel %vm852, %v2867, -inf
      %2904 = vmax.xlane.f32.xlu0 %v2903
      %v2905 = vpop.xlane.xlu0 %2904
      %v2906 = vsel %vm852, %v2868, -inf
      %2907 = vmax.xlane.f32.xlu0 %v2906
      %v2908 = vpop.xlane.xlu0 %2907
      %v2909 = vsel %vm852, %v2869, -inf
      %2910 = vmax.xlane.f32.xlu0 %v2909
      %v2911 = vpop.xlane.xlu0 %2910
      %v2912 = vsel %vm852, %v2870, -inf
      %2913 = vmax.xlane.f32.xlu0 %v2912
      %v2914 = vpop.xlane.xlu0 %2913
      %v2915 = vsel %vm852, %v2871, -inf
      %2916 = vmax.xlane.f32.xlu0 %v2915
      %v2917 = vpop.xlane.xlu0 %2916
      %v2918 = vsel %vm852, %v2872, -inf
      %2919 = vmax.xlane.f32.xlu0 %v2918
      %v2920 = vpop.xlane.xlu0 %2919
      %v2921 = vsub.f32 %v2857, %v2875
      %v2922 = vsub.f32 %v2858, %v2878
      %v2923 = vsub.f32 %v2859, %v2881
      %v2924 = vsub.f32 %v2860, %v2884
      %v2925 = vsub.f32 %v2861, %v2887
      %v2926 = vsub.f32 %v2862, %v2890
      %v2927 = vsub.f32 %v2863, %v2893
      %v2928 = vsub.f32 %v2864, %v2896
      %v2929 = vsub.f32 %v2865, %v2899
      %v2930 = vsub.f32 %v2866, %v2902
      %v2931 = vsub.f32 %v2867, %v2905
      %v2932 = vsub.f32 %v2868, %v2908
      %v2933 = vsub.f32 %v2869, %v2911
      %v2934 = vsub.f32 %v2870, %v2914
      %v2935 = vsub.f32 %v2871, %v2917
      %v2936 = vsub.f32 %v2872, %v2920
      %v2937 = vmul.f32 %v2921, 1.442695
      %v2938 = vpow.pop %v2937
      %v2939 = vmul.f32 %v2922, 1.442695
      %v2940 = vpow.pop %v2939
      %v2941 = vmul.f32 %v2923, 1.442695
      %v2942 = vpow.pop %v2941
      %v2943 = vmul.f32 %v2924, 1.442695
      %v2944 = vpow.pop %v2943
      %v2945 = vmul.f32 %v2925, 1.442695
      %v2946 = vpow.pop %v2945
      %v2947 = vmul.f32 %v2926, 1.442695
      %v2948 = vpow.pop %v2947
      %v2949 = vmul.f32 %v2927, 1.442695
      %v2950 = vpow.pop %v2949
      %v2951 = vmul.f32 %v2928, 1.442695
      %v2952 = vpow.pop %v2951
      %v2953 = vmul.f32 %v2929, 1.442695
      %v2954 = vpow.pop %v2953
      %v2955 = vmul.f32 %v2930, 1.442695
      %v2956 = vpow.pop %v2955
      %v2957 = vmul.f32 %v2931, 1.442695
      %v2958 = vpow.pop %v2957
      %v2959 = vmul.f32 %v2932, 1.442695
      %v2960 = vpow.pop %v2959
      %v2961 = vmul.f32 %v2933, 1.442695
      %v2962 = vpow.pop %v2961
      %v2963 = vmul.f32 %v2934, 1.442695
      %v2964 = vpow.pop %v2963
      %v2965 = vmul.f32 %v2935, 1.442695
      %v2966 = vpow.pop %v2965
      %v2967 = vmul.f32 %v2936, 1.442695
      %v2968 = vpow.pop %v2967
      %v2969 = vsel %vm852, %v2938, 0.0
      %2970 = vadd.xlane.f32.xlu0 %v2969
      %v2971 = vpop.xlane.xlu0 %2970
      %v2972 = vsel %vm852, %v2940, 0.0
      %2973 = vadd.xlane.f32.xlu0 %v2972
      %v2974 = vpop.xlane.xlu0 %2973
      %v2975 = vsel %vm852, %v2942, 0.0
      %2976 = vadd.xlane.f32.xlu0 %v2975
      %v2977 = vpop.xlane.xlu0 %2976
      %v2978 = vsel %vm852, %v2944, 0.0
      %2979 = vadd.xlane.f32.xlu0 %v2978
      %v2980 = vpop.xlane.xlu0 %2979
      %v2981 = vsel %vm852, %v2946, 0.0
      %2982 = vadd.xlane.f32.xlu0 %v2981
      %v2983 = vpop.xlane.xlu0 %2982
      %v2984 = vsel %vm852, %v2948, 0.0
      %2985 = vadd.xlane.f32.xlu0 %v2984
      %v2986 = vpop.xlane.xlu0 %2985
      %v2987 = vsel %vm852, %v2950, 0.0
      %2988 = vadd.xlane.f32.xlu0 %v2987
      %v2989 = vpop.xlane.xlu0 %2988
      %v2990 = vsel %vm852, %v2952, 0.0
      %2991 = vadd.xlane.f32.xlu0 %v2990
      %v2992 = vpop.xlane.xlu0 %2991
      %v2993 = vsel %vm852, %v2954, 0.0
      %2994 = vadd.xlane.f32.xlu0 %v2993
      %v2995 = vpop.xlane.xlu0 %2994
      %v2996 = vsel %vm852, %v2956, 0.0
      %2997 = vadd.xlane.f32.xlu0 %v2996
      %v2998 = vpop.xlane.xlu0 %2997
      %v2999 = vsel %vm852, %v2958, 0.0
      %3000 = vadd.xlane.f32.xlu0 %v2999
      %v3001 = vpop.xlane.xlu0 %3000
      %v3002 = vsel %vm852, %v2960, 0.0
      %3003 = vadd.xlane.f32.xlu0 %v3002
      %v3004 = vpop.xlane.xlu0 %3003
      %v3005 = vsel %vm852, %v2962, 0.0
      %3006 = vadd.xlane.f32.xlu0 %v3005
      %v3007 = vpop.xlane.xlu0 %3006
      %v3008 = vsel %vm852, %v2964, 0.0
      %3009 = vadd.xlane.f32.xlu0 %v3008
      %v3010 = vpop.xlane.xlu0 %3009
      %v3011 = vsel %vm852, %v2966, 0.0
      %3012 = vadd.xlane.f32.xlu0 %v3011
      %v3013 = vpop.xlane.xlu0 %3012
      %v3014 = vsel %vm852, %v2968, 0.0
      %3015 = vadd.xlane.f32.xlu0 %v3014
      %v3016 = vpop.xlane.xlu0 %3015
      %v3017 = vrcp.pop %v2971
      %v3018 = vrcp.pop %v2974
      %v3019 = vrcp.pop %v2977
      %v3020 = vrcp.pop %v2980
      %v3021 = vrcp.pop %v2983
      %v3022 = vrcp.pop %v2986
      %v3023 = vrcp.pop %v2989
      %v3024 = vrcp.pop %v2992
      %v3025 = vrcp.pop %v2995
      %v3026 = vrcp.pop %v2998
      %v3027 = vrcp.pop %v3001
      %v3028 = vrcp.pop %v3004
      %v3029 = vrcp.pop %v3007
      %v3030 = vrcp.pop %v3010
      %v3031 = vrcp.pop %v3013
      %v3032 = vrcp.pop %v3016
      %v3033 = vadd.f32 %v2347, %v855
      %v3034 = vadd.f32 %v2350, %v858
      %v3035 = vadd.f32 %v2353, %v861
      %v3036 = vadd.f32 %v2356, %v864
      %v3037 = vadd.f32 %v2359, %v867
      %v3038 = vadd.f32 %v2362, %v870
      %v3039 = vadd.f32 %v2365, %v873
      %v3040 = vadd.f32 %v2368, %v876
      %v3041 = vadd.f32 %v2371, %v879
      %v3042 = vadd.f32 %v2374, %v882
      %v3043 = vadd.f32 %v2377, %v885
      %v3044 = vadd.f32 %v2380, %v888
      %v3045 = vadd.f32 %v2383, %v891
      %v3046 = vadd.f32 %v2386, %v894
      %v3047 = vadd.f32 %v2389, %v897
      %v3048 = vadd.f32 %v2392, %v900
      %v3049 = vsub.f32 %v3033, %v2875
      %v3050 = vsub.f32 %v3034, %v2878
      %v3051 = vsub.f32 %v3035, %v2881
      %v3052 = vsub.f32 %v3036, %v2884
      %v3053 = vsub.f32 %v3037, %v2887
      %v3054 = vsub.f32 %v3038, %v2890
      %v3055 = vsub.f32 %v3039, %v2893
      %v3056 = vsub.f32 %v3040, %v2896
      %v3057 = vsub.f32 %v3041, %v2899
      %v3058 = vsub.f32 %v3042, %v2902
      %v3059 = vsub.f32 %v3043, %v2905
      %v3060 = vsub.f32 %v3044, %v2908
      %v3061 = vsub.f32 %v3045, %v2911
      %v3062 = vsub.f32 %v3046, %v2914
      %v3063 = vsub.f32 %v3047, %v2917
      %v3064 = vsub.f32 %v3048, %v2920
      %v3065 = vmul.f32 %v3049, 1.442695
      %v3066 = vpow.pop %v3065
      %v3067 = vmul.f32 %v3050, 1.442695
      %v3068 = vpow.pop %v3067
      %v3069 = vmul.f32 %v3051, 1.442695
      %v3070 = vpow.pop %v3069
      %v3071 = vmul.f32 %v3052, 1.442695
      %v3072 = vpow.pop %v3071
      %v3073 = vmul.f32 %v3053, 1.442695
      %v3074 = vpow.pop %v3073
      %v3075 = vmul.f32 %v3054, 1.442695
      %v3076 = vpow.pop %v3075
      %v3077 = vmul.f32 %v3055, 1.442695
      %v3078 = vpow.pop %v3077
      %v3079 = vmul.f32 %v3056, 1.442695
      %v3080 = vpow.pop %v3079
      %v3081 = vmul.f32 %v3057, 1.442695
      %v3082 = vpow.pop %v3081
      %v3083 = vmul.f32 %v3058, 1.442695
      %v3084 = vpow.pop %v3083
      %v3085 = vmul.f32 %v3059, 1.442695
      %v3086 = vpow.pop %v3085
      %v3087 = vmul.f32 %v3060, 1.442695
      %v3088 = vpow.pop %v3087
      %v3089 = vmul.f32 %v3061, 1.442695
      %v3090 = vpow.pop %v3089
      %v3091 = vmul.f32 %v3062, 1.442695
      %v3092 = vpow.pop %v3091
      %v3093 = vmul.f32 %v3063, 1.442695
      %v3094 = vpow.pop %v3093
      %v3095 = vmul.f32 %v3064, 1.442695
      %v3096 = vpow.pop %v3095
      %v3097 = vmul.f32 %v3066, %v3017
      %v3098 = vmul.f32 %v3068, %v3018
      %v3099 = vmul.f32 %v3070, %v3019
      %v3100 = vmul.f32 %v3072, %v3020
      %v3101 = vmul.f32 %v3074, %v3021
      %v3102 = vmul.f32 %v3076, %v3022
      %v3103 = vmul.f32 %v3078, %v3023
      %v3104 = vmul.f32 %v3080, %v3024
      %v3105 = vmul.f32 %v3082, %v3025
      %v3106 = vmul.f32 %v3084, %v3026
      %v3107 = vmul.f32 %v3086, %v3027
      %v3108 = vmul.f32 %v3088, %v3028
      %v3109 = vmul.f32 %v3090, %v3029
      %v3110 = vmul.f32 %v3092, %v3030
      %v3111 = vmul.f32 %v3094, %v3031
      %v3112 = vmul.f32 %v3096, %v3032
      %3113 = vrot.lane.b32.xlu0 %v765, 88
      %v3114 = vpop.permute.xlu0 %3113
      %v3117 = vsel %vm852, %v2938, 0
      %3119 = vmatpush.msra.mxu0 0.0
      %3120 = vmatpush.msra.mxu0 0.0
      %3121 = vmatpush.msra.mxu0 0.0
      %3122 = vmatpush.msra.mxu0 0.0
      %3123 = vmatpush.msra.mxu0 0.0
      %3124 = vmatpush.msra.mxu0 0.0
      %3125 = vmatpush.msra.mxu0 0.0
      %3126 = vmatpush.msra.mxu0 0.0
      %3127 = vmatpush.msra.mxu0 0.0
      %3128 = vmatpush.msra.mxu0 0.0
      %3129 = vmatpush.msra.mxu0 0.0
      %3130 = vmatpush.msra.mxu0 0.0
      %3131 = vmatpush.msra.mxu0 0.0
      %3132 = vmatpush.msra.mxu0 0.0
      %3133 = vmatpush.msra.mxu0 0.0
      %3134 = vmatpush.msra.mxu0 %v3114
      %3135 = vmatmul.f32.gmra.mxu0 %v3117
      %v3136 = vpop.f32.mrf.mxu0
      %v3137 = vadd.f32 0.0, %v3136
      %3138 = vdwg.mxu0
      %3139 = vrot.lane.b32.xlu0 %v766, 88
      %v3140 = vpop.permute.xlu0 %3139
      %v3143 = vsel %vm852, %v2940, 0
      %3145 = vmatpush.msra.mxu0 0.0
      %3146 = vmatpush.msra.mxu0 0.0
      %3147 = vmatpush.msra.mxu0 0.0
      %3148 = vmatpush.msra.mxu0 0.0
      %3149 = vmatpush.msra.mxu0 0.0
      %3150 = vmatpush.msra.mxu0 0.0
      %3151 = vmatpush.msra.mxu0 0.0
      %3152 = vmatpush.msra.mxu0 0.0
      %3153 = vmatpush.msra.mxu0 0.0
      %3154 = vmatpush.msra.mxu0 0.0
      %3155 = vmatpush.msra.mxu0 0.0
      %3156 = vmatpush.msra.mxu0 0.0
      %3157 = vmatpush.msra.mxu0 0.0
      %3158 = vmatpush.msra.mxu0 0.0
      %3159 = vmatpush.msra.mxu0 0.0
      %3160 = vmatpush.msra.mxu0 %v3140
      %3161 = vmatmul.f32.gmra.mxu0 %v3143
      %v3162 = vpop.f32.mrf.mxu0
      %v3163 = vadd.f32 0.0, %v3162
      %3164 = vdwg.mxu0
      %3165 = vrot.lane.b32.xlu0 %v767, 88
      %v3166 = vpop.permute.xlu0 %3165
      %v3169 = vsel %vm852, %v2942, 0
      %3171 = vmatpush.msra.mxu0 0.0
      %3172 = vmatpush.msra.mxu0 0.0
      %3173 = vmatpush.msra.mxu0 0.0
      %3174 = vmatpush.msra.mxu0 0.0
      %3175 = vmatpush.msra.mxu0 0.0
      %3176 = vmatpush.msra.mxu0 0.0
      %3177 = vmatpush.msra.mxu0 0.0
      %3178 = vmatpush.msra.mxu0 0.0
      %3179 = vmatpush.msra.mxu0 0.0
      %3180 = vmatpush.msra.mxu0 0.0
      %3181 = vmatpush.msra.mxu0 0.0
      %3182 = vmatpush.msra.mxu0 0.0
      %3183 = vmatpush.msra.mxu0 0.0
      %3184 = vmatpush.msra.mxu0 0.0
      %3185 = vmatpush.msra.mxu0 0.0
      %3186 = vmatpush.msra.mxu0 %v3166
      %3187 = vmatmul.f32.gmra.mxu0 %v3169
      %v3188 = vpop.f32.mrf.mxu0
      %v3189 = vadd.f32 0.0, %v3188
      %3190 = vdwg.mxu0
      %3191 = vrot.lane.b32.xlu0 %v768, 88
      %v3192 = vpop.permute.xlu0 %3191
      %v3195 = vsel %vm852, %v2944, 0
      %3197 = vmatpush.msra.mxu0 0.0
      %3198 = vmatpush.msra.mxu0 0.0
      %3199 = vmatpush.msra.mxu0 0.0
      %3200 = vmatpush.msra.mxu0 0.0
      %3201 = vmatpush.msra.mxu0 0.0
      %3202 = vmatpush.msra.mxu0 0.0
      %3203 = vmatpush.msra.mxu0 0.0
      %3204 = vmatpush.msra.mxu0 0.0
      %3205 = vmatpush.msra.mxu0 0.0
      %3206 = vmatpush.msra.mxu0 0.0
      %3207 = vmatpush.msra.mxu0 0.0
      %3208 = vmatpush.msra.mxu0 0.0
      %3209 = vmatpush.msra.mxu0 0.0
      %3210 = vmatpush.msra.mxu0 0.0
      %3211 = vmatpush.msra.mxu0 0.0
      %3212 = vmatpush.msra.mxu0 %v3192
      %3213 = vmatmul.f32.gmra.mxu0 %v3195
      %v3214 = vpop.f32.mrf.mxu0
      %v3215 = vadd.f32 0.0, %v3214
      %3216 = vdwg.mxu0
      %3217 = vrot.lane.b32.xlu0 %v769, 88
      %v3218 = vpop.permute.xlu0 %3217
      %v3221 = vsel %vm852, %v2946, 0
      %3223 = vmatpush.msra.mxu0 0.0
      %3224 = vmatpush.msra.mxu0 0.0
      %3225 = vmatpush.msra.mxu0 0.0
      %3226 = vmatpush.msra.mxu0 0.0
      %3227 = vmatpush.msra.mxu0 0.0
      %3228 = vmatpush.msra.mxu0 0.0
      %3229 = vmatpush.msra.mxu0 0.0
      %3230 = vmatpush.msra.mxu0 0.0
      %3231 = vmatpush.msra.mxu0 0.0
      %3232 = vmatpush.msra.mxu0 0.0
      %3233 = vmatpush.msra.mxu0 0.0
      %3234 = vmatpush.msra.mxu0 0.0
      %3235 = vmatpush.msra.mxu0 0.0
      %3236 = vmatpush.msra.mxu0 0.0
      %3237 = vmatpush.msra.mxu0 0.0
      %3238 = vmatpush.msra.mxu0 %v3218
      %3239 = vmatmul.f32.gmra.mxu0 %v3221
      %v3240 = vpop.f32.mrf.mxu0
      %v3241 = vadd.f32 0.0, %v3240
      %3242 = vdwg.mxu0
      %3243 = vrot.lane.b32.xlu0 %v770, 88
      %v3244 = vpop.permute.xlu0 %3243
      %v3247 = vsel %vm852, %v2948, 0
      %3249 = vmatpush.msra.mxu0 0.0
      %3250 = vmatpush.msra.mxu0 0.0
      %3251 = vmatpush.msra.mxu0 0.0
      %3252 = vmatpush.msra.mxu0 0.0
      %3253 = vmatpush.msra.mxu0 0.0
      %3254 = vmatpush.msra.mxu0 0.0
      %3255 = vmatpush.msra.mxu0 0.0
      %3256 = vmatpush.msra.mxu0 0.0
      %3257 = vmatpush.msra.mxu0 0.0
      %3258 = vmatpush.msra.mxu0 0.0
      %3259 = vmatpush.msra.mxu0 0.0
      %3260 = vmatpush.msra.mxu0 0.0
      %3261 = vmatpush.msra.mxu0 0.0
      %3262 = vmatpush.msra.mxu0 0.0
      %3263 = vmatpush.msra.mxu0 0.0
      %3264 = vmatpush.msra.mxu0 %v3244
      %3265 = vmatmul.f32.gmra.mxu0 %v3247
      %v3266 = vpop.f32.mrf.mxu0
      %v3267 = vadd.f32 0.0, %v3266
      %3268 = vdwg.mxu0
      %3269 = vrot.lane.b32.xlu0 %v771, 88
      %v3270 = vpop.permute.xlu0 %3269
      %v3273 = vsel %vm852, %v2950, 0
      %3275 = vmatpush.msra.mxu0 0.0
      %3276 = vmatpush.msra.mxu0 0.0
      %3277 = vmatpush.msra.mxu0 0.0
      %3278 = vmatpush.msra.mxu0 0.0
      %3279 = vmatpush.msra.mxu0 0.0
      %3280 = vmatpush.msra.mxu0 0.0
      %3281 = vmatpush.msra.mxu0 0.0
      %3282 = vmatpush.msra.mxu0 0.0
      %3283 = vmatpush.msra.mxu0 0.0
      %3284 = vmatpush.msra.mxu0 0.0
      %3285 = vmatpush.msra.mxu0 0.0
      %3286 = vmatpush.msra.mxu0 0.0
      %3287 = vmatpush.msra.mxu0 0.0
      %3288 = vmatpush.msra.mxu0 0.0
      %3289 = vmatpush.msra.mxu0 0.0
      %3290 = vmatpush.msra.mxu0 %v3270
      %3291 = vmatmul.f32.gmra.mxu0 %v3273
      %v3292 = vpop.f32.mrf.mxu0
      %v3293 = vadd.f32 0.0, %v3292
      %3294 = vdwg.mxu0
      %3295 = vrot.lane.b32.xlu0 %v772, 88
      %v3296 = vpop.permute.xlu0 %3295
      %v3299 = vsel %vm852, %v2952, 0
      %3301 = vmatpush.msra.mxu0 0.0
      %3302 = vmatpush.msra.mxu0 0.0
      %3303 = vmatpush.msra.mxu0 0.0
      %3304 = vmatpush.msra.mxu0 0.0
      %3305 = vmatpush.msra.mxu0 0.0
      %3306 = vmatpush.msra.mxu0 0.0
      %3307 = vmatpush.msra.mxu0 0.0
      %3308 = vmatpush.msra.mxu0 0.0
      %3309 = vmatpush.msra.mxu0 0.0
      %3310 = vmatpush.msra.mxu0 0.0
      %3311 = vmatpush.msra.mxu0 0.0
      %3312 = vmatpush.msra.mxu0 0.0
      %3313 = vmatpush.msra.mxu0 0.0
      %3314 = vmatpush.msra.mxu0 0.0
      %3315 = vmatpush.msra.mxu0 0.0
      %3316 = vmatpush.msra.mxu0 %v3296
      %3317 = vmatmul.f32.gmra.mxu0 %v3299
      %v3318 = vpop.f32.mrf.mxu0
      %v3319 = vadd.f32 0.0, %v3318
      %3320 = vdwg.mxu0
      %3321 = vrot.lane.b32.xlu0 %v773, 88
      %v3322 = vpop.permute.xlu0 %3321
      %v3325 = vsel %vm852, %v2954, 0
      %3327 = vmatpush.msra.mxu0 0.0
      %3328 = vmatpush.msra.mxu0 0.0
      %3329 = vmatpush.msra.mxu0 0.0
      %3330 = vmatpush.msra.mxu0 0.0
      %3331 = vmatpush.msra.mxu0 0.0
      %3332 = vmatpush.msra.mxu0 0.0
      %3333 = vmatpush.msra.mxu0 0.0
      %3334 = vmatpush.msra.mxu0 0.0
      %3335 = vmatpush.msra.mxu0 0.0
      %3336 = vmatpush.msra.mxu0 0.0
      %3337 = vmatpush.msra.mxu0 0.0
      %3338 = vmatpush.msra.mxu0 0.0
      %3339 = vmatpush.msra.mxu0 0.0
      %3340 = vmatpush.msra.mxu0 0.0
      %3341 = vmatpush.msra.mxu0 0.0
      %3342 = vmatpush.msra.mxu0 %v3322
      %3343 = vmatmul.f32.gmra.mxu0 %v3325
      %v3344 = vpop.f32.mrf.mxu0
      %v3345 = vadd.f32 0.0, %v3344
      %3346 = vdwg.mxu0
      %3347 = vrot.lane.b32.xlu0 %v774, 88
      %v3348 = vpop.permute.xlu0 %3347
      %v3351 = vsel %vm852, %v2956, 0
      %3353 = vmatpush.msra.mxu0 0.0
      %3354 = vmatpush.msra.mxu0 0.0
      %3355 = vmatpush.msra.mxu0 0.0
      %3356 = vmatpush.msra.mxu0 0.0
      %3357 = vmatpush.msra.mxu0 0.0
      %3358 = vmatpush.msra.mxu0 0.0
      %3359 = vmatpush.msra.mxu0 0.0
      %3360 = vmatpush.msra.mxu0 0.0
      %3361 = vmatpush.msra.mxu0 0.0
      %3362 = vmatpush.msra.mxu0 0.0
      %3363 = vmatpush.msra.mxu0 0.0
      %3364 = vmatpush.msra.mxu0 0.0
      %3365 = vmatpush.msra.mxu0 0.0
      %3366 = vmatpush.msra.mxu0 0.0
      %3367 = vmatpush.msra.mxu0 0.0
      %3368 = vmatpush.msra.mxu0 %v3348
      %3369 = vmatmul.f32.gmra.mxu0 %v3351
      %v3370 = vpop.f32.mrf.mxu0
      %v3371 = vadd.f32 0.0, %v3370
      %3372 = vdwg.mxu0
      %3373 = vrot.lane.b32.xlu0 %v775, 88
      %v3374 = vpop.permute.xlu0 %3373
      %v3377 = vsel %vm852, %v2958, 0
      %3379 = vmatpush.msra.mxu0 0.0
      %3380 = vmatpush.msra.mxu0 0.0
      %3381 = vmatpush.msra.mxu0 0.0
      %3382 = vmatpush.msra.mxu0 0.0
      %3383 = vmatpush.msra.mxu0 0.0
      %3384 = vmatpush.msra.mxu0 0.0
      %3385 = vmatpush.msra.mxu0 0.0
      %3386 = vmatpush.msra.mxu0 0.0
      %3387 = vmatpush.msra.mxu0 0.0
      %3388 = vmatpush.msra.mxu0 0.0
      %3389 = vmatpush.msra.mxu0 0.0
      %3390 = vmatpush.msra.mxu0 0.0
      %3391 = vmatpush.msra.mxu0 0.0
      %3392 = vmatpush.msra.mxu0 0.0
      %3393 = vmatpush.msra.mxu0 0.0
      %3394 = vmatpush.msra.mxu0 %v3374
      %3395 = vmatmul.f32.gmra.mxu0 %v3377
      %v3396 = vpop.f32.mrf.mxu0
      %v3397 = vadd.f32 0.0, %v3396
      %3398 = vdwg.mxu0
      %3399 = vrot.lane.b32.xlu0 %v776, 88
      %v3400 = vpop.permute.xlu0 %3399
      %v3403 = vsel %vm852, %v2960, 0
      %3405 = vmatpush.msra.mxu0 0.0
      %3406 = vmatpush.msra.mxu0 0.0
      %3407 = vmatpush.msra.mxu0 0.0
      %3408 = vmatpush.msra.mxu0 0.0
      %3409 = vmatpush.msra.mxu0 0.0
      %3410 = vmatpush.msra.mxu0 0.0
      %3411 = vmatpush.msra.mxu0 0.0
      %3412 = vmatpush.msra.mxu0 0.0
      %3413 = vmatpush.msra.mxu0 0.0
      %3414 = vmatpush.msra.mxu0 0.0
      %3415 = vmatpush.msra.mxu0 0.0
      %3416 = vmatpush.msra.mxu0 0.0
      %3417 = vmatpush.msra.mxu0 0.0
      %3418 = vmatpush.msra.mxu0 0.0
      %3419 = vmatpush.msra.mxu0 0.0
      %3420 = vmatpush.msra.mxu0 %v3400
      %3421 = vmatmul.f32.gmra.mxu0 %v3403
      %v3422 = vpop.f32.mrf.mxu0
      %v3423 = vadd.f32 0.0, %v3422
      %3424 = vdwg.mxu0
      %3425 = vrot.lane.b32.xlu0 %v777, 88
      %v3426 = vpop.permute.xlu0 %3425
      %v3429 = vsel %vm852, %v2962, 0
      %3431 = vmatpush.msra.mxu0 0.0
      %3432 = vmatpush.msra.mxu0 0.0
      %3433 = vmatpush.msra.mxu0 0.0
      %3434 = vmatpush.msra.mxu0 0.0
      %3435 = vmatpush.msra.mxu0 0.0
      %3436 = vmatpush.msra.mxu0 0.0
      %3437 = vmatpush.msra.mxu0 0.0
      %3438 = vmatpush.msra.mxu0 0.0
      %3439 = vmatpush.msra.mxu0 0.0
      %3440 = vmatpush.msra.mxu0 0.0
      %3441 = vmatpush.msra.mxu0 0.0
      %3442 = vmatpush.msra.mxu0 0.0
      %3443 = vmatpush.msra.mxu0 0.0
      %3444 = vmatpush.msra.mxu0 0.0
      %3445 = vmatpush.msra.mxu0 0.0
      %3446 = vmatpush.msra.mxu0 %v3426
      %3447 = vmatmul.f32.gmra.mxu0 %v3429
      %v3448 = vpop.f32.mrf.mxu0
      %v3449 = vadd.f32 0.0, %v3448
      %3450 = vdwg.mxu0
      %3451 = vrot.lane.b32.xlu0 %v778, 88
      %v3452 = vpop.permute.xlu0 %3451
      %v3455 = vsel %vm852, %v2964, 0
      %3457 = vmatpush.msra.mxu0 0.0
      %3458 = vmatpush.msra.mxu0 0.0
      %3459 = vmatpush.msra.mxu0 0.0
      %3460 = vmatpush.msra.mxu0 0.0
      %3461 = vmatpush.msra.mxu0 0.0
      %3462 = vmatpush.msra.mxu0 0.0
      %3463 = vmatpush.msra.mxu0 0.0
      %3464 = vmatpush.msra.mxu0 0.0
      %3465 = vmatpush.msra.mxu0 0.0
      %3466 = vmatpush.msra.mxu0 0.0
      %3467 = vmatpush.msra.mxu0 0.0
      %3468 = vmatpush.msra.mxu0 0.0
      %3469 = vmatpush.msra.mxu0 0.0
      %3470 = vmatpush.msra.mxu0 0.0
      %3471 = vmatpush.msra.mxu0 0.0
      %3472 = vmatpush.msra.mxu0 %v3452
      %3473 = vmatmul.f32.gmra.mxu0 %v3455
      %v3474 = vpop.f32.mrf.mxu0
      %v3475 = vadd.f32 0.0, %v3474
      %3476 = vdwg.mxu0
      %3477 = vrot.lane.b32.xlu0 %v779, 88
      %v3478 = vpop.permute.xlu0 %3477
      %v3481 = vsel %vm852, %v2966, 0
      %3483 = vmatpush.msra.mxu0 0.0
      %3484 = vmatpush.msra.mxu0 0.0
      %3485 = vmatpush.msra.mxu0 0.0
      %3486 = vmatpush.msra.mxu0 0.0
      %3487 = vmatpush.msra.mxu0 0.0
      %3488 = vmatpush.msra.mxu0 0.0
      %3489 = vmatpush.msra.mxu0 0.0
      %3490 = vmatpush.msra.mxu0 0.0
      %3491 = vmatpush.msra.mxu0 0.0
      %3492 = vmatpush.msra.mxu0 0.0
      %3493 = vmatpush.msra.mxu0 0.0
      %3494 = vmatpush.msra.mxu0 0.0
      %3495 = vmatpush.msra.mxu0 0.0
      %3496 = vmatpush.msra.mxu0 0.0
      %3497 = vmatpush.msra.mxu0 0.0
      %3498 = vmatpush.msra.mxu0 %v3478
      %3499 = vmatmul.f32.gmra.mxu0 %v3481
      %v3500 = vpop.f32.mrf.mxu0
      %v3501 = vadd.f32 0.0, %v3500
      %3502 = vdwg.mxu0
      %3503 = vrot.lane.b32.xlu0 %v780, 88
      %v3504 = vpop.permute.xlu0 %3503
      %v3507 = vsel %vm852, %v2968, 0
      %3509 = vmatpush.msra.mxu0 0.0
      %3510 = vmatpush.msra.mxu0 0.0
      %3511 = vmatpush.msra.mxu0 0.0
      %3512 = vmatpush.msra.mxu0 0.0
      %3513 = vmatpush.msra.mxu0 0.0
      %3514 = vmatpush.msra.mxu0 0.0
      %3515 = vmatpush.msra.mxu0 0.0
      %3516 = vmatpush.msra.mxu0 0.0
      %3517 = vmatpush.msra.mxu0 0.0
      %3518 = vmatpush.msra.mxu0 0.0
      %3519 = vmatpush.msra.mxu0 0.0
      %3520 = vmatpush.msra.mxu0 0.0
      %3521 = vmatpush.msra.mxu0 0.0
      %3522 = vmatpush.msra.mxu0 0.0
      %3523 = vmatpush.msra.mxu0 0.0
      %3524 = vmatpush.msra.mxu0 %v3504
      %3525 = vmatmul.f32.gmra.mxu0 %v3507
      %v3526 = vpop.f32.mrf.mxu0
      %v3527 = vadd.f32 0.0, %v3526
      %3528 = vdwg.mxu0
      %v3529 = vmul.f32 %v3137, %v3017
      %v3530 = vmul.f32 %v3163, %v3018
      %v3531 = vmul.f32 %v3189, %v3019
      %v3532 = vmul.f32 %v3215, %v3020
      %v3533 = vmul.f32 %v3241, %v3021
      %v3534 = vmul.f32 %v3267, %v3022
      %v3535 = vmul.f32 %v3293, %v3023
      %v3536 = vmul.f32 %v3319, %v3024
      %v3537 = vmul.f32 %v3345, %v3025
      %v3538 = vmul.f32 %v3371, %v3026
      %v3539 = vmul.f32 %v3397, %v3027
      %v3540 = vmul.f32 %v3423, %v3028
      %v3541 = vmul.f32 %v3449, %v3029
      %v3542 = vmul.f32 %v3475, %v3030
      %v3543 = vmul.f32 %v3501, %v3031
      %v3544 = vmul.f32 %v3527, %v3032
      %v3545 = vmul.f32 %v3097, %v2249
      %v3546 = vmul.f32 %v3098, %v2250
      %v3547 = vmul.f32 %v3099, %v2251
      %v3548 = vmul.f32 %v3100, %v2252
      %v3549 = vmul.f32 %v3101, %v2253
      %v3550 = vmul.f32 %v3102, %v2254
      %v3551 = vmul.f32 %v3103, %v2255
      %v3552 = vmul.f32 %v3104, %v2256
      %v3553 = vmul.f32 %v3105, %v2257
      %v3554 = vmul.f32 %v3106, %v2258
      %v3555 = vmul.f32 %v3107, %v2259
      %v3556 = vmul.f32 %v3108, %v2260
      %v3557 = vmul.f32 %v3109, %v2261
      %v3558 = vmul.f32 %v3110, %v2262
      %v3559 = vmul.f32 %v3111, %v2263
      %v3560 = vmul.f32 %v3112, %v2264
      %3577 = vrot.lane.b32.xlu0 %v3545, 120
      %v3578 = vpop.permute.xlu0 %3577
      %3579 = vrot.lane.b32.xlu0 %v3546, 120
      %v3580 = vpop.permute.xlu0 %3579
      %3581 = vrot.lane.b32.xlu0 %v3547, 120
      %v3582 = vpop.permute.xlu0 %3581
      %3583 = vrot.lane.b32.xlu0 %v3548, 120
      %v3584 = vpop.permute.xlu0 %3583
      %3585 = vrot.lane.b32.xlu0 %v3549, 120
      %v3586 = vpop.permute.xlu0 %3585
      %3587 = vrot.lane.b32.xlu0 %v3550, 120
      %v3588 = vpop.permute.xlu0 %3587
      %3589 = vrot.lane.b32.xlu0 %v3551, 120
      %v3590 = vpop.permute.xlu0 %3589
      %3591 = vrot.lane.b32.xlu0 %v3552, 120
      %v3592 = vpop.permute.xlu0 %3591
      %3593 = vrot.lane.b32.xlu0 %v3553, 120
      %v3594 = vpop.permute.xlu0 %3593
      %3595 = vrot.lane.b32.xlu0 %v3554, 120
      %v3596 = vpop.permute.xlu0 %3595
      %3597 = vrot.lane.b32.xlu0 %v3555, 120
      %v3598 = vpop.permute.xlu0 %3597
      %3599 = vrot.lane.b32.xlu0 %v3556, 120
      %v3600 = vpop.permute.xlu0 %3599
      %3601 = vrot.lane.b32.xlu0 %v3557, 120
      %v3602 = vpop.permute.xlu0 %3601
      %3603 = vrot.lane.b32.xlu0 %v3558, 120
      %v3604 = vpop.permute.xlu0 %3603
      %3605 = vrot.lane.b32.xlu0 %v3559, 120
      %v3606 = vpop.permute.xlu0 %3605
      %3607 = vrot.lane.b32.xlu0 %v3560, 120
      %v3608 = vpop.permute.xlu0 %3607
      %v3625 = vadd.f32 %v3529, %v3578
      %v3626 = vadd.f32 %v3530, %v3580
      %v3627 = vadd.f32 %v3531, %v3582
      %v3628 = vadd.f32 %v3532, %v3584
      %v3629 = vadd.f32 %v3533, %v3586
      %v3630 = vadd.f32 %v3534, %v3588
      %v3631 = vadd.f32 %v3535, %v3590
      %v3632 = vadd.f32 %v3536, %v3592
      %v3633 = vadd.f32 %v3537, %v3594
      %v3634 = vadd.f32 %v3538, %v3596
      %v3635 = vadd.f32 %v3539, %v3598
      %v3636 = vadd.f32 %v3540, %v3600
      %v3637 = vadd.f32 %v3541, %v3602
      %v3638 = vadd.f32 %v3542, %v3604
      %v3639 = vadd.f32 %v3543, %v3606
      %v3640 = vadd.f32 %v3544, %v3608
      %v3642 = vsel %vm852, %v3625, 0
      %v3645 = vsel %vm852, %v3626, 0
      %v3648 = vsel %vm852, %v3627, 0
      %v3651 = vsel %vm852, %v3628, 0
      %v3654 = vsel %vm852, %v3629, 0
      %v3657 = vsel %vm852, %v3630, 0
      %v3660 = vsel %vm852, %v3631, 0
      %v3663 = vsel %vm852, %v3632, 0
      %v3666 = vsel %vm852, %v3633, 0
      %v3669 = vsel %vm852, %v3634, 0
      %v3672 = vsel %vm852, %v3635, 0
      %v3675 = vsel %vm852, %v3636, 0
      %v3678 = vsel %vm852, %v3637, 0
      %v3681 = vsel %vm852, %v3638, 0
      %v3684 = vsel %vm852, %v3639, 0
      %v3687 = vsel %vm852, %v3640, 0
      %3689 = vmatpush.msra.mxu0 0.0
      %3690 = vmatpush.msra.mxu0 0.0
      %3691 = vmatpush.msra.mxu0 0.0
      %3692 = vmatpush.msra.mxu0 0.0
      %3693 = vmatpush.msra.mxu0 0.0
      %3694 = vmatpush.msra.mxu0 0.0
      %3695 = vmatpush.msra.mxu0 0.0
      %3696 = vmatpush.msra.mxu0 0.0
      %3697 = vmatpush.msra.mxu0 0.0
      %3698 = vmatpush.msra.mxu0 0.0
      %3699 = vmatpush.msra.mxu0 0.0
      %3700 = vmatpush.msra.mxu0 0.0
      %3701 = vmatpush.msra.mxu0 0.0
      %3702 = vmatpush.msra.mxu0 0.0
      %3703 = vmatpush.msra.mxu0 0.0
      %3704 = vmatpush.msra.mxu0 %v902
      %3705 = vmatmul.f32.gmra.mxu0 %v3642
      %v3706 = vpop.f32.mrf.mxu0
      %v3707 = vadd.f32 0.0, %v3706
      %3708 = vmatmul.f32.gmra.mxu0 %v3645
      %v3709 = vpop.f32.mrf.mxu0
      %v3710 = vadd.f32 0.0, %v3709
      %3711 = vmatmul.f32.gmra.mxu0 %v3648
      %v3712 = vpop.f32.mrf.mxu0
      %v3713 = vadd.f32 0.0, %v3712
      %3714 = vmatmul.f32.gmra.mxu0 %v3651
      %v3715 = vpop.f32.mrf.mxu0
      %v3716 = vadd.f32 0.0, %v3715
      %3717 = vmatmul.f32.gmra.mxu0 %v3654
      %v3718 = vpop.f32.mrf.mxu0
      %v3719 = vadd.f32 0.0, %v3718
      %3720 = vmatmul.f32.gmra.mxu0 %v3657
      %v3721 = vpop.f32.mrf.mxu0
      %v3722 = vadd.f32 0.0, %v3721
      %3723 = vmatmul.f32.gmra.mxu0 %v3660
      %v3724 = vpop.f32.mrf.mxu0
      %v3725 = vadd.f32 0.0, %v3724
      %3726 = vmatmul.f32.gmra.mxu0 %v3663
      %v3727 = vpop.f32.mrf.mxu0
      %v3728 = vadd.f32 0.0, %v3727
      %3729 = vmatmul.f32.gmra.mxu0 %v3666
      %v3730 = vpop.f32.mrf.mxu0
      %v3731 = vadd.f32 0.0, %v3730
      %3732 = vmatmul.f32.gmra.mxu0 %v3669
      %v3733 = vpop.f32.mrf.mxu0
      %v3734 = vadd.f32 0.0, %v3733
      %3735 = vmatmul.f32.gmra.mxu0 %v3672
      %v3736 = vpop.f32.mrf.mxu0
      %v3737 = vadd.f32 0.0, %v3736
      %3738 = vmatmul.f32.gmra.mxu0 %v3675
      %v3739 = vpop.f32.mrf.mxu0
      %v3740 = vadd.f32 0.0, %v3739
      %3741 = vmatmul.f32.gmra.mxu0 %v3678
      %v3742 = vpop.f32.mrf.mxu0
      %v3743 = vadd.f32 0.0, %v3742
      %3744 = vmatmul.f32.gmra.mxu0 %v3681
      %v3745 = vpop.f32.mrf.mxu0
      %v3746 = vadd.f32 0.0, %v3745
      %3747 = vmatmul.f32.gmra.mxu0 %v3684
      %v3748 = vpop.f32.mrf.mxu0
      %v3749 = vadd.f32 0.0, %v3748
      %3750 = vmatmul.f32.gmra.mxu0 %v3687
      %v3751 = vpop.f32.mrf.mxu0
      %v3752 = vadd.f32 0.0, %v3751
      %3753 = vdwg.mxu0
      %v3755 = vsel %vm852, %v2281, 0
      %v3758 = vsel %vm852, %v2282, 0
      %v3761 = vsel %vm852, %v2283, 0
      %v3764 = vsel %vm852, %v2284, 0
      %v3767 = vsel %vm852, %v2285, 0
      %v3770 = vsel %vm852, %v2286, 0
      %v3773 = vsel %vm852, %v2287, 0
      %v3776 = vsel %vm852, %v2288, 0
      %v3779 = vsel %vm852, %v2289, 0
      %v3782 = vsel %vm852, %v2290, 0
      %v3785 = vsel %vm852, %v2291, 0
      %v3788 = vsel %vm852, %v2292, 0
      %v3791 = vsel %vm852, %v2293, 0
      %v3794 = vsel %vm852, %v2294, 0
      %v3797 = vsel %vm852, %v2295, 0
      %v3800 = vsel %vm852, %v2296, 0
      %3802 = vmatpush.msra.mxu0 0.0
      %3803 = vmatpush.msra.mxu0 0.0
      %3804 = vmatpush.msra.mxu0 0.0
      %3805 = vmatpush.msra.mxu0 0.0
      %3806 = vmatpush.msra.mxu0 0.0
      %3807 = vmatpush.msra.mxu0 0.0
      %3808 = vmatpush.msra.mxu0 0.0
      %3809 = vmatpush.msra.mxu0 0.0
      %3810 = vmatpush.msra.mxu0 0.0
      %3811 = vmatpush.msra.mxu0 0.0
      %3812 = vmatpush.msra.mxu0 0.0
      %3813 = vmatpush.msra.mxu0 0.0
      %3814 = vmatpush.msra.mxu0 0.0
      %3815 = vmatpush.msra.mxu0 0.0
      %3816 = vmatpush.msra.mxu0 0.0
      %3817 = vmatpush.msra.mxu0 %v901
      %3818 = vmatmul.f32.gmra.mxu0 %v3755
      %v3819 = vpop.f32.mrf.mxu0
      %v3820 = vadd.f32 %v3707, %v3819
      %3821 = vmatmul.f32.gmra.mxu0 %v3758
      %v3822 = vpop.f32.mrf.mxu0
      %v3823 = vadd.f32 %v3710, %v3822
      %3824 = vmatmul.f32.gmra.mxu0 %v3761
      %v3825 = vpop.f32.mrf.mxu0
      %v3826 = vadd.f32 %v3713, %v3825
      %3827 = vmatmul.f32.gmra.mxu0 %v3764
      %v3828 = vpop.f32.mrf.mxu0
      %v3829 = vadd.f32 %v3716, %v3828
      %3830 = vmatmul.f32.gmra.mxu0 %v3767
      %v3831 = vpop.f32.mrf.mxu0
      %v3832 = vadd.f32 %v3719, %v3831
      %3833 = vmatmul.f32.gmra.mxu0 %v3770
      %v3834 = vpop.f32.mrf.mxu0
      %v3835 = vadd.f32 %v3722, %v3834
      %3836 = vmatmul.f32.gmra.mxu0 %v3773
      %v3837 = vpop.f32.mrf.mxu0
      %v3838 = vadd.f32 %v3725, %v3837
      %3839 = vmatmul.f32.gmra.mxu0 %v3776
      %v3840 = vpop.f32.mrf.mxu0
      %v3841 = vadd.f32 %v3728, %v3840
      %3842 = vmatmul.f32.gmra.mxu0 %v3779
      %v3843 = vpop.f32.mrf.mxu0
      %v3844 = vadd.f32 %v3731, %v3843
      %3845 = vmatmul.f32.gmra.mxu0 %v3782
      %v3846 = vpop.f32.mrf.mxu0
      %v3847 = vadd.f32 %v3734, %v3846
      %3848 = vmatmul.f32.gmra.mxu0 %v3785
      %v3849 = vpop.f32.mrf.mxu0
      %v3850 = vadd.f32 %v3737, %v3849
      %3851 = vmatmul.f32.gmra.mxu0 %v3788
      %v3852 = vpop.f32.mrf.mxu0
      %v3853 = vadd.f32 %v3740, %v3852
      %3854 = vmatmul.f32.gmra.mxu0 %v3791
      %v3855 = vpop.f32.mrf.mxu0
      %v3856 = vadd.f32 %v3743, %v3855
      %3857 = vmatmul.f32.gmra.mxu0 %v3794
      %v3858 = vpop.f32.mrf.mxu0
      %v3859 = vadd.f32 %v3746, %v3858
      %3860 = vmatmul.f32.gmra.mxu0 %v3797
      %v3861 = vpop.f32.mrf.mxu0
      %v3862 = vadd.f32 %v3749, %v3861
      %3863 = vmatmul.f32.gmra.mxu0 %v3800
      %v3864 = vpop.f32.mrf.mxu0
      %v3865 = vadd.f32 %v3752, %v3864
      %3866 = vdwg.mxu0
      %3867 = vrot.lane.b32.xlu0 %v969, 48
      %v3868 = vpop.permute.xlu0 %3867
      %3869 = vrot.lane.b32.xlu0 %v970, 48
      %v3870 = vpop.permute.xlu0 %3869
      %3871 = vrot.lane.b32.xlu0 %v971, 48
      %v3872 = vpop.permute.xlu0 %3871
      %3873 = vrot.lane.b32.xlu0 %v972, 48
      %v3874 = vpop.permute.xlu0 %3873
      %3875 = vrot.lane.b32.xlu0 %v973, 48
      %v3876 = vpop.permute.xlu0 %3875
      %3877 = vrot.lane.b32.xlu0 %v974, 48
      %v3878 = vpop.permute.xlu0 %3877
      %3879 = vrot.lane.b32.xlu0 %v975, 48
      %v3880 = vpop.permute.xlu0 %3879
      %3881 = vrot.lane.b32.xlu0 %v976, 48
      %v3882 = vpop.permute.xlu0 %3881
      %3883 = vrot.lane.b32.xlu0 %v977, 48
      %v3884 = vpop.permute.xlu0 %3883
      %3885 = vrot.lane.b32.xlu0 %v978, 48
      %v3886 = vpop.permute.xlu0 %3885
      %3887 = vrot.lane.b32.xlu0 %v979, 48
      %v3888 = vpop.permute.xlu0 %3887
      %3889 = vrot.lane.b32.xlu0 %v980, 48
      %v3890 = vpop.permute.xlu0 %3889
      %3891 = vrot.lane.b32.xlu0 %v981, 48
      %v3892 = vpop.permute.xlu0 %3891
      %3893 = vrot.lane.b32.xlu0 %v982, 48
      %v3894 = vpop.permute.xlu0 %3893
      %3895 = vrot.lane.b32.xlu0 %v983, 48
      %v3896 = vpop.permute.xlu0 %3895
      %3897 = vrot.lane.b32.xlu0 %v984, 48
      %v3898 = vpop.permute.xlu0 %3897
      %v3915 = vsel %vm852, %v3868, 0.0
      %3916 = vadd.xlane.f32.xlu0 %v3915
      %v3917 = vpop.xlane.xlu0 %3916
      %v3918 = vsel %vm852, %v3870, 0.0
      %3919 = vadd.xlane.f32.xlu0 %v3918
      %v3920 = vpop.xlane.xlu0 %3919
      %v3921 = vsel %vm852, %v3872, 0.0
      %3922 = vadd.xlane.f32.xlu0 %v3921
      %v3923 = vpop.xlane.xlu0 %3922
      %v3924 = vsel %vm852, %v3874, 0.0
      %3925 = vadd.xlane.f32.xlu0 %v3924
      %v3926 = vpop.xlane.xlu0 %3925
      %v3927 = vsel %vm852, %v3876, 0.0
      %3928 = vadd.xlane.f32.xlu0 %v3927
      %v3929 = vpop.xlane.xlu0 %3928
      %v3930 = vsel %vm852, %v3878, 0.0
      %3931 = vadd.xlane.f32.xlu0 %v3930
      %v3932 = vpop.xlane.xlu0 %3931
      %v3933 = vsel %vm852, %v3880, 0.0
      %3934 = vadd.xlane.f32.xlu0 %v3933
      %v3935 = vpop.xlane.xlu0 %3934
      %v3936 = vsel %vm852, %v3882, 0.0
      %3937 = vadd.xlane.f32.xlu0 %v3936
      %v3938 = vpop.xlane.xlu0 %3937
      %v3939 = vsel %vm852, %v3884, 0.0
      %3940 = vadd.xlane.f32.xlu0 %v3939
      %v3941 = vpop.xlane.xlu0 %3940
      %v3942 = vsel %vm852, %v3886, 0.0
      %3943 = vadd.xlane.f32.xlu0 %v3942
      %v3944 = vpop.xlane.xlu0 %3943
      %v3945 = vsel %vm852, %v3888, 0.0
      %3946 = vadd.xlane.f32.xlu0 %v3945
      %v3947 = vpop.xlane.xlu0 %3946
      %v3948 = vsel %vm852, %v3890, 0.0
      %3949 = vadd.xlane.f32.xlu0 %v3948
      %v3950 = vpop.xlane.xlu0 %3949
      %v3951 = vsel %vm852, %v3892, 0.0
      %3952 = vadd.xlane.f32.xlu0 %v3951
      %v3953 = vpop.xlane.xlu0 %3952
      %v3954 = vsel %vm852, %v3894, 0.0
      %3955 = vadd.xlane.f32.xlu0 %v3954
      %v3956 = vpop.xlane.xlu0 %3955
      %v3957 = vsel %vm852, %v3896, 0.0
      %3958 = vadd.xlane.f32.xlu0 %v3957
      %v3959 = vpop.xlane.xlu0 %3958
      %v3960 = vsel %vm852, %v3898, 0.0
      %3961 = vadd.xlane.f32.xlu0 %v3960
      %v3962 = vpop.xlane.xlu0 %3961
      %3963 = vrot.lane.b32.xlu0 %v781, 48
      %v3964 = vpop.permute.xlu0 %3963
      %3965 = vrot.lane.b32.xlu0 %v765, 112
      %v3966 = vpop.permute.xlu0 %3965
      %v3967 = vsel %vm852, %v3964, 0
      %v3969 = vsel %vm852, %v3966, 0
      %3971 = vmatpush.xpose.msra.mxu0 0.0
      %3972 = vmatpush.xpose.msra.mxu0 0.0
      %3973 = vmatpush.xpose.msra.mxu0 0.0
      %3974 = vmatpush.xpose.msra.mxu0 0.0
      %3975 = vmatpush.xpose.msra.mxu0 0.0
      %3976 = vmatpush.xpose.msra.mxu0 0.0
      %3977 = vmatpush.xpose.msra.mxu0 0.0
      %3978 = vmatpush.xpose.msra.mxu0 0.0
      %3979 = vmatpush.xpose.msra.mxu0 0.0
      %3980 = vmatpush.xpose.msra.mxu0 0.0
      %3981 = vmatpush.xpose.msra.mxu0 0.0
      %3982 = vmatpush.xpose.msra.mxu0 0.0
      %3983 = vmatpush.xpose.msra.mxu0 0.0
      %3984 = vmatpush.xpose.msra.mxu0 0.0
      %3985 = vmatpush.xpose.msra.mxu0 0.0
      %3986 = vmatpush.xpose.msra.mxu0 %v3969
      %3987 = vmatmul.f32.gmra.mxu0 %v3967
      %v3988 = vpop.f32.mrf.mxu0
      %v3989 = vadd.f32 0.0, %v3988
      %3990 = vdwg.mxu0
      %3991 = vrot.lane.b32.xlu0 %v782, 48
      %v3992 = vpop.permute.xlu0 %3991
      %3993 = vrot.lane.b32.xlu0 %v766, 112
      %v3994 = vpop.permute.xlu0 %3993
      %v3995 = vsel %vm852, %v3992, 0
      %v3997 = vsel %vm852, %v3994, 0
      %3999 = vmatpush.xpose.msra.mxu0 0.0
      %4000 = vmatpush.xpose.msra.mxu0 0.0
      %4001 = vmatpush.xpose.msra.mxu0 0.0
      %4002 = vmatpush.xpose.msra.mxu0 0.0
      %4003 = vmatpush.xpose.msra.mxu0 0.0
      %4004 = vmatpush.xpose.msra.mxu0 0.0
      %4005 = vmatpush.xpose.msra.mxu0 0.0
      %4006 = vmatpush.xpose.msra.mxu0 0.0
      %4007 = vmatpush.xpose.msra.mxu0 0.0
      %4008 = vmatpush.xpose.msra.mxu0 0.0
      %4009 = vmatpush.xpose.msra.mxu0 0.0
      %4010 = vmatpush.xpose.msra.mxu0 0.0
      %4011 = vmatpush.xpose.msra.mxu0 0.0
      %4012 = vmatpush.xpose.msra.mxu0 0.0
      %4013 = vmatpush.xpose.msra.mxu0 0.0
      %4014 = vmatpush.xpose.msra.mxu0 %v3997
      %4015 = vmatmul.f32.gmra.mxu0 %v3995
      %v4016 = vpop.f32.mrf.mxu0
      %v4017 = vadd.f32 0.0, %v4016
      %4018 = vdwg.mxu0
      %4019 = vrot.lane.b32.xlu0 %v783, 48
      %v4020 = vpop.permute.xlu0 %4019
      %4021 = vrot.lane.b32.xlu0 %v767, 112
      %v4022 = vpop.permute.xlu0 %4021
      %v4023 = vsel %vm852, %v4020, 0
      %v4025 = vsel %vm852, %v4022, 0
      %4027 = vmatpush.xpose.msra.mxu0 0.0
      %4028 = vmatpush.xpose.msra.mxu0 0.0
      %4029 = vmatpush.xpose.msra.mxu0 0.0
      %4030 = vmatpush.xpose.msra.mxu0 0.0
      %4031 = vmatpush.xpose.msra.mxu0 0.0
      %4032 = vmatpush.xpose.msra.mxu0 0.0
      %4033 = vmatpush.xpose.msra.mxu0 0.0
      %4034 = vmatpush.xpose.msra.mxu0 0.0
      %4035 = vmatpush.xpose.msra.mxu0 0.0
      %4036 = vmatpush.xpose.msra.mxu0 0.0
      %4037 = vmatpush.xpose.msra.mxu0 0.0
      %4038 = vmatpush.xpose.msra.mxu0 0.0
      %4039 = vmatpush.xpose.msra.mxu0 0.0
      %4040 = vmatpush.xpose.msra.mxu0 0.0
      %4041 = vmatpush.xpose.msra.mxu0 0.0
      %4042 = vmatpush.xpose.msra.mxu0 %v4025
      %4043 = vmatmul.f32.gmra.mxu0 %v4023
      %v4044 = vpop.f32.mrf.mxu0
      %v4045 = vadd.f32 0.0, %v4044
      %4046 = vdwg.mxu0
      %4047 = vrot.lane.b32.xlu0 %v784, 48
      %v4048 = vpop.permute.xlu0 %4047
      %4049 = vrot.lane.b32.xlu0 %v768, 112
      %v4050 = vpop.permute.xlu0 %4049
      %v4051 = vsel %vm852, %v4048, 0
      %v4053 = vsel %vm852, %v4050, 0
      %4055 = vmatpush.xpose.msra.mxu0 0.0
      %4056 = vmatpush.xpose.msra.mxu0 0.0
      %4057 = vmatpush.xpose.msra.mxu0 0.0
      %4058 = vmatpush.xpose.msra.mxu0 0.0
      %4059 = vmatpush.xpose.msra.mxu0 0.0
      %4060 = vmatpush.xpose.msra.mxu0 0.0
      %4061 = vmatpush.xpose.msra.mxu0 0.0
      %4062 = vmatpush.xpose.msra.mxu0 0.0
      %4063 = vmatpush.xpose.msra.mxu0 0.0
      %4064 = vmatpush.xpose.msra.mxu0 0.0
      %4065 = vmatpush.xpose.msra.mxu0 0.0
      %4066 = vmatpush.xpose.msra.mxu0 0.0
      %4067 = vmatpush.xpose.msra.mxu0 0.0
      %4068 = vmatpush.xpose.msra.mxu0 0.0
      %4069 = vmatpush.xpose.msra.mxu0 0.0
      %4070 = vmatpush.xpose.msra.mxu0 %v4053
      %4071 = vmatmul.f32.gmra.mxu0 %v4051
      %v4072 = vpop.f32.mrf.mxu0
      %v4073 = vadd.f32 0.0, %v4072
      %4074 = vdwg.mxu0
      %4075 = vrot.lane.b32.xlu0 %v785, 48
      %v4076 = vpop.permute.xlu0 %4075
      %4077 = vrot.lane.b32.xlu0 %v769, 112
      %v4078 = vpop.permute.xlu0 %4077
      %v4079 = vsel %vm852, %v4076, 0
      %v4081 = vsel %vm852, %v4078, 0
      %4083 = vmatpush.xpose.msra.mxu0 0.0
      %4084 = vmatpush.xpose.msra.mxu0 0.0
      %4085 = vmatpush.xpose.msra.mxu0 0.0
      %4086 = vmatpush.xpose.msra.mxu0 0.0
      %4087 = vmatpush.xpose.msra.mxu0 0.0
      %4088 = vmatpush.xpose.msra.mxu0 0.0
      %4089 = vmatpush.xpose.msra.mxu0 0.0
      %4090 = vmatpush.xpose.msra.mxu0 0.0
      %4091 = vmatpush.xpose.msra.mxu0 0.0
      %4092 = vmatpush.xpose.msra.mxu0 0.0
      %4093 = vmatpush.xpose.msra.mxu0 0.0
      %4094 = vmatpush.xpose.msra.mxu0 0.0
      %4095 = vmatpush.xpose.msra.mxu0 0.0
      %4096 = vmatpush.xpose.msra.mxu0 0.0
      %4097 = vmatpush.xpose.msra.mxu0 0.0
      %4098 = vmatpush.xpose.msra.mxu0 %v4081
      %4099 = vmatmul.f32.gmra.mxu0 %v4079
      %v4100 = vpop.f32.mrf.mxu0
      %v4101 = vadd.f32 0.0, %v4100
      %4102 = vdwg.mxu0
      %4103 = vrot.lane.b32.xlu0 %v786, 48
      %v4104 = vpop.permute.xlu0 %4103
      %4105 = vrot.lane.b32.xlu0 %v770, 112
      %v4106 = vpop.permute.xlu0 %4105
      %v4107 = vsel %vm852, %v4104, 0
      %v4109 = vsel %vm852, %v4106, 0
      %4111 = vmatpush.xpose.msra.mxu0 0.0
      %4112 = vmatpush.xpose.msra.mxu0 0.0
      %4113 = vmatpush.xpose.msra.mxu0 0.0
      %4114 = vmatpush.xpose.msra.mxu0 0.0
      %4115 = vmatpush.xpose.msra.mxu0 0.0
      %4116 = vmatpush.xpose.msra.mxu0 0.0
      %4117 = vmatpush.xpose.msra.mxu0 0.0
      %4118 = vmatpush.xpose.msra.mxu0 0.0
      %4119 = vmatpush.xpose.msra.mxu0 0.0
      %4120 = vmatpush.xpose.msra.mxu0 0.0
      %4121 = vmatpush.xpose.msra.mxu0 0.0
      %4122 = vmatpush.xpose.msra.mxu0 0.0
      %4123 = vmatpush.xpose.msra.mxu0 0.0
      %4124 = vmatpush.xpose.msra.mxu0 0.0
      %4125 = vmatpush.xpose.msra.mxu0 0.0
      %4126 = vmatpush.xpose.msra.mxu0 %v4109
      %4127 = vmatmul.f32.gmra.mxu0 %v4107
      %v4128 = vpop.f32.mrf.mxu0
      %v4129 = vadd.f32 0.0, %v4128
      %4130 = vdwg.mxu0
      %4131 = vrot.lane.b32.xlu0 %v787, 48
      %v4132 = vpop.permute.xlu0 %4131
      %4133 = vrot.lane.b32.xlu0 %v771, 112
      %v4134 = vpop.permute.xlu0 %4133
      %v4135 = vsel %vm852, %v4132, 0
      %v4137 = vsel %vm852, %v4134, 0
      %4139 = vmatpush.xpose.msra.mxu0 0.0
      %4140 = vmatpush.xpose.msra.mxu0 0.0
      %4141 = vmatpush.xpose.msra.mxu0 0.0
      %4142 = vmatpush.xpose.msra.mxu0 0.0
      %4143 = vmatpush.xpose.msra.mxu0 0.0
      %4144 = vmatpush.xpose.msra.mxu0 0.0
      %4145 = vmatpush.xpose.msra.mxu0 0.0
      %4146 = vmatpush.xpose.msra.mxu0 0.0
      %4147 = vmatpush.xpose.msra.mxu0 0.0
      %4148 = vmatpush.xpose.msra.mxu0 0.0
      %4149 = vmatpush.xpose.msra.mxu0 0.0
      %4150 = vmatpush.xpose.msra.mxu0 0.0
      %4151 = vmatpush.xpose.msra.mxu0 0.0
      %4152 = vmatpush.xpose.msra.mxu0 0.0
      %4153 = vmatpush.xpose.msra.mxu0 0.0
      %4154 = vmatpush.xpose.msra.mxu0 %v4137
      %4155 = vmatmul.f32.gmra.mxu0 %v4135
      %v4156 = vpop.f32.mrf.mxu0
      %v4157 = vadd.f32 0.0, %v4156
      %4158 = vdwg.mxu0
      %4159 = vrot.lane.b32.xlu0 %v788, 48
      %v4160 = vpop.permute.xlu0 %4159
      %4161 = vrot.lane.b32.xlu0 %v772, 112
      %v4162 = vpop.permute.xlu0 %4161
      %v4163 = vsel %vm852, %v4160, 0
      %v4165 = vsel %vm852, %v4162, 0
      %4167 = vmatpush.xpose.msra.mxu0 0.0
      %4168 = vmatpush.xpose.msra.mxu0 0.0
      %4169 = vmatpush.xpose.msra.mxu0 0.0
      %4170 = vmatpush.xpose.msra.mxu0 0.0
      %4171 = vmatpush.xpose.msra.mxu0 0.0
      %4172 = vmatpush.xpose.msra.mxu0 0.0
      %4173 = vmatpush.xpose.msra.mxu0 0.0
      %4174 = vmatpush.xpose.msra.mxu0 0.0
      %4175 = vmatpush.xpose.msra.mxu0 0.0
      %4176 = vmatpush.xpose.msra.mxu0 0.0
      %4177 = vmatpush.xpose.msra.mxu0 0.0
      %4178 = vmatpush.xpose.msra.mxu0 0.0
      %4179 = vmatpush.xpose.msra.mxu0 0.0
      %4180 = vmatpush.xpose.msra.mxu0 0.0
      %4181 = vmatpush.xpose.msra.mxu0 0.0
      %4182 = vmatpush.xpose.msra.mxu0 %v4165
      %4183 = vmatmul.f32.gmra.mxu0 %v4163
      %v4184 = vpop.f32.mrf.mxu0
      %v4185 = vadd.f32 0.0, %v4184
      %4186 = vdwg.mxu0
      %4187 = vrot.lane.b32.xlu0 %v789, 48
      %v4188 = vpop.permute.xlu0 %4187
      %4189 = vrot.lane.b32.xlu0 %v773, 112
      %v4190 = vpop.permute.xlu0 %4189
      %v4191 = vsel %vm852, %v4188, 0
      %v4193 = vsel %vm852, %v4190, 0
      %4195 = vmatpush.xpose.msra.mxu0 0.0
      %4196 = vmatpush.xpose.msra.mxu0 0.0
      %4197 = vmatpush.xpose.msra.mxu0 0.0
      %4198 = vmatpush.xpose.msra.mxu0 0.0
      %4199 = vmatpush.xpose.msra.mxu0 0.0
      %4200 = vmatpush.xpose.msra.mxu0 0.0
      %4201 = vmatpush.xpose.msra.mxu0 0.0
      %4202 = vmatpush.xpose.msra.mxu0 0.0
      %4203 = vmatpush.xpose.msra.mxu0 0.0
      %4204 = vmatpush.xpose.msra.mxu0 0.0
      %4205 = vmatpush.xpose.msra.mxu0 0.0
      %4206 = vmatpush.xpose.msra.mxu0 0.0
      %4207 = vmatpush.xpose.msra.mxu0 0.0
      %4208 = vmatpush.xpose.msra.mxu0 0.0
      %4209 = vmatpush.xpose.msra.mxu0 0.0
      %4210 = vmatpush.xpose.msra.mxu0 %v4193
      %4211 = vmatmul.f32.gmra.mxu0 %v4191
      %v4212 = vpop.f32.mrf.mxu0
      %v4213 = vadd.f32 0.0, %v4212
      %4214 = vdwg.mxu0
      %4215 = vrot.lane.b32.xlu0 %v790, 48
      %v4216 = vpop.permute.xlu0 %4215
      %4217 = vrot.lane.b32.xlu0 %v774, 112
      %v4218 = vpop.permute.xlu0 %4217
      %v4219 = vsel %vm852, %v4216, 0
      %v4221 = vsel %vm852, %v4218, 0
      %4223 = vmatpush.xpose.msra.mxu0 0.0
      %4224 = vmatpush.xpose.msra.mxu0 0.0
      %4225 = vmatpush.xpose.msra.mxu0 0.0
      %4226 = vmatpush.xpose.msra.mxu0 0.0
      %4227 = vmatpush.xpose.msra.mxu0 0.0
      %4228 = vmatpush.xpose.msra.mxu0 0.0
      %4229 = vmatpush.xpose.msra.mxu0 0.0
      %4230 = vmatpush.xpose.msra.mxu0 0.0
      %4231 = vmatpush.xpose.msra.mxu0 0.0
      %4232 = vmatpush.xpose.msra.mxu0 0.0
      %4233 = vmatpush.xpose.msra.mxu0 0.0
      %4234 = vmatpush.xpose.msra.mxu0 0.0
      %4235 = vmatpush.xpose.msra.mxu0 0.0
      %4236 = vmatpush.xpose.msra.mxu0 0.0
      %4237 = vmatpush.xpose.msra.mxu0 0.0
      %4238 = vmatpush.xpose.msra.mxu0 %v4221
      %4239 = vmatmul.f32.gmra.mxu0 %v4219
      %v4240 = vpop.f32.mrf.mxu0
      %v4241 = vadd.f32 0.0, %v4240
      %4242 = vdwg.mxu0
      %4243 = vrot.lane.b32.xlu0 %v791, 48
      %v4244 = vpop.permute.xlu0 %4243
      %4245 = vrot.lane.b32.xlu0 %v775, 112
      %v4246 = vpop.permute.xlu0 %4245
      %v4247 = vsel %vm852, %v4244, 0
      %v4249 = vsel %vm852, %v4246, 0
      %4251 = vmatpush.xpose.msra.mxu0 0.0
      %4252 = vmatpush.xpose.msra.mxu0 0.0
      %4253 = vmatpush.xpose.msra.mxu0 0.0
      %4254 = vmatpush.xpose.msra.mxu0 0.0
      %4255 = vmatpush.xpose.msra.mxu0 0.0
      %4256 = vmatpush.xpose.msra.mxu0 0.0
      %4257 = vmatpush.xpose.msra.mxu0 0.0
      %4258 = vmatpush.xpose.msra.mxu0 0.0
      %4259 = vmatpush.xpose.msra.mxu0 0.0
      %4260 = vmatpush.xpose.msra.mxu0 0.0
      %4261 = vmatpush.xpose.msra.mxu0 0.0
      %4262 = vmatpush.xpose.msra.mxu0 0.0
      %4263 = vmatpush.xpose.msra.mxu0 0.0
      %4264 = vmatpush.xpose.msra.mxu0 0.0
      %4265 = vmatpush.xpose.msra.mxu0 0.0
      %4266 = vmatpush.xpose.msra.mxu0 %v4249
      %4267 = vmatmul.f32.gmra.mxu0 %v4247
      %v4268 = vpop.f32.mrf.mxu0
      %v4269 = vadd.f32 0.0, %v4268
      %4270 = vdwg.mxu0
      %4271 = vrot.lane.b32.xlu0 %v792, 48
      %v4272 = vpop.permute.xlu0 %4271
      %4273 = vrot.lane.b32.xlu0 %v776, 112
      %v4274 = vpop.permute.xlu0 %4273
      %v4275 = vsel %vm852, %v4272, 0
      %v4277 = vsel %vm852, %v4274, 0
      %4279 = vmatpush.xpose.msra.mxu0 0.0
      %4280 = vmatpush.xpose.msra.mxu0 0.0
      %4281 = vmatpush.xpose.msra.mxu0 0.0
      %4282 = vmatpush.xpose.msra.mxu0 0.0
      %4283 = vmatpush.xpose.msra.mxu0 0.0
      %4284 = vmatpush.xpose.msra.mxu0 0.0
      %4285 = vmatpush.xpose.msra.mxu0 0.0
      %4286 = vmatpush.xpose.msra.mxu0 0.0
      %4287 = vmatpush.xpose.msra.mxu0 0.0
      %4288 = vmatpush.xpose.msra.mxu0 0.0
      %4289 = vmatpush.xpose.msra.mxu0 0.0
      %4290 = vmatpush.xpose.msra.mxu0 0.0
      %4291 = vmatpush.xpose.msra.mxu0 0.0
      %4292 = vmatpush.xpose.msra.mxu0 0.0
      %4293 = vmatpush.xpose.msra.mxu0 0.0
      %4294 = vmatpush.xpose.msra.mxu0 %v4277
      %4295 = vmatmul.f32.gmra.mxu0 %v4275
      %v4296 = vpop.f32.mrf.mxu0
      %v4297 = vadd.f32 0.0, %v4296
      %4298 = vdwg.mxu0
      %4299 = vrot.lane.b32.xlu0 %v793, 48
      %v4300 = vpop.permute.xlu0 %4299
      %4301 = vrot.lane.b32.xlu0 %v777, 112
      %v4302 = vpop.permute.xlu0 %4301
      %v4303 = vsel %vm852, %v4300, 0
      %v4305 = vsel %vm852, %v4302, 0
      %4307 = vmatpush.xpose.msra.mxu0 0.0
      %4308 = vmatpush.xpose.msra.mxu0 0.0
      %4309 = vmatpush.xpose.msra.mxu0 0.0
      %4310 = vmatpush.xpose.msra.mxu0 0.0
      %4311 = vmatpush.xpose.msra.mxu0 0.0
      %4312 = vmatpush.xpose.msra.mxu0 0.0
      %4313 = vmatpush.xpose.msra.mxu0 0.0
      %4314 = vmatpush.xpose.msra.mxu0 0.0
      %4315 = vmatpush.xpose.msra.mxu0 0.0
      %4316 = vmatpush.xpose.msra.mxu0 0.0
      %4317 = vmatpush.xpose.msra.mxu0 0.0
      %4318 = vmatpush.xpose.msra.mxu0 0.0
      %4319 = vmatpush.xpose.msra.mxu0 0.0
      %4320 = vmatpush.xpose.msra.mxu0 0.0
      %4321 = vmatpush.xpose.msra.mxu0 0.0
      %4322 = vmatpush.xpose.msra.mxu0 %v4305
      %4323 = vmatmul.f32.gmra.mxu0 %v4303
      %v4324 = vpop.f32.mrf.mxu0
      %v4325 = vadd.f32 0.0, %v4324
      %4326 = vdwg.mxu0
      %4327 = vrot.lane.b32.xlu0 %v794, 48
      %v4328 = vpop.permute.xlu0 %4327
      %4329 = vrot.lane.b32.xlu0 %v778, 112
      %v4330 = vpop.permute.xlu0 %4329
      %v4331 = vsel %vm852, %v4328, 0
      %v4333 = vsel %vm852, %v4330, 0
      %4335 = vmatpush.xpose.msra.mxu0 0.0
      %4336 = vmatpush.xpose.msra.mxu0 0.0
      %4337 = vmatpush.xpose.msra.mxu0 0.0
      %4338 = vmatpush.xpose.msra.mxu0 0.0
      %4339 = vmatpush.xpose.msra.mxu0 0.0
      %4340 = vmatpush.xpose.msra.mxu0 0.0
      %4341 = vmatpush.xpose.msra.mxu0 0.0
      %4342 = vmatpush.xpose.msra.mxu0 0.0
      %4343 = vmatpush.xpose.msra.mxu0 0.0
      %4344 = vmatpush.xpose.msra.mxu0 0.0
      %4345 = vmatpush.xpose.msra.mxu0 0.0
      %4346 = vmatpush.xpose.msra.mxu0 0.0
      %4347 = vmatpush.xpose.msra.mxu0 0.0
      %4348 = vmatpush.xpose.msra.mxu0 0.0
      %4349 = vmatpush.xpose.msra.mxu0 0.0
      %4350 = vmatpush.xpose.msra.mxu0 %v4333
      %4351 = vmatmul.f32.gmra.mxu0 %v4331
      %v4352 = vpop.f32.mrf.mxu0
      %v4353 = vadd.f32 0.0, %v4352
      %4354 = vdwg.mxu0
      %4355 = vrot.lane.b32.xlu0 %v795, 48
      %v4356 = vpop.permute.xlu0 %4355
      %4357 = vrot.lane.b32.xlu0 %v779, 112
      %v4358 = vpop.permute.xlu0 %4357
      %v4359 = vsel %vm852, %v4356, 0
      %v4361 = vsel %vm852, %v4358, 0
      %4363 = vmatpush.xpose.msra.mxu0 0.0
      %4364 = vmatpush.xpose.msra.mxu0 0.0
      %4365 = vmatpush.xpose.msra.mxu0 0.0
      %4366 = vmatpush.xpose.msra.mxu0 0.0
      %4367 = vmatpush.xpose.msra.mxu0 0.0
      %4368 = vmatpush.xpose.msra.mxu0 0.0
      %4369 = vmatpush.xpose.msra.mxu0 0.0
      %4370 = vmatpush.xpose.msra.mxu0 0.0
      %4371 = vmatpush.xpose.msra.mxu0 0.0
      %4372 = vmatpush.xpose.msra.mxu0 0.0
      %4373 = vmatpush.xpose.msra.mxu0 0.0
      %4374 = vmatpush.xpose.msra.mxu0 0.0
      %4375 = vmatpush.xpose.msra.mxu0 0.0
      %4376 = vmatpush.xpose.msra.mxu0 0.0
      %4377 = vmatpush.xpose.msra.mxu0 0.0
      %4378 = vmatpush.xpose.msra.mxu0 %v4361
      %4379 = vmatmul.f32.gmra.mxu0 %v4359
      %v4380 = vpop.f32.mrf.mxu0
      %v4381 = vadd.f32 0.0, %v4380
      %4382 = vdwg.mxu0
      %4383 = vrot.lane.b32.xlu0 %v796, 48
      %v4384 = vpop.permute.xlu0 %4383
      %4385 = vrot.lane.b32.xlu0 %v780, 112
      %v4386 = vpop.permute.xlu0 %4385
      %v4387 = vsel %vm852, %v4384, 0
      %v4389 = vsel %vm852, %v4386, 0
      %4391 = vmatpush.xpose.msra.mxu0 0.0
      %4392 = vmatpush.xpose.msra.mxu0 0.0
      %4393 = vmatpush.xpose.msra.mxu0 0.0
      %4394 = vmatpush.xpose.msra.mxu0 0.0
      %4395 = vmatpush.xpose.msra.mxu0 0.0
      %4396 = vmatpush.xpose.msra.mxu0 0.0
      %4397 = vmatpush.xpose.msra.mxu0 0.0
      %4398 = vmatpush.xpose.msra.mxu0 0.0
      %4399 = vmatpush.xpose.msra.mxu0 0.0
      %4400 = vmatpush.xpose.msra.mxu0 0.0
      %4401 = vmatpush.xpose.msra.mxu0 0.0
      %4402 = vmatpush.xpose.msra.mxu0 0.0
      %4403 = vmatpush.xpose.msra.mxu0 0.0
      %4404 = vmatpush.xpose.msra.mxu0 0.0
      %4405 = vmatpush.xpose.msra.mxu0 0.0
      %4406 = vmatpush.xpose.msra.mxu0 %v4389
      %4407 = vmatmul.f32.gmra.mxu0 %v4387
      %v4408 = vpop.f32.mrf.mxu0
      %v4409 = vadd.f32 0.0, %v4408
      %4410 = vdwg.mxu0
      %v4411 = vsel %vm835, %v3917, %v3989
      %v4412 = vsel %vm835, %v3920, %v4017
      %v4413 = vsel %vm835, %v3923, %v4045
      %v4414 = vsel %vm835, %v3926, %v4073
      %v4415 = vsel %vm835, %v3929, %v4101
      %v4416 = vsel %vm835, %v3932, %v4129
      %v4417 = vsel %vm835, %v3935, %v4157
      %v4418 = vsel %vm835, %v3938, %v4185
      %v4419 = vsel %vm835, %v3941, %v4213
      %v4420 = vsel %vm835, %v3944, %v4241
      %v4421 = vsel %vm835, %v3947, %v4269
      %v4422 = vsel %vm835, %v3950, %v4297
      %v4423 = vsel %vm835, %v3953, %v4325
      %v4424 = vsel %vm835, %v3956, %v4353
      %v4425 = vsel %vm835, %v3959, %v4381
      %v4426 = vsel %vm835, %v3962, %v4409
      %v4427 = vadd.f32 %v4411, %v818
      %v4428 = vadd.f32 %v4412, %v819
      %v4429 = vadd.f32 %v4413, %v820
      %v4430 = vadd.f32 %v4414, %v821
      %v4431 = vadd.f32 %v4415, %v822
      %v4432 = vadd.f32 %v4416, %v823
      %v4433 = vadd.f32 %v4417, %v824
      %v4434 = vadd.f32 %v4418, %v825
      %v4435 = vadd.f32 %v4419, %v826
      %v4436 = vadd.f32 %v4420, %v827
      %v4437 = vadd.f32 %v4421, %v828
      %v4438 = vadd.f32 %v4422, %v829
      %v4439 = vadd.f32 %v4423, %v830
      %v4440 = vadd.f32 %v4424, %v831
      %v4441 = vadd.f32 %v4425, %v832
      %v4442 = vadd.f32 %v4426, %v833
      %v4443 = vsel %vm852, %v4427, -inf
      %4444 = vmax.xlane.f32.xlu0 %v4443
      %v4445 = vpop.xlane.xlu0 %4444
      %v4446 = vsel %vm852, %v4428, -inf
      %4447 = vmax.xlane.f32.xlu0 %v4446
      %v4448 = vpop.xlane.xlu0 %4447
      %v4449 = vsel %vm852, %v4429, -inf
      %4450 = vmax.xlane.f32.xlu0 %v4449
      %v4451 = vpop.xlane.xlu0 %4450
      %v4452 = vsel %vm852, %v4430, -inf
      %4453 = vmax.xlane.f32.xlu0 %v4452
      %v4454 = vpop.xlane.xlu0 %4453
      %v4455 = vsel %vm852, %v4431, -inf
      %4456 = vmax.xlane.f32.xlu0 %v4455
      %v4457 = vpop.xlane.xlu0 %4456
      %v4458 = vsel %vm852, %v4432, -inf
      %4459 = vmax.xlane.f32.xlu0 %v4458
      %v4460 = vpop.xlane.xlu0 %4459
      %v4461 = vsel %vm852, %v4433, -inf
      %4462 = vmax.xlane.f32.xlu0 %v4461
      %v4463 = vpop.xlane.xlu0 %4462
      %v4464 = vsel %vm852, %v4434, -inf
      %4465 = vmax.xlane.f32.xlu0 %v4464
      %v4466 = vpop.xlane.xlu0 %4465
      %v4467 = vsel %vm852, %v4435, -inf
      %4468 = vmax.xlane.f32.xlu0 %v4467
      %v4469 = vpop.xlane.xlu0 %4468
      %v4470 = vsel %vm852, %v4436, -inf
      %4471 = vmax.xlane.f32.xlu0 %v4470
      %v4472 = vpop.xlane.xlu0 %4471
      %v4473 = vsel %vm852, %v4437, -inf
      %4474 = vmax.xlane.f32.xlu0 %v4473
      %v4475 = vpop.xlane.xlu0 %4474
      %v4476 = vsel %vm852, %v4438, -inf
      %4477 = vmax.xlane.f32.xlu0 %v4476
      %v4478 = vpop.xlane.xlu0 %4477
      %v4479 = vsel %vm852, %v4439, -inf
      %4480 = vmax.xlane.f32.xlu0 %v4479
      %v4481 = vpop.xlane.xlu0 %4480
      %v4482 = vsel %vm852, %v4440, -inf
      %4483 = vmax.xlane.f32.xlu0 %v4482
      %v4484 = vpop.xlane.xlu0 %4483
      %v4485 = vsel %vm852, %v4441, -inf
      %4486 = vmax.xlane.f32.xlu0 %v4485
      %v4487 = vpop.xlane.xlu0 %4486
      %v4488 = vsel %vm852, %v4442, -inf
      %4489 = vmax.xlane.f32.xlu0 %v4488
      %v4490 = vpop.xlane.xlu0 %4489
      %v4491 = vsub.f32 %v4427, %v4445
      %v4492 = vsub.f32 %v4428, %v4448
      %v4493 = vsub.f32 %v4429, %v4451
      %v4494 = vsub.f32 %v4430, %v4454
      %v4495 = vsub.f32 %v4431, %v4457
      %v4496 = vsub.f32 %v4432, %v4460
      %v4497 = vsub.f32 %v4433, %v4463
      %v4498 = vsub.f32 %v4434, %v4466
      %v4499 = vsub.f32 %v4435, %v4469
      %v4500 = vsub.f32 %v4436, %v4472
      %v4501 = vsub.f32 %v4437, %v4475
      %v4502 = vsub.f32 %v4438, %v4478
      %v4503 = vsub.f32 %v4439, %v4481
      %v4504 = vsub.f32 %v4440, %v4484
      %v4505 = vsub.f32 %v4441, %v4487
      %v4506 = vsub.f32 %v4442, %v4490
      %v4507 = vmul.f32 %v4491, 1.442695
      %v4508 = vpow.pop %v4507
      %v4509 = vmul.f32 %v4492, 1.442695
      %v4510 = vpow.pop %v4509
      %v4511 = vmul.f32 %v4493, 1.442695
      %v4512 = vpow.pop %v4511
      %v4513 = vmul.f32 %v4494, 1.442695
      %v4514 = vpow.pop %v4513
      %v4515 = vmul.f32 %v4495, 1.442695
      %v4516 = vpow.pop %v4515
      %v4517 = vmul.f32 %v4496, 1.442695
      %v4518 = vpow.pop %v4517
      %v4519 = vmul.f32 %v4497, 1.442695
      %v4520 = vpow.pop %v4519
      %v4521 = vmul.f32 %v4498, 1.442695
      %v4522 = vpow.pop %v4521
      %v4523 = vmul.f32 %v4499, 1.442695
      %v4524 = vpow.pop %v4523
      %v4525 = vmul.f32 %v4500, 1.442695
      %v4526 = vpow.pop %v4525
      %v4527 = vmul.f32 %v4501, 1.442695
      %v4528 = vpow.pop %v4527
      %v4529 = vmul.f32 %v4502, 1.442695
      %v4530 = vpow.pop %v4529
      %v4531 = vmul.f32 %v4503, 1.442695
      %v4532 = vpow.pop %v4531
      %v4533 = vmul.f32 %v4504, 1.442695
      %v4534 = vpow.pop %v4533
      %v4535 = vmul.f32 %v4505, 1.442695
      %v4536 = vpow.pop %v4535
      %v4537 = vmul.f32 %v4506, 1.442695
      %v4538 = vpow.pop %v4537
      %v4539 = vsel %vm852, %v4508, 0.0
      %4540 = vadd.xlane.f32.xlu0 %v4539
      %v4541 = vpop.xlane.xlu0 %4540
      %v4542 = vsel %vm852, %v4510, 0.0
      %4543 = vadd.xlane.f32.xlu0 %v4542
      %v4544 = vpop.xlane.xlu0 %4543
      %v4545 = vsel %vm852, %v4512, 0.0
      %4546 = vadd.xlane.f32.xlu0 %v4545
      %v4547 = vpop.xlane.xlu0 %4546
      %v4548 = vsel %vm852, %v4514, 0.0
      %4549 = vadd.xlane.f32.xlu0 %v4548
      %v4550 = vpop.xlane.xlu0 %4549
      %v4551 = vsel %vm852, %v4516, 0.0
      %4552 = vadd.xlane.f32.xlu0 %v4551
      %v4553 = vpop.xlane.xlu0 %4552
      %v4554 = vsel %vm852, %v4518, 0.0
      %4555 = vadd.xlane.f32.xlu0 %v4554
      %v4556 = vpop.xlane.xlu0 %4555
      %v4557 = vsel %vm852, %v4520, 0.0
      %4558 = vadd.xlane.f32.xlu0 %v4557
      %v4559 = vpop.xlane.xlu0 %4558
      %v4560 = vsel %vm852, %v4522, 0.0
      %4561 = vadd.xlane.f32.xlu0 %v4560
      %v4562 = vpop.xlane.xlu0 %4561
      %v4563 = vsel %vm852, %v4524, 0.0
      %4564 = vadd.xlane.f32.xlu0 %v4563
      %v4565 = vpop.xlane.xlu0 %4564
      %v4566 = vsel %vm852, %v4526, 0.0
      %4567 = vadd.xlane.f32.xlu0 %v4566
      %v4568 = vpop.xlane.xlu0 %4567
      %v4569 = vsel %vm852, %v4528, 0.0
      %4570 = vadd.xlane.f32.xlu0 %v4569
      %v4571 = vpop.xlane.xlu0 %4570
      %v4572 = vsel %vm852, %v4530, 0.0
      %4573 = vadd.xlane.f32.xlu0 %v4572
      %v4574 = vpop.xlane.xlu0 %4573
      %v4575 = vsel %vm852, %v4532, 0.0
      %4576 = vadd.xlane.f32.xlu0 %v4575
      %v4577 = vpop.xlane.xlu0 %4576
      %v4578 = vsel %vm852, %v4534, 0.0
      %4579 = vadd.xlane.f32.xlu0 %v4578
      %v4580 = vpop.xlane.xlu0 %4579
      %v4581 = vsel %vm852, %v4536, 0.0
      %4582 = vadd.xlane.f32.xlu0 %v4581
      %v4583 = vpop.xlane.xlu0 %4582
      %v4584 = vsel %vm852, %v4538, 0.0
      %4585 = vadd.xlane.f32.xlu0 %v4584
      %v4586 = vpop.xlane.xlu0 %4585
      %v4587 = vrcp.pop %v4541
      %v4588 = vrcp.pop %v4544
      %v4589 = vrcp.pop %v4547
      %v4590 = vrcp.pop %v4550
      %v4591 = vrcp.pop %v4553
      %v4592 = vrcp.pop %v4556
      %v4593 = vrcp.pop %v4559
      %v4594 = vrcp.pop %v4562
      %v4595 = vrcp.pop %v4565
      %v4596 = vrcp.pop %v4568
      %v4597 = vrcp.pop %v4571
      %v4598 = vrcp.pop %v4574
      %v4599 = vrcp.pop %v4577
      %v4600 = vrcp.pop %v4580
      %v4601 = vrcp.pop %v4583
      %v4602 = vrcp.pop %v4586
      %v4603 = vadd.f32 %v3917, %v855
      %v4604 = vadd.f32 %v3920, %v858
      %v4605 = vadd.f32 %v3923, %v861
      %v4606 = vadd.f32 %v3926, %v864
      %v4607 = vadd.f32 %v3929, %v867
      %v4608 = vadd.f32 %v3932, %v870
      %v4609 = vadd.f32 %v3935, %v873
      %v4610 = vadd.f32 %v3938, %v876
      %v4611 = vadd.f32 %v3941, %v879
      %v4612 = vadd.f32 %v3944, %v882
      %v4613 = vadd.f32 %v3947, %v885
      %v4614 = vadd.f32 %v3950, %v888
      %v4615 = vadd.f32 %v3953, %v891
      %v4616 = vadd.f32 %v3956, %v894
      %v4617 = vadd.f32 %v3959, %v897
      %v4618 = vadd.f32 %v3962, %v900
      %v4619 = vsub.f32 %v4603, %v4445
      %v4620 = vsub.f32 %v4604, %v4448
      %v4621 = vsub.f32 %v4605, %v4451
      %v4622 = vsub.f32 %v4606, %v4454
      %v4623 = vsub.f32 %v4607, %v4457
      %v4624 = vsub.f32 %v4608, %v4460
      %v4625 = vsub.f32 %v4609, %v4463
      %v4626 = vsub.f32 %v4610, %v4466
      %v4627 = vsub.f32 %v4611, %v4469
      %v4628 = vsub.f32 %v4612, %v4472
      %v4629 = vsub.f32 %v4613, %v4475
      %v4630 = vsub.f32 %v4614, %v4478
      %v4631 = vsub.f32 %v4615, %v4481
      %v4632 = vsub.f32 %v4616, %v4484
      %v4633 = vsub.f32 %v4617, %v4487
      %v4634 = vsub.f32 %v4618, %v4490
      %v4635 = vmul.f32 %v4619, 1.442695
      %v4636 = vpow.pop %v4635
      %v4637 = vmul.f32 %v4620, 1.442695
      %v4638 = vpow.pop %v4637
      %v4639 = vmul.f32 %v4621, 1.442695
      %v4640 = vpow.pop %v4639
      %v4641 = vmul.f32 %v4622, 1.442695
      %v4642 = vpow.pop %v4641
      %v4643 = vmul.f32 %v4623, 1.442695
      %v4644 = vpow.pop %v4643
      %v4645 = vmul.f32 %v4624, 1.442695
      %v4646 = vpow.pop %v4645
      %v4647 = vmul.f32 %v4625, 1.442695
      %v4648 = vpow.pop %v4647
      %v4649 = vmul.f32 %v4626, 1.442695
      %v4650 = vpow.pop %v4649
      %v4651 = vmul.f32 %v4627, 1.442695
      %v4652 = vpow.pop %v4651
      %v4653 = vmul.f32 %v4628, 1.442695
      %v4654 = vpow.pop %v4653
      %v4655 = vmul.f32 %v4629, 1.442695
      %v4656 = vpow.pop %v4655
      %v4657 = vmul.f32 %v4630, 1.442695
      %v4658 = vpow.pop %v4657
      %v4659 = vmul.f32 %v4631, 1.442695
      %v4660 = vpow.pop %v4659
      %v4661 = vmul.f32 %v4632, 1.442695
      %v4662 = vpow.pop %v4661
      %v4663 = vmul.f32 %v4633, 1.442695
      %v4664 = vpow.pop %v4663
      %v4665 = vmul.f32 %v4634, 1.442695
      %v4666 = vpow.pop %v4665
      %v4667 = vmul.f32 %v4636, %v4587
      %v4668 = vmul.f32 %v4638, %v4588
      %v4669 = vmul.f32 %v4640, %v4589
      %v4670 = vmul.f32 %v4642, %v4590
      %v4671 = vmul.f32 %v4644, %v4591
      %v4672 = vmul.f32 %v4646, %v4592
      %v4673 = vmul.f32 %v4648, %v4593
      %v4674 = vmul.f32 %v4650, %v4594
      %v4675 = vmul.f32 %v4652, %v4595
      %v4676 = vmul.f32 %v4654, %v4596
      %v4677 = vmul.f32 %v4656, %v4597
      %v4678 = vmul.f32 %v4658, %v4598
      %v4679 = vmul.f32 %v4660, %v4599
      %v4680 = vmul.f32 %v4662, %v4600
      %v4681 = vmul.f32 %v4664, %v4601
      %v4682 = vmul.f32 %v4666, %v4602
      %4683 = vrot.lane.b32.xlu0 %v765, 80
      %v4684 = vpop.permute.xlu0 %4683
      %v4687 = vsel %vm852, %v4508, 0
      %4689 = vmatpush.msra.mxu0 0.0
      %4690 = vmatpush.msra.mxu0 0.0
      %4691 = vmatpush.msra.mxu0 0.0
      %4692 = vmatpush.msra.mxu0 0.0
      %4693 = vmatpush.msra.mxu0 0.0
      %4694 = vmatpush.msra.mxu0 0.0
      %4695 = vmatpush.msra.mxu0 0.0
      %4696 = vmatpush.msra.mxu0 0.0
      %4697 = vmatpush.msra.mxu0 0.0
      %4698 = vmatpush.msra.mxu0 0.0
      %4699 = vmatpush.msra.mxu0 0.0
      %4700 = vmatpush.msra.mxu0 0.0
      %4701 = vmatpush.msra.mxu0 0.0
      %4702 = vmatpush.msra.mxu0 0.0
      %4703 = vmatpush.msra.mxu0 0.0
      %4704 = vmatpush.msra.mxu0 %v4684
      %4705 = vmatmul.f32.gmra.mxu0 %v4687
      %v4706 = vpop.f32.mrf.mxu0
      %v4707 = vadd.f32 0.0, %v4706
      %4708 = vdwg.mxu0
      %4709 = vrot.lane.b32.xlu0 %v766, 80
      %v4710 = vpop.permute.xlu0 %4709
      %v4713 = vsel %vm852, %v4510, 0
      %4715 = vmatpush.msra.mxu0 0.0
      %4716 = vmatpush.msra.mxu0 0.0
      %4717 = vmatpush.msra.mxu0 0.0
      %4718 = vmatpush.msra.mxu0 0.0
      %4719 = vmatpush.msra.mxu0 0.0
      %4720 = vmatpush.msra.mxu0 0.0
      %4721 = vmatpush.msra.mxu0 0.0
      %4722 = vmatpush.msra.mxu0 0.0
      %4723 = vmatpush.msra.mxu0 0.0
      %4724 = vmatpush.msra.mxu0 0.0
      %4725 = vmatpush.msra.mxu0 0.0
      %4726 = vmatpush.msra.mxu0 0.0
      %4727 = vmatpush.msra.mxu0 0.0
      %4728 = vmatpush.msra.mxu0 0.0
      %4729 = vmatpush.msra.mxu0 0.0
      %4730 = vmatpush.msra.mxu0 %v4710
      %4731 = vmatmul.f32.gmra.mxu0 %v4713
      %v4732 = vpop.f32.mrf.mxu0
      %v4733 = vadd.f32 0.0, %v4732
      %4734 = vdwg.mxu0
      %4735 = vrot.lane.b32.xlu0 %v767, 80
      %v4736 = vpop.permute.xlu0 %4735
      %v4739 = vsel %vm852, %v4512, 0
      %4741 = vmatpush.msra.mxu0 0.0
      %4742 = vmatpush.msra.mxu0 0.0
      %4743 = vmatpush.msra.mxu0 0.0
      %4744 = vmatpush.msra.mxu0 0.0
      %4745 = vmatpush.msra.mxu0 0.0
      %4746 = vmatpush.msra.mxu0 0.0
      %4747 = vmatpush.msra.mxu0 0.0
      %4748 = vmatpush.msra.mxu0 0.0
      %4749 = vmatpush.msra.mxu0 0.0
      %4750 = vmatpush.msra.mxu0 0.0
      %4751 = vmatpush.msra.mxu0 0.0
      %4752 = vmatpush.msra.mxu0 0.0
      %4753 = vmatpush.msra.mxu0 0.0
      %4754 = vmatpush.msra.mxu0 0.0
      %4755 = vmatpush.msra.mxu0 0.0
      %4756 = vmatpush.msra.mxu0 %v4736
      %4757 = vmatmul.f32.gmra.mxu0 %v4739
      %v4758 = vpop.f32.mrf.mxu0
      %v4759 = vadd.f32 0.0, %v4758
      %4760 = vdwg.mxu0
      %4761 = vrot.lane.b32.xlu0 %v768, 80
      %v4762 = vpop.permute.xlu0 %4761
      %v4765 = vsel %vm852, %v4514, 0
      %4767 = vmatpush.msra.mxu0 0.0
      %4768 = vmatpush.msra.mxu0 0.0
      %4769 = vmatpush.msra.mxu0 0.0
      %4770 = vmatpush.msra.mxu0 0.0
      %4771 = vmatpush.msra.mxu0 0.0
      %4772 = vmatpush.msra.mxu0 0.0
      %4773 = vmatpush.msra.mxu0 0.0
      %4774 = vmatpush.msra.mxu0 0.0
      %4775 = vmatpush.msra.mxu0 0.0
      %4776 = vmatpush.msra.mxu0 0.0
      %4777 = vmatpush.msra.mxu0 0.0
      %4778 = vmatpush.msra.mxu0 0.0
      %4779 = vmatpush.msra.mxu0 0.0
      %4780 = vmatpush.msra.mxu0 0.0
      %4781 = vmatpush.msra.mxu0 0.0
      %4782 = vmatpush.msra.mxu0 %v4762
      %4783 = vmatmul.f32.gmra.mxu0 %v4765
      %v4784 = vpop.f32.mrf.mxu0
      %v4785 = vadd.f32 0.0, %v4784
      %4786 = vdwg.mxu0
      %4787 = vrot.lane.b32.xlu0 %v769, 80
      %v4788 = vpop.permute.xlu0 %4787
      %v4791 = vsel %vm852, %v4516, 0
      %4793 = vmatpush.msra.mxu0 0.0
      %4794 = vmatpush.msra.mxu0 0.0
      %4795 = vmatpush.msra.mxu0 0.0
      %4796 = vmatpush.msra.mxu0 0.0
      %4797 = vmatpush.msra.mxu0 0.0
      %4798 = vmatpush.msra.mxu0 0.0
      %4799 = vmatpush.msra.mxu0 0.0
      %4800 = vmatpush.msra.mxu0 0.0
      %4801 = vmatpush.msra.mxu0 0.0
      %4802 = vmatpush.msra.mxu0 0.0
      %4803 = vmatpush.msra.mxu0 0.0
      %4804 = vmatpush.msra.mxu0 0.0
      %4805 = vmatpush.msra.mxu0 0.0
      %4806 = vmatpush.msra.mxu0 0.0
      %4807 = vmatpush.msra.mxu0 0.0
      %4808 = vmatpush.msra.mxu0 %v4788
      %4809 = vmatmul.f32.gmra.mxu0 %v4791
      %v4810 = vpop.f32.mrf.mxu0
      %v4811 = vadd.f32 0.0, %v4810
      %4812 = vdwg.mxu0
      %4813 = vrot.lane.b32.xlu0 %v770, 80
      %v4814 = vpop.permute.xlu0 %4813
      %v4817 = vsel %vm852, %v4518, 0
      %4819 = vmatpush.msra.mxu0 0.0
      %4820 = vmatpush.msra.mxu0 0.0
      %4821 = vmatpush.msra.mxu0 0.0
      %4822 = vmatpush.msra.mxu0 0.0
      %4823 = vmatpush.msra.mxu0 0.0
      %4824 = vmatpush.msra.mxu0 0.0
      %4825 = vmatpush.msra.mxu0 0.0
      %4826 = vmatpush.msra.mxu0 0.0
      %4827 = vmatpush.msra.mxu0 0.0
      %4828 = vmatpush.msra.mxu0 0.0
      %4829 = vmatpush.msra.mxu0 0.0
      %4830 = vmatpush.msra.mxu0 0.0
      %4831 = vmatpush.msra.mxu0 0.0
      %4832 = vmatpush.msra.mxu0 0.0
      %4833 = vmatpush.msra.mxu0 0.0
      %4834 = vmatpush.msra.mxu0 %v4814
      %4835 = vmatmul.f32.gmra.mxu0 %v4817
      %v4836 = vpop.f32.mrf.mxu0
      %v4837 = vadd.f32 0.0, %v4836
      %4838 = vdwg.mxu0
      %4839 = vrot.lane.b32.xlu0 %v771, 80
      %v4840 = vpop.permute.xlu0 %4839
      %v4843 = vsel %vm852, %v4520, 0
      %4845 = vmatpush.msra.mxu0 0.0
      %4846 = vmatpush.msra.mxu0 0.0
      %4847 = vmatpush.msra.mxu0 0.0
      %4848 = vmatpush.msra.mxu0 0.0
      %4849 = vmatpush.msra.mxu0 0.0
      %4850 = vmatpush.msra.mxu0 0.0
      %4851 = vmatpush.msra.mxu0 0.0
      %4852 = vmatpush.msra.mxu0 0.0
      %4853 = vmatpush.msra.mxu0 0.0
      %4854 = vmatpush.msra.mxu0 0.0
      %4855 = vmatpush.msra.mxu0 0.0
      %4856 = vmatpush.msra.mxu0 0.0
      %4857 = vmatpush.msra.mxu0 0.0
      %4858 = vmatpush.msra.mxu0 0.0
      %4859 = vmatpush.msra.mxu0 0.0
      %4860 = vmatpush.msra.mxu0 %v4840
      %4861 = vmatmul.f32.gmra.mxu0 %v4843
      %v4862 = vpop.f32.mrf.mxu0
      %v4863 = vadd.f32 0.0, %v4862
      %4864 = vdwg.mxu0
      %4865 = vrot.lane.b32.xlu0 %v772, 80
      %v4866 = vpop.permute.xlu0 %4865
      %v4869 = vsel %vm852, %v4522, 0
      %4871 = vmatpush.msra.mxu0 0.0
      %4872 = vmatpush.msra.mxu0 0.0
      %4873 = vmatpush.msra.mxu0 0.0
      %4874 = vmatpush.msra.mxu0 0.0
      %4875 = vmatpush.msra.mxu0 0.0
      %4876 = vmatpush.msra.mxu0 0.0
      %4877 = vmatpush.msra.mxu0 0.0
      %4878 = vmatpush.msra.mxu0 0.0
      %4879 = vmatpush.msra.mxu0 0.0
      %4880 = vmatpush.msra.mxu0 0.0
      %4881 = vmatpush.msra.mxu0 0.0
      %4882 = vmatpush.msra.mxu0 0.0
      %4883 = vmatpush.msra.mxu0 0.0
      %4884 = vmatpush.msra.mxu0 0.0
      %4885 = vmatpush.msra.mxu0 0.0
      %4886 = vmatpush.msra.mxu0 %v4866
      %4887 = vmatmul.f32.gmra.mxu0 %v4869
      %v4888 = vpop.f32.mrf.mxu0
      %v4889 = vadd.f32 0.0, %v4888
      %4890 = vdwg.mxu0
      %4891 = vrot.lane.b32.xlu0 %v773, 80
      %v4892 = vpop.permute.xlu0 %4891
      %v4895 = vsel %vm852, %v4524, 0
      %4897 = vmatpush.msra.mxu0 0.0
      %4898 = vmatpush.msra.mxu0 0.0
      %4899 = vmatpush.msra.mxu0 0.0
      %4900 = vmatpush.msra.mxu0 0.0
      %4901 = vmatpush.msra.mxu0 0.0
      %4902 = vmatpush.msra.mxu0 0.0
      %4903 = vmatpush.msra.mxu0 0.0
      %4904 = vmatpush.msra.mxu0 0.0
      %4905 = vmatpush.msra.mxu0 0.0
      %4906 = vmatpush.msra.mxu0 0.0
      %4907 = vmatpush.msra.mxu0 0.0
      %4908 = vmatpush.msra.mxu0 0.0
      %4909 = vmatpush.msra.mxu0 0.0
      %4910 = vmatpush.msra.mxu0 0.0
      %4911 = vmatpush.msra.mxu0 0.0
      %4912 = vmatpush.msra.mxu0 %v4892
      %4913 = vmatmul.f32.gmra.mxu0 %v4895
      %v4914 = vpop.f32.mrf.mxu0
      %v4915 = vadd.f32 0.0, %v4914
      %4916 = vdwg.mxu0
      %4917 = vrot.lane.b32.xlu0 %v774, 80
      %v4918 = vpop.permute.xlu0 %4917
      %v4921 = vsel %vm852, %v4526, 0
      %4923 = vmatpush.msra.mxu0 0.0
      %4924 = vmatpush.msra.mxu0 0.0
      %4925 = vmatpush.msra.mxu0 0.0
      %4926 = vmatpush.msra.mxu0 0.0
      %4927 = vmatpush.msra.mxu0 0.0
      %4928 = vmatpush.msra.mxu0 0.0
      %4929 = vmatpush.msra.mxu0 0.0
      %4930 = vmatpush.msra.mxu0 0.0
      %4931 = vmatpush.msra.mxu0 0.0
      %4932 = vmatpush.msra.mxu0 0.0
      %4933 = vmatpush.msra.mxu0 0.0
      %4934 = vmatpush.msra.mxu0 0.0
      %4935 = vmatpush.msra.mxu0 0.0
      %4936 = vmatpush.msra.mxu0 0.0
      %4937 = vmatpush.msra.mxu0 0.0
      %4938 = vmatpush.msra.mxu0 %v4918
      %4939 = vmatmul.f32.gmra.mxu0 %v4921
      %v4940 = vpop.f32.mrf.mxu0
      %v4941 = vadd.f32 0.0, %v4940
      %4942 = vdwg.mxu0
      %4943 = vrot.lane.b32.xlu0 %v775, 80
      %v4944 = vpop.permute.xlu0 %4943
      %v4947 = vsel %vm852, %v4528, 0
      %4949 = vmatpush.msra.mxu0 0.0
      %4950 = vmatpush.msra.mxu0 0.0
      %4951 = vmatpush.msra.mxu0 0.0
      %4952 = vmatpush.msra.mxu0 0.0
      %4953 = vmatpush.msra.mxu0 0.0
      %4954 = vmatpush.msra.mxu0 0.0
      %4955 = vmatpush.msra.mxu0 0.0
      %4956 = vmatpush.msra.mxu0 0.0
      %4957 = vmatpush.msra.mxu0 0.0
      %4958 = vmatpush.msra.mxu0 0.0
      %4959 = vmatpush.msra.mxu0 0.0
      %4960 = vmatpush.msra.mxu0 0.0
      %4961 = vmatpush.msra.mxu0 0.0
      %4962 = vmatpush.msra.mxu0 0.0
      %4963 = vmatpush.msra.mxu0 0.0
      %4964 = vmatpush.msra.mxu0 %v4944
      %4965 = vmatmul.f32.gmra.mxu0 %v4947
      %v4966 = vpop.f32.mrf.mxu0
      %v4967 = vadd.f32 0.0, %v4966
      %4968 = vdwg.mxu0
      %4969 = vrot.lane.b32.xlu0 %v776, 80
      %v4970 = vpop.permute.xlu0 %4969
      %v4973 = vsel %vm852, %v4530, 0
      %4975 = vmatpush.msra.mxu0 0.0
      %4976 = vmatpush.msra.mxu0 0.0
      %4977 = vmatpush.msra.mxu0 0.0
      %4978 = vmatpush.msra.mxu0 0.0
      %4979 = vmatpush.msra.mxu0 0.0
      %4980 = vmatpush.msra.mxu0 0.0
      %4981 = vmatpush.msra.mxu0 0.0
      %4982 = vmatpush.msra.mxu0 0.0
      %4983 = vmatpush.msra.mxu0 0.0
      %4984 = vmatpush.msra.mxu0 0.0
      %4985 = vmatpush.msra.mxu0 0.0
      %4986 = vmatpush.msra.mxu0 0.0
      %4987 = vmatpush.msra.mxu0 0.0
      %4988 = vmatpush.msra.mxu0 0.0
      %4989 = vmatpush.msra.mxu0 0.0
      %4990 = vmatpush.msra.mxu0 %v4970
      %4991 = vmatmul.f32.gmra.mxu0 %v4973
      %v4992 = vpop.f32.mrf.mxu0
      %v4993 = vadd.f32 0.0, %v4992
      %4994 = vdwg.mxu0
      %4995 = vrot.lane.b32.xlu0 %v777, 80
      %v4996 = vpop.permute.xlu0 %4995
      %v4999 = vsel %vm852, %v4532, 0
      %5001 = vmatpush.msra.mxu0 0.0
      %5002 = vmatpush.msra.mxu0 0.0
      %5003 = vmatpush.msra.mxu0 0.0
      %5004 = vmatpush.msra.mxu0 0.0
      %5005 = vmatpush.msra.mxu0 0.0
      %5006 = vmatpush.msra.mxu0 0.0
      %5007 = vmatpush.msra.mxu0 0.0
      %5008 = vmatpush.msra.mxu0 0.0
      %5009 = vmatpush.msra.mxu0 0.0
      %5010 = vmatpush.msra.mxu0 0.0
      %5011 = vmatpush.msra.mxu0 0.0
      %5012 = vmatpush.msra.mxu0 0.0
      %5013 = vmatpush.msra.mxu0 0.0
      %5014 = vmatpush.msra.mxu0 0.0
      %5015 = vmatpush.msra.mxu0 0.0
      %5016 = vmatpush.msra.mxu0 %v4996
      %5017 = vmatmul.f32.gmra.mxu0 %v4999
      %v5018 = vpop.f32.mrf.mxu0
      %v5019 = vadd.f32 0.0, %v5018
      %5020 = vdwg.mxu0
      %5021 = vrot.lane.b32.xlu0 %v778, 80
      %v5022 = vpop.permute.xlu0 %5021
      %v5025 = vsel %vm852, %v4534, 0
      %5027 = vmatpush.msra.mxu0 0.0
      %5028 = vmatpush.msra.mxu0 0.0
      %5029 = vmatpush.msra.mxu0 0.0
      %5030 = vmatpush.msra.mxu0 0.0
      %5031 = vmatpush.msra.mxu0 0.0
      %5032 = vmatpush.msra.mxu0 0.0
      %5033 = vmatpush.msra.mxu0 0.0
      %5034 = vmatpush.msra.mxu0 0.0
      %5035 = vmatpush.msra.mxu0 0.0
      %5036 = vmatpush.msra.mxu0 0.0
      %5037 = vmatpush.msra.mxu0 0.0
      %5038 = vmatpush.msra.mxu0 0.0
      %5039 = vmatpush.msra.mxu0 0.0
      %5040 = vmatpush.msra.mxu0 0.0
      %5041 = vmatpush.msra.mxu0 0.0
      %5042 = vmatpush.msra.mxu0 %v5022
      %5043 = vmatmul.f32.gmra.mxu0 %v5025
      %v5044 = vpop.f32.mrf.mxu0
      %v5045 = vadd.f32 0.0, %v5044
      %5046 = vdwg.mxu0
      %5047 = vrot.lane.b32.xlu0 %v779, 80
      %v5048 = vpop.permute.xlu0 %5047
      %v5051 = vsel %vm852, %v4536, 0
      %5053 = vmatpush.msra.mxu0 0.0
      %5054 = vmatpush.msra.mxu0 0.0
      %5055 = vmatpush.msra.mxu0 0.0
      %5056 = vmatpush.msra.mxu0 0.0
      %5057 = vmatpush.msra.mxu0 0.0
      %5058 = vmatpush.msra.mxu0 0.0
      %5059 = vmatpush.msra.mxu0 0.0
      %5060 = vmatpush.msra.mxu0 0.0
      %5061 = vmatpush.msra.mxu0 0.0
      %5062 = vmatpush.msra.mxu0 0.0
      %5063 = vmatpush.msra.mxu0 0.0
      %5064 = vmatpush.msra.mxu0 0.0
      %5065 = vmatpush.msra.mxu0 0.0
      %5066 = vmatpush.msra.mxu0 0.0
      %5067 = vmatpush.msra.mxu0 0.0
      %5068 = vmatpush.msra.mxu0 %v5048
      %5069 = vmatmul.f32.gmra.mxu0 %v5051
      %v5070 = vpop.f32.mrf.mxu0
      %v5071 = vadd.f32 0.0, %v5070
      %5072 = vdwg.mxu0
      %5073 = vrot.lane.b32.xlu0 %v780, 80
      %v5074 = vpop.permute.xlu0 %5073
      %v5077 = vsel %vm852, %v4538, 0
      %5079 = vmatpush.msra.mxu0 0.0
      %5080 = vmatpush.msra.mxu0 0.0
      %5081 = vmatpush.msra.mxu0 0.0
      %5082 = vmatpush.msra.mxu0 0.0
      %5083 = vmatpush.msra.mxu0 0.0
      %5084 = vmatpush.msra.mxu0 0.0
      %5085 = vmatpush.msra.mxu0 0.0
      %5086 = vmatpush.msra.mxu0 0.0
      %5087 = vmatpush.msra.mxu0 0.0
      %5088 = vmatpush.msra.mxu0 0.0
      %5089 = vmatpush.msra.mxu0 0.0
      %5090 = vmatpush.msra.mxu0 0.0
      %5091 = vmatpush.msra.mxu0 0.0
      %5092 = vmatpush.msra.mxu0 0.0
      %5093 = vmatpush.msra.mxu0 0.0
      %5094 = vmatpush.msra.mxu0 %v5074
      %5095 = vmatmul.f32.gmra.mxu0 %v5077
      %v5096 = vpop.f32.mrf.mxu0
      %v5097 = vadd.f32 0.0, %v5096
      %5098 = vdwg.mxu0
      %v5099 = vmul.f32 %v4707, %v4587
      %v5100 = vmul.f32 %v4733, %v4588
      %v5101 = vmul.f32 %v4759, %v4589
      %v5102 = vmul.f32 %v4785, %v4590
      %v5103 = vmul.f32 %v4811, %v4591
      %v5104 = vmul.f32 %v4837, %v4592
      %v5105 = vmul.f32 %v4863, %v4593
      %v5106 = vmul.f32 %v4889, %v4594
      %v5107 = vmul.f32 %v4915, %v4595
      %v5108 = vmul.f32 %v4941, %v4596
      %v5109 = vmul.f32 %v4967, %v4597
      %v5110 = vmul.f32 %v4993, %v4598
      %v5111 = vmul.f32 %v5019, %v4599
      %v5112 = vmul.f32 %v5045, %v4600
      %v5113 = vmul.f32 %v5071, %v4601
      %v5114 = vmul.f32 %v5097, %v4602
      %v5115 = vmul.f32 %v4667, %v2249
      %v5116 = vmul.f32 %v4668, %v2250
      %v5117 = vmul.f32 %v4669, %v2251
      %v5118 = vmul.f32 %v4670, %v2252
      %v5119 = vmul.f32 %v4671, %v2253
      %v5120 = vmul.f32 %v4672, %v2254
      %v5121 = vmul.f32 %v4673, %v2255
      %v5122 = vmul.f32 %v4674, %v2256
      %v5123 = vmul.f32 %v4675, %v2257
      %v5124 = vmul.f32 %v4676, %v2258
      %v5125 = vmul.f32 %v4677, %v2259
      %v5126 = vmul.f32 %v4678, %v2260
      %v5127 = vmul.f32 %v4679, %v2261
      %v5128 = vmul.f32 %v4680, %v2262
      %v5129 = vmul.f32 %v4681, %v2263
      %v5130 = vmul.f32 %v4682, %v2264
      %5147 = vrot.lane.b32.xlu0 %v5115, 112
      %v5148 = vpop.permute.xlu0 %5147
      %5149 = vrot.lane.b32.xlu0 %v5116, 112
      %v5150 = vpop.permute.xlu0 %5149
      %5151 = vrot.lane.b32.xlu0 %v5117, 112
      %v5152 = vpop.permute.xlu0 %5151
      %5153 = vrot.lane.b32.xlu0 %v5118, 112
      %v5154 = vpop.permute.xlu0 %5153
      %5155 = vrot.lane.b32.xlu0 %v5119, 112
      %v5156 = vpop.permute.xlu0 %5155
      %5157 = vrot.lane.b32.xlu0 %v5120, 112
      %v5158 = vpop.permute.xlu0 %5157
      %5159 = vrot.lane.b32.xlu0 %v5121, 112
      %v5160 = vpop.permute.xlu0 %5159
      %5161 = vrot.lane.b32.xlu0 %v5122, 112
      %v5162 = vpop.permute.xlu0 %5161
      %5163 = vrot.lane.b32.xlu0 %v5123, 112
      %v5164 = vpop.permute.xlu0 %5163
      %5165 = vrot.lane.b32.xlu0 %v5124, 112
      %v5166 = vpop.permute.xlu0 %5165
      %5167 = vrot.lane.b32.xlu0 %v5125, 112
      %v5168 = vpop.permute.xlu0 %5167
      %5169 = vrot.lane.b32.xlu0 %v5126, 112
      %v5170 = vpop.permute.xlu0 %5169
      %5171 = vrot.lane.b32.xlu0 %v5127, 112
      %v5172 = vpop.permute.xlu0 %5171
      %5173 = vrot.lane.b32.xlu0 %v5128, 112
      %v5174 = vpop.permute.xlu0 %5173
      %5175 = vrot.lane.b32.xlu0 %v5129, 112
      %v5176 = vpop.permute.xlu0 %5175
      %5177 = vrot.lane.b32.xlu0 %v5130, 112
      %v5178 = vpop.permute.xlu0 %5177
      %v5195 = vadd.f32 %v5099, %v5148
      %v5196 = vadd.f32 %v5100, %v5150
      %v5197 = vadd.f32 %v5101, %v5152
      %v5198 = vadd.f32 %v5102, %v5154
      %v5199 = vadd.f32 %v5103, %v5156
      %v5200 = vadd.f32 %v5104, %v5158
      %v5201 = vadd.f32 %v5105, %v5160
      %v5202 = vadd.f32 %v5106, %v5162
      %v5203 = vadd.f32 %v5107, %v5164
      %v5204 = vadd.f32 %v5108, %v5166
      %v5205 = vadd.f32 %v5109, %v5168
      %v5206 = vadd.f32 %v5110, %v5170
      %v5207 = vadd.f32 %v5111, %v5172
      %v5208 = vadd.f32 %v5112, %v5174
      %v5209 = vadd.f32 %v5113, %v5176
      %v5210 = vadd.f32 %v5114, %v5178
      %v5212 = vsel %vm852, %v5195, 0
      %v5215 = vsel %vm852, %v5196, 0
      %v5218 = vsel %vm852, %v5197, 0
      %v5221 = vsel %vm852, %v5198, 0
      %v5224 = vsel %vm852, %v5199, 0
      %v5227 = vsel %vm852, %v5200, 0
      %v5230 = vsel %vm852, %v5201, 0
      %v5233 = vsel %vm852, %v5202, 0
      %v5236 = vsel %vm852, %v5203, 0
      %v5239 = vsel %vm852, %v5204, 0
      %v5242 = vsel %vm852, %v5205, 0
      %v5245 = vsel %vm852, %v5206, 0
      %v5248 = vsel %vm852, %v5207, 0
      %v5251 = vsel %vm852, %v5208, 0
      %v5254 = vsel %vm852, %v5209, 0
      %v5257 = vsel %vm852, %v5210, 0
      %5259 = vmatpush.msra.mxu0 0.0
      %5260 = vmatpush.msra.mxu0 0.0
      %5261 = vmatpush.msra.mxu0 0.0
      %5262 = vmatpush.msra.mxu0 0.0
      %5263 = vmatpush.msra.mxu0 0.0
      %5264 = vmatpush.msra.mxu0 0.0
      %5265 = vmatpush.msra.mxu0 0.0
      %5266 = vmatpush.msra.mxu0 0.0
      %5267 = vmatpush.msra.mxu0 0.0
      %5268 = vmatpush.msra.mxu0 0.0
      %5269 = vmatpush.msra.mxu0 0.0
      %5270 = vmatpush.msra.mxu0 0.0
      %5271 = vmatpush.msra.mxu0 0.0
      %5272 = vmatpush.msra.mxu0 0.0
      %5273 = vmatpush.msra.mxu0 0.0
      %5274 = vmatpush.msra.mxu0 %v903
      %5275 = vmatmul.f32.gmra.mxu0 %v5212
      %v5276 = vpop.f32.mrf.mxu0
      %v5277 = vadd.f32 0.0, %v5276
      %5278 = vmatmul.f32.gmra.mxu0 %v5215
      %v5279 = vpop.f32.mrf.mxu0
      %v5280 = vadd.f32 0.0, %v5279
      %5281 = vmatmul.f32.gmra.mxu0 %v5218
      %v5282 = vpop.f32.mrf.mxu0
      %v5283 = vadd.f32 0.0, %v5282
      %5284 = vmatmul.f32.gmra.mxu0 %v5221
      %v5285 = vpop.f32.mrf.mxu0
      %v5286 = vadd.f32 0.0, %v5285
      %5287 = vmatmul.f32.gmra.mxu0 %v5224
      %v5288 = vpop.f32.mrf.mxu0
      %v5289 = vadd.f32 0.0, %v5288
      %5290 = vmatmul.f32.gmra.mxu0 %v5227
      %v5291 = vpop.f32.mrf.mxu0
      %v5292 = vadd.f32 0.0, %v5291
      %5293 = vmatmul.f32.gmra.mxu0 %v5230
      %v5294 = vpop.f32.mrf.mxu0
      %v5295 = vadd.f32 0.0, %v5294
      %5296 = vmatmul.f32.gmra.mxu0 %v5233
      %v5297 = vpop.f32.mrf.mxu0
      %v5298 = vadd.f32 0.0, %v5297
      %5299 = vmatmul.f32.gmra.mxu0 %v5236
      %v5300 = vpop.f32.mrf.mxu0
      %v5301 = vadd.f32 0.0, %v5300
      %5302 = vmatmul.f32.gmra.mxu0 %v5239
      %v5303 = vpop.f32.mrf.mxu0
      %v5304 = vadd.f32 0.0, %v5303
      %5305 = vmatmul.f32.gmra.mxu0 %v5242
      %v5306 = vpop.f32.mrf.mxu0
      %v5307 = vadd.f32 0.0, %v5306
      %5308 = vmatmul.f32.gmra.mxu0 %v5245
      %v5309 = vpop.f32.mrf.mxu0
      %v5310 = vadd.f32 0.0, %v5309
      %5311 = vmatmul.f32.gmra.mxu0 %v5248
      %v5312 = vpop.f32.mrf.mxu0
      %v5313 = vadd.f32 0.0, %v5312
      %5314 = vmatmul.f32.gmra.mxu0 %v5251
      %v5315 = vpop.f32.mrf.mxu0
      %v5316 = vadd.f32 0.0, %v5315
      %5317 = vmatmul.f32.gmra.mxu0 %v5254
      %v5318 = vpop.f32.mrf.mxu0
      %v5319 = vadd.f32 0.0, %v5318
      %5320 = vmatmul.f32.gmra.mxu0 %v5257
      %v5321 = vpop.f32.mrf.mxu0
      %v5322 = vadd.f32 0.0, %v5321
      %5323 = vdwg.mxu0
      %v5324 = vadd.f32 %v3820, %v5277
      %v5325 = vadd.f32 %v3823, %v5280
      %v5326 = vadd.f32 %v3826, %v5283
      %v5327 = vadd.f32 %v3829, %v5286
      %v5328 = vadd.f32 %v3832, %v5289
      %v5329 = vadd.f32 %v3835, %v5292
      %v5330 = vadd.f32 %v3838, %v5295
      %v5331 = vadd.f32 %v3841, %v5298
      %v5332 = vadd.f32 %v3844, %v5301
      %v5333 = vadd.f32 %v3847, %v5304
      %v5334 = vadd.f32 %v3850, %v5307
      %v5335 = vadd.f32 %v3853, %v5310
      %v5336 = vadd.f32 %v3856, %v5313
      %v5337 = vadd.f32 %v3859, %v5316
      %v5338 = vadd.f32 %v3862, %v5319
      %v5339 = vadd.f32 %v3865, %v5322
      %5340 = vrot.lane.b32.xlu0 %v969, 40
      %v5341 = vpop.permute.xlu0 %5340
      %5342 = vrot.lane.b32.xlu0 %v970, 40
      %v5343 = vpop.permute.xlu0 %5342
      %5344 = vrot.lane.b32.xlu0 %v971, 40
      %v5345 = vpop.permute.xlu0 %5344
      %5346 = vrot.lane.b32.xlu0 %v972, 40
      %v5347 = vpop.permute.xlu0 %5346
      %5348 = vrot.lane.b32.xlu0 %v973, 40
      %v5349 = vpop.permute.xlu0 %5348
      %5350 = vrot.lane.b32.xlu0 %v974, 40
      %v5351 = vpop.permute.xlu0 %5350
      %5352 = vrot.lane.b32.xlu0 %v975, 40
      %v5353 = vpop.permute.xlu0 %5352
      %5354 = vrot.lane.b32.xlu0 %v976, 40
      %v5355 = vpop.permute.xlu0 %5354
      %5356 = vrot.lane.b32.xlu0 %v977, 40
      %v5357 = vpop.permute.xlu0 %5356
      %5358 = vrot.lane.b32.xlu0 %v978, 40
      %v5359 = vpop.permute.xlu0 %5358
      %5360 = vrot.lane.b32.xlu0 %v979, 40
      %v5361 = vpop.permute.xlu0 %5360
      %5362 = vrot.lane.b32.xlu0 %v980, 40
      %v5363 = vpop.permute.xlu0 %5362
      %5364 = vrot.lane.b32.xlu0 %v981, 40
      %v5365 = vpop.permute.xlu0 %5364
      %5366 = vrot.lane.b32.xlu0 %v982, 40
      %v5367 = vpop.permute.xlu0 %5366
      %5368 = vrot.lane.b32.xlu0 %v983, 40
      %v5369 = vpop.permute.xlu0 %5368
      %5370 = vrot.lane.b32.xlu0 %v984, 40
      %v5371 = vpop.permute.xlu0 %5370
      %v5388 = vsel %vm852, %v5341, 0.0
      %5389 = vadd.xlane.f32.xlu0 %v5388
      %v5390 = vpop.xlane.xlu0 %5389
      %v5391 = vsel %vm852, %v5343, 0.0
      %5392 = vadd.xlane.f32.xlu0 %v5391
      %v5393 = vpop.xlane.xlu0 %5392
      %v5394 = vsel %vm852, %v5345, 0.0
      %5395 = vadd.xlane.f32.xlu0 %v5394
      %v5396 = vpop.xlane.xlu0 %5395
      %v5397 = vsel %vm852, %v5347, 0.0
      %5398 = vadd.xlane.f32.xlu0 %v5397
      %v5399 = vpop.xlane.xlu0 %5398
      %v5400 = vsel %vm852, %v5349, 0.0
      %5401 = vadd.xlane.f32.xlu0 %v5400
      %v5402 = vpop.xlane.xlu0 %5401
      %v5403 = vsel %vm852, %v5351, 0.0
      %5404 = vadd.xlane.f32.xlu0 %v5403
      %v5405 = vpop.xlane.xlu0 %5404
      %v5406 = vsel %vm852, %v5353, 0.0
      %5407 = vadd.xlane.f32.xlu0 %v5406
      %v5408 = vpop.xlane.xlu0 %5407
      %v5409 = vsel %vm852, %v5355, 0.0
      %5410 = vadd.xlane.f32.xlu0 %v5409
      %v5411 = vpop.xlane.xlu0 %5410
      %v5412 = vsel %vm852, %v5357, 0.0
      %5413 = vadd.xlane.f32.xlu0 %v5412
      %v5414 = vpop.xlane.xlu0 %5413
      %v5415 = vsel %vm852, %v5359, 0.0
      %5416 = vadd.xlane.f32.xlu0 %v5415
      %v5417 = vpop.xlane.xlu0 %5416
      %v5418 = vsel %vm852, %v5361, 0.0
      %5419 = vadd.xlane.f32.xlu0 %v5418
      %v5420 = vpop.xlane.xlu0 %5419
      %v5421 = vsel %vm852, %v5363, 0.0
      %5422 = vadd.xlane.f32.xlu0 %v5421
      %v5423 = vpop.xlane.xlu0 %5422
      %v5424 = vsel %vm852, %v5365, 0.0
      %5425 = vadd.xlane.f32.xlu0 %v5424
      %v5426 = vpop.xlane.xlu0 %5425
      %v5427 = vsel %vm852, %v5367, 0.0
      %5428 = vadd.xlane.f32.xlu0 %v5427
      %v5429 = vpop.xlane.xlu0 %5428
      %v5430 = vsel %vm852, %v5369, 0.0
      %5431 = vadd.xlane.f32.xlu0 %v5430
      %v5432 = vpop.xlane.xlu0 %5431
      %v5433 = vsel %vm852, %v5371, 0.0
      %5434 = vadd.xlane.f32.xlu0 %v5433
      %v5435 = vpop.xlane.xlu0 %5434
      %5436 = vrot.lane.b32.xlu0 %v781, 40
      %v5437 = vpop.permute.xlu0 %5436
      %5438 = vrot.lane.b32.xlu0 %v765, 104
      %v5439 = vpop.permute.xlu0 %5438
      %v5440 = vsel %vm852, %v5437, 0
      %v5442 = vsel %vm852, %v5439, 0
      %5444 = vmatpush.xpose.msra.mxu0 0.0
      %5445 = vmatpush.xpose.msra.mxu0 0.0
      %5446 = vmatpush.xpose.msra.mxu0 0.0
      %5447 = vmatpush.xpose.msra.mxu0 0.0
      %5448 = vmatpush.xpose.msra.mxu0 0.0
      %5449 = vmatpush.xpose.msra.mxu0 0.0
      %5450 = vmatpush.xpose.msra.mxu0 0.0
      %5451 = vmatpush.xpose.msra.mxu0 0.0
      %5452 = vmatpush.xpose.msra.mxu0 0.0
      %5453 = vmatpush.xpose.msra.mxu0 0.0
      %5454 = vmatpush.xpose.msra.mxu0 0.0
      %5455 = vmatpush.xpose.msra.mxu0 0.0
      %5456 = vmatpush.xpose.msra.mxu0 0.0
      %5457 = vmatpush.xpose.msra.mxu0 0.0
      %5458 = vmatpush.xpose.msra.mxu0 0.0
      %5459 = vmatpush.xpose.msra.mxu0 %v5442
      %5460 = vmatmul.f32.gmra.mxu0 %v5440
      %v5461 = vpop.f32.mrf.mxu0
      %v5462 = vadd.f32 0.0, %v5461
      %5463 = vdwg.mxu0
      %5464 = vrot.lane.b32.xlu0 %v782, 40
      %v5465 = vpop.permute.xlu0 %5464
      %5466 = vrot.lane.b32.xlu0 %v766, 104
      %v5467 = vpop.permute.xlu0 %5466
      %v5468 = vsel %vm852, %v5465, 0
      %v5470 = vsel %vm852, %v5467, 0
      %5472 = vmatpush.xpose.msra.mxu0 0.0
      %5473 = vmatpush.xpose.msra.mxu0 0.0
      %5474 = vmatpush.xpose.msra.mxu0 0.0
      %5475 = vmatpush.xpose.msra.mxu0 0.0
      %5476 = vmatpush.xpose.msra.mxu0 0.0
      %5477 = vmatpush.xpose.msra.mxu0 0.0
      %5478 = vmatpush.xpose.msra.mxu0 0.0
      %5479 = vmatpush.xpose.msra.mxu0 0.0
      %5480 = vmatpush.xpose.msra.mxu0 0.0
      %5481 = vmatpush.xpose.msra.mxu0 0.0
      %5482 = vmatpush.xpose.msra.mxu0 0.0
      %5483 = vmatpush.xpose.msra.mxu0 0.0
      %5484 = vmatpush.xpose.msra.mxu0 0.0
      %5485 = vmatpush.xpose.msra.mxu0 0.0
      %5486 = vmatpush.xpose.msra.mxu0 0.0
      %5487 = vmatpush.xpose.msra.mxu0 %v5470
      %5488 = vmatmul.f32.gmra.mxu0 %v5468
      %v5489 = vpop.f32.mrf.mxu0
      %v5490 = vadd.f32 0.0, %v5489
      %5491 = vdwg.mxu0
      %5492 = vrot.lane.b32.xlu0 %v783, 40
      %v5493 = vpop.permute.xlu0 %5492
      %5494 = vrot.lane.b32.xlu0 %v767, 104
      %v5495 = vpop.permute.xlu0 %5494
      %v5496 = vsel %vm852, %v5493, 0
      %v5498 = vsel %vm852, %v5495, 0
      %5500 = vmatpush.xpose.msra.mxu0 0.0
      %5501 = vmatpush.xpose.msra.mxu0 0.0
      %5502 = vmatpush.xpose.msra.mxu0 0.0
      %5503 = vmatpush.xpose.msra.mxu0 0.0
      %5504 = vmatpush.xpose.msra.mxu0 0.0
      %5505 = vmatpush.xpose.msra.mxu0 0.0
      %5506 = vmatpush.xpose.msra.mxu0 0.0
      %5507 = vmatpush.xpose.msra.mxu0 0.0
      %5508 = vmatpush.xpose.msra.mxu0 0.0
      %5509 = vmatpush.xpose.msra.mxu0 0.0
      %5510 = vmatpush.xpose.msra.mxu0 0.0
      %5511 = vmatpush.xpose.msra.mxu0 0.0
      %5512 = vmatpush.xpose.msra.mxu0 0.0
      %5513 = vmatpush.xpose.msra.mxu0 0.0
      %5514 = vmatpush.xpose.msra.mxu0 0.0
      %5515 = vmatpush.xpose.msra.mxu0 %v5498
      %5516 = vmatmul.f32.gmra.mxu0 %v5496
      %v5517 = vpop.f32.mrf.mxu0
      %v5518 = vadd.f32 0.0, %v5517
      %5519 = vdwg.mxu0
      %5520 = vrot.lane.b32.xlu0 %v784, 40
      %v5521 = vpop.permute.xlu0 %5520
      %5522 = vrot.lane.b32.xlu0 %v768, 104
      %v5523 = vpop.permute.xlu0 %5522
      %v5524 = vsel %vm852, %v5521, 0
      %v5526 = vsel %vm852, %v5523, 0
      %5528 = vmatpush.xpose.msra.mxu0 0.0
      %5529 = vmatpush.xpose.msra.mxu0 0.0
      %5530 = vmatpush.xpose.msra.mxu0 0.0
      %5531 = vmatpush.xpose.msra.mxu0 0.0
      %5532 = vmatpush.xpose.msra.mxu0 0.0
      %5533 = vmatpush.xpose.msra.mxu0 0.0
      %5534 = vmatpush.xpose.msra.mxu0 0.0
      %5535 = vmatpush.xpose.msra.mxu0 0.0
      %5536 = vmatpush.xpose.msra.mxu0 0.0
      %5537 = vmatpush.xpose.msra.mxu0 0.0
      %5538 = vmatpush.xpose.msra.mxu0 0.0
      %5539 = vmatpush.xpose.msra.mxu0 0.0
      %5540 = vmatpush.xpose.msra.mxu0 0.0
      %5541 = vmatpush.xpose.msra.mxu0 0.0
      %5542 = vmatpush.xpose.msra.mxu0 0.0
      %5543 = vmatpush.xpose.msra.mxu0 %v5526
      %5544 = vmatmul.f32.gmra.mxu0 %v5524
      %v5545 = vpop.f32.mrf.mxu0
      %v5546 = vadd.f32 0.0, %v5545
      %5547 = vdwg.mxu0
      %5548 = vrot.lane.b32.xlu0 %v785, 40
      %v5549 = vpop.permute.xlu0 %5548
      %5550 = vrot.lane.b32.xlu0 %v769, 104
      %v5551 = vpop.permute.xlu0 %5550
      %v5552 = vsel %vm852, %v5549, 0
      %v5554 = vsel %vm852, %v5551, 0
      %5556 = vmatpush.xpose.msra.mxu0 0.0
      %5557 = vmatpush.xpose.msra.mxu0 0.0
      %5558 = vmatpush.xpose.msra.mxu0 0.0
      %5559 = vmatpush.xpose.msra.mxu0 0.0
      %5560 = vmatpush.xpose.msra.mxu0 0.0
      %5561 = vmatpush.xpose.msra.mxu0 0.0
      %5562 = vmatpush.xpose.msra.mxu0 0.0
      %5563 = vmatpush.xpose.msra.mxu0 0.0
      %5564 = vmatpush.xpose.msra.mxu0 0.0
      %5565 = vmatpush.xpose.msra.mxu0 0.0
      %5566 = vmatpush.xpose.msra.mxu0 0.0
      %5567 = vmatpush.xpose.msra.mxu0 0.0
      %5568 = vmatpush.xpose.msra.mxu0 0.0
      %5569 = vmatpush.xpose.msra.mxu0 0.0
      %5570 = vmatpush.xpose.msra.mxu0 0.0
      %5571 = vmatpush.xpose.msra.mxu0 %v5554
      %5572 = vmatmul.f32.gmra.mxu0 %v5552
      %v5573 = vpop.f32.mrf.mxu0
      %v5574 = vadd.f32 0.0, %v5573
      %5575 = vdwg.mxu0
      %5576 = vrot.lane.b32.xlu0 %v786, 40
      %v5577 = vpop.permute.xlu0 %5576
      %5578 = vrot.lane.b32.xlu0 %v770, 104
      %v5579 = vpop.permute.xlu0 %5578
      %v5580 = vsel %vm852, %v5577, 0
      %v5582 = vsel %vm852, %v5579, 0
      %5584 = vmatpush.xpose.msra.mxu0 0.0
      %5585 = vmatpush.xpose.msra.mxu0 0.0
      %5586 = vmatpush.xpose.msra.mxu0 0.0
      %5587 = vmatpush.xpose.msra.mxu0 0.0
      %5588 = vmatpush.xpose.msra.mxu0 0.0
      %5589 = vmatpush.xpose.msra.mxu0 0.0
      %5590 = vmatpush.xpose.msra.mxu0 0.0
      %5591 = vmatpush.xpose.msra.mxu0 0.0
      %5592 = vmatpush.xpose.msra.mxu0 0.0
      %5593 = vmatpush.xpose.msra.mxu0 0.0
      %5594 = vmatpush.xpose.msra.mxu0 0.0
      %5595 = vmatpush.xpose.msra.mxu0 0.0
      %5596 = vmatpush.xpose.msra.mxu0 0.0
      %5597 = vmatpush.xpose.msra.mxu0 0.0
      %5598 = vmatpush.xpose.msra.mxu0 0.0
      %5599 = vmatpush.xpose.msra.mxu0 %v5582
      %5600 = vmatmul.f32.gmra.mxu0 %v5580
      %v5601 = vpop.f32.mrf.mxu0
      %v5602 = vadd.f32 0.0, %v5601
      %5603 = vdwg.mxu0
      %5604 = vrot.lane.b32.xlu0 %v787, 40
      %v5605 = vpop.permute.xlu0 %5604
      %5606 = vrot.lane.b32.xlu0 %v771, 104
      %v5607 = vpop.permute.xlu0 %5606
      %v5608 = vsel %vm852, %v5605, 0
      %v5610 = vsel %vm852, %v5607, 0
      %5612 = vmatpush.xpose.msra.mxu0 0.0
      %5613 = vmatpush.xpose.msra.mxu0 0.0
      %5614 = vmatpush.xpose.msra.mxu0 0.0
      %5615 = vmatpush.xpose.msra.mxu0 0.0
      %5616 = vmatpush.xpose.msra.mxu0 0.0
      %5617 = vmatpush.xpose.msra.mxu0 0.0
      %5618 = vmatpush.xpose.msra.mxu0 0.0
      %5619 = vmatpush.xpose.msra.mxu0 0.0
      %5620 = vmatpush.xpose.msra.mxu0 0.0
      %5621 = vmatpush.xpose.msra.mxu0 0.0
      %5622 = vmatpush.xpose.msra.mxu0 0.0
      %5623 = vmatpush.xpose.msra.mxu0 0.0
      %5624 = vmatpush.xpose.msra.mxu0 0.0
      %5625 = vmatpush.xpose.msra.mxu0 0.0
      %5626 = vmatpush.xpose.msra.mxu0 0.0
      %5627 = vmatpush.xpose.msra.mxu0 %v5610
      %5628 = vmatmul.f32.gmra.mxu0 %v5608
      %v5629 = vpop.f32.mrf.mxu0
      %v5630 = vadd.f32 0.0, %v5629
      %5631 = vdwg.mxu0
      %5632 = vrot.lane.b32.xlu0 %v788, 40
      %v5633 = vpop.permute.xlu0 %5632
      %5634 = vrot.lane.b32.xlu0 %v772, 104
      %v5635 = vpop.permute.xlu0 %5634
      %v5636 = vsel %vm852, %v5633, 0
      %v5638 = vsel %vm852, %v5635, 0
      %5640 = vmatpush.xpose.msra.mxu0 0.0
      %5641 = vmatpush.xpose.msra.mxu0 0.0
      %5642 = vmatpush.xpose.msra.mxu0 0.0
      %5643 = vmatpush.xpose.msra.mxu0 0.0
      %5644 = vmatpush.xpose.msra.mxu0 0.0
      %5645 = vmatpush.xpose.msra.mxu0 0.0
      %5646 = vmatpush.xpose.msra.mxu0 0.0
      %5647 = vmatpush.xpose.msra.mxu0 0.0
      %5648 = vmatpush.xpose.msra.mxu0 0.0
      %5649 = vmatpush.xpose.msra.mxu0 0.0
      %5650 = vmatpush.xpose.msra.mxu0 0.0
      %5651 = vmatpush.xpose.msra.mxu0 0.0
      %5652 = vmatpush.xpose.msra.mxu0 0.0
      %5653 = vmatpush.xpose.msra.mxu0 0.0
      %5654 = vmatpush.xpose.msra.mxu0 0.0
      %5655 = vmatpush.xpose.msra.mxu0 %v5638
      %5656 = vmatmul.f32.gmra.mxu0 %v5636
      %v5657 = vpop.f32.mrf.mxu0
      %v5658 = vadd.f32 0.0, %v5657
      %5659 = vdwg.mxu0
      %5660 = vrot.lane.b32.xlu0 %v789, 40
      %v5661 = vpop.permute.xlu0 %5660
      %5662 = vrot.lane.b32.xlu0 %v773, 104
      %v5663 = vpop.permute.xlu0 %5662
      %v5664 = vsel %vm852, %v5661, 0
      %v5666 = vsel %vm852, %v5663, 0
      %5668 = vmatpush.xpose.msra.mxu0 0.0
      %5669 = vmatpush.xpose.msra.mxu0 0.0
      %5670 = vmatpush.xpose.msra.mxu0 0.0
      %5671 = vmatpush.xpose.msra.mxu0 0.0
      %5672 = vmatpush.xpose.msra.mxu0 0.0
      %5673 = vmatpush.xpose.msra.mxu0 0.0
      %5674 = vmatpush.xpose.msra.mxu0 0.0
      %5675 = vmatpush.xpose.msra.mxu0 0.0
      %5676 = vmatpush.xpose.msra.mxu0 0.0
      %5677 = vmatpush.xpose.msra.mxu0 0.0
      %5678 = vmatpush.xpose.msra.mxu0 0.0
      %5679 = vmatpush.xpose.msra.mxu0 0.0
      %5680 = vmatpush.xpose.msra.mxu0 0.0
      %5681 = vmatpush.xpose.msra.mxu0 0.0
      %5682 = vmatpush.xpose.msra.mxu0 0.0
      %5683 = vmatpush.xpose.msra.mxu0 %v5666
      %5684 = vmatmul.f32.gmra.mxu0 %v5664
      %v5685 = vpop.f32.mrf.mxu0
      %v5686 = vadd.f32 0.0, %v5685
      %5687 = vdwg.mxu0
      %5688 = vrot.lane.b32.xlu0 %v790, 40
      %v5689 = vpop.permute.xlu0 %5688
      %5690 = vrot.lane.b32.xlu0 %v774, 104
      %v5691 = vpop.permute.xlu0 %5690
      %v5692 = vsel %vm852, %v5689, 0
      %v5694 = vsel %vm852, %v5691, 0
      %5696 = vmatpush.xpose.msra.mxu0 0.0
      %5697 = vmatpush.xpose.msra.mxu0 0.0
      %5698 = vmatpush.xpose.msra.mxu0 0.0
      %5699 = vmatpush.xpose.msra.mxu0 0.0
      %5700 = vmatpush.xpose.msra.mxu0 0.0
      %5701 = vmatpush.xpose.msra.mxu0 0.0
      %5702 = vmatpush.xpose.msra.mxu0 0.0
      %5703 = vmatpush.xpose.msra.mxu0 0.0
      %5704 = vmatpush.xpose.msra.mxu0 0.0
      %5705 = vmatpush.xpose.msra.mxu0 0.0
      %5706 = vmatpush.xpose.msra.mxu0 0.0
      %5707 = vmatpush.xpose.msra.mxu0 0.0
      %5708 = vmatpush.xpose.msra.mxu0 0.0
      %5709 = vmatpush.xpose.msra.mxu0 0.0
      %5710 = vmatpush.xpose.msra.mxu0 0.0
      %5711 = vmatpush.xpose.msra.mxu0 %v5694
      %5712 = vmatmul.f32.gmra.mxu0 %v5692
      %v5713 = vpop.f32.mrf.mxu0
      %v5714 = vadd.f32 0.0, %v5713
      %5715 = vdwg.mxu0
      %5716 = vrot.lane.b32.xlu0 %v791, 40
      %v5717 = vpop.permute.xlu0 %5716
      %5718 = vrot.lane.b32.xlu0 %v775, 104
      %v5719 = vpop.permute.xlu0 %5718
      %v5720 = vsel %vm852, %v5717, 0
      %v5722 = vsel %vm852, %v5719, 0
      %5724 = vmatpush.xpose.msra.mxu0 0.0
      %5725 = vmatpush.xpose.msra.mxu0 0.0
      %5726 = vmatpush.xpose.msra.mxu0 0.0
      %5727 = vmatpush.xpose.msra.mxu0 0.0
      %5728 = vmatpush.xpose.msra.mxu0 0.0
      %5729 = vmatpush.xpose.msra.mxu0 0.0
      %5730 = vmatpush.xpose.msra.mxu0 0.0
      %5731 = vmatpush.xpose.msra.mxu0 0.0
      %5732 = vmatpush.xpose.msra.mxu0 0.0
      %5733 = vmatpush.xpose.msra.mxu0 0.0
      %5734 = vmatpush.xpose.msra.mxu0 0.0
      %5735 = vmatpush.xpose.msra.mxu0 0.0
      %5736 = vmatpush.xpose.msra.mxu0 0.0
      %5737 = vmatpush.xpose.msra.mxu0 0.0
      %5738 = vmatpush.xpose.msra.mxu0 0.0
      %5739 = vmatpush.xpose.msra.mxu0 %v5722
      %5740 = vmatmul.f32.gmra.mxu0 %v5720
      %v5741 = vpop.f32.mrf.mxu0
      %v5742 = vadd.f32 0.0, %v5741
      %5743 = vdwg.mxu0
      %5744 = vrot.lane.b32.xlu0 %v792, 40
      %v5745 = vpop.permute.xlu0 %5744
      %5746 = vrot.lane.b32.xlu0 %v776, 104
      %v5747 = vpop.permute.xlu0 %5746
      %v5748 = vsel %vm852, %v5745, 0
      %v5750 = vsel %vm852, %v5747, 0
      %5752 = vmatpush.xpose.msra.mxu0 0.0
      %5753 = vmatpush.xpose.msra.mxu0 0.0
      %5754 = vmatpush.xpose.msra.mxu0 0.0
      %5755 = vmatpush.xpose.msra.mxu0 0.0
      %5756 = vmatpush.xpose.msra.mxu0 0.0
      %5757 = vmatpush.xpose.msra.mxu0 0.0
      %5758 = vmatpush.xpose.msra.mxu0 0.0
      %5759 = vmatpush.xpose.msra.mxu0 0.0
      %5760 = vmatpush.xpose.msra.mxu0 0.0
      %5761 = vmatpush.xpose.msra.mxu0 0.0
      %5762 = vmatpush.xpose.msra.mxu0 0.0
      %5763 = vmatpush.xpose.msra.mxu0 0.0
      %5764 = vmatpush.xpose.msra.mxu0 0.0
      %5765 = vmatpush.xpose.msra.mxu0 0.0
      %5766 = vmatpush.xpose.msra.mxu0 0.0
      %5767 = vmatpush.xpose.msra.mxu0 %v5750
      %5768 = vmatmul.f32.gmra.mxu0 %v5748
      %v5769 = vpop.f32.mrf.mxu0
      %v5770 = vadd.f32 0.0, %v5769
      %5771 = vdwg.mxu0
      %5772 = vrot.lane.b32.xlu0 %v793, 40
      %v5773 = vpop.permute.xlu0 %5772
      %5774 = vrot.lane.b32.xlu0 %v777, 104
      %v5775 = vpop.permute.xlu0 %5774
      %v5776 = vsel %vm852, %v5773, 0
      %v5778 = vsel %vm852, %v5775, 0
      %5780 = vmatpush.xpose.msra.mxu0 0.0
      %5781 = vmatpush.xpose.msra.mxu0 0.0
      %5782 = vmatpush.xpose.msra.mxu0 0.0
      %5783 = vmatpush.xpose.msra.mxu0 0.0
      %5784 = vmatpush.xpose.msra.mxu0 0.0
      %5785 = vmatpush.xpose.msra.mxu0 0.0
      %5786 = vmatpush.xpose.msra.mxu0 0.0
      %5787 = vmatpush.xpose.msra.mxu0 0.0
      %5788 = vmatpush.xpose.msra.mxu0 0.0
      %5789 = vmatpush.xpose.msra.mxu0 0.0
      %5790 = vmatpush.xpose.msra.mxu0 0.0
      %5791 = vmatpush.xpose.msra.mxu0 0.0
      %5792 = vmatpush.xpose.msra.mxu0 0.0
      %5793 = vmatpush.xpose.msra.mxu0 0.0
      %5794 = vmatpush.xpose.msra.mxu0 0.0
      %5795 = vmatpush.xpose.msra.mxu0 %v5778
      %5796 = vmatmul.f32.gmra.mxu0 %v5776
      %v5797 = vpop.f32.mrf.mxu0
      %v5798 = vadd.f32 0.0, %v5797
      %5799 = vdwg.mxu0
      %5800 = vrot.lane.b32.xlu0 %v794, 40
      %v5801 = vpop.permute.xlu0 %5800
      %5802 = vrot.lane.b32.xlu0 %v778, 104
      %v5803 = vpop.permute.xlu0 %5802
      %v5804 = vsel %vm852, %v5801, 0
      %v5806 = vsel %vm852, %v5803, 0
      %5808 = vmatpush.xpose.msra.mxu0 0.0
      %5809 = vmatpush.xpose.msra.mxu0 0.0
      %5810 = vmatpush.xpose.msra.mxu0 0.0
      %5811 = vmatpush.xpose.msra.mxu0 0.0
      %5812 = vmatpush.xpose.msra.mxu0 0.0
      %5813 = vmatpush.xpose.msra.mxu0 0.0
      %5814 = vmatpush.xpose.msra.mxu0 0.0
      %5815 = vmatpush.xpose.msra.mxu0 0.0
      %5816 = vmatpush.xpose.msra.mxu0 0.0
      %5817 = vmatpush.xpose.msra.mxu0 0.0
      %5818 = vmatpush.xpose.msra.mxu0 0.0
      %5819 = vmatpush.xpose.msra.mxu0 0.0
      %5820 = vmatpush.xpose.msra.mxu0 0.0
      %5821 = vmatpush.xpose.msra.mxu0 0.0
      %5822 = vmatpush.xpose.msra.mxu0 0.0
      %5823 = vmatpush.xpose.msra.mxu0 %v5806
      %5824 = vmatmul.f32.gmra.mxu0 %v5804
      %v5825 = vpop.f32.mrf.mxu0
      %v5826 = vadd.f32 0.0, %v5825
      %5827 = vdwg.mxu0
      %5828 = vrot.lane.b32.xlu0 %v795, 40
      %v5829 = vpop.permute.xlu0 %5828
      %5830 = vrot.lane.b32.xlu0 %v779, 104
      %v5831 = vpop.permute.xlu0 %5830
      %v5832 = vsel %vm852, %v5829, 0
      %v5834 = vsel %vm852, %v5831, 0
      %5836 = vmatpush.xpose.msra.mxu0 0.0
      %5837 = vmatpush.xpose.msra.mxu0 0.0
      %5838 = vmatpush.xpose.msra.mxu0 0.0
      %5839 = vmatpush.xpose.msra.mxu0 0.0
      %5840 = vmatpush.xpose.msra.mxu0 0.0
      %5841 = vmatpush.xpose.msra.mxu0 0.0
      %5842 = vmatpush.xpose.msra.mxu0 0.0
      %5843 = vmatpush.xpose.msra.mxu0 0.0
      %5844 = vmatpush.xpose.msra.mxu0 0.0
      %5845 = vmatpush.xpose.msra.mxu0 0.0
      %5846 = vmatpush.xpose.msra.mxu0 0.0
      %5847 = vmatpush.xpose.msra.mxu0 0.0
      %5848 = vmatpush.xpose.msra.mxu0 0.0
      %5849 = vmatpush.xpose.msra.mxu0 0.0
      %5850 = vmatpush.xpose.msra.mxu0 0.0
      %5851 = vmatpush.xpose.msra.mxu0 %v5834
      %5852 = vmatmul.f32.gmra.mxu0 %v5832
      %v5853 = vpop.f32.mrf.mxu0
      %v5854 = vadd.f32 0.0, %v5853
      %5855 = vdwg.mxu0
      %5856 = vrot.lane.b32.xlu0 %v796, 40
      %v5857 = vpop.permute.xlu0 %5856
      %5858 = vrot.lane.b32.xlu0 %v780, 104
      %v5859 = vpop.permute.xlu0 %5858
      %v5860 = vsel %vm852, %v5857, 0
      %v5862 = vsel %vm852, %v5859, 0
      %5864 = vmatpush.xpose.msra.mxu0 0.0
      %5865 = vmatpush.xpose.msra.mxu0 0.0
      %5866 = vmatpush.xpose.msra.mxu0 0.0
      %5867 = vmatpush.xpose.msra.mxu0 0.0
      %5868 = vmatpush.xpose.msra.mxu0 0.0
      %5869 = vmatpush.xpose.msra.mxu0 0.0
      %5870 = vmatpush.xpose.msra.mxu0 0.0
      %5871 = vmatpush.xpose.msra.mxu0 0.0
      %5872 = vmatpush.xpose.msra.mxu0 0.0
      %5873 = vmatpush.xpose.msra.mxu0 0.0
      %5874 = vmatpush.xpose.msra.mxu0 0.0
      %5875 = vmatpush.xpose.msra.mxu0 0.0
      %5876 = vmatpush.xpose.msra.mxu0 0.0
      %5877 = vmatpush.xpose.msra.mxu0 0.0
      %5878 = vmatpush.xpose.msra.mxu0 0.0
      %5879 = vmatpush.xpose.msra.mxu0 %v5862
      %5880 = vmatmul.f32.gmra.mxu0 %v5860
      %v5881 = vpop.f32.mrf.mxu0
      %v5882 = vadd.f32 0.0, %v5881
      %5883 = vdwg.mxu0
      %v5884 = vsel %vm835, %v5390, %v5462
      %v5885 = vsel %vm835, %v5393, %v5490
      %v5886 = vsel %vm835, %v5396, %v5518
      %v5887 = vsel %vm835, %v5399, %v5546
      %v5888 = vsel %vm835, %v5402, %v5574
      %v5889 = vsel %vm835, %v5405, %v5602
      %v5890 = vsel %vm835, %v5408, %v5630
      %v5891 = vsel %vm835, %v5411, %v5658
      %v5892 = vsel %vm835, %v5414, %v5686
      %v5893 = vsel %vm835, %v5417, %v5714
      %v5894 = vsel %vm835, %v5420, %v5742
      %v5895 = vsel %vm835, %v5423, %v5770
      %v5896 = vsel %vm835, %v5426, %v5798
      %v5897 = vsel %vm835, %v5429, %v5826
      %v5898 = vsel %vm835, %v5432, %v5854
      %v5899 = vsel %vm835, %v5435, %v5882
      %v5900 = vadd.f32 %v5884, %v818
      %v5901 = vadd.f32 %v5885, %v819
      %v5902 = vadd.f32 %v5886, %v820
      %v5903 = vadd.f32 %v5887, %v821
      %v5904 = vadd.f32 %v5888, %v822
      %v5905 = vadd.f32 %v5889, %v823
      %v5906 = vadd.f32 %v5890, %v824
      %v5907 = vadd.f32 %v5891, %v825
      %v5908 = vadd.f32 %v5892, %v826
      %v5909 = vadd.f32 %v5893, %v827
      %v5910 = vadd.f32 %v5894, %v828
      %v5911 = vadd.f32 %v5895, %v829
      %v5912 = vadd.f32 %v5896, %v830
      %v5913 = vadd.f32 %v5897, %v831
      %v5914 = vadd.f32 %v5898, %v832
      %v5915 = vadd.f32 %v5899, %v833
      %v5916 = vsel %vm852, %v5900, -inf
      %5917 = vmax.xlane.f32.xlu0 %v5916
      %v5918 = vpop.xlane.xlu0 %5917
      %v5919 = vsel %vm852, %v5901, -inf
      %5920 = vmax.xlane.f32.xlu0 %v5919
      %v5921 = vpop.xlane.xlu0 %5920
      %v5922 = vsel %vm852, %v5902, -inf
      %5923 = vmax.xlane.f32.xlu0 %v5922
      %v5924 = vpop.xlane.xlu0 %5923
      %v5925 = vsel %vm852, %v5903, -inf
      %5926 = vmax.xlane.f32.xlu0 %v5925
      %v5927 = vpop.xlane.xlu0 %5926
      %v5928 = vsel %vm852, %v5904, -inf
      %5929 = vmax.xlane.f32.xlu0 %v5928
      %v5930 = vpop.xlane.xlu0 %5929
      %v5931 = vsel %vm852, %v5905, -inf
      %5932 = vmax.xlane.f32.xlu0 %v5931
      %v5933 = vpop.xlane.xlu0 %5932
      %v5934 = vsel %vm852, %v5906, -inf
      %5935 = vmax.xlane.f32.xlu0 %v5934
      %v5936 = vpop.xlane.xlu0 %5935
      %v5937 = vsel %vm852, %v5907, -inf
      %5938 = vmax.xlane.f32.xlu0 %v5937
      %v5939 = vpop.xlane.xlu0 %5938
      %v5940 = vsel %vm852, %v5908, -inf
      %5941 = vmax.xlane.f32.xlu0 %v5940
      %v5942 = vpop.xlane.xlu0 %5941
      %v5943 = vsel %vm852, %v5909, -inf
      %5944 = vmax.xlane.f32.xlu0 %v5943
      %v5945 = vpop.xlane.xlu0 %5944
      %v5946 = vsel %vm852, %v5910, -inf
      %5947 = vmax.xlane.f32.xlu0 %v5946
      %v5948 = vpop.xlane.xlu0 %5947
      %v5949 = vsel %vm852, %v5911, -inf
      %5950 = vmax.xlane.f32.xlu0 %v5949
      %v5951 = vpop.xlane.xlu0 %5950
      %v5952 = vsel %vm852, %v5912, -inf
      %5953 = vmax.xlane.f32.xlu0 %v5952
      %v5954 = vpop.xlane.xlu0 %5953
      %v5955 = vsel %vm852, %v5913, -inf
      %5956 = vmax.xlane.f32.xlu0 %v5955
      %v5957 = vpop.xlane.xlu0 %5956
      %v5958 = vsel %vm852, %v5914, -inf
      %5959 = vmax.xlane.f32.xlu0 %v5958
      %v5960 = vpop.xlane.xlu0 %5959
      %v5961 = vsel %vm852, %v5915, -inf
      %5962 = vmax.xlane.f32.xlu0 %v5961
      %v5963 = vpop.xlane.xlu0 %5962
      %v5964 = vsub.f32 %v5900, %v5918
      %v5965 = vsub.f32 %v5901, %v5921
      %v5966 = vsub.f32 %v5902, %v5924
      %v5967 = vsub.f32 %v5903, %v5927
      %v5968 = vsub.f32 %v5904, %v5930
      %v5969 = vsub.f32 %v5905, %v5933
      %v5970 = vsub.f32 %v5906, %v5936
      %v5971 = vsub.f32 %v5907, %v5939
      %v5972 = vsub.f32 %v5908, %v5942
      %v5973 = vsub.f32 %v5909, %v5945
      %v5974 = vsub.f32 %v5910, %v5948
      %v5975 = vsub.f32 %v5911, %v5951
      %v5976 = vsub.f32 %v5912, %v5954
      %v5977 = vsub.f32 %v5913, %v5957
      %v5978 = vsub.f32 %v5914, %v5960
      %v5979 = vsub.f32 %v5915, %v5963
      %v5980 = vmul.f32 %v5964, 1.442695
      %v5981 = vpow.pop %v5980
      %v5982 = vmul.f32 %v5965, 1.442695
      %v5983 = vpow.pop %v5982
      %v5984 = vmul.f32 %v5966, 1.442695
      %v5985 = vpow.pop %v5984
      %v5986 = vmul.f32 %v5967, 1.442695
      %v5987 = vpow.pop %v5986
      %v5988 = vmul.f32 %v5968, 1.442695
      %v5989 = vpow.pop %v5988
      %v5990 = vmul.f32 %v5969, 1.442695
      %v5991 = vpow.pop %v5990
      %v5992 = vmul.f32 %v5970, 1.442695
      %v5993 = vpow.pop %v5992
      %v5994 = vmul.f32 %v5971, 1.442695
      %v5995 = vpow.pop %v5994
      %v5996 = vmul.f32 %v5972, 1.442695
      %v5997 = vpow.pop %v5996
      %v5998 = vmul.f32 %v5973, 1.442695
      %v5999 = vpow.pop %v5998
      %v6000 = vmul.f32 %v5974, 1.442695
      %v6001 = vpow.pop %v6000
      %v6002 = vmul.f32 %v5975, 1.442695
      %v6003 = vpow.pop %v6002
      %v6004 = vmul.f32 %v5976, 1.442695
      %v6005 = vpow.pop %v6004
      %v6006 = vmul.f32 %v5977, 1.442695
      %v6007 = vpow.pop %v6006
      %v6008 = vmul.f32 %v5978, 1.442695
      %v6009 = vpow.pop %v6008
      %v6010 = vmul.f32 %v5979, 1.442695
      %v6011 = vpow.pop %v6010
      %v6012 = vsel %vm852, %v5981, 0.0
      %6013 = vadd.xlane.f32.xlu0 %v6012
      %v6014 = vpop.xlane.xlu0 %6013
      %v6015 = vsel %vm852, %v5983, 0.0
      %6016 = vadd.xlane.f32.xlu0 %v6015
      %v6017 = vpop.xlane.xlu0 %6016
      %v6018 = vsel %vm852, %v5985, 0.0
      %6019 = vadd.xlane.f32.xlu0 %v6018
      %v6020 = vpop.xlane.xlu0 %6019
      %v6021 = vsel %vm852, %v5987, 0.0
      %6022 = vadd.xlane.f32.xlu0 %v6021
      %v6023 = vpop.xlane.xlu0 %6022
      %v6024 = vsel %vm852, %v5989, 0.0
      %6025 = vadd.xlane.f32.xlu0 %v6024
      %v6026 = vpop.xlane.xlu0 %6025
      %v6027 = vsel %vm852, %v5991, 0.0
      %6028 = vadd.xlane.f32.xlu0 %v6027
      %v6029 = vpop.xlane.xlu0 %6028
      %v6030 = vsel %vm852, %v5993, 0.0
      %6031 = vadd.xlane.f32.xlu0 %v6030
      %v6032 = vpop.xlane.xlu0 %6031
      %v6033 = vsel %vm852, %v5995, 0.0
      %6034 = vadd.xlane.f32.xlu0 %v6033
      %v6035 = vpop.xlane.xlu0 %6034
      %v6036 = vsel %vm852, %v5997, 0.0
      %6037 = vadd.xlane.f32.xlu0 %v6036
      %v6038 = vpop.xlane.xlu0 %6037
      %v6039 = vsel %vm852, %v5999, 0.0
      %6040 = vadd.xlane.f32.xlu0 %v6039
      %v6041 = vpop.xlane.xlu0 %6040
      %v6042 = vsel %vm852, %v6001, 0.0
      %6043 = vadd.xlane.f32.xlu0 %v6042
      %v6044 = vpop.xlane.xlu0 %6043
      %v6045 = vsel %vm852, %v6003, 0.0
      %6046 = vadd.xlane.f32.xlu0 %v6045
      %v6047 = vpop.xlane.xlu0 %6046
      %v6048 = vsel %vm852, %v6005, 0.0
      %6049 = vadd.xlane.f32.xlu0 %v6048
      %v6050 = vpop.xlane.xlu0 %6049
      %v6051 = vsel %vm852, %v6007, 0.0
      %6052 = vadd.xlane.f32.xlu0 %v6051
      %v6053 = vpop.xlane.xlu0 %6052
      %v6054 = vsel %vm852, %v6009, 0.0
      %6055 = vadd.xlane.f32.xlu0 %v6054
      %v6056 = vpop.xlane.xlu0 %6055
      %v6057 = vsel %vm852, %v6011, 0.0
      %6058 = vadd.xlane.f32.xlu0 %v6057
      %v6059 = vpop.xlane.xlu0 %6058
      %v6060 = vrcp.pop %v6014
      %v6061 = vrcp.pop %v6017
      %v6062 = vrcp.pop %v6020
      %v6063 = vrcp.pop %v6023
      %v6064 = vrcp.pop %v6026
      %v6065 = vrcp.pop %v6029
      %v6066 = vrcp.pop %v6032
      %v6067 = vrcp.pop %v6035
      %v6068 = vrcp.pop %v6038
      %v6069 = vrcp.pop %v6041
      %v6070 = vrcp.pop %v6044
      %v6071 = vrcp.pop %v6047
      %v6072 = vrcp.pop %v6050
      %v6073 = vrcp.pop %v6053
      %v6074 = vrcp.pop %v6056
      %v6075 = vrcp.pop %v6059
      %v6076 = vadd.f32 %v5390, %v855
      %v6077 = vadd.f32 %v5393, %v858
      %v6078 = vadd.f32 %v5396, %v861
      %v6079 = vadd.f32 %v5399, %v864
      %v6080 = vadd.f32 %v5402, %v867
      %v6081 = vadd.f32 %v5405, %v870
      %v6082 = vadd.f32 %v5408, %v873
      %v6083 = vadd.f32 %v5411, %v876
      %v6084 = vadd.f32 %v5414, %v879
      %v6085 = vadd.f32 %v5417, %v882
      %v6086 = vadd.f32 %v5420, %v885
      %v6087 = vadd.f32 %v5423, %v888
      %v6088 = vadd.f32 %v5426, %v891
      %v6089 = vadd.f32 %v5429, %v894
      %v6090 = vadd.f32 %v5432, %v897
      %v6091 = vadd.f32 %v5435, %v900
      %v6092 = vsub.f32 %v6076, %v5918
      %v6093 = vsub.f32 %v6077, %v5921
      %v6094 = vsub.f32 %v6078, %v5924
      %v6095 = vsub.f32 %v6079, %v5927
      %v6096 = vsub.f32 %v6080, %v5930
      %v6097 = vsub.f32 %v6081, %v5933
      %v6098 = vsub.f32 %v6082, %v5936
      %v6099 = vsub.f32 %v6083, %v5939
      %v6100 = vsub.f32 %v6084, %v5942
      %v6101 = vsub.f32 %v6085, %v5945
      %v6102 = vsub.f32 %v6086, %v5948
      %v6103 = vsub.f32 %v6087, %v5951
      %v6104 = vsub.f32 %v6088, %v5954
      %v6105 = vsub.f32 %v6089, %v5957
      %v6106 = vsub.f32 %v6090, %v5960
      %v6107 = vsub.f32 %v6091, %v5963
      %v6108 = vmul.f32 %v6092, 1.442695
      %v6109 = vpow.pop %v6108
      %v6110 = vmul.f32 %v6093, 1.442695
      %v6111 = vpow.pop %v6110
      %v6112 = vmul.f32 %v6094, 1.442695
      %v6113 = vpow.pop %v6112
      %v6114 = vmul.f32 %v6095, 1.442695
      %v6115 = vpow.pop %v6114
      %v6116 = vmul.f32 %v6096, 1.442695
      %v6117 = vpow.pop %v6116
      %v6118 = vmul.f32 %v6097, 1.442695
      %v6119 = vpow.pop %v6118
      %v6120 = vmul.f32 %v6098, 1.442695
      %v6121 = vpow.pop %v6120
      %v6122 = vmul.f32 %v6099, 1.442695
      %v6123 = vpow.pop %v6122
      %v6124 = vmul.f32 %v6100, 1.442695
      %v6125 = vpow.pop %v6124
      %v6126 = vmul.f32 %v6101, 1.442695
      %v6127 = vpow.pop %v6126
      %v6128 = vmul.f32 %v6102, 1.442695
      %v6129 = vpow.pop %v6128
      %v6130 = vmul.f32 %v6103, 1.442695
      %v6131 = vpow.pop %v6130
      %v6132 = vmul.f32 %v6104, 1.442695
      %v6133 = vpow.pop %v6132
      %v6134 = vmul.f32 %v6105, 1.442695
      %v6135 = vpow.pop %v6134
      %v6136 = vmul.f32 %v6106, 1.442695
      %v6137 = vpow.pop %v6136
      %v6138 = vmul.f32 %v6107, 1.442695
      %v6139 = vpow.pop %v6138
      %v6140 = vmul.f32 %v6109, %v6060
      %v6141 = vmul.f32 %v6111, %v6061
      %v6142 = vmul.f32 %v6113, %v6062
      %v6143 = vmul.f32 %v6115, %v6063
      %v6144 = vmul.f32 %v6117, %v6064
      %v6145 = vmul.f32 %v6119, %v6065
      %v6146 = vmul.f32 %v6121, %v6066
      %v6147 = vmul.f32 %v6123, %v6067
      %v6148 = vmul.f32 %v6125, %v6068
      %v6149 = vmul.f32 %v6127, %v6069
      %v6150 = vmul.f32 %v6129, %v6070
      %v6151 = vmul.f32 %v6131, %v6071
      %v6152 = vmul.f32 %v6133, %v6072
      %v6153 = vmul.f32 %v6135, %v6073
      %v6154 = vmul.f32 %v6137, %v6074
      %v6155 = vmul.f32 %v6139, %v6075
      %6156 = vrot.lane.b32.xlu0 %v765, 72
      %v6157 = vpop.permute.xlu0 %6156
      %v6160 = vsel %vm852, %v5981, 0
      %6162 = vmatpush.msra.mxu0 0.0
      %6163 = vmatpush.msra.mxu0 0.0
      %6164 = vmatpush.msra.mxu0 0.0
      %6165 = vmatpush.msra.mxu0 0.0
      %6166 = vmatpush.msra.mxu0 0.0
      %6167 = vmatpush.msra.mxu0 0.0
      %6168 = vmatpush.msra.mxu0 0.0
      %6169 = vmatpush.msra.mxu0 0.0
      %6170 = vmatpush.msra.mxu0 0.0
      %6171 = vmatpush.msra.mxu0 0.0
      %6172 = vmatpush.msra.mxu0 0.0
      %6173 = vmatpush.msra.mxu0 0.0
      %6174 = vmatpush.msra.mxu0 0.0
      %6175 = vmatpush.msra.mxu0 0.0
      %6176 = vmatpush.msra.mxu0 0.0
      %6177 = vmatpush.msra.mxu0 %v6157
      %6178 = vmatmul.f32.gmra.mxu0 %v6160
      %v6179 = vpop.f32.mrf.mxu0
      %v6180 = vadd.f32 0.0, %v6179
      %6181 = vdwg.mxu0
      %6182 = vrot.lane.b32.xlu0 %v766, 72
      %v6183 = vpop.permute.xlu0 %6182
      %v6186 = vsel %vm852, %v5983, 0
      %6188 = vmatpush.msra.mxu0 0.0
      %6189 = vmatpush.msra.mxu0 0.0
      %6190 = vmatpush.msra.mxu0 0.0
      %6191 = vmatpush.msra.mxu0 0.0
      %6192 = vmatpush.msra.mxu0 0.0
      %6193 = vmatpush.msra.mxu0 0.0
      %6194 = vmatpush.msra.mxu0 0.0
      %6195 = vmatpush.msra.mxu0 0.0
      %6196 = vmatpush.msra.mxu0 0.0
      %6197 = vmatpush.msra.mxu0 0.0
      %6198 = vmatpush.msra.mxu0 0.0
      %6199 = vmatpush.msra.mxu0 0.0
      %6200 = vmatpush.msra.mxu0 0.0
      %6201 = vmatpush.msra.mxu0 0.0
      %6202 = vmatpush.msra.mxu0 0.0
      %6203 = vmatpush.msra.mxu0 %v6183
      %6204 = vmatmul.f32.gmra.mxu0 %v6186
      %v6205 = vpop.f32.mrf.mxu0
      %v6206 = vadd.f32 0.0, %v6205
      %6207 = vdwg.mxu0
      %6208 = vrot.lane.b32.xlu0 %v767, 72
      %v6209 = vpop.permute.xlu0 %6208
      %v6212 = vsel %vm852, %v5985, 0
      %6214 = vmatpush.msra.mxu0 0.0
      %6215 = vmatpush.msra.mxu0 0.0
      %6216 = vmatpush.msra.mxu0 0.0
      %6217 = vmatpush.msra.mxu0 0.0
      %6218 = vmatpush.msra.mxu0 0.0
      %6219 = vmatpush.msra.mxu0 0.0
      %6220 = vmatpush.msra.mxu0 0.0
      %6221 = vmatpush.msra.mxu0 0.0
      %6222 = vmatpush.msra.mxu0 0.0
      %6223 = vmatpush.msra.mxu0 0.0
      %6224 = vmatpush.msra.mxu0 0.0
      %6225 = vmatpush.msra.mxu0 0.0
      %6226 = vmatpush.msra.mxu0 0.0
      %6227 = vmatpush.msra.mxu0 0.0
      %6228 = vmatpush.msra.mxu0 0.0
      %6229 = vmatpush.msra.mxu0 %v6209
      %6230 = vmatmul.f32.gmra.mxu0 %v6212
      %v6231 = vpop.f32.mrf.mxu0
      %v6232 = vadd.f32 0.0, %v6231
      %6233 = vdwg.mxu0
      %6234 = vrot.lane.b32.xlu0 %v768, 72
      %v6235 = vpop.permute.xlu0 %6234
      %v6238 = vsel %vm852, %v5987, 0
      %6240 = vmatpush.msra.mxu0 0.0
      %6241 = vmatpush.msra.mxu0 0.0
      %6242 = vmatpush.msra.mxu0 0.0
      %6243 = vmatpush.msra.mxu0 0.0
      %6244 = vmatpush.msra.mxu0 0.0
      %6245 = vmatpush.msra.mxu0 0.0
      %6246 = vmatpush.msra.mxu0 0.0
      %6247 = vmatpush.msra.mxu0 0.0
      %6248 = vmatpush.msra.mxu0 0.0
      %6249 = vmatpush.msra.mxu0 0.0
      %6250 = vmatpush.msra.mxu0 0.0
      %6251 = vmatpush.msra.mxu0 0.0
      %6252 = vmatpush.msra.mxu0 0.0
      %6253 = vmatpush.msra.mxu0 0.0
      %6254 = vmatpush.msra.mxu0 0.0
      %6255 = vmatpush.msra.mxu0 %v6235
      %6256 = vmatmul.f32.gmra.mxu0 %v6238
      %v6257 = vpop.f32.mrf.mxu0
      %v6258 = vadd.f32 0.0, %v6257
      %6259 = vdwg.mxu0
      %6260 = vrot.lane.b32.xlu0 %v769, 72
      %v6261 = vpop.permute.xlu0 %6260
      %v6264 = vsel %vm852, %v5989, 0
      %6266 = vmatpush.msra.mxu0 0.0
      %6267 = vmatpush.msra.mxu0 0.0
      %6268 = vmatpush.msra.mxu0 0.0
      %6269 = vmatpush.msra.mxu0 0.0
      %6270 = vmatpush.msra.mxu0 0.0
      %6271 = vmatpush.msra.mxu0 0.0
      %6272 = vmatpush.msra.mxu0 0.0
      %6273 = vmatpush.msra.mxu0 0.0
      %6274 = vmatpush.msra.mxu0 0.0
      %6275 = vmatpush.msra.mxu0 0.0
      %6276 = vmatpush.msra.mxu0 0.0
      %6277 = vmatpush.msra.mxu0 0.0
      %6278 = vmatpush.msra.mxu0 0.0
      %6279 = vmatpush.msra.mxu0 0.0
      %6280 = vmatpush.msra.mxu0 0.0
      %6281 = vmatpush.msra.mxu0 %v6261
      %6282 = vmatmul.f32.gmra.mxu0 %v6264
      %v6283 = vpop.f32.mrf.mxu0
      %v6284 = vadd.f32 0.0, %v6283
      %6285 = vdwg.mxu0
      %6286 = vrot.lane.b32.xlu0 %v770, 72
      %v6287 = vpop.permute.xlu0 %6286
      %v6290 = vsel %vm852, %v5991, 0
      %6292 = vmatpush.msra.mxu0 0.0
      %6293 = vmatpush.msra.mxu0 0.0
      %6294 = vmatpush.msra.mxu0 0.0
      %6295 = vmatpush.msra.mxu0 0.0
      %6296 = vmatpush.msra.mxu0 0.0
      %6297 = vmatpush.msra.mxu0 0.0
      %6298 = vmatpush.msra.mxu0 0.0
      %6299 = vmatpush.msra.mxu0 0.0
      %6300 = vmatpush.msra.mxu0 0.0
      %6301 = vmatpush.msra.mxu0 0.0
      %6302 = vmatpush.msra.mxu0 0.0
      %6303 = vmatpush.msra.mxu0 0.0
      %6304 = vmatpush.msra.mxu0 0.0
      %6305 = vmatpush.msra.mxu0 0.0
      %6306 = vmatpush.msra.mxu0 0.0
      %6307 = vmatpush.msra.mxu0 %v6287
      %6308 = vmatmul.f32.gmra.mxu0 %v6290
      %v6309 = vpop.f32.mrf.mxu0
      %v6310 = vadd.f32 0.0, %v6309
      %6311 = vdwg.mxu0
      %6312 = vrot.lane.b32.xlu0 %v771, 72
      %v6313 = vpop.permute.xlu0 %6312
      %v6316 = vsel %vm852, %v5993, 0
      %6318 = vmatpush.msra.mxu0 0.0
      %6319 = vmatpush.msra.mxu0 0.0
      %6320 = vmatpush.msra.mxu0 0.0
      %6321 = vmatpush.msra.mxu0 0.0
      %6322 = vmatpush.msra.mxu0 0.0
      %6323 = vmatpush.msra.mxu0 0.0
      %6324 = vmatpush.msra.mxu0 0.0
      %6325 = vmatpush.msra.mxu0 0.0
      %6326 = vmatpush.msra.mxu0 0.0
      %6327 = vmatpush.msra.mxu0 0.0
      %6328 = vmatpush.msra.mxu0 0.0
      %6329 = vmatpush.msra.mxu0 0.0
      %6330 = vmatpush.msra.mxu0 0.0
      %6331 = vmatpush.msra.mxu0 0.0
      %6332 = vmatpush.msra.mxu0 0.0
      %6333 = vmatpush.msra.mxu0 %v6313
      %6334 = vmatmul.f32.gmra.mxu0 %v6316
      %v6335 = vpop.f32.mrf.mxu0
      %v6336 = vadd.f32 0.0, %v6335
      %6337 = vdwg.mxu0
      %6338 = vrot.lane.b32.xlu0 %v772, 72
      %v6339 = vpop.permute.xlu0 %6338
      %v6342 = vsel %vm852, %v5995, 0
      %6344 = vmatpush.msra.mxu0 0.0
      %6345 = vmatpush.msra.mxu0 0.0
      %6346 = vmatpush.msra.mxu0 0.0
      %6347 = vmatpush.msra.mxu0 0.0
      %6348 = vmatpush.msra.mxu0 0.0
      %6349 = vmatpush.msra.mxu0 0.0
      %6350 = vmatpush.msra.mxu0 0.0
      %6351 = vmatpush.msra.mxu0 0.0
      %6352 = vmatpush.msra.mxu0 0.0
      %6353 = vmatpush.msra.mxu0 0.0
      %6354 = vmatpush.msra.mxu0 0.0
      %6355 = vmatpush.msra.mxu0 0.0
      %6356 = vmatpush.msra.mxu0 0.0
      %6357 = vmatpush.msra.mxu0 0.0
      %6358 = vmatpush.msra.mxu0 0.0
      %6359 = vmatpush.msra.mxu0 %v6339
      %6360 = vmatmul.f32.gmra.mxu0 %v6342
      %v6361 = vpop.f32.mrf.mxu0
      %v6362 = vadd.f32 0.0, %v6361
      %6363 = vdwg.mxu0
      %6364 = vrot.lane.b32.xlu0 %v773, 72
      %v6365 = vpop.permute.xlu0 %6364
      %v6368 = vsel %vm852, %v5997, 0
      %6370 = vmatpush.msra.mxu0 0.0
      %6371 = vmatpush.msra.mxu0 0.0
      %6372 = vmatpush.msra.mxu0 0.0
      %6373 = vmatpush.msra.mxu0 0.0
      %6374 = vmatpush.msra.mxu0 0.0
      %6375 = vmatpush.msra.mxu0 0.0
      %6376 = vmatpush.msra.mxu0 0.0
      %6377 = vmatpush.msra.mxu0 0.0
      %6378 = vmatpush.msra.mxu0 0.0
      %6379 = vmatpush.msra.mxu0 0.0
      %6380 = vmatpush.msra.mxu0 0.0
      %6381 = vmatpush.msra.mxu0 0.0
      %6382 = vmatpush.msra.mxu0 0.0
      %6383 = vmatpush.msra.mxu0 0.0
      %6384 = vmatpush.msra.mxu0 0.0
      %6385 = vmatpush.msra.mxu0 %v6365
      %6386 = vmatmul.f32.gmra.mxu0 %v6368
      %v6387 = vpop.f32.mrf.mxu0
      %v6388 = vadd.f32 0.0, %v6387
      %6389 = vdwg.mxu0
      %6390 = vrot.lane.b32.xlu0 %v774, 72
      %v6391 = vpop.permute.xlu0 %6390
      %v6394 = vsel %vm852, %v5999, 0
      %6396 = vmatpush.msra.mxu0 0.0
      %6397 = vmatpush.msra.mxu0 0.0
      %6398 = vmatpush.msra.mxu0 0.0
      %6399 = vmatpush.msra.mxu0 0.0
      %6400 = vmatpush.msra.mxu0 0.0
      %6401 = vmatpush.msra.mxu0 0.0
      %6402 = vmatpush.msra.mxu0 0.0
      %6403 = vmatpush.msra.mxu0 0.0
      %6404 = vmatpush.msra.mxu0 0.0
      %6405 = vmatpush.msra.mxu0 0.0
      %6406 = vmatpush.msra.mxu0 0.0
      %6407 = vmatpush.msra.mxu0 0.0
      %6408 = vmatpush.msra.mxu0 0.0
      %6409 = vmatpush.msra.mxu0 0.0
      %6410 = vmatpush.msra.mxu0 0.0
      %6411 = vmatpush.msra.mxu0 %v6391
      %6412 = vmatmul.f32.gmra.mxu0 %v6394
      %v6413 = vpop.f32.mrf.mxu0
      %v6414 = vadd.f32 0.0, %v6413
      %6415 = vdwg.mxu0
      %6416 = vrot.lane.b32.xlu0 %v775, 72
      %v6417 = vpop.permute.xlu0 %6416
      %v6420 = vsel %vm852, %v6001, 0
      %6422 = vmatpush.msra.mxu0 0.0
      %6423 = vmatpush.msra.mxu0 0.0
      %6424 = vmatpush.msra.mxu0 0.0
      %6425 = vmatpush.msra.mxu0 0.0
      %6426 = vmatpush.msra.mxu0 0.0
      %6427 = vmatpush.msra.mxu0 0.0
      %6428 = vmatpush.msra.mxu0 0.0
      %6429 = vmatpush.msra.mxu0 0.0
      %6430 = vmatpush.msra.mxu0 0.0
      %6431 = vmatpush.msra.mxu0 0.0
      %6432 = vmatpush.msra.mxu0 0.0
      %6433 = vmatpush.msra.mxu0 0.0
      %6434 = vmatpush.msra.mxu0 0.0
      %6435 = vmatpush.msra.mxu0 0.0
      %6436 = vmatpush.msra.mxu0 0.0
      %6437 = vmatpush.msra.mxu0 %v6417
      %6438 = vmatmul.f32.gmra.mxu0 %v6420
      %v6439 = vpop.f32.mrf.mxu0
      %v6440 = vadd.f32 0.0, %v6439
      %6441 = vdwg.mxu0
      %6442 = vrot.lane.b32.xlu0 %v776, 72
      %v6443 = vpop.permute.xlu0 %6442
      %v6446 = vsel %vm852, %v6003, 0
      %6448 = vmatpush.msra.mxu0 0.0
      %6449 = vmatpush.msra.mxu0 0.0
      %6450 = vmatpush.msra.mxu0 0.0
      %6451 = vmatpush.msra.mxu0 0.0
      %6452 = vmatpush.msra.mxu0 0.0
      %6453 = vmatpush.msra.mxu0 0.0
      %6454 = vmatpush.msra.mxu0 0.0
      %6455 = vmatpush.msra.mxu0 0.0
      %6456 = vmatpush.msra.mxu0 0.0
      %6457 = vmatpush.msra.mxu0 0.0
      %6458 = vmatpush.msra.mxu0 0.0
      %6459 = vmatpush.msra.mxu0 0.0
      %6460 = vmatpush.msra.mxu0 0.0
      %6461 = vmatpush.msra.mxu0 0.0
      %6462 = vmatpush.msra.mxu0 0.0
      %6463 = vmatpush.msra.mxu0 %v6443
      %6464 = vmatmul.f32.gmra.mxu0 %v6446
      %v6465 = vpop.f32.mrf.mxu0
      %v6466 = vadd.f32 0.0, %v6465
      %6467 = vdwg.mxu0
      %6468 = vrot.lane.b32.xlu0 %v777, 72
      %v6469 = vpop.permute.xlu0 %6468
      %v6472 = vsel %vm852, %v6005, 0
      %6474 = vmatpush.msra.mxu0 0.0
      %6475 = vmatpush.msra.mxu0 0.0
      %6476 = vmatpush.msra.mxu0 0.0
      %6477 = vmatpush.msra.mxu0 0.0
      %6478 = vmatpush.msra.mxu0 0.0
      %6479 = vmatpush.msra.mxu0 0.0
      %6480 = vmatpush.msra.mxu0 0.0
      %6481 = vmatpush.msra.mxu0 0.0
      %6482 = vmatpush.msra.mxu0 0.0
      %6483 = vmatpush.msra.mxu0 0.0
      %6484 = vmatpush.msra.mxu0 0.0
      %6485 = vmatpush.msra.mxu0 0.0
      %6486 = vmatpush.msra.mxu0 0.0
      %6487 = vmatpush.msra.mxu0 0.0
      %6488 = vmatpush.msra.mxu0 0.0
      %6489 = vmatpush.msra.mxu0 %v6469
      %6490 = vmatmul.f32.gmra.mxu0 %v6472
      %v6491 = vpop.f32.mrf.mxu0
      %v6492 = vadd.f32 0.0, %v6491
      %6493 = vdwg.mxu0
      %6494 = vrot.lane.b32.xlu0 %v778, 72
      %v6495 = vpop.permute.xlu0 %6494
      %v6498 = vsel %vm852, %v6007, 0
      %6500 = vmatpush.msra.mxu0 0.0
      %6501 = vmatpush.msra.mxu0 0.0
      %6502 = vmatpush.msra.mxu0 0.0
      %6503 = vmatpush.msra.mxu0 0.0
      %6504 = vmatpush.msra.mxu0 0.0
      %6505 = vmatpush.msra.mxu0 0.0
      %6506 = vmatpush.msra.mxu0 0.0
      %6507 = vmatpush.msra.mxu0 0.0
      %6508 = vmatpush.msra.mxu0 0.0
      %6509 = vmatpush.msra.mxu0 0.0
      %6510 = vmatpush.msra.mxu0 0.0
      %6511 = vmatpush.msra.mxu0 0.0
      %6512 = vmatpush.msra.mxu0 0.0
      %6513 = vmatpush.msra.mxu0 0.0
      %6514 = vmatpush.msra.mxu0 0.0
      %6515 = vmatpush.msra.mxu0 %v6495
      %6516 = vmatmul.f32.gmra.mxu0 %v6498
      %v6517 = vpop.f32.mrf.mxu0
      %v6518 = vadd.f32 0.0, %v6517
      %6519 = vdwg.mxu0
      %6520 = vrot.lane.b32.xlu0 %v779, 72
      %v6521 = vpop.permute.xlu0 %6520
      %v6524 = vsel %vm852, %v6009, 0
      %6526 = vmatpush.msra.mxu0 0.0
      %6527 = vmatpush.msra.mxu0 0.0
      %6528 = vmatpush.msra.mxu0 0.0
      %6529 = vmatpush.msra.mxu0 0.0
      %6530 = vmatpush.msra.mxu0 0.0
      %6531 = vmatpush.msra.mxu0 0.0
      %6532 = vmatpush.msra.mxu0 0.0
      %6533 = vmatpush.msra.mxu0 0.0
      %6534 = vmatpush.msra.mxu0 0.0
      %6535 = vmatpush.msra.mxu0 0.0
      %6536 = vmatpush.msra.mxu0 0.0
      %6537 = vmatpush.msra.mxu0 0.0
      %6538 = vmatpush.msra.mxu0 0.0
      %6539 = vmatpush.msra.mxu0 0.0
      %6540 = vmatpush.msra.mxu0 0.0
      %6541 = vmatpush.msra.mxu0 %v6521
      %6542 = vmatmul.f32.gmra.mxu0 %v6524
      %v6543 = vpop.f32.mrf.mxu0
      %v6544 = vadd.f32 0.0, %v6543
      %6545 = vdwg.mxu0
      %6546 = vrot.lane.b32.xlu0 %v780, 72
      %v6547 = vpop.permute.xlu0 %6546
      %v6550 = vsel %vm852, %v6011, 0
      %6552 = vmatpush.msra.mxu0 0.0
      %6553 = vmatpush.msra.mxu0 0.0
      %6554 = vmatpush.msra.mxu0 0.0
      %6555 = vmatpush.msra.mxu0 0.0
      %6556 = vmatpush.msra.mxu0 0.0
      %6557 = vmatpush.msra.mxu0 0.0
      %6558 = vmatpush.msra.mxu0 0.0
      %6559 = vmatpush.msra.mxu0 0.0
      %6560 = vmatpush.msra.mxu0 0.0
      %6561 = vmatpush.msra.mxu0 0.0
      %6562 = vmatpush.msra.mxu0 0.0
      %6563 = vmatpush.msra.mxu0 0.0
      %6564 = vmatpush.msra.mxu0 0.0
      %6565 = vmatpush.msra.mxu0 0.0
      %6566 = vmatpush.msra.mxu0 0.0
      %6567 = vmatpush.msra.mxu0 %v6547
      %6568 = vmatmul.f32.gmra.mxu0 %v6550
      %v6569 = vpop.f32.mrf.mxu0
      %v6570 = vadd.f32 0.0, %v6569
      %6571 = vdwg.mxu0
      %v6572 = vmul.f32 %v6180, %v6060
      %v6573 = vmul.f32 %v6206, %v6061
      %v6574 = vmul.f32 %v6232, %v6062
      %v6575 = vmul.f32 %v6258, %v6063
      %v6576 = vmul.f32 %v6284, %v6064
      %v6577 = vmul.f32 %v6310, %v6065
      %v6578 = vmul.f32 %v6336, %v6066
      %v6579 = vmul.f32 %v6362, %v6067
      %v6580 = vmul.f32 %v6388, %v6068
      %v6581 = vmul.f32 %v6414, %v6069
      %v6582 = vmul.f32 %v6440, %v6070
      %v6583 = vmul.f32 %v6466, %v6071
      %v6584 = vmul.f32 %v6492, %v6072
      %v6585 = vmul.f32 %v6518, %v6073
      %v6586 = vmul.f32 %v6544, %v6074
      %v6587 = vmul.f32 %v6570, %v6075
      %v6588 = vmul.f32 %v6140, %v2249
      %v6589 = vmul.f32 %v6141, %v2250
      %v6590 = vmul.f32 %v6142, %v2251
      %v6591 = vmul.f32 %v6143, %v2252
      %v6592 = vmul.f32 %v6144, %v2253
      %v6593 = vmul.f32 %v6145, %v2254
      %v6594 = vmul.f32 %v6146, %v2255
      %v6595 = vmul.f32 %v6147, %v2256
      %v6596 = vmul.f32 %v6148, %v2257
      %v6597 = vmul.f32 %v6149, %v2258
      %v6598 = vmul.f32 %v6150, %v2259
      %v6599 = vmul.f32 %v6151, %v2260
      %v6600 = vmul.f32 %v6152, %v2261
      %v6601 = vmul.f32 %v6153, %v2262
      %v6602 = vmul.f32 %v6154, %v2263
      %v6603 = vmul.f32 %v6155, %v2264
      %6620 = vrot.lane.b32.xlu0 %v6588, 104
      %v6621 = vpop.permute.xlu0 %6620
      %6622 = vrot.lane.b32.xlu0 %v6589, 104
      %v6623 = vpop.permute.xlu0 %6622
      %6624 = vrot.lane.b32.xlu0 %v6590, 104
      %v6625 = vpop.permute.xlu0 %6624
      %6626 = vrot.lane.b32.xlu0 %v6591, 104
      %v6627 = vpop.permute.xlu0 %6626
      %6628 = vrot.lane.b32.xlu0 %v6592, 104
      %v6629 = vpop.permute.xlu0 %6628
      %6630 = vrot.lane.b32.xlu0 %v6593, 104
      %v6631 = vpop.permute.xlu0 %6630
      %6632 = vrot.lane.b32.xlu0 %v6594, 104
      %v6633 = vpop.permute.xlu0 %6632
      %6634 = vrot.lane.b32.xlu0 %v6595, 104
      %v6635 = vpop.permute.xlu0 %6634
      %6636 = vrot.lane.b32.xlu0 %v6596, 104
      %v6637 = vpop.permute.xlu0 %6636
      %6638 = vrot.lane.b32.xlu0 %v6597, 104
      %v6639 = vpop.permute.xlu0 %6638
      %6640 = vrot.lane.b32.xlu0 %v6598, 104
      %v6641 = vpop.permute.xlu0 %6640
      %6642 = vrot.lane.b32.xlu0 %v6599, 104
      %v6643 = vpop.permute.xlu0 %6642
      %6644 = vrot.lane.b32.xlu0 %v6600, 104
      %v6645 = vpop.permute.xlu0 %6644
      %6646 = vrot.lane.b32.xlu0 %v6601, 104
      %v6647 = vpop.permute.xlu0 %6646
      %6648 = vrot.lane.b32.xlu0 %v6602, 104
      %v6649 = vpop.permute.xlu0 %6648
      %6650 = vrot.lane.b32.xlu0 %v6603, 104
      %v6651 = vpop.permute.xlu0 %6650
      %v6668 = vadd.f32 %v6572, %v6621
      %v6669 = vadd.f32 %v6573, %v6623
      %v6670 = vadd.f32 %v6574, %v6625
      %v6671 = vadd.f32 %v6575, %v6627
      %v6672 = vadd.f32 %v6576, %v6629
      %v6673 = vadd.f32 %v6577, %v6631
      %v6674 = vadd.f32 %v6578, %v6633
      %v6675 = vadd.f32 %v6579, %v6635
      %v6676 = vadd.f32 %v6580, %v6637
      %v6677 = vadd.f32 %v6581, %v6639
      %v6678 = vadd.f32 %v6582, %v6641
      %v6679 = vadd.f32 %v6583, %v6643
      %v6680 = vadd.f32 %v6584, %v6645
      %v6681 = vadd.f32 %v6585, %v6647
      %v6682 = vadd.f32 %v6586, %v6649
      %v6683 = vadd.f32 %v6587, %v6651
      %v6685 = vsel %vm852, %v6668, 0
      %v6688 = vsel %vm852, %v6669, 0
      %v6691 = vsel %vm852, %v6670, 0
      %v6694 = vsel %vm852, %v6671, 0
      %v6697 = vsel %vm852, %v6672, 0
      %v6700 = vsel %vm852, %v6673, 0
      %v6703 = vsel %vm852, %v6674, 0
      %v6706 = vsel %vm852, %v6675, 0
      %v6709 = vsel %vm852, %v6676, 0
      %v6712 = vsel %vm852, %v6677, 0
      %v6715 = vsel %vm852, %v6678, 0
      %v6718 = vsel %vm852, %v6679, 0
      %v6721 = vsel %vm852, %v6680, 0
      %v6724 = vsel %vm852, %v6681, 0
      %v6727 = vsel %vm852, %v6682, 0
      %v6730 = vsel %vm852, %v6683, 0
      %6732 = vmatpush.msra.mxu0 0.0
      %6733 = vmatpush.msra.mxu0 0.0
      %6734 = vmatpush.msra.mxu0 0.0
      %6735 = vmatpush.msra.mxu0 0.0
      %6736 = vmatpush.msra.mxu0 0.0
      %6737 = vmatpush.msra.mxu0 0.0
      %6738 = vmatpush.msra.mxu0 0.0
      %6739 = vmatpush.msra.mxu0 0.0
      %6740 = vmatpush.msra.mxu0 0.0
      %6741 = vmatpush.msra.mxu0 0.0
      %6742 = vmatpush.msra.mxu0 0.0
      %6743 = vmatpush.msra.mxu0 0.0
      %6744 = vmatpush.msra.mxu0 0.0
      %6745 = vmatpush.msra.mxu0 0.0
      %6746 = vmatpush.msra.mxu0 0.0
      %6747 = vmatpush.msra.mxu0 %v904
      %6748 = vmatmul.f32.gmra.mxu0 %v6685
      %v6749 = vpop.f32.mrf.mxu0
      %v6750 = vadd.f32 0.0, %v6749
      %6751 = vmatmul.f32.gmra.mxu0 %v6688
      %v6752 = vpop.f32.mrf.mxu0
      %v6753 = vadd.f32 0.0, %v6752
      %6754 = vmatmul.f32.gmra.mxu0 %v6691
      %v6755 = vpop.f32.mrf.mxu0
      %v6756 = vadd.f32 0.0, %v6755
      %6757 = vmatmul.f32.gmra.mxu0 %v6694
      %v6758 = vpop.f32.mrf.mxu0
      %v6759 = vadd.f32 0.0, %v6758
      %6760 = vmatmul.f32.gmra.mxu0 %v6697
      %v6761 = vpop.f32.mrf.mxu0
      %v6762 = vadd.f32 0.0, %v6761
      %6763 = vmatmul.f32.gmra.mxu0 %v6700
      %v6764 = vpop.f32.mrf.mxu0
      %v6765 = vadd.f32 0.0, %v6764
      %6766 = vmatmul.f32.gmra.mxu0 %v6703
      %v6767 = vpop.f32.mrf.mxu0
      %v6768 = vadd.f32 0.0, %v6767
      %6769 = vmatmul.f32.gmra.mxu0 %v6706
      %v6770 = vpop.f32.mrf.mxu0
      %v6771 = vadd.f32 0.0, %v6770
      %6772 = vmatmul.f32.gmra.mxu0 %v6709
      %v6773 = vpop.f32.mrf.mxu0
      %v6774 = vadd.f32 0.0, %v6773
      %6775 = vmatmul.f32.gmra.mxu0 %v6712
      %v6776 = vpop.f32.mrf.mxu0
      %v6777 = vadd.f32 0.0, %v6776
      %6778 = vmatmul.f32.gmra.mxu0 %v6715
      %v6779 = vpop.f32.mrf.mxu0
      %v6780 = vadd.f32 0.0, %v6779
      %6781 = vmatmul.f32.gmra.mxu0 %v6718
      %v6782 = vpop.f32.mrf.mxu0
      %v6783 = vadd.f32 0.0, %v6782
      %6784 = vmatmul.f32.gmra.mxu0 %v6721
      %v6785 = vpop.f32.mrf.mxu0
      %v6786 = vadd.f32 0.0, %v6785
      %6787 = vmatmul.f32.gmra.mxu0 %v6724
      %v6788 = vpop.f32.mrf.mxu0
      %v6789 = vadd.f32 0.0, %v6788
      %6790 = vmatmul.f32.gmra.mxu0 %v6727
      %v6791 = vpop.f32.mrf.mxu0
      %v6792 = vadd.f32 0.0, %v6791
      %6793 = vmatmul.f32.gmra.mxu0 %v6730
      %v6794 = vpop.f32.mrf.mxu0
      %v6795 = vadd.f32 0.0, %v6794
      %6796 = vdwg.mxu0
      %v6797 = vadd.f32 %v5324, %v6750
      %v6798 = vadd.f32 %v5325, %v6753
      %v6799 = vadd.f32 %v5326, %v6756
      %v6800 = vadd.f32 %v5327, %v6759
      %v6801 = vadd.f32 %v5328, %v6762
      %v6802 = vadd.f32 %v5329, %v6765
      %v6803 = vadd.f32 %v5330, %v6768
      %v6804 = vadd.f32 %v5331, %v6771
      %v6805 = vadd.f32 %v5332, %v6774
      %v6806 = vadd.f32 %v5333, %v6777
      %v6807 = vadd.f32 %v5334, %v6780
      %v6808 = vadd.f32 %v5335, %v6783
      %v6809 = vadd.f32 %v5336, %v6786
      %v6810 = vadd.f32 %v5337, %v6789
      %v6811 = vadd.f32 %v5338, %v6792
      %v6812 = vadd.f32 %v5339, %v6795
      %v6813 = vld [vmem:[%s9] sm:$0x1]
      %v6814 = vperm.slane %v6813, 0
      %v6815 = vadd.f32 %v6797, %v6814
      %v6816 = vadd.f32 %v6798, %v6814
      %v6817 = vadd.f32 %v6799, %v6814
      %v6818 = vadd.f32 %v6800, %v6814
      %v6819 = vadd.f32 %v6801, %v6814
      %v6820 = vadd.f32 %v6802, %v6814
      %v6821 = vadd.f32 %v6803, %v6814
      %v6822 = vadd.f32 %v6804, %v6814
      %v6823 = vadd.f32 %v6805, %v6814
      %v6824 = vadd.f32 %v6806, %v6814
      %v6825 = vadd.f32 %v6807, %v6814
      %v6826 = vadd.f32 %v6808, %v6814
      %v6827 = vadd.f32 %v6809, %v6814
      %v6828 = vadd.f32 %v6810, %v6814
      %v6829 = vadd.f32 %v6811, %v6814
      %v6830 = vadd.f32 %v6812, %v6814
      %v6831 = vadd.f32 %v407, %v6815
      %v6832 = vadd.f32 %v408, %v6816
      %v6833 = vadd.f32 %v409, %v6817
      %v6834 = vadd.f32 %v410, %v6818
      %v6835 = vadd.f32 %v411, %v6819
      %v6836 = vadd.f32 %v412, %v6820
      %v6837 = vadd.f32 %v413, %v6821
      %v6838 = vadd.f32 %v414, %v6822
      %v6839 = vadd.f32 %v415, %v6823
      %v6840 = vadd.f32 %v416, %v6824
      %v6841 = vadd.f32 %v417, %v6825
      %v6842 = vadd.f32 %v418, %v6826
      %v6843 = vadd.f32 %v419, %v6827
      %v6844 = vadd.f32 %v420, %v6828
      %v6845 = vadd.f32 %v421, %v6829
      %v6846 = vadd.f32 %v422, %v6830
      %v6847 = vld [vmem:[%s9 + $0x3] sm:$0x1]
      %v6848 = vld [vmem:[%s9 + $0x4] sm:$0x1]
      %v6849 = vsel %vm469, %v6831, 0.0
      %6850 = vadd.xlane.f32.xlu0 %v6849
      %v6851 = vpop.xlane.xlu0 %6850
      %v6852 = vsel %vm469, %v6832, 0.0
      %6853 = vadd.xlane.f32.xlu0 %v6852
      %v6854 = vpop.xlane.xlu0 %6853
      %v6855 = vsel %vm469, %v6833, 0.0
      %6856 = vadd.xlane.f32.xlu0 %v6855
      %v6857 = vpop.xlane.xlu0 %6856
      %v6858 = vsel %vm469, %v6834, 0.0
      %6859 = vadd.xlane.f32.xlu0 %v6858
      %v6860 = vpop.xlane.xlu0 %6859
      %v6861 = vsel %vm469, %v6835, 0.0
      %6862 = vadd.xlane.f32.xlu0 %v6861
      %v6863 = vpop.xlane.xlu0 %6862
      %v6864 = vsel %vm469, %v6836, 0.0
      %6865 = vadd.xlane.f32.xlu0 %v6864
      %v6866 = vpop.xlane.xlu0 %6865
      %v6867 = vsel %vm469, %v6837, 0.0
      %6868 = vadd.xlane.f32.xlu0 %v6867
      %v6869 = vpop.xlane.xlu0 %6868
      %v6870 = vsel %vm469, %v6838, 0.0
      %6871 = vadd.xlane.f32.xlu0 %v6870
      %v6872 = vpop.xlane.xlu0 %6871
      %v6873 = vsel %vm469, %v6839, 0.0
      %6874 = vadd.xlane.f32.xlu0 %v6873
      %v6875 = vpop.xlane.xlu0 %6874
      %v6876 = vsel %vm469, %v6840, 0.0
      %6877 = vadd.xlane.f32.xlu0 %v6876
      %v6878 = vpop.xlane.xlu0 %6877
      %v6879 = vsel %vm469, %v6841, 0.0
      %6880 = vadd.xlane.f32.xlu0 %v6879
      %v6881 = vpop.xlane.xlu0 %6880
      %v6882 = vsel %vm469, %v6842, 0.0
      %6883 = vadd.xlane.f32.xlu0 %v6882
      %v6884 = vpop.xlane.xlu0 %6883
      %v6885 = vsel %vm469, %v6843, 0.0
      %6886 = vadd.xlane.f32.xlu0 %v6885
      %v6887 = vpop.xlane.xlu0 %6886
      %v6888 = vsel %vm469, %v6844, 0.0
      %6889 = vadd.xlane.f32.xlu0 %v6888
      %v6890 = vpop.xlane.xlu0 %6889
      %v6891 = vsel %vm469, %v6845, 0.0
      %6892 = vadd.xlane.f32.xlu0 %v6891
      %v6893 = vpop.xlane.xlu0 %6892
      %v6894 = vsel %vm469, %v6846, 0.0
      %6895 = vadd.xlane.f32.xlu0 %v6894
      %v6896 = vpop.xlane.xlu0 %6895
      %v6897 = vrcp.pop 32.0
      %v6898 = vmul.f32 32.0, %v6897
      %v6899 = vsub.f32 1.0, %v6898
      %v6900 = vmul.f32 %v6897, %v6899
      %v6901 = vadd.f32 %v6897, %v6900
      %vm6902 = vweird.f32 %v6897
      %v6903 = vsel %vm6902, %v6897, %v6901
      %v6904 = vmul.f32 %v6851, %v6903
      %v6905 = vmul.f32 %v6854, %v6903
      %v6906 = vmul.f32 %v6857, %v6903
      %v6907 = vmul.f32 %v6860, %v6903
      %v6908 = vmul.f32 %v6863, %v6903
      %v6909 = vmul.f32 %v6866, %v6903
      %v6910 = vmul.f32 %v6869, %v6903
      %v6911 = vmul.f32 %v6872, %v6903
      %v6912 = vmul.f32 %v6875, %v6903
      %v6913 = vmul.f32 %v6878, %v6903
      %v6914 = vmul.f32 %v6881, %v6903
      %v6915 = vmul.f32 %v6884, %v6903
      %v6916 = vmul.f32 %v6887, %v6903
      %v6917 = vmul.f32 %v6890, %v6903
      %v6918 = vmul.f32 %v6893, %v6903
      %v6919 = vmul.f32 %v6896, %v6903
      %v6920 = vsub.f32 %v6831, %v6904
      %v6921 = vsub.f32 %v6832, %v6905
      %v6922 = vsub.f32 %v6833, %v6906
      %v6923 = vsub.f32 %v6834, %v6907
      %v6924 = vsub.f32 %v6835, %v6908
      %v6925 = vsub.f32 %v6836, %v6909
      %v6926 = vsub.f32 %v6837, %v6910
      %v6927 = vsub.f32 %v6838, %v6911
      %v6928 = vsub.f32 %v6839, %v6912
      %v6929 = vsub.f32 %v6840, %v6913
      %v6930 = vsub.f32 %v6841, %v6914
      %v6931 = vsub.f32 %v6842, %v6915
      %v6932 = vsub.f32 %v6843, %v6916
      %v6933 = vsub.f32 %v6844, %v6917
      %v6934 = vsub.f32 %v6845, %v6918
      %v6935 = vsub.f32 %v6846, %v6919
      %v6936 = vmul.f32 %v6920, %v6920
      %v6937 = vmul.f32 %v6921, %v6921
      %v6938 = vmul.f32 %v6922, %v6922
      %v6939 = vmul.f32 %v6923, %v6923
      %v6940 = vmul.f32 %v6924, %v6924
      %v6941 = vmul.f32 %v6925, %v6925
      %v6942 = vmul.f32 %v6926, %v6926
      %v6943 = vmul.f32 %v6927, %v6927
      %v6944 = vmul.f32 %v6928, %v6928
      %v6945 = vmul.f32 %v6929, %v6929
      %v6946 = vmul.f32 %v6930, %v6930
      %v6947 = vmul.f32 %v6931, %v6931
      %v6948 = vmul.f32 %v6932, %v6932
      %v6949 = vmul.f32 %v6933, %v6933
      %v6950 = vmul.f32 %v6934, %v6934
      %v6951 = vmul.f32 %v6935, %v6935
      %v6952 = vsel %vm469, %v6936, 0.0
      %6953 = vadd.xlane.f32.xlu0 %v6952
      %v6954 = vpop.xlane.xlu0 %6953
      %v6955 = vsel %vm469, %v6937, 0.0
      %6956 = vadd.xlane.f32.xlu0 %v6955
      %v6957 = vpop.xlane.xlu0 %6956
      %v6958 = vsel %vm469, %v6938, 0.0
      %6959 = vadd.xlane.f32.xlu0 %v6958
      %v6960 = vpop.xlane.xlu0 %6959
      %v6961 = vsel %vm469, %v6939, 0.0
      %6962 = vadd.xlane.f32.xlu0 %v6961
      %v6963 = vpop.xlane.xlu0 %6962
      %v6964 = vsel %vm469, %v6940, 0.0
      %6965 = vadd.xlane.f32.xlu0 %v6964
      %v6966 = vpop.xlane.xlu0 %6965
      %v6967 = vsel %vm469, %v6941, 0.0
      %6968 = vadd.xlane.f32.xlu0 %v6967
      %v6969 = vpop.xlane.xlu0 %6968
      %v6970 = vsel %vm469, %v6942, 0.0
      %6971 = vadd.xlane.f32.xlu0 %v6970
      %v6972 = vpop.xlane.xlu0 %6971
      %v6973 = vsel %vm469, %v6943, 0.0
      %6974 = vadd.xlane.f32.xlu0 %v6973
      %v6975 = vpop.xlane.xlu0 %6974
      %v6976 = vsel %vm469, %v6944, 0.0
      %6977 = vadd.xlane.f32.xlu0 %v6976
      %v6978 = vpop.xlane.xlu0 %6977
      %v6979 = vsel %vm469, %v6945, 0.0
      %6980 = vadd.xlane.f32.xlu0 %v6979
      %v6981 = vpop.xlane.xlu0 %6980
      %v6982 = vsel %vm469, %v6946, 0.0
      %6983 = vadd.xlane.f32.xlu0 %v6982
      %v6984 = vpop.xlane.xlu0 %6983
      %v6985 = vsel %vm469, %v6947, 0.0
      %6986 = vadd.xlane.f32.xlu0 %v6985
      %v6987 = vpop.xlane.xlu0 %6986
      %v6988 = vsel %vm469, %v6948, 0.0
      %6989 = vadd.xlane.f32.xlu0 %v6988
      %v6990 = vpop.xlane.xlu0 %6989
      %v6991 = vsel %vm469, %v6949, 0.0
      %6992 = vadd.xlane.f32.xlu0 %v6991
      %v6993 = vpop.xlane.xlu0 %6992
      %v6994 = vsel %vm469, %v6950, 0.0
      %6995 = vadd.xlane.f32.xlu0 %v6994
      %v6996 = vpop.xlane.xlu0 %6995
      %v6997 = vsel %vm469, %v6951, 0.0
      %6998 = vadd.xlane.f32.xlu0 %v6997
      %v6999 = vpop.xlane.xlu0 %6998
      %v7000 = vmul.f32 %v6954, %v6903
      %v7001 = vmul.f32 %v6957, %v6903
      %v7002 = vmul.f32 %v6960, %v6903
      %v7003 = vmul.f32 %v6963, %v6903
      %v7004 = vmul.f32 %v6966, %v6903
      %v7005 = vmul.f32 %v6969, %v6903
      %v7006 = vmul.f32 %v6972, %v6903
      %v7007 = vmul.f32 %v6975, %v6903
      %v7008 = vmul.f32 %v6978, %v6903
      %v7009 = vmul.f32 %v6981, %v6903
      %v7010 = vmul.f32 %v6984, %v6903
      %v7011 = vmul.f32 %v6987, %v6903
      %v7012 = vmul.f32 %v6990, %v6903
      %v7013 = vmul.f32 %v6993, %v6903
      %v7014 = vmul.f32 %v6996, %v6903
      %v7015 = vmul.f32 %v6999, %v6903
      %v7016 = vadd.f32 %v7000, 1e-05
      %v7017 = vadd.f32 %v7001, 1e-05
      %v7018 = vadd.f32 %v7002, 1e-05
      %v7019 = vadd.f32 %v7003, 1e-05
      %v7020 = vadd.f32 %v7004, 1e-05
      %v7021 = vadd.f32 %v7005, 1e-05
      %v7022 = vadd.f32 %v7006, 1e-05
      %v7023 = vadd.f32 %v7007, 1e-05
      %v7024 = vadd.f32 %v7008, 1e-05
      %v7025 = vadd.f32 %v7009, 1e-05
      %v7026 = vadd.f32 %v7010, 1e-05
      %v7027 = vadd.f32 %v7011, 1e-05
      %v7028 = vadd.f32 %v7012, 1e-05
      %v7029 = vadd.f32 %v7013, 1e-05
      %v7030 = vadd.f32 %v7014, 1e-05
      %v7031 = vadd.f32 %v7015, 1e-05
      %v7032 = vrsqrt.pop %v7016
      %v7033 = vmul.f32 %v7032, %v7016
      %v7034 = vmul.f32 %v7033, %v7032
      %v7035 = vmul.f32 0.5, %v7034
      %v7036 = vsub.f32 1.5, %v7035
      %v7037 = vmul.f32 %v7032, %v7036
      %vm7038 = vweird.f32 %v7016
      %vm7039 = vweird.f32 %v7032
      %vm7040 = vmor %vm7038, %vm7039
      %v7041 = vsel %vm7040, %v7032, %v7037
      %v7042 = vrsqrt.pop %v7017
      %v7043 = vmul.f32 %v7042, %v7017
      %v7044 = vmul.f32 %v7043, %v7042
      %v7045 = vmul.f32 0.5, %v7044
      %v7046 = vsub.f32 1.5, %v7045
      %v7047 = vmul.f32 %v7042, %v7046
      %vm7048 = vweird.f32 %v7017
      %vm7049 = vweird.f32 %v7042
      %vm7050 = vmor %vm7048, %vm7049
      %v7051 = vsel %vm7050, %v7042, %v7047
      %v7052 = vrsqrt.pop %v7018
      %v7053 = vmul.f32 %v7052, %v7018
      %v7054 = vmul.f32 %v7053, %v7052
      %v7055 = vmul.f32 0.5, %v7054
      %v7056 = vsub.f32 1.5, %v7055
      %v7057 = vmul.f32 %v7052, %v7056
      %vm7058 = vweird.f32 %v7018
      %vm7059 = vweird.f32 %v7052
      %vm7060 = vmor %vm7058, %vm7059
      %v7061 = vsel %vm7060, %v7052, %v7057
      %v7062 = vrsqrt.pop %v7019
      %v7063 = vmul.f32 %v7062, %v7019
      %v7064 = vmul.f32 %v7063, %v7062
      %v7065 = vmul.f32 0.5, %v7064
      %v7066 = vsub.f32 1.5, %v7065
      %v7067 = vmul.f32 %v7062, %v7066
      %vm7068 = vweird.f32 %v7019
      %vm7069 = vweird.f32 %v7062
      %vm7070 = vmor %vm7068, %vm7069
      %v7071 = vsel %vm7070, %v7062, %v7067
      %v7072 = vrsqrt.pop %v7020
      %v7073 = vmul.f32 %v7072, %v7020
      %v7074 = vmul.f32 %v7073, %v7072
      %v7075 = vmul.f32 0.5, %v7074
      %v7076 = vsub.f32 1.5, %v7075
      %v7077 = vmul.f32 %v7072, %v7076
      %vm7078 = vweird.f32 %v7020
      %vm7079 = vweird.f32 %v7072
      %vm7080 = vmor %vm7078, %vm7079
      %v7081 = vsel %vm7080, %v7072, %v7077
      %v7082 = vrsqrt.pop %v7021
      %v7083 = vmul.f32 %v7082, %v7021
      %v7084 = vmul.f32 %v7083, %v7082
      %v7085 = vmul.f32 0.5, %v7084
      %v7086 = vsub.f32 1.5, %v7085
      %v7087 = vmul.f32 %v7082, %v7086
      %vm7088 = vweird.f32 %v7021
      %vm7089 = vweird.f32 %v7082
      %vm7090 = vmor %vm7088, %vm7089
      %v7091 = vsel %vm7090, %v7082, %v7087
      %v7092 = vrsqrt.pop %v7022
      %v7093 = vmul.f32 %v7092, %v7022
      %v7094 = vmul.f32 %v7093, %v7092
      %v7095 = vmul.f32 0.5, %v7094
      %v7096 = vsub.f32 1.5, %v7095
      %v7097 = vmul.f32 %v7092, %v7096
      %vm7098 = vweird.f32 %v7022
      %vm7099 = vweird.f32 %v7092
      %vm7100 = vmor %vm7098, %vm7099
      %v7101 = vsel %vm7100, %v7092, %v7097
      %v7102 = vrsqrt.pop %v7023
      %v7103 = vmul.f32 %v7102, %v7023
      %v7104 = vmul.f32 %v7103, %v7102
      %v7105 = vmul.f32 0.5, %v7104
      %v7106 = vsub.f32 1.5, %v7105
      %v7107 = vmul.f32 %v7102, %v7106
      %vm7108 = vweird.f32 %v7023
      %vm7109 = vweird.f32 %v7102
      %vm7110 = vmor %vm7108, %vm7109
      %v7111 = vsel %vm7110, %v7102, %v7107
      %v7112 = vrsqrt.pop %v7024
      %v7113 = vmul.f32 %v7112, %v7024
      %v7114 = vmul.f32 %v7113, %v7112
      %v7115 = vmul.f32 0.5, %v7114
      %v7116 = vsub.f32 1.5, %v7115
      %v7117 = vmul.f32 %v7112, %v7116
      %vm7118 = vweird.f32 %v7024
      %vm7119 = vweird.f32 %v7112
      %vm7120 = vmor %vm7118, %vm7119
      %v7121 = vsel %vm7120, %v7112, %v7117
      %v7122 = vrsqrt.pop %v7025
      %v7123 = vmul.f32 %v7122, %v7025
      %v7124 = vmul.f32 %v7123, %v7122
      %v7125 = vmul.f32 0.5, %v7124
      %v7126 = vsub.f32 1.5, %v7125
      %v7127 = vmul.f32 %v7122, %v7126
      %vm7128 = vweird.f32 %v7025
      %vm7129 = vweird.f32 %v7122
      %vm7130 = vmor %vm7128, %vm7129
      %v7131 = vsel %vm7130, %v7122, %v7127
      %v7132 = vrsqrt.pop %v7026
      %v7133 = vmul.f32 %v7132, %v7026
      %v7134 = vmul.f32 %v7133, %v7132
      %v7135 = vmul.f32 0.5, %v7134
      %v7136 = vsub.f32 1.5, %v7135
      %v7137 = vmul.f32 %v7132, %v7136
      %vm7138 = vweird.f32 %v7026
      %vm7139 = vweird.f32 %v7132
      %vm7140 = vmor %vm7138, %vm7139
      %v7141 = vsel %vm7140, %v7132, %v7137
      %v7142 = vrsqrt.pop %v7027
      %v7143 = vmul.f32 %v7142, %v7027
      %v7144 = vmul.f32 %v7143, %v7142
      %v7145 = vmul.f32 0.5, %v7144
      %v7146 = vsub.f32 1.5, %v7145
      %v7147 = vmul.f32 %v7142, %v7146
      %vm7148 = vweird.f32 %v7027
      %vm7149 = vweird.f32 %v7142
      %vm7150 = vmor %vm7148, %vm7149
      %v7151 = vsel %vm7150, %v7142, %v7147
      %v7152 = vrsqrt.pop %v7028
      %v7153 = vmul.f32 %v7152, %v7028
      %v7154 = vmul.f32 %v7153, %v7152
      %v7155 = vmul.f32 0.5, %v7154
      %v7156 = vsub.f32 1.5, %v7155
      %v7157 = vmul.f32 %v7152, %v7156
      %vm7158 = vweird.f32 %v7028
      %vm7159 = vweird.f32 %v7152
      %vm7160 = vmor %vm7158, %vm7159
      %v7161 = vsel %vm7160, %v7152, %v7157
      %v7162 = vrsqrt.pop %v7029
      %v7163 = vmul.f32 %v7162, %v7029
      %v7164 = vmul.f32 %v7163, %v7162
      %v7165 = vmul.f32 0.5, %v7164
      %v7166 = vsub.f32 1.5, %v7165
      %v7167 = vmul.f32 %v7162, %v7166
      %vm7168 = vweird.f32 %v7029
      %vm7169 = vweird.f32 %v7162
      %vm7170 = vmor %vm7168, %vm7169
      %v7171 = vsel %vm7170, %v7162, %v7167
      %v7172 = vrsqrt.pop %v7030
      %v7173 = vmul.f32 %v7172, %v7030
      %v7174 = vmul.f32 %v7173, %v7172
      %v7175 = vmul.f32 0.5, %v7174
      %v7176 = vsub.f32 1.5, %v7175
      %v7177 = vmul.f32 %v7172, %v7176
      %vm7178 = vweird.f32 %v7030
      %vm7179 = vweird.f32 %v7172
      %vm7180 = vmor %vm7178, %vm7179
      %v7181 = vsel %vm7180, %v7172, %v7177
      %v7182 = vrsqrt.pop %v7031
      %v7183 = vmul.f32 %v7182, %v7031
      %v7184 = vmul.f32 %v7183, %v7182
      %v7185 = vmul.f32 0.5, %v7184
      %v7186 = vsub.f32 1.5, %v7185
      %v7187 = vmul.f32 %v7182, %v7186
      %vm7188 = vweird.f32 %v7031
      %vm7189 = vweird.f32 %v7182
      %vm7190 = vmor %vm7188, %vm7189
      %v7191 = vsel %vm7190, %v7182, %v7187
      %v7192 = vmul.f32 %v6920, %v7041
      %v7193 = vmul.f32 %v6921, %v7051
      %v7194 = vmul.f32 %v6922, %v7061
      %v7195 = vmul.f32 %v6923, %v7071
      %v7196 = vmul.f32 %v6924, %v7081
      %v7197 = vmul.f32 %v6925, %v7091
      %v7198 = vmul.f32 %v6926, %v7101
      %v7199 = vmul.f32 %v6927, %v7111
      %v7200 = vmul.f32 %v6928, %v7121
      %v7201 = vmul.f32 %v6929, %v7131
      %v7202 = vmul.f32 %v6930, %v7141
      %v7203 = vmul.f32 %v6931, %v7151
      %v7204 = vmul.f32 %v6932, %v7161
      %v7205 = vmul.f32 %v6933, %v7171
      %v7206 = vmul.f32 %v6934, %v7181
      %v7207 = vmul.f32 %v6935, %v7191
      %v7208 = vperm.slane %v6847, 0
      %v7209 = vmul.f32 %v7192, %v7208
      %v7210 = vmul.f32 %v7193, %v7208
      %v7211 = vmul.f32 %v7194, %v7208
      %v7212 = vmul.f32 %v7195, %v7208
      %v7213 = vmul.f32 %v7196, %v7208
      %v7214 = vmul.f32 %v7197, %v7208
      %v7215 = vmul.f32 %v7198, %v7208
      %v7216 = vmul.f32 %v7199, %v7208
      %v7217 = vmul.f32 %v7200, %v7208
      %v7218 = vmul.f32 %v7201, %v7208
      %v7219 = vmul.f32 %v7202, %v7208
      %v7220 = vmul.f32 %v7203, %v7208
      %v7221 = vmul.f32 %v7204, %v7208
      %v7222 = vmul.f32 %v7205, %v7208
      %v7223 = vmul.f32 %v7206, %v7208
      %v7224 = vmul.f32 %v7207, %v7208
      %v7225 = vperm.slane %v6848, 0
      %v7226 = vadd.f32 %v7209, %v7225
      %v7227 = vadd.f32 %v7210, %v7225
      %v7228 = vadd.f32 %v7211, %v7225
      %v7229 = vadd.f32 %v7212, %v7225
      %v7230 = vadd.f32 %v7213, %v7225
      %v7231 = vadd.f32 %v7214, %v7225
      %v7232 = vadd.f32 %v7215, %v7225
      %v7233 = vadd.f32 %v7216, %v7225
      %v7234 = vadd.f32 %v7217, %v7225
      %v7235 = vadd.f32 %v7218, %v7225
      %v7236 = vadd.f32 %v7219, %v7225
      %v7237 = vadd.f32 %v7220, %v7225
      %v7238 = vadd.f32 %v7221, %v7225
      %v7239 = vadd.f32 %v7222, %v7225
      %v7240 = vadd.f32 %v7223, %v7225
      %v7241 = vadd.f32 %v7224, %v7225
      %v7242 = vld [vmem:[%s7] sm:$0xff]
      %v7243 = vld [vmem:[%s7 + $0x8] sm:$0xff]
      %v7244 = vld [vmem:[%s7 + $0x10] sm:$0xff]
      %v7245 = vld [vmem:[%s7 + $0x18] sm:$0xff]
      %v7246 = vld [vmem:[%s9 + $0x1] sm:$0x1]
      %v7247 = vperm.slane %v7246, 0
      %v7249 = vsel %vm469, %v7226, 0
      %v7252 = vsel %vm469, %v7227, 0
      %v7255 = vsel %vm469, %v7228, 0
      %v7258 = vsel %vm469, %v7229, 0
      %v7261 = vsel %vm469, %v7230, 0
      %v7264 = vsel %vm469, %v7231, 0
      %v7267 = vsel %vm469, %v7232, 0
      %v7270 = vsel %vm469, %v7233, 0
      %v7273 = vsel %vm469, %v7234, 0
      %v7276 = vsel %vm469, %v7235, 0
      %v7279 = vsel %vm469, %v7236, 0
      %v7282 = vsel %vm469, %v7237, 0
      %v7285 = vsel %vm469, %v7238, 0
      %v7288 = vsel %vm469, %v7239, 0
      %v7291 = vsel %vm469, %v7240, 0
      %v7294 = vsel %vm469, %v7241, 0
      %7296 = vmatpush.msra.mxu0 0.0
      %7297 = vmatpush.msra.mxu0 0.0
      %7298 = vmatpush.msra.mxu0 0.0
      %7299 = vmatpush.msra.mxu0 0.0
      %7300 = vmatpush.msra.mxu0 0.0
      %7301 = vmatpush.msra.mxu0 0.0
      %7302 = vmatpush.msra.mxu0 0.0
      %7303 = vmatpush.msra.mxu0 0.0
      %7304 = vmatpush.msra.mxu0 0.0
      %7305 = vmatpush.msra.mxu0 0.0
      %7306 = vmatpush.msra.mxu0 0.0
      %7307 = vmatpush.msra.mxu0 0.0
      %7308 = vmatpush.msra.mxu0 %v7245
      %7309 = vmatpush.msra.mxu0 %v7244
      %7310 = vmatpush.msra.mxu0 %v7243
      %7311 = vmatpush.msra.mxu0 %v7242
      %7312 = vmatmul.f32.gmra.mxu0 %v7249
      %v7313 = vpop.f32.mrf.mxu0
      %v7314 = vadd.f32 %v7247, %v7313
      %7315 = vmatmul.f32.gmra.mxu0 %v7252
      %v7316 = vpop.f32.mrf.mxu0
      %v7317 = vadd.f32 %v7247, %v7316
      %7318 = vmatmul.f32.gmra.mxu0 %v7255
      %v7319 = vpop.f32.mrf.mxu0
      %v7320 = vadd.f32 %v7247, %v7319
      %7321 = vmatmul.f32.gmra.mxu0 %v7258
      %v7322 = vpop.f32.mrf.mxu0
      %v7323 = vadd.f32 %v7247, %v7322
      %7324 = vmatmul.f32.gmra.mxu0 %v7261
      %v7325 = vpop.f32.mrf.mxu0
      %v7326 = vadd.f32 %v7247, %v7325
      %7327 = vmatmul.f32.gmra.mxu0 %v7264
      %v7328 = vpop.f32.mrf.mxu0
      %v7329 = vadd.f32 %v7247, %v7328
      %7330 = vmatmul.f32.gmra.mxu0 %v7267
      %v7331 = vpop.f32.mrf.mxu0
      %v7332 = vadd.f32 %v7247, %v7331
      %7333 = vmatmul.f32.gmra.mxu0 %v7270
      %v7334 = vpop.f32.mrf.mxu0
      %v7335 = vadd.f32 %v7247, %v7334
      %7336 = vmatmul.f32.gmra.mxu0 %v7273
      %v7337 = vpop.f32.mrf.mxu0
      %v7338 = vadd.f32 %v7247, %v7337
      %7339 = vmatmul.f32.gmra.mxu0 %v7276
      %v7340 = vpop.f32.mrf.mxu0
      %v7341 = vadd.f32 %v7247, %v7340
      %7342 = vmatmul.f32.gmra.mxu0 %v7279
      %v7343 = vpop.f32.mrf.mxu0
      %v7344 = vadd.f32 %v7247, %v7343
      %7345 = vmatmul.f32.gmra.mxu0 %v7282
      %v7346 = vpop.f32.mrf.mxu0
      %v7347 = vadd.f32 %v7247, %v7346
      %7348 = vmatmul.f32.gmra.mxu0 %v7285
      %v7349 = vpop.f32.mrf.mxu0
      %v7350 = vadd.f32 %v7247, %v7349
      %7351 = vmatmul.f32.gmra.mxu0 %v7288
      %v7352 = vpop.f32.mrf.mxu0
      %v7353 = vadd.f32 %v7247, %v7352
      %7354 = vmatmul.f32.gmra.mxu0 %v7291
      %v7355 = vpop.f32.mrf.mxu0
      %v7356 = vadd.f32 %v7247, %v7355
      %7357 = vmatmul.f32.gmra.mxu0 %v7294
      %v7358 = vpop.f32.mrf.mxu0
      %v7359 = vadd.f32 %v7247, %v7358
      %7360 = vdwg.mxu0
      %v7361 = vmul.f32 %v7314, 0.5
      %v7362 = vmul.f32 %v7317, 0.5
      %v7363 = vmul.f32 %v7320, 0.5
      %v7364 = vmul.f32 %v7323, 0.5
      %v7365 = vmul.f32 %v7326, 0.5
      %v7366 = vmul.f32 %v7329, 0.5
      %v7367 = vmul.f32 %v7332, 0.5
      %v7368 = vmul.f32 %v7335, 0.5
      %v7369 = vmul.f32 %v7338, 0.5
      %v7370 = vmul.f32 %v7341, 0.5
      %v7371 = vmul.f32 %v7344, 0.5
      %v7372 = vmul.f32 %v7347, 0.5
      %v7373 = vmul.f32 %v7350, 0.5
      %v7374 = vmul.f32 %v7353, 0.5
      %v7375 = vmul.f32 %v7356, 0.5
      %v7376 = vmul.f32 %v7359, 0.5
      %v7377 = vmul.f32 %v7314, 0.044715
      %v7378 = vmul.f32 %v7317, 0.044715
      %v7379 = vmul.f32 %v7320, 0.044715
      %v7380 = vmul.f32 %v7323, 0.044715
      %v7381 = vmul.f32 %v7326, 0.044715
      %v7382 = vmul.f32 %v7329, 0.044715
      %v7383 = vmul.f32 %v7332, 0.044715
      %v7384 = vmul.f32 %v7335, 0.044715
      %v7385 = vmul.f32 %v7338, 0.044715
      %v7386 = vmul.f32 %v7341, 0.044715
      %v7387 = vmul.f32 %v7344, 0.044715
      %v7388 = vmul.f32 %v7347, 0.044715
      %v7389 = vmul.f32 %v7350, 0.044715
      %v7390 = vmul.f32 %v7353, 0.044715
      %v7391 = vmul.f32 %v7356, 0.044715
      %v7392 = vmul.f32 %v7359, 0.044715
      %v7393 = vmul.f32 %v7377, %v7314
      %v7394 = vmul.f32 %v7378, %v7317
      %v7395 = vmul.f32 %v7379, %v7320
      %v7396 = vmul.f32 %v7380, %v7323
      %v7397 = vmul.f32 %v7381, %v7326
      %v7398 = vmul.f32 %v7382, %v7329
      %v7399 = vmul.f32 %v7383, %v7332
      %v7400 = vmul.f32 %v7384, %v7335
      %v7401 = vmul.f32 %v7385, %v7338
      %v7402 = vmul.f32 %v7386, %v7341
      %v7403 = vmul.f32 %v7387, %v7344
      %v7404 = vmul.f32 %v7388, %v7347
      %v7405 = vmul.f32 %v7389, %v7350
      %v7406 = vmul.f32 %v7390, %v7353
      %v7407 = vmul.f32 %v7391, %v7356
      %v7408 = vmul.f32 %v7392, %v7359
      %v7409 = vmul.f32 %v7393, %v7314
      %v7410 = vmul.f32 %v7394, %v7317
      %v7411 = vmul.f32 %v7395, %v7320
      %v7412 = vmul.f32 %v7396, %v7323
      %v7413 = vmul.f32 %v7397, %v7326
      %v7414 = vmul.f32 %v7398, %v7329
      %v7415 = vmul.f32 %v7399, %v7332
      %v7416 = vmul.f32 %v7400, %v7335
      %v7417 = vmul.f32 %v7401, %v7338
      %v7418 = vmul.f32 %v7402, %v7341
      %v7419 = vmul.f32 %v7403, %v7344
      %v7420 = vmul.f32 %v7404, %v7347
      %v7421 = vmul.f32 %v7405, %v7350
      %v7422 = vmul.f32 %v7406, %v7353
      %v7423 = vmul.f32 %v7407, %v7356
      %v7424 = vmul.f32 %v7408, %v7359
      %v7425 = vadd.f32 %v7314, %v7409
      %v7426 = vadd.f32 %v7317, %v7410
      %v7427 = vadd.f32 %v7320, %v7411
      %v7428 = vadd.f32 %v7323, %v7412
      %v7429 = vadd.f32 %v7326, %v7413
      %v7430 = vadd.f32 %v7329, %v7414
      %v7431 = vadd.f32 %v7332, %v7415
      %v7432 = vadd.f32 %v7335, %v7416
      %v7433 = vadd.f32 %v7338, %v7417
      %v7434 = vadd.f32 %v7341, %v7418
      %v7435 = vadd.f32 %v7344, %v7419
      %v7436 = vadd.f32 %v7347, %v7420
      %v7437 = vadd.f32 %v7350, %v7421
      %v7438 = vadd.f32 %v7353, %v7422
      %v7439 = vadd.f32 %v7356, %v7423
      %v7440 = vadd.f32 %v7359, %v7424
      %v7441 = vmul.f32 %v7425, 0.7978846
      %v7442 = vmul.f32 %v7426, 0.7978846
      %v7443 = vmul.f32 %v7427, 0.7978846
      %v7444 = vmul.f32 %v7428, 0.7978846
      %v7445 = vmul.f32 %v7429, 0.7978846
      %v7446 = vmul.f32 %v7430, 0.7978846
      %v7447 = vmul.f32 %v7431, 0.7978846
      %v7448 = vmul.f32 %v7432, 0.7978846
      %v7449 = vmul.f32 %v7433, 0.7978846
      %v7450 = vmul.f32 %v7434, 0.7978846
      %v7451 = vmul.f32 %v7435, 0.7978846
      %v7452 = vmul.f32 %v7436, 0.7978846
      %v7453 = vmul.f32 %v7437, 0.7978846
      %v7454 = vmul.f32 %v7438, 0.7978846
      %v7455 = vmul.f32 %v7439, 0.7978846
      %v7456 = vmul.f32 %v7440, 0.7978846
      %v7457 = vtanh.pop %v7441
      %v7458 = vtanh.pop %v7442
      %v7459 = vtanh.pop %v7443
      %v7460 = vtanh.pop %v7444
      %v7461 = vtanh.pop %v7445
      %v7462 = vtanh.pop %v7446
      %v7463 = vtanh.pop %v7447
      %v7464 = vtanh.pop %v7448
      %v7465 = vtanh.pop %v7449
      %v7466 = vtanh.pop %v7450
      %v7467 = vtanh.pop %v7451
      %v7468 = vtanh.pop %v7452
      %v7469 = vtanh.pop %v7453
      %v7470 = vtanh.pop %v7454
      %v7471 = vtanh.pop %v7455
      %v7472 = vtanh.pop %v7456
      %v7473 = vadd.f32 %v7457, 1.0
      %v7474 = vadd.f32 %v7458, 1.0
      %v7475 = vadd.f32 %v7459, 1.0
      %v7476 = vadd.f32 %v7460, 1.0
      %v7477 = vadd.f32 %v7461, 1.0
      %v7478 = vadd.f32 %v7462, 1.0
      %v7479 = vadd.f32 %v7463, 1.0
      %v7480 = vadd.f32 %v7464, 1.0
      %v7481 = vadd.f32 %v7465, 1.0
      %v7482 = vadd.f32 %v7466, 1.0
      %v7483 = vadd.f32 %v7467, 1.0
      %v7484 = vadd.f32 %v7468, 1.0
      %v7485 = vadd.f32 %v7469, 1.0
      %v7486 = vadd.f32 %v7470, 1.0
      %v7487 = vadd.f32 %v7471, 1.0
      %v7488 = vadd.f32 %v7472, 1.0
      %v7489 = vmul.f32 %v7361, %v7473
      %v7490 = vmul.f32 %v7362, %v7474
      %v7491 = vmul.f32 %v7363, %v7475
      %v7492 = vmul.f32 %v7364, %v7476
      %v7493 = vmul.f32 %v7365, %v7477
      %v7494 = vmul.f32 %v7366, %v7478
      %v7495 = vmul.f32 %v7367, %v7479
      %v7496 = vmul.f32 %v7368, %v7480
      %v7497 = vmul.f32 %v7369, %v7481
      %v7498 = vmul.f32 %v7370, %v7482
      %v7499 = vmul.f32 %v7371, %v7483
      %v7500 = vmul.f32 %v7372, %v7484
      %v7501 = vmul.f32 %v7373, %v7485
      %v7502 = vmul.f32 %v7374, %v7486
      %v7503 = vmul.f32 %v7375, %v7487
      %v7504 = vmul.f32 %v7376, %v7488
      %v7505 = vld [vmem:[%s8] sm:$0xff]
      %v7506 = vld [vmem:[%s8 + $0x8] sm:$0xff]
      %v7507 = vld [vmem:[%s8 + $0x10] sm:$0xff]
      %v7508 = vld [vmem:[%s8 + $0x18] sm:$0xff]
      %v7509 = vld [vmem:[%s9 + $0x2] sm:$0x1]
      %v7510 = vperm.slane %v7509, 0
      %v7512 = vsel %vm469, %v7489, 0
      %v7515 = vsel %vm469, %v7490, 0
      %v7518 = vsel %vm469, %v7491, 0
      %v7521 = vsel %vm469, %v7492, 0
      %v7524 = vsel %vm469, %v7493, 0
      %v7527 = vsel %vm469, %v7494, 0
      %v7530 = vsel %vm469, %v7495, 0
      %v7533 = vsel %vm469, %v7496, 0
      %v7536 = vsel %vm469, %v7497, 0
      %v7539 = vsel %vm469, %v7498, 0
      %v7542 = vsel %vm469, %v7499, 0
      %v7545 = vsel %vm469, %v7500, 0
      %v7548 = vsel %vm469, %v7501, 0
      %v7551 = vsel %vm469, %v7502, 0
      %v7554 = vsel %vm469, %v7503, 0
      %v7557 = vsel %vm469, %v7504, 0
      %7559 = vmatpush.msra.mxu0 0.0
      %7560 = vmatpush.msra.mxu0 0.0
      %7561 = vmatpush.msra.mxu0 0.0
      %7562 = vmatpush.msra.mxu0 0.0
      %7563 = vmatpush.msra.mxu0 0.0
      %7564 = vmatpush.msra.mxu0 0.0
      %7565 = vmatpush.msra.mxu0 0.0
      %7566 = vmatpush.msra.mxu0 0.0
      %7567 = vmatpush.msra.mxu0 0.0
      %7568 = vmatpush.msra.mxu0 0.0
      %7569 = vmatpush.msra.mxu0 0.0
      %7570 = vmatpush.msra.mxu0 0.0
      %7571 = vmatpush.msra.mxu0 %v7508
      %7572 = vmatpush.msra.mxu0 %v7507
      %7573 = vmatpush.msra.mxu0 %v7506
      %7574 = vmatpush.msra.mxu0 %v7505
      %7575 = vmatmul.f32.gmra.mxu0 %v7512
      %v7576 = vpop.f32.mrf.mxu0
      %v7577 = vadd.f32 %v7510, %v7576
      %7578 = vmatmul.f32.gmra.mxu0 %v7515
      %v7579 = vpop.f32.mrf.mxu0
      %v7580 = vadd.f32 %v7510, %v7579
      %7581 = vmatmul.f32.gmra.mxu0 %v7518
      %v7582 = vpop.f32.mrf.mxu0
      %v7583 = vadd.f32 %v7510, %v7582
      %7584 = vmatmul.f32.gmra.mxu0 %v7521
      %v7585 = vpop.f32.mrf.mxu0
      %v7586 = vadd.f32 %v7510, %v7585
      %7587 = vmatmul.f32.gmra.mxu0 %v7524
      %v7588 = vpop.f32.mrf.mxu0
      %v7589 = vadd.f32 %v7510, %v7588
      %7590 = vmatmul.f32.gmra.mxu0 %v7527
      %v7591 = vpop.f32.mrf.mxu0
      %v7592 = vadd.f32 %v7510, %v7591
      %7593 = vmatmul.f32.gmra.mxu0 %v7530
      %v7594 = vpop.f32.mrf.mxu0
      %v7595 = vadd.f32 %v7510, %v7594
      %7596 = vmatmul.f32.gmra.mxu0 %v7533
      %v7597 = vpop.f32.mrf.mxu0
      %v7598 = vadd.f32 %v7510, %v7597
      %7599 = vmatmul.f32.gmra.mxu0 %v7536
      %v7600 = vpop.f32.mrf.mxu0
      %v7601 = vadd.f32 %v7510, %v7600
      %7602 = vmatmul.f32.gmra.mxu0 %v7539
      %v7603 = vpop.f32.mrf.mxu0
      %v7604 = vadd.f32 %v7510, %v7603
      %7605 = vmatmul.f32.gmra.mxu0 %v7542
      %v7606 = vpop.f32.mrf.mxu0
      %v7607 = vadd.f32 %v7510, %v7606
      %7608 = vmatmul.f32.gmra.mxu0 %v7545
      %v7609 = vpop.f32.mrf.mxu0
      %v7610 = vadd.f32 %v7510, %v7609
      %7611 = vmatmul.f32.gmra.mxu0 %v7548
      %v7612 = vpop.f32.mrf.mxu0
      %v7613 = vadd.f32 %v7510, %v7612
      %7614 = vmatmul.f32.gmra.mxu0 %v7551
      %v7615 = vpop.f32.mrf.mxu0
      %v7616 = vadd.f32 %v7510, %v7615
      %7617 = vmatmul.f32.gmra.mxu0 %v7554
      %v7618 = vpop.f32.mrf.mxu0
      %v7619 = vadd.f32 %v7510, %v7618
      %7620 = vmatmul.f32.gmra.mxu0 %v7557
      %v7621 = vpop.f32.mrf.mxu0
      %v7622 = vadd.f32 %v7510, %v7621
      %7623 = vdwg.mxu0
      %v7624 = vadd.f32 %v7226, %v7577
      %v7625 = vadd.f32 %v7227, %v7580
      %v7626 = vadd.f32 %v7228, %v7583
      %v7627 = vadd.f32 %v7229, %v7586
      %v7628 = vadd.f32 %v7230, %v7589
      %v7629 = vadd.f32 %v7231, %v7592
      %v7630 = vadd.f32 %v7232, %v7595
      %v7631 = vadd.f32 %v7233, %v7598
      %v7632 = vadd.f32 %v7234, %v7601
      %v7633 = vadd.f32 %v7235, %v7604
      %v7634 = vadd.f32 %v7236, %v7607
      %v7635 = vadd.f32 %v7237, %v7610
      %v7636 = vadd.f32 %v7238, %v7613
      %v7637 = vadd.f32 %v7239, %v7616
      %v7638 = vadd.f32 %v7240, %v7619
      %v7639 = vadd.f32 %v7241, %v7622
      %v7640 = vld [vmem:[%s9 + $0x5] sm:$0x1]
      %v7641 = vld [vmem:[%s9 + $0x6] sm:$0x1]
      %v7642 = vsel %vm469, %v7624, 0.0
      %7643 = vadd.xlane.f32.xlu0 %v7642
      %v7644 = vpop.xlane.xlu0 %7643
      %v7645 = vsel %vm469, %v7625, 0.0
      %7646 = vadd.xlane.f32.xlu0 %v7645
      %v7647 = vpop.xlane.xlu0 %7646
      %v7648 = vsel %vm469, %v7626, 0.0
      %7649 = vadd.xlane.f32.xlu0 %v7648
      %v7650 = vpop.xlane.xlu0 %7649
      %v7651 = vsel %vm469, %v7627, 0.0
      %7652 = vadd.xlane.f32.xlu0 %v7651
      %v7653 = vpop.xlane.xlu0 %7652
      %v7654 = vsel %vm469, %v7628, 0.0
      %7655 = vadd.xlane.f32.xlu0 %v7654
      %v7656 = vpop.xlane.xlu0 %7655
      %v7657 = vsel %vm469, %v7629, 0.0
      %7658 = vadd.xlane.f32.xlu0 %v7657
      %v7659 = vpop.xlane.xlu0 %7658
      %v7660 = vsel %vm469, %v7630, 0.0
      %7661 = vadd.xlane.f32.xlu0 %v7660
      %v7662 = vpop.xlane.xlu0 %7661
      %v7663 = vsel %vm469, %v7631, 0.0
      %7664 = vadd.xlane.f32.xlu0 %v7663
      %v7665 = vpop.xlane.xlu0 %7664
      %v7666 = vsel %vm469, %v7632, 0.0
      %7667 = vadd.xlane.f32.xlu0 %v7666
      %v7668 = vpop.xlane.xlu0 %7667
      %v7669 = vsel %vm469, %v7633, 0.0
      %7670 = vadd.xlane.f32.xlu0 %v7669
      %v7671 = vpop.xlane.xlu0 %7670
      %v7672 = vsel %vm469, %v7634, 0.0
      %7673 = vadd.xlane.f32.xlu0 %v7672
      %v7674 = vpop.xlane.xlu0 %7673
      %v7675 = vsel %vm469, %v7635, 0.0
      %7676 = vadd.xlane.f32.xlu0 %v7675
      %v7677 = vpop.xlane.xlu0 %7676
      %v7678 = vsel %vm469, %v7636, 0.0
      %7679 = vadd.xlane.f32.xlu0 %v7678
      %v7680 = vpop.xlane.xlu0 %7679
      %v7681 = vsel %vm469, %v7637, 0.0
      %7682 = vadd.xlane.f32.xlu0 %v7681
      %v7683 = vpop.xlane.xlu0 %7682
      %v7684 = vsel %vm469, %v7638, 0.0
      %7685 = vadd.xlane.f32.xlu0 %v7684
      %v7686 = vpop.xlane.xlu0 %7685
      %v7687 = vsel %vm469, %v7639, 0.0
      %7688 = vadd.xlane.f32.xlu0 %v7687
      %v7689 = vpop.xlane.xlu0 %7688
      %v7690 = vmul.f32 %v7644, %v6903
      %v7691 = vmul.f32 %v7647, %v6903
      %v7692 = vmul.f32 %v7650, %v6903
      %v7693 = vmul.f32 %v7653, %v6903
      %v7694 = vmul.f32 %v7656, %v6903
      %v7695 = vmul.f32 %v7659, %v6903
      %v7696 = vmul.f32 %v7662, %v6903
      %v7697 = vmul.f32 %v7665, %v6903
      %v7698 = vmul.f32 %v7668, %v6903
      %v7699 = vmul.f32 %v7671, %v6903
      %v7700 = vmul.f32 %v7674, %v6903
      %v7701 = vmul.f32 %v7677, %v6903
      %v7702 = vmul.f32 %v7680, %v6903
      %v7703 = vmul.f32 %v7683, %v6903
      %v7704 = vmul.f32 %v7686, %v6903
      %v7705 = vmul.f32 %v7689, %v6903
      %v7706 = vsub.f32 %v7624, %v7690
      %v7707 = vsub.f32 %v7625, %v7691
      %v7708 = vsub.f32 %v7626, %v7692
      %v7709 = vsub.f32 %v7627, %v7693
      %v7710 = vsub.f32 %v7628, %v7694
      %v7711 = vsub.f32 %v7629, %v7695
      %v7712 = vsub.f32 %v7630, %v7696
      %v7713 = vsub.f32 %v7631, %v7697
      %v7714 = vsub.f32 %v7632, %v7698
      %v7715 = vsub.f32 %v7633, %v7699
      %v7716 = vsub.f32 %v7634, %v7700
      %v7717 = vsub.f32 %v7635, %v7701
      %v7718 = vsub.f32 %v7636, %v7702
      %v7719 = vsub.f32 %v7637, %v7703
      %v7720 = vsub.f32 %v7638, %v7704
      %v7721 = vsub.f32 %v7639, %v7705
      %v7722 = vmul.f32 %v7706, %v7706
      %v7723 = vmul.f32 %v7707, %v7707
      %v7724 = vmul.f32 %v7708, %v7708
      %v7725 = vmul.f32 %v7709, %v7709
      %v7726 = vmul.f32 %v7710, %v7710
      %v7727 = vmul.f32 %v7711, %v7711
      %v7728 = vmul.f32 %v7712, %v7712
      %v7729 = vmul.f32 %v7713, %v7713
      %v7730 = vmul.f32 %v7714, %v7714
      %v7731 = vmul.f32 %v7715, %v7715
      %v7732 = vmul.f32 %v7716, %v7716
      %v7733 = vmul.f32 %v7717, %v7717
      %v7734 = vmul.f32 %v7718, %v7718
      %v7735 = vmul.f32 %v7719, %v7719
      %v7736 = vmul.f32 %v7720, %v7720
      %v7737 = vmul.f32 %v7721, %v7721
      %v7738 = vsel %vm469, %v7722, 0.0
      %7739 = vadd.xlane.f32.xlu0 %v7738
      %v7740 = vpop.xlane.xlu0 %7739
      %v7741 = vsel %vm469, %v7723, 0.0
      %7742 = vadd.xlane.f32.xlu0 %v7741
      %v7743 = vpop.xlane.xlu0 %7742
      %v7744 = vsel %vm469, %v7724, 0.0
      %7745 = vadd.xlane.f32.xlu0 %v7744
      %v7746 = vpop.xlane.xlu0 %7745
      %v7747 = vsel %vm469, %v7725, 0.0
      %7748 = vadd.xlane.f32.xlu0 %v7747
      %v7749 = vpop.xlane.xlu0 %7748
      %v7750 = vsel %vm469, %v7726, 0.0
      %7751 = vadd.xlane.f32.xlu0 %v7750
      %v7752 = vpop.xlane.xlu0 %7751
      %v7753 = vsel %vm469, %v7727, 0.0
      %7754 = vadd.xlane.f32.xlu0 %v7753
      %v7755 = vpop.xlane.xlu0 %7754
      %v7756 = vsel %vm469, %v7728, 0.0
      %7757 = vadd.xlane.f32.xlu0 %v7756
      %v7758 = vpop.xlane.xlu0 %7757
      %v7759 = vsel %vm469, %v7729, 0.0
      %7760 = vadd.xlane.f32.xlu0 %v7759
      %v7761 = vpop.xlane.xlu0 %7760
      %v7762 = vsel %vm469, %v7730, 0.0
      %7763 = vadd.xlane.f32.xlu0 %v7762
      %v7764 = vpop.xlane.xlu0 %7763
      %v7765 = vsel %vm469, %v7731, 0.0
      %7766 = vadd.xlane.f32.xlu0 %v7765
      %v7767 = vpop.xlane.xlu0 %7766
      %v7768 = vsel %vm469, %v7732, 0.0
      %7769 = vadd.xlane.f32.xlu0 %v7768
      %v7770 = vpop.xlane.xlu0 %7769
      %v7771 = vsel %vm469, %v7733, 0.0
      %7772 = vadd.xlane.f32.xlu0 %v7771
      %v7773 = vpop.xlane.xlu0 %7772
      %v7774 = vsel %vm469, %v7734, 0.0
      %7775 = vadd.xlane.f32.xlu0 %v7774
      %v7776 = vpop.xlane.xlu0 %7775
      %v7777 = vsel %vm469, %v7735, 0.0
      %7778 = vadd.xlane.f32.xlu0 %v7777
      %v7779 = vpop.xlane.xlu0 %7778
      %v7780 = vsel %vm469, %v7736, 0.0
      %7781 = vadd.xlane.f32.xlu0 %v7780
      %v7782 = vpop.xlane.xlu0 %7781
      %v7783 = vsel %vm469, %v7737, 0.0
      %7784 = vadd.xlane.f32.xlu0 %v7783
      %v7785 = vpop.xlane.xlu0 %7784
      %v7786 = vmul.f32 %v7740, %v6903
      %v7787 = vmul.f32 %v7743, %v6903
      %v7788 = vmul.f32 %v7746, %v6903
      %v7789 = vmul.f32 %v7749, %v6903
      %v7790 = vmul.f32 %v7752, %v6903
      %v7791 = vmul.f32 %v7755, %v6903
      %v7792 = vmul.f32 %v7758, %v6903
      %v7793 = vmul.f32 %v7761, %v6903
      %v7794 = vmul.f32 %v7764, %v6903
      %v7795 = vmul.f32 %v7767, %v6903
      %v7796 = vmul.f32 %v7770, %v6903
      %v7797 = vmul.f32 %v7773, %v6903
      %v7798 = vmul.f32 %v7776, %v6903
      %v7799 = vmul.f32 %v7779, %v6903
      %v7800 = vmul.f32 %v7782, %v6903
      %v7801 = vmul.f32 %v7785, %v6903
      %v7802 = vadd.f32 %v7786, 1e-05
      %v7803 = vadd.f32 %v7787, 1e-05
      %v7804 = vadd.f32 %v7788, 1e-05
      %v7805 = vadd.f32 %v7789, 1e-05
      %v7806 = vadd.f32 %v7790, 1e-05
      %v7807 = vadd.f32 %v7791, 1e-05
      %v7808 = vadd.f32 %v7792, 1e-05
      %v7809 = vadd.f32 %v7793, 1e-05
      %v7810 = vadd.f32 %v7794, 1e-05
      %v7811 = vadd.f32 %v7795, 1e-05
      %v7812 = vadd.f32 %v7796, 1e-05
      %v7813 = vadd.f32 %v7797, 1e-05
      %v7814 = vadd.f32 %v7798, 1e-05
      %v7815 = vadd.f32 %v7799, 1e-05
      %v7816 = vadd.f32 %v7800, 1e-05
      %v7817 = vadd.f32 %v7801, 1e-05
      %v7818 = vrsqrt.pop %v7802
      %v7819 = vmul.f32 %v7818, %v7802
      %v7820 = vmul.f32 %v7819, %v7818
      %v7821 = vmul.f32 0.5, %v7820
      %v7822 = vsub.f32 1.5, %v7821
      %v7823 = vmul.f32 %v7818, %v7822
      %vm7824 = vweird.f32 %v7802
      %vm7825 = vweird.f32 %v7818
      %vm7826 = vmor %vm7824, %vm7825
      %v7827 = vsel %vm7826, %v7818, %v7823
      %v7828 = vrsqrt.pop %v7803
      %v7829 = vmul.f32 %v7828, %v7803
      %v7830 = vmul.f32 %v7829, %v7828
      %v7831 = vmul.f32 0.5, %v7830
      %v7832 = vsub.f32 1.5, %v7831
      %v7833 = vmul.f32 %v7828, %v7832
      %vm7834 = vweird.f32 %v7803
      %vm7835 = vweird.f32 %v7828
      %vm7836 = vmor %vm7834, %vm7835
      %v7837 = vsel %vm7836, %v7828, %v7833
      %v7838 = vrsqrt.pop %v7804
      %v7839 = vmul.f32 %v7838, %v7804
      %v7840 = vmul.f32 %v7839, %v7838
      %v7841 = vmul.f32 0.5, %v7840
      %v7842 = vsub.f32 1.5, %v7841
      %v7843 = vmul.f32 %v7838, %v7842
      %vm7844 = vweird.f32 %v7804
      %vm7845 = vweird.f32 %v7838
      %vm7846 = vmor %vm7844, %vm7845
      %v7847 = vsel %vm7846, %v7838, %v7843
      %v7848 = vrsqrt.pop %v7805
      %v7849 = vmul.f32 %v7848, %v7805
      %v7850 = vmul.f32 %v7849, %v7848
      %v7851 = vmul.f32 0.5, %v7850
      %v7852 = vsub.f32 1.5, %v7851
      %v7853 = vmul.f32 %v7848, %v7852
      %vm7854 = vweird.f32 %v7805
      %vm7855 = vweird.f32 %v7848
      %vm7856 = vmor %vm7854, %vm7855
      %v7857 = vsel %vm7856, %v7848, %v7853
      %v7858 = vrsqrt.pop %v7806
      %v7859 = vmul.f32 %v7858, %v7806
      %v7860 = vmul.f32 %v7859, %v7858
      %v7861 = vmul.f32 0.5, %v7860
      %v7862 = vsub.f32 1.5, %v7861
      %v7863 = vmul.f32 %v7858, %v7862
      %vm7864 = vweird.f32 %v7806
      %vm7865 = vweird.f32 %v7858
      %vm7866 = vmor %vm7864, %vm7865
      %v7867 = vsel %vm7866, %v7858, %v7863
      %v7868 = vrsqrt.pop %v7807
      %v7869 = vmul.f32 %v7868, %v7807
      %v7870 = vmul.f32 %v7869, %v7868
      %v7871 = vmul.f32 0.5, %v7870
      %v7872 = vsub.f32 1.5, %v7871
      %v7873 = vmul.f32 %v7868, %v7872
      %vm7874 = vweird.f32 %v7807
      %vm7875 = vweird.f32 %v7868
      %vm7876 = vmor %vm7874, %vm7875
      %v7877 = vsel %vm7876, %v7868, %v7873
      %v7878 = vrsqrt.pop %v7808
      %v7879 = vmul.f32 %v7878, %v7808
      %v7880 = vmul.f32 %v7879, %v7878
      %v7881 = vmul.f32 0.5, %v7880
      %v7882 = vsub.f32 1.5, %v7881
      %v7883 = vmul.f32 %v7878, %v7882
      %vm7884 = vweird.f32 %v7808
      %vm7885 = vweird.f32 %v7878
      %vm7886 = vmor %vm7884, %vm7885
      %v7887 = vsel %vm7886, %v7878, %v7883
      %v7888 = vrsqrt.pop %v7809
      %v7889 = vmul.f32 %v7888, %v7809
      %v7890 = vmul.f32 %v7889, %v7888
      %v7891 = vmul.f32 0.5, %v7890
      %v7892 = vsub.f32 1.5, %v7891
      %v7893 = vmul.f32 %v7888, %v7892
      %vm7894 = vweird.f32 %v7809
      %vm7895 = vweird.f32 %v7888
      %vm7896 = vmor %vm7894, %vm7895
      %v7897 = vsel %vm7896, %v7888, %v7893
      %v7898 = vrsqrt.pop %v7810
      %v7899 = vmul.f32 %v7898, %v7810
      %v7900 = vmul.f32 %v7899, %v7898
      %v7901 = vmul.f32 0.5, %v7900
      %v7902 = vsub.f32 1.5, %v7901
      %v7903 = vmul.f32 %v7898, %v7902
      %vm7904 = vweird.f32 %v7810
      %vm7905 = vweird.f32 %v7898
      %vm7906 = vmor %vm7904, %vm7905
      %v7907 = vsel %vm7906, %v7898, %v7903
      %v7908 = vrsqrt.pop %v7811
      %v7909 = vmul.f32 %v7908, %v7811
      %v7910 = vmul.f32 %v7909, %v7908
      %v7911 = vmul.f32 0.5, %v7910
      %v7912 = vsub.f32 1.5, %v7911
      %v7913 = vmul.f32 %v7908, %v7912
      %vm7914 = vweird.f32 %v7811
      %vm7915 = vweird.f32 %v7908
      %vm7916 = vmor %vm7914, %vm7915
      %v7917 = vsel %vm7916, %v7908, %v7913
      %v7918 = vrsqrt.pop %v7812
      %v7919 = vmul.f32 %v7918, %v7812
      %v7920 = vmul.f32 %v7919, %v7918
      %v7921 = vmul.f32 0.5, %v7920
      %v7922 = vsub.f32 1.5, %v7921
      %v7923 = vmul.f32 %v7918, %v7922
      %vm7924 = vweird.f32 %v7812
      %vm7925 = vweird.f32 %v7918
      %vm7926 = vmor %vm7924, %vm7925
      %v7927 = vsel %vm7926, %v7918, %v7923
      %v7928 = vrsqrt.pop %v7813
      %v7929 = vmul.f32 %v7928, %v7813
      %v7930 = vmul.f32 %v7929, %v7928
      %v7931 = vmul.f32 0.5, %v7930
      %v7932 = vsub.f32 1.5, %v7931
      %v7933 = vmul.f32 %v7928, %v7932
      %vm7934 = vweird.f32 %v7813
      %vm7935 = vweird.f32 %v7928
      %vm7936 = vmor %vm7934, %vm7935
      %v7937 = vsel %vm7936, %v7928, %v7933
      %v7938 = vrsqrt.pop %v7814
      %v7939 = vmul.f32 %v7938, %v7814
      %v7940 = vmul.f32 %v7939, %v7938
      %v7941 = vmul.f32 0.5, %v7940
      %v7942 = vsub.f32 1.5, %v7941
      %v7943 = vmul.f32 %v7938, %v7942
      %vm7944 = vweird.f32 %v7814
      %vm7945 = vweird.f32 %v7938
      %vm7946 = vmor %vm7944, %vm7945
      %v7947 = vsel %vm7946, %v7938, %v7943
      %v7948 = vrsqrt.pop %v7815
      %v7949 = vmul.f32 %v7948, %v7815
      %v7950 = vmul.f32 %v7949, %v7948
      %v7951 = vmul.f32 0.5, %v7950
      %v7952 = vsub.f32 1.5, %v7951
      %v7953 = vmul.f32 %v7948, %v7952
      %vm7954 = vweird.f32 %v7815
      %vm7955 = vweird.f32 %v7948
      %vm7956 = vmor %vm7954, %vm7955
      %v7957 = vsel %vm7956, %v7948, %v7953
      %v7958 = vrsqrt.pop %v7816
      %v7959 = vmul.f32 %v7958, %v7816
      %v7960 = vmul.f32 %v7959, %v7958
      %v7961 = vmul.f32 0.5, %v7960
      %v7962 = vsub.f32 1.5, %v7961
      %v7963 = vmul.f32 %v7958, %v7962
      %vm7964 = vweird.f32 %v7816
      %vm7965 = vweird.f32 %v7958
      %vm7966 = vmor %vm7964, %vm7965
      %v7967 = vsel %vm7966, %v7958, %v7963
      %v7968 = vrsqrt.pop %v7817
      %v7969 = vmul.f32 %v7968, %v7817
      %v7970 = vmul.f32 %v7969, %v7968
      %v7971 = vmul.f32 0.5, %v7970
      %v7972 = vsub.f32 1.5, %v7971
      %v7973 = vmul.f32 %v7968, %v7972
      %vm7974 = vweird.f32 %v7817
      %vm7975 = vweird.f32 %v7968
      %vm7976 = vmor %vm7974, %vm7975
      %v7977 = vsel %vm7976, %v7968, %v7973
      %v7978 = vmul.f32 %v7706, %v7827
      %v7979 = vmul.f32 %v7707, %v7837
      %v7980 = vmul.f32 %v7708, %v7847
      %v7981 = vmul.f32 %v7709, %v7857
      %v7982 = vmul.f32 %v7710, %v7867
      %v7983 = vmul.f32 %v7711, %v7877
      %v7984 = vmul.f32 %v7712, %v7887
      %v7985 = vmul.f32 %v7713, %v7897
      %v7986 = vmul.f32 %v7714, %v7907
      %v7987 = vmul.f32 %v7715, %v7917
      %v7988 = vmul.f32 %v7716, %v7927
      %v7989 = vmul.f32 %v7717, %v7937
      %v7990 = vmul.f32 %v7718, %v7947
      %v7991 = vmul.f32 %v7719, %v7957
      %v7992 = vmul.f32 %v7720, %v7967
      %v7993 = vmul.f32 %v7721, %v7977
      %v7994 = vperm.slane %v7640, 0
      %v7995 = vmul.f32 %v7978, %v7994
      %v7996 = vmul.f32 %v7979, %v7994
      %v7997 = vmul.f32 %v7980, %v7994
      %v7998 = vmul.f32 %v7981, %v7994
      %v7999 = vmul.f32 %v7982, %v7994
      %v8000 = vmul.f32 %v7983, %v7994
      %v8001 = vmul.f32 %v7984, %v7994
      %v8002 = vmul.f32 %v7985, %v7994
      %v8003 = vmul.f32 %v7986, %v7994
      %v8004 = vmul.f32 %v7987, %v7994
      %v8005 = vmul.f32 %v7988, %v7994
      %v8006 = vmul.f32 %v7989, %v7994
      %v8007 = vmul.f32 %v7990, %v7994
      %v8008 = vmul.f32 %v7991, %v7994
      %v8009 = vmul.f32 %v7992, %v7994
      %v8010 = vmul.f32 %v7993, %v7994
      %v8011 = vperm.slane %v7641, 0
      %v8012 = vadd.f32 %v7995, %v8011
      %v8013 = vadd.f32 %v7996, %v8011
      %v8014 = vadd.f32 %v7997, %v8011
      %v8015 = vadd.f32 %v7998, %v8011
      %v8016 = vadd.f32 %v7999, %v8011
      %v8017 = vadd.f32 %v8000, %v8011
      %v8018 = vadd.f32 %v8001, %v8011
      %v8019 = vadd.f32 %v8002, %v8011
      %v8020 = vadd.f32 %v8003, %v8011
      %v8021 = vadd.f32 %v8004, %v8011
      %v8022 = vadd.f32 %v8005, %v8011
      %v8023 = vadd.f32 %v8006, %v8011
      %v8024 = vadd.f32 %v8007, %v8011
      %v8025 = vadd.f32 %v8008, %v8011
      %v8026 = vadd.f32 %v8009, %v8011
      %v8027 = vadd.f32 %v8010, %v8011
      %8028 = vst.msk [vmem:[%s405] sm:$0xff] %vm469, %v8012
      %8029 = vst.msk [vmem:[%s405 + $0x8] sm:$0xff] %vm469, %v8013
      %8030 = vst.msk [vmem:[%s405 + $0x10] sm:$0xff] %vm469, %v8014
      %8031 = vst.msk [vmem:[%s405 + $0x18] sm:$0xff] %vm469, %v8015
      %8032 = vst.msk [vmem:[%s405 + $0x20] sm:$0xff] %vm469, %v8016
      %8033 = vst.msk [vmem:[%s405 + $0x28] sm:$0xff] %vm469, %v8017
      %8034 = vst.msk [vmem:[%s405 + $0x30] sm:$0xff] %vm469, %v8018
      %8035 = vst.msk [vmem:[%s405 + $0x38] sm:$0xff] %vm469, %v8019
      %8036 = vst.msk [vmem:[%s405 + $0x40] sm:$0xff] %vm469, %v8020
      %8037 = vst.msk [vmem:[%s405 + $0x48] sm:$0xff] %vm469, %v8021
      %8038 = vst.msk [vmem:[%s405 + $0x50] sm:$0xff] %vm469, %v8022
      %8039 = vst.msk [vmem:[%s405 + $0x58] sm:$0xff] %vm469, %v8023
      %8040 = vst.msk [vmem:[%s405 + $0x60] sm:$0xff] %vm469, %v8024
      %8041 = vst.msk [vmem:[%s405 + $0x68] sm:$0xff] %vm469, %v8025
      %8042 = vst.msk [vmem:[%s405 + $0x70] sm:$0xff] %vm469, %v8026
      %8043 = vst.msk [vmem:[%s405 + $0x78] sm:$0xff] %vm469, %v8027
      %s8044 = smul.u32 16, %s21
      %p8045 = scmp.lt.s32.totalorder %s8044, 31
      %s8046 = scalar_select %p8045, %s8044, 31
      %s8047 = smul.addr %s8046, 8
      %s8048 = scalar_lea.vmem %s10, %s8047
      // Predicated region
      $region61: #{tpu_custom_call.1} parent=59 // pred_check
        %p8049 = pneg %p264
      $region62: #{tpu_custom_call.1} parent=59 // pred_check_branch
        %8051 = sbr.rel (%p8049) target = $region64
      $region63: #{tpu_custom_call.1} parent=59 // pred_region
        %s8052 = smul.u32 16, %s21
      $region64: #{tpu_custom_call.1} parent=59 // pred_fallthru
        _
    $region60: #{tpu_custom_call.1} parent=5 // pred_fallthru
      _
    %p8053 = scmp.le.s32.totalorder 2, %s16
    // Predicated region
    $region65: #{tpu_custom_call.1} parent=5 // pred_check
      %p8054 = pneg %p8053
    $region66: #{tpu_custom_call.1} parent=5 // pred_check_branch
      %8056 = sbr.rel (%p8054) target = $region68
    $region67: #{tpu_custom_call.1} parent=5 // pred_region
      %s8057 = ssub.s32 %s16, 2
      // Predicated region
      $region69: #{tpu_custom_call.1} parent=67 // pred_check
        %p8058 = pneg %p270
      $region70: #{tpu_custom_call.1} parent=67 // pred_check_branch
        %8060 = sbr.rel (%p8058) target = $region72
      $region71: #{tpu_custom_call.1} parent=67 // pred_region
        %s8061 = smul.u32 16, %s22
        %p8062 = scmp.lt.s32.totalorder %s8061, 31
        %s8063 = scalar_select %p8062, %s8061, 31
        %s8064 = smul.addr %s8063, 8
        %s8065 = scalar_lea.vmem %s10, %s8064
      $region72: #{tpu_custom_call.1} parent=67 // pred_fallthru
        _
    $region68: #{tpu_custom_call.1} parent=5 // pred_fallthru
      _
  $region6: #{tpu_custom_call.1} parent=0 // loop_footer
    %s20 = sadd.s32 1, %s16
  $region7: #{tpu_custom_call.1} parent=0 // loop_footer_branch
    %15 = sbr.rel target = $region3
  $region8: #{tpu_custom_call.1} parent=0 // loop_exit
    _

</llo_original>
